<compile_context>
chip_gen: v7x
topology: tpu7x:2x2x1
jax: 0.10.0
libtpu: 0.0.40
codegen_flags: <defaults>
</compile_context>

<pallas_src>
import functools

import jax
import jax.numpy as jnp
from jax.experimental import pallas as pl
from jax.experimental.pallas import tpu as pltpu

MXU_DTYPE = jnp.bfloat16          # matmul operand dtype (accumulation stays f32)
_VMEM_LIMIT = 32 * 1024 * 1024    # safe on v5e/v6e/v7x (v7x scoped default)


def _largest_divisor(n, target):
    """Largest divisor of n that is <= target (avoids degenerate giant/unit tiles)."""
    d = min(n, target)
    while n % d != 0:
        d -= 1
    return d


# --------------------- Fused LSTM: chunk x-proj + recurrence -----------------
def lstm_kernel(emb_ref, wih_ref, whh_ref, bias_ref, h0_ref, c0_ref,
                out_ref, hT_ref, cT_ref,
                xg_sc, h_sc, c_sc):
    ci = pl.program_id(0)
    nC = pl.num_programs(0)
    C, B, E = emb_ref.shape
    H = h_sc.shape[-1]

    @pl.when(ci == 0)
    def _():
        h_sc[...] = h0_ref[0]
        c_sc[...] = c0_ref[0]

    # Per-chunk input projection on the otherwise-idle MXU:
    #   (C*B, E) bf16 @ (E, 4H) bf16 -> (C*B, 4H) f32, bias folded in.
    xg = (jnp.dot(emb_ref[...].reshape(C * B, E), wih_ref[...],
                  preferred_element_type=jnp.float32)
          + bias_ref[...])
    xg_sc[...] = xg.reshape(C, B, 4 * H)

    def step(t, carry):
        h, c = carry                                     # (B, H) f32, carried in vregs
        # Read W_hh inside the step: no 32 live weight vregs across the unrolled chunk.
        gates = xg_sc[t] + jnp.dot(h.astype(whh_ref.dtype), whh_ref[...],
                                   preferred_element_type=jnp.float32)   # (B, 4H) f32
        i = jax.nn.sigmoid(gates[:, 0:H])
        f = jax.nn.sigmoid(gates[:, H:2 * H])
        g = jnp.tanh(gates[:, 2 * H:3 * H])
        o = jax.nn.sigmoid(gates[:, 3 * H:4 * H])
        c_new = f * c + i * g
        h_new = o * jnp.tanh(c_new)
        out_ref[t] = h_new.astype(out_ref.dtype)         # bf16 hidden stream
        return h_new, c_new

    h, c = jax.lax.fori_loop(0, C, step, (h_sc[...], c_sc[...]), unroll=True)
    h_sc[...] = h
    c_sc[...] = c

    @pl.when(ci == nC - 1)
    def _():
        hT_ref[0] = h                                    # exact f32 recurrent state
        cT_ref[0] = c


def lstm_forward(emb_tbf, w_ih, w_hh, bias, h0, c0, time_chunk=16):
    """emb_tbf: (T, B, E) bf16 time-major embeddings.
    Returns (out (T, B, H) bf16, h_n (1, B, H) f32, c_n (1, B, H) f32)."""
    T, B, E = emb_tbf.shape
    H = w_hh.shape[0]
    G = 4 * H
    C = _largest_divisor(T, time_chunk)

    grid_spec = pltpu.PrefetchScalarGridSpec(
        num_scalar_prefetch=0,
        grid=(T // C,),
        in_specs=[
            pl.BlockSpec((C, B, E), lambda c: (c, 0, 0)),   # embeddings (chunk)
            pl.BlockSpec((E, G), lambda c: (0, 0)),         # W_ih (resident, fetched once)
            pl.BlockSpec((H, G), lambda c: (0, 0)),         # W_hh (resident, fetched once)
            pl.BlockSpec((1, G), lambda c: (0, 0)),         # combined bias
            pl.BlockSpec((1, B, H), lambda c: (0, 0, 0)),   # h0
            pl.BlockSpec((1, B, H), lambda c: (0, 0, 0)),   # c0
        ],
        out_specs=[
            pl.BlockSpec((C, B, H), lambda c: (c, 0, 0)),   # hidden outputs (bf16)
            pl.BlockSpec((1, B, H), lambda c: (0, 0, 0)),   # h_n (f32)
            pl.BlockSpec((1, B, H), lambda c: (0, 0, 0)),   # c_n (f32)
        ],
        scratch_shapes=[
            pltpu.VMEM((C, B, G), jnp.float32),             # per-chunk gate pre-acts
            pltpu.VMEM((B, H), jnp.float32),                # h carry
            pltpu.VMEM((B, H), jnp.float32),                # c carry
        ],
    )

    out, h_n, c_n = pl.pallas_call(
        lstm_kernel,
        grid_spec=grid_spec,
        out_shape=(
            jax.ShapeDtypeStruct((T, B, H), MXU_DTYPE),
            jax.ShapeDtypeStruct((1, B, H), jnp.float32),
            jax.ShapeDtypeStruct((1, B, H), jnp.float32),
        ),
        compiler_params=pltpu.CompilerParams(
            dimension_semantics=("arbitrary",),             # serial recurrence
            vmem_limit_bytes=_VMEM_LIMIT),
    )(emb_tbf, w_ih, w_hh, bias, h0, c0)
    # TODO(synk): for v7x, shard the 4H gate columns (or batch, once realistic) on a
    # leading "parallel"/CORE_PARALLEL grid axis to use both TensorCores here.
    return out, h_n, c_n


# ---------------------------- Decoder (Linear) ------------------------------
def decoder_kernel(x_ref, w_ref, b_ref, o_ref):
    tc, B, H = x_ref.shape
    x = x_ref[...].reshape(tc * B, H)                       # bf16 LHS, no cast needed
    y = (jnp.dot(x, w_ref[...], preferred_element_type=jnp.float32)
         + b_ref[...])                                      # (tc*B, tv) f32
    y = y.reshape(tc, B, -1)
    # (T, B) -> (B, T) permutation as one in-kernel sublane permute (lanes untouched),
    # then a single dense full-block store (no per-row masked vst).
    o_ref[...] = jnp.transpose(y, (1, 0, 2))


def decoder_forward(out_tbf, w_dec, b_dec):
    """out_tbf: (T, B, H) bf16 time-major; w_dec: (H, V) bf16; b_dec: (1, V) f32.
    Returns logits (B, T, V) f32 (batch-first)."""
    T, B, H = out_tbf.shape
    V = w_dec.shape[1]
    tc = _largest_divisor(T, max(1, 128 // B))              # tc*B >= 128 LHS rows when possible
    tv = _largest_divisor(V, 512)

    return pl.pallas_call(
        decoder_kernel,
        out_shape=jax.ShapeDtypeStruct((B, T, V), jnp.float32),
        grid_spec=pltpu.PrefetchScalarGridSpec(
            num_scalar_prefetch=0,
            grid=(T // tc, V // tv),
            in_specs=[
                pl.BlockSpec((tc, B, H), lambda t, v: (t, 0, 0)),
                pl.BlockSpec((H, tv), lambda t, v: (0, v)),
                pl.BlockSpec((1, tv), lambda t, v: (0, v)),
            ],
            out_specs=pl.BlockSpec((B, tc, tv), lambda t, v: (0, t, v)),
        ),
        compiler_params=pltpu.CompilerParams(
            dimension_semantics=("parallel", "parallel"),
            vmem_limit_bytes=_VMEM_LIMIT),
    )(out_tbf, w_dec, b_dec)


# ------------------------------ Full model ----------------------------------
@functools.partial(jax.jit, static_argnames=())
def lstm_model_forward(x_ids, hidden, params):
    """x_ids: (B, T) int32; hidden: (h0, c0) each (1, B, H).
    Returns (decoded (B, T, V), (h_n, c_n))."""
    h0, c0 = hidden
    # Embedding lookup, emitted directly time-major in bf16 (glue, plain JAX gather).
    emb_tbf = jnp.take(params["embedding"], x_ids.T, axis=0)          # (T, B, E) bf16

    out_tbf, h_n, c_n = lstm_forward(emb_tbf, params["w_ih"], params["w_hh"],
                                     params["bias"], h0, c0)

    decoded = decoder_forward(out_tbf, params["w_dec"], params["b_dec"])  # (B, T, V)
    return decoded, (h_n, c_n)


# --------------------------- Param initialization ---------------------------
def init_params(key, vocab_size, embedding_dim, hidden_dim):
    kE, kih, khh, kbi, kbh, kdw, kdb = jax.random.split(key, 7)
    E, H, V = embedding_dim, hidden_dim, vocab_size
    bound = 1.0 / jnp.sqrt(H)

    embedding = jax.random.normal(kE, (V, E), jnp.float32)     # nn.Embedding default N(0,1)

    # LSTM weights stored pre-transposed (in, 4H), gate order [i|f|g|o], bf16 for MXU.
    w_ih = jax.random.uniform(kih, (E, 4 * H), jnp.float32, -bound, bound)
    w_hh = jax.random.uniform(khh, (H, 4 * H), jnp.float32, -bound, bound)
    b_ih = jax.random.uniform(kbi, (4 * H,), jnp.float32, -bound, bound)
    b_hh = jax.random.uniform(kbh, (4 * H,), jnp.float32, -bound, bound)
    # init_lstm fills the forget-gate slice of BOTH bias_ih and bias_hh with 2.0
    # (the loop hits every name containing 'bias'), so the combined forget bias is 4.0;
    # input_bias=False leaves the input-gate slice alone.
    b_ih = b_ih.at[H:2 * H].set(2.0)
    b_hh = b_hh.at[H:2 * H].set(2.0)
    bias = (b_ih + b_hh).reshape(1, 4 * H)
    # TODO(synk): use_ortho/xavier/ghazi re-inits are init-time weight distributions
    # only; deterministic uniform init is used (forward semantics unchanged).

    w_dec = jax.random.uniform(kdw, (H, V), jnp.float32, -bound, bound)
    b_dec = jax.random.uniform(kdb, (1, V), jnp.float32, -bound, bound)

    return {
        "embedding": embedding.astype(MXU_DTYPE),
        "w_ih": w_ih.astype(MXU_DTYPE),
        "w_hh": w_hh.astype(MXU_DTYPE),
        "bias": bias,
        "w_dec": w_dec.astype(MXU_DTYPE),
        "b_dec": b_dec,
    }


if __name__ == "__main__":
    # Small but lane/sublane-aligned demo shapes (B>=8, H multiple of 128).
    vocab_size, embedding_dim, hidden_dim, n_layers = 256, 128, 128, 1
    B, T = 8, 16

    key = jax.random.PRNGKey(0)
    kp, kx = jax.random.split(key)
    params = init_params(kp, vocab_size, embedding_dim, hidden_dim)

    x_ids = jax.random.randint(kx, (B, T), 0, vocab_size, dtype=jnp.int32)
    h0 = jnp.zeros((n_layers, B, hidden_dim), jnp.float32)
    c0 = jnp.zeros((n_layers, B, hidden_dim), jnp.float32)

    decoded, (h_n, c_n) = lstm_model_forward(x_ids, (h0, c0), params)
    jax.block_until_ready((decoded, h_n, c_n))

    assert decoded.shape == (B, T, vocab_size)
    assert h_n.shape == (n_layers, B, hidden_dim)
    assert c_n.shape == (n_layers, B, hidden_dim)
    assert bool(jnp.isfinite(decoded).all())
    assert bool(jnp.isfinite(h_n).all()) and bool(jnp.isfinite(c_n).all())
    print("KERNEL_OK")
</pallas_src>

<mosaic_0001>
module attributes {stable_mosaic.version = 11 : i64} {
  func.func @decoder_kernel(%arg0: i32, %arg1: i32, %arg2: memref<16x8x128xbf16, #tpu.memory_space<vmem>>, %arg3: memref<128x256xbf16, #tpu.memory_space<vmem>>, %arg4: memref<1x256xf32, #tpu.memory_space<vmem>>, %arg5: memref<8x16x256xf32, #tpu.memory_space<vmem>>) attributes {dimension_semantics = [#tpu.dimension_semantics<parallel>, #tpu.dimension_semantics<parallel>], iteration_bounds = array<i64: 1, 1>, scalar_prefetch = 0 : i64, scratch_operands = 0 : i64, tpu.core_type = #tpu.core_type<tc>, window_params = [{transform_indices = @transform_0, window_bounds = array<i64: 16, 8, 128>}, {transform_indices = @transform_1, window_bounds = array<i64: 128, 256>}, {transform_indices = @transform_2, window_bounds = array<i64: 1, 256>}, {transform_indices = @transform_3, window_bounds = array<i64: 8, 16, 256>}]} {
    %c0 = arith.constant 0 : index
    %c0_0 = arith.constant 0 : index
    %c0_1 = arith.constant 0 : index
    %0 = vector.load %arg2[%c0, %c0_0, %c0_1] : memref<16x8x128xbf16, #tpu.memory_space<vmem>>, vector<16x8x128xbf16>
    %1 = vector.shape_cast %0 : vector<16x8x128xbf16> to vector<128x128xbf16>
    %c0_2 = arith.constant 0 : index
    %c0_3 = arith.constant 0 : index
    %2 = vector.load %arg3[%c0_2, %c0_3] : memref<128x256xbf16, #tpu.memory_space<vmem>>, vector<128x256xbf16>
    %cst = arith.constant dense<0.000000e+00> : vector<128x256xf32>
    %3 = tpu.matmul %1, %2, %cst {dimension_numbers = #tpu.dot_dimension_numbers<[1], [0], [0], [1], [0, 0, 1, 1], [], []>} : vector<128x128xbf16>, vector<128x256xbf16>, vector<128x256xf32> -> vector<128x256xf32>
    %c0_4 = arith.constant 0 : index
    %c0_5 = arith.constant 0 : index
    %4 = vector.load %arg4[%c0_4, %c0_5] : memref<1x256xf32, #tpu.memory_space<vmem>>, vector<1x256xf32>
    %5 = vector.broadcast %4 : vector<1x256xf32> to vector<128x256xf32>
    %6 = arith.addf %3, %5 : vector<128x256xf32>
    %7 = vector.shape_cast %6 : vector<128x256xf32> to vector<16x8x256xf32>
    %8 = tpu.transpose %7, [1, 0, 2] : vector<16x8x256xf32> -> vector<8x16x256xf32>
    %c0_6 = arith.constant 0 : index
    %c0_7 = arith.constant 0 : index
    %c0_8 = arith.constant 0 : index
    %9 = vector.load %arg5[%c0_6, %c0_7, %c0_8] : memref<8x16x256xf32, #tpu.memory_space<vmem>>, vector<8x16x256xf32>
    tpu.vector_store %arg5[%c0_6, %c0_7, %c0_8], %8 {strides = array<i32>} : memref<8x16x256xf32, #tpu.memory_space<vmem>>, vector<8x16x256xf32>,
    return
  }
  func.func @transform_0(%arg0: i32, %arg1: i32) -> (i32, i32, i32) {
    %c0_i32 = arith.constant 0 : i32
    %c0_i32_0 = arith.constant 0 : i32
    %c0_i32_1 = arith.constant 0 : i32
    return %arg0, %c0_i32, %c0_i32_0 : i32, i32, i32
  }
  func.func @transform_1(%arg0: i32, %arg1: i32) -> (i32, i32) {
    %c0_i32 = arith.constant 0 : i32
    %c0_i32_0 = arith.constant 0 : i32
    return %c0_i32, %arg1 : i32, i32
  }
  func.func @transform_2(%arg0: i32, %arg1: i32) -> (i32, i32) {
    %c0_i32 = arith.constant 0 : i32
    %c0_i32_0 = arith.constant 0 : i32
    return %c0_i32, %arg1 : i32, i32
  }
  func.func @transform_3(%arg0: i32, %arg1: i32) -> (i32, i32, i32) {
    %c0_i32 = arith.constant 0 : i32
    %c0_i32_0 = arith.constant 0 : i32
    return %c0_i32, %arg0, %arg1 : i32, i32, i32
  }
}

module attributes {stable_mosaic.version = 11 : i64} {
  func.func @lstm_kernel(%arg0: i32, %arg1: memref<16x8x128xbf16, #tpu.memory_space<vmem>>, %arg2: memref<128x512xbf16, #tpu.memory_space<vmem>>, %arg3: memref<128x512xbf16, #tpu.memory_space<vmem>>, %arg4: memref<1x512xf32, #tpu.memory_space<vmem>>, %arg5: memref<1x8x128xf32, #tpu.memory_space<vmem>>, %arg6: memref<1x8x128xf32, #tpu.memory_space<vmem>>, %arg7: memref<16x8x128xbf16, #tpu.memory_space<vmem>>, %arg8: memref<1x8x128xf32, #tpu.memory_space<vmem>>, %arg9: memref<1x8x128xf32, #tpu.memory_space<vmem>>, %arg10: memref<16x8x512xf32, #tpu.memory_space<vmem>>, %arg11: memref<8x128xf32, #tpu.memory_space<vmem>>, %arg12: memref<8x128xf32, #tpu.memory_space<vmem>>) attributes {dimension_semantics = [#tpu.dimension_semantics<arbitrary>], iteration_bounds = array<i64: 1>, scalar_prefetch = 0 : i64, scratch_operands = 3 : i64, tpu.core_type = #tpu.core_type<tc>, window_params = [{transform_indices = @transform_0, window_bounds = array<i64: 16, 8, 128>}, {pipeline_mode = #tpu.pipeline_mode<synchronous>, transform_indices = @transform_1, window_bounds = array<i64: 128, 512>}, {pipeline_mode = #tpu.pipeline_mode<synchronous>, transform_indices = @transform_2, window_bounds = array<i64: 128, 512>}, {pipeline_mode = #tpu.pipeline_mode<synchronous>, transform_indices = @transform_3, window_bounds = array<i64: 1, 512>}, {pipeline_mode = #tpu.pipeline_mode<synchronous>, transform_indices = @transform_4, window_bounds = array<i64: 1, 8, 128>}, {pipeline_mode = #tpu.pipeline_mode<synchronous>, transform_indices = @transform_5, window_bounds = array<i64: 1, 8, 128>}, {transform_indices = @transform_6, window_bounds = array<i64: 16, 8, 128>}, {pipeline_mode = #tpu.pipeline_mode<synchronous>, transform_indices = @transform_7, window_bounds = array<i64: 1, 8, 128>}, {pipeline_mode = #tpu.pipeline_mode<synchronous>, transform_indices = @transform_8, window_bounds = array<i64: 1, 8, 128>}]} {
    %c0_i32 = arith.constant 0 : i32
    %0 = arith.cmpi eq, %arg0, %c0_i32 : i32
    %1 = arith.extui %0 : i1 to i32
    %c0_i32_0 = arith.constant 0 : i32
    %2 = arith.cmpi ne, %1, %c0_i32_0 : i32
    scf.if %2 {
      %c0_181 = arith.constant 0 : index
      %c0_182 = arith.constant 0 : index
      %c0_183 = arith.constant 0 : index
      %611 = vector.load %arg5[%c0_181, %c0_182, %c0_183] : memref<1x8x128xf32, #tpu.memory_space<vmem>>, vector<1x8x128xf32>
      %612 = vector.shape_cast %611 : vector<1x8x128xf32> to vector<8x128xf32>
      %c0_184 = arith.constant 0 : index
      %c0_185 = arith.constant 0 : index
      %613 = vector.load %arg11[%c0_184, %c0_185] : memref<8x128xf32, #tpu.memory_space<vmem>>, vector<8x128xf32>
      tpu.vector_store %arg11[%c0_184, %c0_185], %612 {strides = array<i32>} : memref<8x128xf32, #tpu.memory_space<vmem>>, vector<8x128xf32>,
      %c0_186 = arith.constant 0 : index
      %c0_187 = arith.constant 0 : index
      %c0_188 = arith.constant 0 : index
      %614 = vector.load %arg6[%c0_186, %c0_187, %c0_188] : memref<1x8x128xf32, #tpu.memory_space<vmem>>, vector<1x8x128xf32>
      %615 = vector.shape_cast %614 : vector<1x8x128xf32> to vector<8x128xf32>
      %c0_189 = arith.constant 0 : index
      %c0_190 = arith.constant 0 : index
      %616 = vector.load %arg12[%c0_189, %c0_190] : memref<8x128xf32, #tpu.memory_space<vmem>>, vector<8x128xf32>
      tpu.vector_store %arg12[%c0_189, %c0_190], %615 {strides = array<i32>} : memref<8x128xf32, #tpu.memory_space<vmem>>, vector<8x128xf32>,
    } else {
    }
    %c0 = arith.constant 0 : index
    %c0_1 = arith.constant 0 : index
    %c0_2 = arith.constant 0 : index
    %3 = vector.load %arg1[%c0, %c0_1, %c0_2] : memref<16x8x128xbf16, #tpu.memory_space<vmem>>, vector<16x8x128xbf16>
    %4 = vector.shape_cast %3 : vector<16x8x128xbf16> to vector<128x128xbf16>
    %c0_3 = arith.constant 0 : index
    %c0_4 = arith.constant 0 : index
    %5 = vector.load %arg2[%c0_3, %c0_4] : memref<128x512xbf16, #tpu.memory_space<vmem>>, vector<128x512xbf16>
    %cst = arith.constant dense<0.000000e+00> : vector<128x512xf32>
    %6 = tpu.matmul %4, %5, %cst {dimension_numbers = #tpu.dot_dimension_numbers<[1], [0], [0], [1], [0, 0, 1, 1], [], []>} : vector<128x128xbf16>, vector<128x512xbf16>, vector<128x512xf32> -> vector<128x512xf32>
    %c0_5 = arith.constant 0 : index
    %c0_6 = arith.constant 0 : index
    %7 = vector.load %arg4[%c0_5, %c0_6] : memref<1x512xf32, #tpu.memory_space<vmem>>, vector<1x512xf32>
    %8 = vector.broadcast %7 : vector<1x512xf32> to vector<128x512xf32>
    %9 = arith.addf %6, %8 : vector<128x512xf32>
    %10 = vector.shape_cast %9 : vector<128x512xf32> to vector<16x8x512xf32>
    %c0_7 = arith.constant 0 : index
    %c0_8 = arith.constant 0 : index
    %c0_9 = arith.constant 0 : index
    %11 = vector.load %arg10[%c0_7, %c0_8, %c0_9] : memref<16x8x512xf32, #tpu.memory_space<vmem>>, vector<16x8x512xf32>
    tpu.vector_store %arg10[%c0_7, %c0_8, %c0_9], %10 {strides = array<i32>} : memref<16x8x512xf32, #tpu.memory_space<vmem>>, vector<16x8x512xf32>,
    %c0_10 = arith.constant 0 : index
    %c0_11 = arith.constant 0 : index
    %12 = vector.load %arg11[%c0_10, %c0_11] : memref<8x128xf32, #tpu.memory_space<vmem>>, vector<8x128xf32>
    %c0_12 = arith.constant 0 : index
    %c0_13 = arith.constant 0 : index
    %13 = vector.load %arg12[%c0_12, %c0_13] : memref<8x128xf32, #tpu.memory_space<vmem>>, vector<8x128xf32>
    %c0_i32_14 = arith.constant 0 : i32
    %14 = arith.index_cast %c0_i32_14 : i32 to index
    %c0_15 = arith.constant 0 : index
    %c0_16 = arith.constant 0 : index
    %15 = vector.load %arg10[%14, %c0_15, %c0_16] : memref<16x8x512xf32, #tpu.memory_space<vmem>>, vector<1x8x512xf32>
    %16 = vector.shape_cast %15 : vector<1x8x512xf32> to vector<8x512xf32>
    %17 = arith.truncf %12 : vector<8x128xf32> to vector<8x128xbf16>
    %c0_17 = arith.constant 0 : index
    %c0_18 = arith.constant 0 : index
    %18 = vector.load %arg3[%c0_17, %c0_18] : memref<128x512xbf16, #tpu.memory_space<vmem>>, vector<128x512xbf16>
    %cst_19 = arith.constant dense<0.000000e+00> : vector<8x512xf32>
    %19 = tpu.matmul %17, %18, %cst_19 {dimension_numbers = #tpu.dot_dimension_numbers<[1], [0], [0], [1], [0, 0, 1, 1], [], []>} : vector<8x128xbf16>, vector<128x512xbf16>, vector<8x512xf32> -> vector<8x512xf32>
    %20 = arith.addf %16, %19 : vector<8x512xf32>
    %21 = vector.extract_strided_slice %20 {offsets = [0, 0], sizes = [8, 128], strides = [1, 1]} : vector<8x512xf32> to vector<8x128xf32>
    %22 = arith.negf %21 : vector<8x128xf32>
    %23 = math.exp %22 : vector<8x128xf32>
    %cst_20 = arith.constant 1.000000e+00 : f32
    %24 = vector.broadcast %cst_20 : f32 to vector<8x128xf32>
    %25 = arith.addf %24, %23 : vector<8x128xf32>
    %26 = arith.divf %24, %25 : vector<8x128xf32>
    %27 = vector.extract_strided_slice %20 {offsets = [0, 128], sizes = [8, 128], strides = [1, 1]} : vector<8x512xf32> to vector<8x128xf32>
    %28 = arith.negf %27 : vector<8x128xf32>
    %29 = math.exp %28 : vector<8x128xf32>
    %cst_21 = arith.constant 1.000000e+00 : f32
    %30 = vector.broadcast %cst_21 : f32 to vector<8x128xf32>
    %31 = arith.addf %30, %29 : vector<8x128xf32>
    %32 = arith.divf %30, %31 : vector<8x128xf32>
    %33 = vector.extract_strided_slice %20 {offsets = [0, 256], sizes = [8, 128], strides = [1, 1]} : vector<8x512xf32> to vector<8x128xf32>
    %34 = math.tanh %33 : vector<8x128xf32>
    %35 = vector.extract_strided_slice %20 {offsets = [0, 384], sizes = [8, 128], strides = [1, 1]} : vector<8x512xf32> to vector<8x128xf32>
    %36 = arith.negf %35 : vector<8x128xf32>
    %37 = math.exp %36 : vector<8x128xf32>
    %cst_22 = arith.constant 1.000000e+00 : f32
    %38 = vector.broadcast %cst_22 : f32 to vector<8x128xf32>
    %39 = arith.addf %38, %37 : vector<8x128xf32>
    %40 = arith.divf %38, %39 : vector<8x128xf32>
    %41 = arith.mulf %32, %13 : vector<8x128xf32>
    %42 = arith.mulf %26, %34 : vector<8x128xf32>
    %43 = arith.addf %41, %42 : vector<8x128xf32>
    %44 = math.tanh %43 : vector<8x128xf32>
    %45 = arith.mulf %40, %44 : vector<8x128xf32>
    %46 = arith.truncf %45 : vector<8x128xf32> to vector<8x128xbf16>
    %47 = arith.index_cast %c0_i32_14 : i32 to index
    %c0_23 = arith.constant 0 : index
    %c0_24 = arith.constant 0 : index
    %48 = vector.load %arg7[%47, %c0_23, %c0_24] : memref<16x8x128xbf16, #tpu.memory_space<vmem>>, vector<1x8x128xbf16>
    %49 = vector.shape_cast %48 : vector<1x8x128xbf16> to vector<8x128xbf16>
    %50 = vector.shape_cast %46 : vector<8x128xbf16> to vector<1x8x128xbf16>
    tpu.vector_store %arg7[%47, %c0_23, %c0_24], %50 {strides = array<i32>} : memref<16x8x128xbf16, #tpu.memory_space<vmem>>, vector<1x8x128xbf16>,
    %c1_i32 = arith.constant 1 : i32
    %51 = arith.index_cast %c1_i32 : i32 to index
    %c0_25 = arith.constant 0 : index
    %c0_26 = arith.constant 0 : index
    %52 = vector.load %arg10[%51, %c0_25, %c0_26] : memref<16x8x512xf32, #tpu.memory_space<vmem>>, vector<1x8x512xf32>
    %53 = vector.shape_cast %52 : vector<1x8x512xf32> to vector<8x512xf32>
    %54 = arith.truncf %45 : vector<8x128xf32> to vector<8x128xbf16>
    %c0_27 = arith.constant 0 : index
    %c0_28 = arith.constant 0 : index
    %55 = vector.load %arg3[%c0_27, %c0_28] : memref<128x512xbf16, #tpu.memory_space<vmem>>, vector<128x512xbf16>
    %cst_29 = arith.constant dense<0.000000e+00> : vector<8x512xf32>
    %56 = tpu.matmul %54, %55, %cst_29 {dimension_numbers = #tpu.dot_dimension_numbers<[1], [0], [0], [1], [0, 0, 1, 1], [], []>} : vector<8x128xbf16>, vector<128x512xbf16>, vector<8x512xf32> -> vector<8x512xf32>
    %57 = arith.addf %53, %56 : vector<8x512xf32>
    %58 = vector.extract_strided_slice %57 {offsets = [0, 0], sizes = [8, 128], strides = [1, 1]} : vector<8x512xf32> to vector<8x128xf32>
    %59 = arith.negf %58 : vector<8x128xf32>
    %60 = math.exp %59 : vector<8x128xf32>
    %cst_30 = arith.constant 1.000000e+00 : f32
    %61 = vector.broadcast %cst_30 : f32 to vector<8x128xf32>
    %62 = arith.addf %61, %60 : vector<8x128xf32>
    %63 = arith.divf %61, %62 : vector<8x128xf32>
    %64 = vector.extract_strided_slice %57 {offsets = [0, 128], sizes = [8, 128], strides = [1, 1]} : vector<8x512xf32> to vector<8x128xf32>
    %65 = arith.negf %64 : vector<8x128xf32>
    %66 = math.exp %65 : vector<8x128xf32>
    %cst_31 = arith.constant 1.000000e+00 : f32
    %67 = vector.broadcast %cst_31 : f32 to vector<8x128xf32>
    %68 = arith.addf %67, %66 : vector<8x128xf32>
    %69 = arith.divf %67, %68 : vector<8x128xf32>
    %70 = vector.extract_strided_slice %57 {offsets = [0, 256], sizes = [8, 128], strides = [1, 1]} : vector<8x512xf32> to vector<8x128xf32>
    %71 = math.tanh %70 : vector<8x128xf32>
    %72 = vector.extract_strided_slice %57 {offsets = [0, 384], sizes = [8, 128], strides = [1, 1]} : vector<8x512xf32> to vector<8x128xf32>
    %73 = arith.negf %72 : vector<8x128xf32>
    %74 = math.exp %73 : vector<8x128xf32>
    %cst_32 = arith.constant 1.000000e+00 : f32
    %75 = vector.broadcast %cst_32 : f32 to vector<8x128xf32>
    %76 = arith.addf %75, %74 : vector<8x128xf32>
    %77 = arith.divf %75, %76 : vector<8x128xf32>
    %78 = arith.mulf %69, %43 : vector<8x128xf32>
    %79 = arith.mulf %63, %71 : vector<8x128xf32>
    %80 = arith.addf %78, %79 : vector<8x128xf32>
    %81 = math.tanh %80 : vector<8x128xf32>
    %82 = arith.mulf %77, %81 : vector<8x128xf32>
    %83 = arith.truncf %82 : vector<8x128xf32> to vector<8x128xbf16>
    %84 = arith.index_cast %c1_i32 : i32 to index
    %c0_33 = arith.constant 0 : index
    %c0_34 = arith.constant 0 : index
    %85 = vector.load %arg7[%84, %c0_33, %c0_34] : memref<16x8x128xbf16, #tpu.memory_space<vmem>>, vector<1x8x128xbf16>
    %86 = vector.shape_cast %85 : vector<1x8x128xbf16> to vector<8x128xbf16>
    %87 = vector.shape_cast %83 : vector<8x128xbf16> to vector<1x8x128xbf16>
    tpu.vector_store %arg7[%84, %c0_33, %c0_34], %87 {strides = array<i32>} : memref<16x8x128xbf16, #tpu.memory_space<vmem>>, vector<1x8x128xbf16>,
    %c2_i32 = arith.constant 2 : i32
    %88 = arith.index_cast %c2_i32 : i32 to index
    %c0_35 = arith.constant 0 : index
    %c0_36 = arith.constant 0 : index
    %89 = vector.load %arg10[%88, %c0_35, %c0_36] : memref<16x8x512xf32, #tpu.memory_space<vmem>>, vector<1x8x512xf32>
    %90 = vector.shape_cast %89 : vector<1x8x512xf32> to vector<8x512xf32>
    %91 = arith.truncf %82 : vector<8x128xf32> to vector<8x128xbf16>
    %c0_37 = arith.constant 0 : index
    %c0_38 = arith.constant 0 : index
    %92 = vector.load %arg3[%c0_37, %c0_38] : memref<128x512xbf16, #tpu.memory_space<vmem>>, vector<128x512xbf16>
    %cst_39 = arith.constant dense<0.000000e+00> : vector<8x512xf32>
    %93 = tpu.matmul %91, %92, %cst_39 {dimension_numbers = #tpu.dot_dimension_numbers<[1], [0], [0], [1], [0, 0, 1, 1], [], []>} : vector<8x128xbf16>, vector<128x512xbf16>, vector<8x512xf32> -> vector<8x512xf32>
    %94 = arith.addf %90, %93 : vector<8x512xf32>
    %95 = vector.extract_strided_slice %94 {offsets = [0, 0], sizes = [8, 128], strides = [1, 1]} : vector<8x512xf32> to vector<8x128xf32>
    %96 = arith.negf %95 : vector<8x128xf32>
    %97 = math.exp %96 : vector<8x128xf32>
    %cst_40 = arith.constant 1.000000e+00 : f32
    %98 = vector.broadcast %cst_40 : f32 to vector<8x128xf32>
    %99 = arith.addf %98, %97 : vector<8x128xf32>
    %100 = arith.divf %98, %99 : vector<8x128xf32>
    %101 = vector.extract_strided_slice %94 {offsets = [0, 128], sizes = [8, 128], strides = [1, 1]} : vector<8x512xf32> to vector<8x128xf32>
    %102 = arith.negf %101 : vector<8x128xf32>
    %103 = math.exp %102 : vector<8x128xf32>
    %cst_41 = arith.constant 1.000000e+00 : f32
    %104 = vector.broadcast %cst_41 : f32 to vector<8x128xf32>
    %105 = arith.addf %104, %103 : vector<8x128xf32>
    %106 = arith.divf %104, %105 : vector<8x128xf32>
    %107 = vector.extract_strided_slice %94 {offsets = [0, 256], sizes = [8, 128], strides = [1, 1]} : vector<8x512xf32> to vector<8x128xf32>
    %108 = math.tanh %107 : vector<8x128xf32>
    %109 = vector.extract_strided_slice %94 {offsets = [0, 384], sizes = [8, 128], strides = [1, 1]} : vector<8x512xf32> to vector<8x128xf32>
    %110 = arith.negf %109 : vector<8x128xf32>
    %111 = math.exp %110 : vector<8x128xf32>
    %cst_42 = arith.constant 1.000000e+00 : f32
    %112 = vector.broadcast %cst_42 : f32 to vector<8x128xf32>
    %113 = arith.addf %112, %111 : vector<8x128xf32>
    %114 = arith.divf %112, %113 : vector<8x128xf32>
    %115 = arith.mulf %106, %80 : vector<8x128xf32>
    %116 = arith.mulf %100, %108 : vector<8x128xf32>
    %117 = arith.addf %115, %116 : vector<8x128xf32>
    %118 = math.tanh %117 : vector<8x128xf32>
    %119 = arith.mulf %114, %118 : vector<8x128xf32>
    %120 = arith.truncf %119 : vector<8x128xf32> to vector<8x128xbf16>
    %121 = arith.index_cast %c2_i32 : i32 to index
    %c0_43 = arith.constant 0 : index
    %c0_44 = arith.constant 0 : index
    %122 = vector.load %arg7[%121, %c0_43, %c0_44] : memref<16x8x128xbf16, #tpu.memory_space<vmem>>, vector<1x8x128xbf16>
    %123 = vector.shape_cast %122 : vector<1x8x128xbf16> to vector<8x128xbf16>
    %124 = vector.shape_cast %120 : vector<8x128xbf16> to vector<1x8x128xbf16>
    tpu.vector_store %arg7[%121, %c0_43, %c0_44], %124 {strides = array<i32>} : memref<16x8x128xbf16, #tpu.memory_space<vmem>>, vector<1x8x128xbf16>,
    %c3_i32 = arith.constant 3 : i32
    %125 = arith.index_cast %c3_i32 : i32 to index
    %c0_45 = arith.constant 0 : index
    %c0_46 = arith.constant 0 : index
    %126 = vector.load %arg10[%125, %c0_45, %c0_46] : memref<16x8x512xf32, #tpu.memory_space<vmem>>, vector<1x8x512xf32>
    %127 = vector.shape_cast %126 : vector<1x8x512xf32> to vector<8x512xf32>
    %128 = arith.truncf %119 : vector<8x128xf32> to vector<8x128xbf16>
    %c0_47 = arith.constant 0 : index
    %c0_48 = arith.constant 0 : index
    %129 = vector.load %arg3[%c0_47, %c0_48] : memref<128x512xbf16, #tpu.memory_space<vmem>>, vector<128x512xbf16>
    %cst_49 = arith.constant dense<0.000000e+00> : vector<8x512xf32>
    %130 = tpu.matmul %128, %129, %cst_49 {dimension_numbers = #tpu.dot_dimension_numbers<[1], [0], [0], [1], [0, 0, 1, 1], [], []>} : vector<8x128xbf16>, vector<128x512xbf16>, vector<8x512xf32> -> vector<8x512xf32>
    %131 = arith.addf %127, %130 : vector<8x512xf32>
    %132 = vector.extract_strided_slice %131 {offsets = [0, 0], sizes = [8, 128], strides = [1, 1]} : vector<8x512xf32> to vector<8x128xf32>
    %133 = arith.negf %132 : vector<8x128xf32>
    %134 = math.exp %133 : vector<8x128xf32>
    %cst_50 = arith.constant 1.000000e+00 : f32
    %135 = vector.broadcast %cst_50 : f32 to vector<8x128xf32>
    %136 = arith.addf %135, %134 : vector<8x128xf32>
    %137 = arith.divf %135, %136 : vector<8x128xf32>
    %138 = vector.extract_strided_slice %131 {offsets = [0, 128], sizes = [8, 128], strides = [1, 1]} : vector<8x512xf32> to vector<8x128xf32>
    %139 = arith.negf %138 : vector<8x128xf32>
    %140 = math.exp %139 : vector<8x128xf32>
    %cst_51 = arith.constant 1.000000e+00 : f32
    %141 = vector.broadcast %cst_51 : f32 to vector<8x128xf32>
    %142 = arith.addf %141, %140 : vector<8x128xf32>
    %143 = arith.divf %141, %142 : vector<8x128xf32>
    %144 = vector.extract_strided_slice %131 {offsets = [0, 256], sizes = [8, 128], strides = [1, 1]} : vector<8x512xf32> to vector<8x128xf32>
    %145 = math.tanh %144 : vector<8x128xf32>
    %146 = vector.extract_strided_slice %131 {offsets = [0, 384], sizes = [8, 128], strides = [1, 1]} : vector<8x512xf32> to vector<8x128xf32>
    %147 = arith.negf %146 : vector<8x128xf32>
    %148 = math.exp %147 : vector<8x128xf32>
    %cst_52 = arith.constant 1.000000e+00 : f32
    %149 = vector.broadcast %cst_52 : f32 to vector<8x128xf32>
    %150 = arith.addf %149, %148 : vector<8x128xf32>
    %151 = arith.divf %149, %150 : vector<8x128xf32>
    %152 = arith.mulf %143, %117 : vector<8x128xf32>
    %153 = arith.mulf %137, %145 : vector<8x128xf32>
    %154 = arith.addf %152, %153 : vector<8x128xf32>
    %155 = math.tanh %154 : vector<8x128xf32>
    %156 = arith.mulf %151, %155 : vector<8x128xf32>
    %157 = arith.truncf %156 : vector<8x128xf32> to vector<8x128xbf16>
    %158 = arith.index_cast %c3_i32 : i32 to index
    %c0_53 = arith.constant 0 : index
    %c0_54 = arith.constant 0 : index
    %159 = vector.load %arg7[%158, %c0_53, %c0_54] : memref<16x8x128xbf16, #tpu.memory_space<vmem>>, vector<1x8x128xbf16>
    %160 = vector.shape_cast %159 : vector<1x8x128xbf16> to vector<8x128xbf16>
    %161 = vector.shape_cast %157 : vector<8x128xbf16> to vector<1x8x128xbf16>
    tpu.vector_store %arg7[%158, %c0_53, %c0_54], %161 {strides = array<i32>} : memref<16x8x128xbf16, #tpu.memory_space<vmem>>, vector<1x8x128xbf16>,
    %c4_i32 = arith.constant 4 : i32
    %162 = arith.index_cast %c4_i32 : i32 to index
    %c0_55 = arith.constant 0 : index
    %c0_56 = arith.constant 0 : index
    %163 = vector.load %arg10[%162, %c0_55, %c0_56] : memref<16x8x512xf32, #tpu.memory_space<vmem>>, vector<1x8x512xf32>
    %164 = vector.shape_cast %163 : vector<1x8x512xf32> to vector<8x512xf32>
    %165 = arith.truncf %156 : vector<8x128xf32> to vector<8x128xbf16>
    %c0_57 = arith.constant 0 : index
    %c0_58 = arith.constant 0 : index
    %166 = vector.load %arg3[%c0_57, %c0_58] : memref<128x512xbf16, #tpu.memory_space<vmem>>, vector<128x512xbf16>
    %cst_59 = arith.constant dense<0.000000e+00> : vector<8x512xf32>
    %167 = tpu.matmul %165, %166, %cst_59 {dimension_numbers = #tpu.dot_dimension_numbers<[1], [0], [0], [1], [0, 0, 1, 1], [], []>} : vector<8x128xbf16>, vector<128x512xbf16>, vector<8x512xf32> -> vector<8x512xf32>
    %168 = arith.addf %164, %167 : vector<8x512xf32>
    %169 = vector.extract_strided_slice %168 {offsets = [0, 0], sizes = [8, 128], strides = [1, 1]} : vector<8x512xf32> to vector<8x128xf32>
    %170 = arith.negf %169 : vector<8x128xf32>
    %171 = math.exp %170 : vector<8x128xf32>
    %cst_60 = arith.constant 1.000000e+00 : f32
    %172 = vector.broadcast %cst_60 : f32 to vector<8x128xf32>
    %173 = arith.addf %172, %171 : vector<8x128xf32>
    %174 = arith.divf %172, %173 : vector<8x128xf32>
    %175 = vector.extract_strided_slice %168 {offsets = [0, 128], sizes = [8, 128], strides = [1, 1]} : vector<8x512xf32> to vector<8x128xf32>
    %176 = arith.negf %175 : vector<8x128xf32>
    %177 = math.exp %176 : vector<8x128xf32>
    %cst_61 = arith.constant 1.000000e+00 : f32
    %178 = vector.broadcast %cst_61 : f32 to vector<8x128xf32>
    %179 = arith.addf %178, %177 : vector<8x128xf32>
    %180 = arith.divf %178, %179 : vector<8x128xf32>
    %181 = vector.extract_strided_slice %168 {offsets = [0, 256], sizes = [8, 128], strides = [1, 1]} : vector<8x512xf32> to vector<8x128xf32>
    %182 = math.tanh %181 : vector<8x128xf32>
    %183 = vector.extract_strided_slice %168 {offsets = [0, 384], sizes = [8, 128], strides = [1, 1]} : vector<8x512xf32> to vector<8x128xf32>
    %184 = arith.negf %183 : vector<8x128xf32>
    %185 = math.exp %184 : vector<8x128xf32>
    %cst_62 = arith.constant 1.000000e+00 : f32
    %186 = vector.broadcast %cst_62 : f32 to vector<8x128xf32>
    %187 = arith.addf %186, %185 : vector<8x128xf32>
    %188 = arith.divf %186, %187 : vector<8x128xf32>
    %189 = arith.mulf %180, %154 : vector<8x128xf32>
    %190 = arith.mulf %174, %182 : vector<8x128xf32>
    %191 = arith.addf %189, %190 : vector<8x128xf32>
    %192 = math.tanh %191 : vector<8x128xf32>
    %193 = arith.mulf %188, %192 : vector<8x128xf32>
    %194 = arith.truncf %193 : vector<8x128xf32> to vector<8x128xbf16>
    %195 = arith.index_cast %c4_i32 : i32 to index
    %c0_63 = arith.constant 0 : index
    %c0_64 = arith.constant 0 : index
    %196 = vector.load %arg7[%195, %c0_63, %c0_64] : memref<16x8x128xbf16, #tpu.memory_space<vmem>>, vector<1x8x128xbf16>
    %197 = vector.shape_cast %196 : vector<1x8x128xbf16> to vector<8x128xbf16>
    %198 = vector.shape_cast %194 : vector<8x128xbf16> to vector<1x8x128xbf16>
    tpu.vector_store %arg7[%195, %c0_63, %c0_64], %198 {strides = array<i32>} : memref<16x8x128xbf16, #tpu.memory_space<vmem>>, vector<1x8x128xbf16>,
    %c5_i32 = arith.constant 5 : i32
    %199 = arith.index_cast %c5_i32 : i32 to index
    %c0_65 = arith.constant 0 : index
    %c0_66 = arith.constant 0 : index
    %200 = vector.load %arg10[%199, %c0_65, %c0_66] : memref<16x8x512xf32, #tpu.memory_space<vmem>>, vector<1x8x512xf32>
    %201 = vector.shape_cast %200 : vector<1x8x512xf32> to vector<8x512xf32>
    %202 = arith.truncf %193 : vector<8x128xf32> to vector<8x128xbf16>
    %c0_67 = arith.constant 0 : index
    %c0_68 = arith.constant 0 : index
    %203 = vector.load %arg3[%c0_67, %c0_68] : memref<128x512xbf16, #tpu.memory_space<vmem>>, vector<128x512xbf16>
    %cst_69 = arith.constant dense<0.000000e+00> : vector<8x512xf32>
    %204 = tpu.matmul %202, %203, %cst_69 {dimension_numbers = #tpu.dot_dimension_numbers<[1], [0], [0], [1], [0, 0, 1, 1], [], []>} : vector<8x128xbf16>, vector<128x512xbf16>, vector<8x512xf32> -> vector<8x512xf32>
    %205 = arith.addf %201, %204 : vector<8x512xf32>
    %206 = vector.extract_strided_slice %205 {offsets = [0, 0], sizes = [8, 128], strides = [1, 1]} : vector<8x512xf32> to vector<8x128xf32>
    %207 = arith.negf %206 : vector<8x128xf32>
    %208 = math.exp %207 : vector<8x128xf32>
    %cst_70 = arith.constant 1.000000e+00 : f32
    %209 = vector.broadcast %cst_70 : f32 to vector<8x128xf32>
    %210 = arith.addf %209, %208 : vector<8x128xf32>
    %211 = arith.divf %209, %210 : vector<8x128xf32>
    %212 = vector.extract_strided_slice %205 {offsets = [0, 128], sizes = [8, 128], strides = [1, 1]} : vector<8x512xf32> to vector<8x128xf32>
    %213 = arith.negf %212 : vector<8x128xf32>
    %214 = math.exp %213 : vector<8x128xf32>
    %cst_71 = arith.constant 1.000000e+00 : f32
    %215 = vector.broadcast %cst_71 : f32 to vector<8x128xf32>
    %216 = arith.addf %215, %214 : vector<8x128xf32>
    %217 = arith.divf %215, %216 : vector<8x128xf32>
    %218 = vector.extract_strided_slice %205 {offsets = [0, 256], sizes = [8, 128], strides = [1, 1]} : vector<8x512xf32> to vector<8x128xf32>
    %219 = math.tanh %218 : vector<8x128xf32>
    %220 = vector.extract_strided_slice %205 {offsets = [0, 384], sizes = [8, 128], strides = [1, 1]} : vector<8x512xf32> to vector<8x128xf32>
    %221 = arith.negf %220 : vector<8x128xf32>
    %222 = math.exp %221 : vector<8x128xf32>
    %cst_72 = arith.constant 1.000000e+00 : f32
    %223 = vector.broadcast %cst_72 : f32 to vector<8x128xf32>
    %224 = arith.addf %223, %222 : vector<8x128xf32>
    %225 = arith.divf %223, %224 : vector<8x128xf32>
    %226 = arith.mulf %217, %191 : vector<8x128xf32>
    %227 = arith.mulf %211, %219 : vector<8x128xf32>
    %228 = arith.addf %226, %227 : vector<8x128xf32>
    %229 = math.tanh %228 : vector<8x128xf32>
    %230 = arith.mulf %225, %229 : vector<8x128xf32>
    %231 = arith.truncf %230 : vector<8x128xf32> to vector<8x128xbf16>
    %232 = arith.index_cast %c5_i32 : i32 to index
    %c0_73 = arith.constant 0 : index
    %c0_74 = arith.constant 0 : index
    %233 = vector.load %arg7[%232, %c0_73, %c0_74] : memref<16x8x128xbf16, #tpu.memory_space<vmem>>, vector<1x8x128xbf16>
    %234 = vector.shape_cast %233 : vector<1x8x128xbf16> to vector<8x128xbf16>
    %235 = vector.shape_cast %231 : vector<8x128xbf16> to vector<1x8x128xbf16>
    tpu.vector_store %arg7[%232, %c0_73, %c0_74], %235 {strides = array<i32>} : memref<16x8x128xbf16, #tpu.memory_space<vmem>>, vector<1x8x128xbf16>,
    %c6_i32 = arith.constant 6 : i32
    %236 = arith.index_cast %c6_i32 : i32 to index
    %c0_75 = arith.constant 0 : index
    %c0_76 = arith.constant 0 : index
    %237 = vector.load %arg10[%236, %c0_75, %c0_76] : memref<16x8x512xf32, #tpu.memory_space<vmem>>, vector<1x8x512xf32>
    %238 = vector.shape_cast %237 : vector<1x8x512xf32> to vector<8x512xf32>
    %239 = arith.truncf %230 : vector<8x128xf32> to vector<8x128xbf16>
    %c0_77 = arith.constant 0 : index
    %c0_78 = arith.constant 0 : index
    %240 = vector.load %arg3[%c0_77, %c0_78] : memref<128x512xbf16, #tpu.memory_space<vmem>>, vector<128x512xbf16>
    %cst_79 = arith.constant dense<0.000000e+00> : vector<8x512xf32>
    %241 = tpu.matmul %239, %240, %cst_79 {dimension_numbers = #tpu.dot_dimension_numbers<[1], [0], [0], [1], [0, 0, 1, 1], [], []>} : vector<8x128xbf16>, vector<128x512xbf16>, vector<8x512xf32> -> vector<8x512xf32>
    %242 = arith.addf %238, %241 : vector<8x512xf32>
    %243 = vector.extract_strided_slice %242 {offsets = [0, 0], sizes = [8, 128], strides = [1, 1]} : vector<8x512xf32> to vector<8x128xf32>
    %244 = arith.negf %243 : vector<8x128xf32>
    %245 = math.exp %244 : vector<8x128xf32>
    %cst_80 = arith.constant 1.000000e+00 : f32
    %246 = vector.broadcast %cst_80 : f32 to vector<8x128xf32>
    %247 = arith.addf %246, %245 : vector<8x128xf32>
    %248 = arith.divf %246, %247 : vector<8x128xf32>
    %249 = vector.extract_strided_slice %242 {offsets = [0, 128], sizes = [8, 128], strides = [1, 1]} : vector<8x512xf32> to vector<8x128xf32>
    %250 = arith.negf %249 : vector<8x128xf32>
    %251 = math.exp %250 : vector<8x128xf32>
    %cst_81 = arith.constant 1.000000e+00 : f32
    %252 = vector.broadcast %cst_81 : f32 to vector<8x128xf32>
    %253 = arith.addf %252, %251 : vector<8x128xf32>
    %254 = arith.divf %252, %253 : vector<8x128xf32>
    %255 = vector.extract_strided_slice %242 {offsets = [0, 256], sizes = [8, 128], strides = [1, 1]} : vector<8x512xf32> to vector<8x128xf32>
    %256 = math.tanh %255 : vector<8x128xf32>
    %257 = vector.extract_strided_slice %242 {offsets = [0, 384], sizes = [8, 128], strides = [1, 1]} : vector<8x512xf32> to vector<8x128xf32>
    %258 = arith.negf %257 : vector<8x128xf32>
    %259 = math.exp %258 : vector<8x128xf32>
    %cst_82 = arith.constant 1.000000e+00 : f32
    %260 = vector.broadcast %cst_82 : f32 to vector<8x128xf32>
    %261 = arith.addf %260, %259 : vector<8x128xf32>
    %262 = arith.divf %260, %261 : vector<8x128xf32>
    %263 = arith.mulf %254, %228 : vector<8x128xf32>
    %264 = arith.mulf %248, %256 : vector<8x128xf32>
    %265 = arith.addf %263, %264 : vector<8x128xf32>
    %266 = math.tanh %265 : vector<8x128xf32>
    %267 = arith.mulf %262, %266 : vector<8x128xf32>
    %268 = arith.truncf %267 : vector<8x128xf32> to vector<8x128xbf16>
    %269 = arith.index_cast %c6_i32 : i32 to index
    %c0_83 = arith.constant 0 : index
    %c0_84 = arith.constant 0 : index
    %270 = vector.load %arg7[%269, %c0_83, %c0_84] : memref<16x8x128xbf16, #tpu.memory_space<vmem>>, vector<1x8x128xbf16>
    %271 = vector.shape_cast %270 : vector<1x8x128xbf16> to vector<8x128xbf16>
    %272 = vector.shape_cast %268 : vector<8x128xbf16> to vector<1x8x128xbf16>
    tpu.vector_store %arg7[%269, %c0_83, %c0_84], %272 {strides = array<i32>} : memref<16x8x128xbf16, #tpu.memory_space<vmem>>, vector<1x8x128xbf16>,
    %c7_i32 = arith.constant 7 : i32
    %273 = arith.index_cast %c7_i32 : i32 to index
    %c0_85 = arith.constant 0 : index
    %c0_86 = arith.constant 0 : index
    %274 = vector.load %arg10[%273, %c0_85, %c0_86] : memref<16x8x512xf32, #tpu.memory_space<vmem>>, vector<1x8x512xf32>
    %275 = vector.shape_cast %274 : vector<1x8x512xf32> to vector<8x512xf32>
    %276 = arith.truncf %267 : vector<8x128xf32> to vector<8x128xbf16>
    %c0_87 = arith.constant 0 : index
    %c0_88 = arith.constant 0 : index
    %277 = vector.load %arg3[%c0_87, %c0_88] : memref<128x512xbf16, #tpu.memory_space<vmem>>, vector<128x512xbf16>
    %cst_89 = arith.constant dense<0.000000e+00> : vector<8x512xf32>
    %278 = tpu.matmul %276, %277, %cst_89 {dimension_numbers = #tpu.dot_dimension_numbers<[1], [0], [0], [1], [0, 0, 1, 1], [], []>} : vector<8x128xbf16>, vector<128x512xbf16>, vector<8x512xf32> -> vector<8x512xf32>
    %279 = arith.addf %275, %278 : vector<8x512xf32>
    %280 = vector.extract_strided_slice %279 {offsets = [0, 0], sizes = [8, 128], strides = [1, 1]} : vector<8x512xf32> to vector<8x128xf32>
    %281 = arith.negf %280 : vector<8x128xf32>
    %282 = math.exp %281 : vector<8x128xf32>
    %cst_90 = arith.constant 1.000000e+00 : f32
    %283 = vector.broadcast %cst_90 : f32 to vector<8x128xf32>
    %284 = arith.addf %283, %282 : vector<8x128xf32>
    %285 = arith.divf %283, %284 : vector<8x128xf32>
    %286 = vector.extract_strided_slice %279 {offsets = [0, 128], sizes = [8, 128], strides = [1, 1]} : vector<8x512xf32> to vector<8x128xf32>
    %287 = arith.negf %286 : vector<8x128xf32>
    %288 = math.exp %287 : vector<8x128xf32>
    %cst_91 = arith.constant 1.000000e+00 : f32
    %289 = vector.broadcast %cst_91 : f32 to vector<8x128xf32>
    %290 = arith.addf %289, %288 : vector<8x128xf32>
    %291 = arith.divf %289, %290 : vector<8x128xf32>
    %292 = vector.extract_strided_slice %279 {offsets = [0, 256], sizes = [8, 128], strides = [1, 1]} : vector<8x512xf32> to vector<8x128xf32>
    %293 = math.tanh %292 : vector<8x128xf32>
    %294 = vector.extract_strided_slice %279 {offsets = [0, 384], sizes = [8, 128], strides = [1, 1]} : vector<8x512xf32> to vector<8x128xf32>
    %295 = arith.negf %294 : vector<8x128xf32>
    %296 = math.exp %295 : vector<8x128xf32>
    %cst_92 = arith.constant 1.000000e+00 : f32
    %297 = vector.broadcast %cst_92 : f32 to vector<8x128xf32>
    %298 = arith.addf %297, %296 : vector<8x128xf32>
    %299 = arith.divf %297, %298 : vector<8x128xf32>
    %300 = arith.mulf %291, %265 : vector<8x128xf32>
    %301 = arith.mulf %285, %293 : vector<8x128xf32>
    %302 = arith.addf %300, %301 : vector<8x128xf32>
    %303 = math.tanh %302 : vector<8x128xf32>
    %304 = arith.mulf %299, %303 : vector<8x128xf32>
    %305 = arith.truncf %304 : vector<8x128xf32> to vector<8x128xbf16>
    %306 = arith.index_cast %c7_i32 : i32 to index
    %c0_93 = arith.constant 0 : index
    %c0_94 = arith.constant 0 : index
    %307 = vector.load %arg7[%306, %c0_93, %c0_94] : memref<16x8x128xbf16, #tpu.memory_space<vmem>>, vector<1x8x128xbf16>
    %308 = vector.shape_cast %307 : vector<1x8x128xbf16> to vector<8x128xbf16>
    %309 = vector.shape_cast %305 : vector<8x128xbf16> to vector<1x8x128xbf16>
    tpu.vector_store %arg7[%306, %c0_93, %c0_94], %309 {strides = array<i32>} : memref<16x8x128xbf16, #tpu.memory_space<vmem>>, vector<1x8x128xbf16>,
    %c8_i32 = arith.constant 8 : i32
    %310 = arith.index_cast %c8_i32 : i32 to index
    %c0_95 = arith.constant 0 : index
    %c0_96 = arith.constant 0 : index
    %311 = vector.load %arg10[%310, %c0_95, %c0_96] : memref<16x8x512xf32, #tpu.memory_space<vmem>>, vector<1x8x512xf32>
    %312 = vector.shape_cast %311 : vector<1x8x512xf32> to vector<8x512xf32>
    %313 = arith.truncf %304 : vector<8x128xf32> to vector<8x128xbf16>
    %c0_97 = arith.constant 0 : index
    %c0_98 = arith.constant 0 : index
    %314 = vector.load %arg3[%c0_97, %c0_98] : memref<128x512xbf16, #tpu.memory_space<vmem>>, vector<128x512xbf16>
    %cst_99 = arith.constant dense<0.000000e+00> : vector<8x512xf32>
    %315 = tpu.matmul %313, %314, %cst_99 {dimension_numbers = #tpu.dot_dimension_numbers<[1], [0], [0], [1], [0, 0, 1, 1], [], []>} : vector<8x128xbf16>, vector<128x512xbf16>, vector<8x512xf32> -> vector<8x512xf32>
    %316 = arith.addf %312, %315 : vector<8x512xf32>
    %317 = vector.extract_strided_slice %316 {offsets = [0, 0], sizes = [8, 128], strides = [1, 1]} : vector<8x512xf32> to vector<8x128xf32>
    %318 = arith.negf %317 : vector<8x128xf32>
    %319 = math.exp %318 : vector<8x128xf32>
    %cst_100 = arith.constant 1.000000e+00 : f32
    %320 = vector.broadcast %cst_100 : f32 to vector<8x128xf32>
    %321 = arith.addf %320, %319 : vector<8x128xf32>
    %322 = arith.divf %320, %321 : vector<8x128xf32>
    %323 = vector.extract_strided_slice %316 {offsets = [0, 128], sizes = [8, 128], strides = [1, 1]} : vector<8x512xf32> to vector<8x128xf32>
    %324 = arith.negf %323 : vector<8x128xf32>
    %325 = math.exp %324 : vector<8x128xf32>
    %cst_101 = arith.constant 1.000000e+00 : f32
    %326 = vector.broadcast %cst_101 : f32 to vector<8x128xf32>
    %327 = arith.addf %326, %325 : vector<8x128xf32>
    %328 = arith.divf %326, %327 : vector<8x128xf32>
    %329 = vector.extract_strided_slice %316 {offsets = [0, 256], sizes = [8, 128], strides = [1, 1]} : vector<8x512xf32> to vector<8x128xf32>
    %330 = math.tanh %329 : vector<8x128xf32>
    %331 = vector.extract_strided_slice %316 {offsets = [0, 384], sizes = [8, 128], strides = [1, 1]} : vector<8x512xf32> to vector<8x128xf32>
    %332 = arith.negf %331 : vector<8x128xf32>
    %333 = math.exp %332 : vector<8x128xf32>
    %cst_102 = arith.constant 1.000000e+00 : f32
    %334 = vector.broadcast %cst_102 : f32 to vector<8x128xf32>
    %335 = arith.addf %334, %333 : vector<8x128xf32>
    %336 = arith.divf %334, %335 : vector<8x128xf32>
    %337 = arith.mulf %328, %302 : vector<8x128xf32>
    %338 = arith.mulf %322, %330 : vector<8x128xf32>
    %339 = arith.addf %337, %338 : vector<8x128xf32>
    %340 = math.tanh %339 : vector<8x128xf32>
    %341 = arith.mulf %336, %340 : vector<8x128xf32>
    %342 = arith.truncf %341 : vector<8x128xf32> to vector<8x128xbf16>
    %343 = arith.index_cast %c8_i32 : i32 to index
    %c0_103 = arith.constant 0 : index
    %c0_104 = arith.constant 0 : index
    %344 = vector.load %arg7[%343, %c0_103, %c0_104] : memref<16x8x128xbf16, #tpu.memory_space<vmem>>, vector<1x8x128xbf16>
    %345 = vector.shape_cast %344 : vector<1x8x128xbf16> to vector<8x128xbf16>
    %346 = vector.shape_cast %342 : vector<8x128xbf16> to vector<1x8x128xbf16>
    tpu.vector_store %arg7[%343, %c0_103, %c0_104], %346 {strides = array<i32>} : memref<16x8x128xbf16, #tpu.memory_space<vmem>>, vector<1x8x128xbf16>,
    %c9_i32 = arith.constant 9 : i32
    %347 = arith.index_cast %c9_i32 : i32 to index
    %c0_105 = arith.constant 0 : index
    %c0_106 = arith.constant 0 : index
    %348 = vector.load %arg10[%347, %c0_105, %c0_106] : memref<16x8x512xf32, #tpu.memory_space<vmem>>, vector<1x8x512xf32>
    %349 = vector.shape_cast %348 : vector<1x8x512xf32> to vector<8x512xf32>
    %350 = arith.truncf %341 : vector<8x128xf32> to vector<8x128xbf16>
    %c0_107 = arith.constant 0 : index
    %c0_108 = arith.constant 0 : index
    %351 = vector.load %arg3[%c0_107, %c0_108] : memref<128x512xbf16, #tpu.memory_space<vmem>>, vector<128x512xbf16>
    %cst_109 = arith.constant dense<0.000000e+00> : vector<8x512xf32>
    %352 = tpu.matmul %350, %351, %cst_109 {dimension_numbers = #tpu.dot_dimension_numbers<[1], [0], [0], [1], [0, 0, 1, 1], [], []>} : vector<8x128xbf16>, vector<128x512xbf16>, vector<8x512xf32> -> vector<8x512xf32>
    %353 = arith.addf %349, %352 : vector<8x512xf32>
    %354 = vector.extract_strided_slice %353 {offsets = [0, 0], sizes = [8, 128], strides = [1, 1]} : vector<8x512xf32> to vector<8x128xf32>
    %355 = arith.negf %354 : vector<8x128xf32>
    %356 = math.exp %355 : vector<8x128xf32>
    %cst_110 = arith.constant 1.000000e+00 : f32
    %357 = vector.broadcast %cst_110 : f32 to vector<8x128xf32>
    %358 = arith.addf %357, %356 : vector<8x128xf32>
    %359 = arith.divf %357, %358 : vector<8x128xf32>
    %360 = vector.extract_strided_slice %353 {offsets = [0, 128], sizes = [8, 128], strides = [1, 1]} : vector<8x512xf32> to vector<8x128xf32>
    %361 = arith.negf %360 : vector<8x128xf32>
    %362 = math.exp %361 : vector<8x128xf32>
    %cst_111 = arith.constant 1.000000e+00 : f32
    %363 = vector.broadcast %cst_111 : f32 to vector<8x128xf32>
    %364 = arith.addf %363, %362 : vector<8x128xf32>
    %365 = arith.divf %363, %364 : vector<8x128xf32>
    %366 = vector.extract_strided_slice %353 {offsets = [0, 256], sizes = [8, 128], strides = [1, 1]} : vector<8x512xf32> to vector<8x128xf32>
    %367 = math.tanh %366 : vector<8x128xf32>
    %368 = vector.extract_strided_slice %353 {offsets = [0, 384], sizes = [8, 128], strides = [1, 1]} : vector<8x512xf32> to vector<8x128xf32>
    %369 = arith.negf %368 : vector<8x128xf32>
    %370 = math.exp %369 : vector<8x128xf32>
    %cst_112 = arith.constant 1.000000e+00 : f32
    %371 = vector.broadcast %cst_112 : f32 to vector<8x128xf32>
    %372 = arith.addf %371, %370 : vector<8x128xf32>
    %373 = arith.divf %371, %372 : vector<8x128xf32>
    %374 = arith.mulf %365, %339 : vector<8x128xf32>
    %375 = arith.mulf %359, %367 : vector<8x128xf32>
    %376 = arith.addf %374, %375 : vector<8x128xf32>
    %377 = math.tanh %376 : vector<8x128xf32>
    %378 = arith.mulf %373, %377 : vector<8x128xf32>
    %379 = arith.truncf %378 : vector<8x128xf32> to vector<8x128xbf16>
    %380 = arith.index_cast %c9_i32 : i32 to index
    %c0_113 = arith.constant 0 : index
    %c0_114 = arith.constant 0 : index
    %381 = vector.load %arg7[%380, %c0_113, %c0_114] : memref<16x8x128xbf16, #tpu.memory_space<vmem>>, vector<1x8x128xbf16>
    %382 = vector.shape_cast %381 : vector<1x8x128xbf16> to vector<8x128xbf16>
    %383 = vector.shape_cast %379 : vector<8x128xbf16> to vector<1x8x128xbf16>
    tpu.vector_store %arg7[%380, %c0_113, %c0_114], %383 {strides = array<i32>} : memref<16x8x128xbf16, #tpu.memory_space<vmem>>, vector<1x8x128xbf16>,
    %c10_i32 = arith.constant 10 : i32
    %384 = arith.index_cast %c10_i32 : i32 to index
    %c0_115 = arith.constant 0 : index
    %c0_116 = arith.constant 0 : index
    %385 = vector.load %arg10[%384, %c0_115, %c0_116] : memref<16x8x512xf32, #tpu.memory_space<vmem>>, vector<1x8x512xf32>
    %386 = vector.shape_cast %385 : vector<1x8x512xf32> to vector<8x512xf32>
    %387 = arith.truncf %378 : vector<8x128xf32> to vector<8x128xbf16>
    %c0_117 = arith.constant 0 : index
    %c0_118 = arith.constant 0 : index
    %388 = vector.load %arg3[%c0_117, %c0_118] : memref<128x512xbf16, #tpu.memory_space<vmem>>, vector<128x512xbf16>
    %cst_119 = arith.constant dense<0.000000e+00> : vector<8x512xf32>
    %389 = tpu.matmul %387, %388, %cst_119 {dimension_numbers = #tpu.dot_dimension_numbers<[1], [0], [0], [1], [0, 0, 1, 1], [], []>} : vector<8x128xbf16>, vector<128x512xbf16>, vector<8x512xf32> -> vector<8x512xf32>
    %390 = arith.addf %386, %389 : vector<8x512xf32>
    %391 = vector.extract_strided_slice %390 {offsets = [0, 0], sizes = [8, 128], strides = [1, 1]} : vector<8x512xf32> to vector<8x128xf32>
    %392 = arith.negf %391 : vector<8x128xf32>
    %393 = math.exp %392 : vector<8x128xf32>
    %cst_120 = arith.constant 1.000000e+00 : f32
    %394 = vector.broadcast %cst_120 : f32 to vector<8x128xf32>
    %395 = arith.addf %394, %393 : vector<8x128xf32>
    %396 = arith.divf %394, %395 : vector<8x128xf32>
    %397 = vector.extract_strided_slice %390 {offsets = [0, 128], sizes = [8, 128], strides = [1, 1]} : vector<8x512xf32> to vector<8x128xf32>
    %398 = arith.negf %397 : vector<8x128xf32>
    %399 = math.exp %398 : vector<8x128xf32>
    %cst_121 = arith.constant 1.000000e+00 : f32
    %400 = vector.broadcast %cst_121 : f32 to vector<8x128xf32>
    %401 = arith.addf %400, %399 : vector<8x128xf32>
    %402 = arith.divf %400, %401 : vector<8x128xf32>
    %403 = vector.extract_strided_slice %390 {offsets = [0, 256], sizes = [8, 128], strides = [1, 1]} : vector<8x512xf32> to vector<8x128xf32>
    %404 = math.tanh %403 : vector<8x128xf32>
    %405 = vector.extract_strided_slice %390 {offsets = [0, 384], sizes = [8, 128], strides = [1, 1]} : vector<8x512xf32> to vector<8x128xf32>
    %406 = arith.negf %405 : vector<8x128xf32>
    %407 = math.exp %406 : vector<8x128xf32>
    %cst_122 = arith.constant 1.000000e+00 : f32
    %408 = vector.broadcast %cst_122 : f32 to vector<8x128xf32>
    %409 = arith.addf %408, %407 : vector<8x128xf32>
    %410 = arith.divf %408, %409 : vector<8x128xf32>
    %411 = arith.mulf %402, %376 : vector<8x128xf32>
    %412 = arith.mulf %396, %404 : vector<8x128xf32>
    %413 = arith.addf %411, %412 : vector<8x128xf32>
    %414 = math.tanh %413 : vector<8x128xf32>
    %415 = arith.mulf %410, %414 : vector<8x128xf32>
    %416 = arith.truncf %415 : vector<8x128xf32> to vector<8x128xbf16>
    %417 = arith.index_cast %c10_i32 : i32 to index
    %c0_123 = arith.constant 0 : index
    %c0_124 = arith.constant 0 : index
    %418 = vector.load %arg7[%417, %c0_123, %c0_124] : memref<16x8x128xbf16, #tpu.memory_space<vmem>>, vector<1x8x128xbf16>
    %419 = vector.shape_cast %418 : vector<1x8x128xbf16> to vector<8x128xbf16>
    %420 = vector.shape_cast %416 : vector<8x128xbf16> to vector<1x8x128xbf16>
    tpu.vector_store %arg7[%417, %c0_123, %c0_124], %420 {strides = array<i32>} : memref<16x8x128xbf16, #tpu.memory_space<vmem>>, vector<1x8x128xbf16>,
    %c11_i32 = arith.constant 11 : i32
    %421 = arith.index_cast %c11_i32 : i32 to index
    %c0_125 = arith.constant 0 : index
    %c0_126 = arith.constant 0 : index
    %422 = vector.load %arg10[%421, %c0_125, %c0_126] : memref<16x8x512xf32, #tpu.memory_space<vmem>>, vector<1x8x512xf32>
    %423 = vector.shape_cast %422 : vector<1x8x512xf32> to vector<8x512xf32>
    %424 = arith.truncf %415 : vector<8x128xf32> to vector<8x128xbf16>
    %c0_127 = arith.constant 0 : index
    %c0_128 = arith.constant 0 : index
    %425 = vector.load %arg3[%c0_127, %c0_128] : memref<128x512xbf16, #tpu.memory_space<vmem>>, vector<128x512xbf16>
    %cst_129 = arith.constant dense<0.000000e+00> : vector<8x512xf32>
    %426 = tpu.matmul %424, %425, %cst_129 {dimension_numbers = #tpu.dot_dimension_numbers<[1], [0], [0], [1], [0, 0, 1, 1], [], []>} : vector<8x128xbf16>, vector<128x512xbf16>, vector<8x512xf32> -> vector<8x512xf32>
    %427 = arith.addf %423, %426 : vector<8x512xf32>
    %428 = vector.extract_strided_slice %427 {offsets = [0, 0], sizes = [8, 128], strides = [1, 1]} : vector<8x512xf32> to vector<8x128xf32>
    %429 = arith.negf %428 : vector<8x128xf32>
    %430 = math.exp %429 : vector<8x128xf32>
    %cst_130 = arith.constant 1.000000e+00 : f32
    %431 = vector.broadcast %cst_130 : f32 to vector<8x128xf32>
    %432 = arith.addf %431, %430 : vector<8x128xf32>
    %433 = arith.divf %431, %432 : vector<8x128xf32>
    %434 = vector.extract_strided_slice %427 {offsets = [0, 128], sizes = [8, 128], strides = [1, 1]} : vector<8x512xf32> to vector<8x128xf32>
    %435 = arith.negf %434 : vector<8x128xf32>
    %436 = math.exp %435 : vector<8x128xf32>
    %cst_131 = arith.constant 1.000000e+00 : f32
    %437 = vector.broadcast %cst_131 : f32 to vector<8x128xf32>
    %438 = arith.addf %437, %436 : vector<8x128xf32>
    %439 = arith.divf %437, %438 : vector<8x128xf32>
    %440 = vector.extract_strided_slice %427 {offsets = [0, 256], sizes = [8, 128], strides = [1, 1]} : vector<8x512xf32> to vector<8x128xf32>
    %441 = math.tanh %440 : vector<8x128xf32>
    %442 = vector.extract_strided_slice %427 {offsets = [0, 384], sizes = [8, 128], strides = [1, 1]} : vector<8x512xf32> to vector<8x128xf32>
    %443 = arith.negf %442 : vector<8x128xf32>
    %444 = math.exp %443 : vector<8x128xf32>
    %cst_132 = arith.constant 1.000000e+00 : f32
    %445 = vector.broadcast %cst_132 : f32 to vector<8x128xf32>
    %446 = arith.addf %445, %444 : vector<8x128xf32>
    %447 = arith.divf %445, %446 : vector<8x128xf32>
    %448 = arith.mulf %439, %413 : vector<8x128xf32>
    %449 = arith.mulf %433, %441 : vector<8x128xf32>
    %450 = arith.addf %448, %449 : vector<8x128xf32>
    %451 = math.tanh %450 : vector<8x128xf32>
    %452 = arith.mulf %447, %451 : vector<8x128xf32>
    %453 = arith.truncf %452 : vector<8x128xf32> to vector<8x128xbf16>
    %454 = arith.index_cast %c11_i32 : i32 to index
    %c0_133 = arith.constant 0 : index
    %c0_134 = arith.constant 0 : index
    %455 = vector.load %arg7[%454, %c0_133, %c0_134] : memref<16x8x128xbf16, #tpu.memory_space<vmem>>, vector<1x8x128xbf16>
    %456 = vector.shape_cast %455 : vector<1x8x128xbf16> to vector<8x128xbf16>
    %457 = vector.shape_cast %453 : vector<8x128xbf16> to vector<1x8x128xbf16>
    tpu.vector_store %arg7[%454, %c0_133, %c0_134], %457 {strides = array<i32>} : memref<16x8x128xbf16, #tpu.memory_space<vmem>>, vector<1x8x128xbf16>,
    %c12_i32 = arith.constant 12 : i32
    %458 = arith.index_cast %c12_i32 : i32 to index
    %c0_135 = arith.constant 0 : index
    %c0_136 = arith.constant 0 : index
    %459 = vector.load %arg10[%458, %c0_135, %c0_136] : memref<16x8x512xf32, #tpu.memory_space<vmem>>, vector<1x8x512xf32>
    %460 = vector.shape_cast %459 : vector<1x8x512xf32> to vector<8x512xf32>
    %461 = arith.truncf %452 : vector<8x128xf32> to vector<8x128xbf16>
    %c0_137 = arith.constant 0 : index
    %c0_138 = arith.constant 0 : index
    %462 = vector.load %arg3[%c0_137, %c0_138] : memref<128x512xbf16, #tpu.memory_space<vmem>>, vector<128x512xbf16>
    %cst_139 = arith.constant dense<0.000000e+00> : vector<8x512xf32>
    %463 = tpu.matmul %461, %462, %cst_139 {dimension_numbers = #tpu.dot_dimension_numbers<[1], [0], [0], [1], [0, 0, 1, 1], [], []>} : vector<8x128xbf16>, vector<128x512xbf16>, vector<8x512xf32> -> vector<8x512xf32>
    %464 = arith.addf %460, %463 : vector<8x512xf32>
    %465 = vector.extract_strided_slice %464 {offsets = [0, 0], sizes = [8, 128], strides = [1, 1]} : vector<8x512xf32> to vector<8x128xf32>
    %466 = arith.negf %465 : vector<8x128xf32>
    %467 = math.exp %466 : vector<8x128xf32>
    %cst_140 = arith.constant 1.000000e+00 : f32
    %468 = vector.broadcast %cst_140 : f32 to vector<8x128xf32>
    %469 = arith.addf %468, %467 : vector<8x128xf32>
    %470 = arith.divf %468, %469 : vector<8x128xf32>
    %471 = vector.extract_strided_slice %464 {offsets = [0, 128], sizes = [8, 128], strides = [1, 1]} : vector<8x512xf32> to vector<8x128xf32>
    %472 = arith.negf %471 : vector<8x128xf32>
    %473 = math.exp %472 : vector<8x128xf32>
    %cst_141 = arith.constant 1.000000e+00 : f32
    %474 = vector.broadcast %cst_141 : f32 to vector<8x128xf32>
    %475 = arith.addf %474, %473 : vector<8x128xf32>
    %476 = arith.divf %474, %475 : vector<8x128xf32>
    %477 = vector.extract_strided_slice %464 {offsets = [0, 256], sizes = [8, 128], strides = [1, 1]} : vector<8x512xf32> to vector<8x128xf32>
    %478 = math.tanh %477 : vector<8x128xf32>
    %479 = vector.extract_strided_slice %464 {offsets = [0, 384], sizes = [8, 128], strides = [1, 1]} : vector<8x512xf32> to vector<8x128xf32>
    %480 = arith.negf %479 : vector<8x128xf32>
    %481 = math.exp %480 : vector<8x128xf32>
    %cst_142 = arith.constant 1.000000e+00 : f32
    %482 = vector.broadcast %cst_142 : f32 to vector<8x128xf32>
    %483 = arith.addf %482, %481 : vector<8x128xf32>
    %484 = arith.divf %482, %483 : vector<8x128xf32>
    %485 = arith.mulf %476, %450 : vector<8x128xf32>
    %486 = arith.mulf %470, %478 : vector<8x128xf32>
    %487 = arith.addf %485, %486 : vector<8x128xf32>
    %488 = math.tanh %487 : vector<8x128xf32>
    %489 = arith.mulf %484, %488 : vector<8x128xf32>
    %490 = arith.truncf %489 : vector<8x128xf32> to vector<8x128xbf16>
    %491 = arith.index_cast %c12_i32 : i32 to index
    %c0_143 = arith.constant 0 : index
    %c0_144 = arith.constant 0 : index
    %492 = vector.load %arg7[%491, %c0_143, %c0_144] : memref<16x8x128xbf16, #tpu.memory_space<vmem>>, vector<1x8x128xbf16>
    %493 = vector.shape_cast %492 : vector<1x8x128xbf16> to vector<8x128xbf16>
    %494 = vector.shape_cast %490 : vector<8x128xbf16> to vector<1x8x128xbf16>
    tpu.vector_store %arg7[%491, %c0_143, %c0_144], %494 {strides = array<i32>} : memref<16x8x128xbf16, #tpu.memory_space<vmem>>, vector<1x8x128xbf16>,
    %c13_i32 = arith.constant 13 : i32
    %495 = arith.index_cast %c13_i32 : i32 to index
    %c0_145 = arith.constant 0 : index
    %c0_146 = arith.constant 0 : index
    %496 = vector.load %arg10[%495, %c0_145, %c0_146] : memref<16x8x512xf32, #tpu.memory_space<vmem>>, vector<1x8x512xf32>
    %497 = vector.shape_cast %496 : vector<1x8x512xf32> to vector<8x512xf32>
    %498 = arith.truncf %489 : vector<8x128xf32> to vector<8x128xbf16>
    %c0_147 = arith.constant 0 : index
    %c0_148 = arith.constant 0 : index
    %499 = vector.load %arg3[%c0_147, %c0_148] : memref<128x512xbf16, #tpu.memory_space<vmem>>, vector<128x512xbf16>
    %cst_149 = arith.constant dense<0.000000e+00> : vector<8x512xf32>
    %500 = tpu.matmul %498, %499, %cst_149 {dimension_numbers = #tpu.dot_dimension_numbers<[1], [0], [0], [1], [0, 0, 1, 1], [], []>} : vector<8x128xbf16>, vector<128x512xbf16>, vector<8x512xf32> -> vector<8x512xf32>
    %501 = arith.addf %497, %500 : vector<8x512xf32>
    %502 = vector.extract_strided_slice %501 {offsets = [0, 0], sizes = [8, 128], strides = [1, 1]} : vector<8x512xf32> to vector<8x128xf32>
    %503 = arith.negf %502 : vector<8x128xf32>
    %504 = math.exp %503 : vector<8x128xf32>
    %cst_150 = arith.constant 1.000000e+00 : f32
    %505 = vector.broadcast %cst_150 : f32 to vector<8x128xf32>
    %506 = arith.addf %505, %504 : vector<8x128xf32>
    %507 = arith.divf %505, %506 : vector<8x128xf32>
    %508 = vector.extract_strided_slice %501 {offsets = [0, 128], sizes = [8, 128], strides = [1, 1]} : vector<8x512xf32> to vector<8x128xf32>
    %509 = arith.negf %508 : vector<8x128xf32>
    %510 = math.exp %509 : vector<8x128xf32>
    %cst_151 = arith.constant 1.000000e+00 : f32
    %511 = vector.broadcast %cst_151 : f32 to vector<8x128xf32>
    %512 = arith.addf %511, %510 : vector<8x128xf32>
    %513 = arith.divf %511, %512 : vector<8x128xf32>
    %514 = vector.extract_strided_slice %501 {offsets = [0, 256], sizes = [8, 128], strides = [1, 1]} : vector<8x512xf32> to vector<8x128xf32>
    %515 = math.tanh %514 : vector<8x128xf32>
    %516 = vector.extract_strided_slice %501 {offsets = [0, 384], sizes = [8, 128], strides = [1, 1]} : vector<8x512xf32> to vector<8x128xf32>
    %517 = arith.negf %516 : vector<8x128xf32>
    %518 = math.exp %517 : vector<8x128xf32>
    %cst_152 = arith.constant 1.000000e+00 : f32
    %519 = vector.broadcast %cst_152 : f32 to vector<8x128xf32>
    %520 = arith.addf %519, %518 : vector<8x128xf32>
    %521 = arith.divf %519, %520 : vector<8x128xf32>
    %522 = arith.mulf %513, %487 : vector<8x128xf32>
    %523 = arith.mulf %507, %515 : vector<8x128xf32>
    %524 = arith.addf %522, %523 : vector<8x128xf32>
    %525 = math.tanh %524 : vector<8x128xf32>
    %526 = arith.mulf %521, %525 : vector<8x128xf32>
    %527 = arith.truncf %526 : vector<8x128xf32> to vector<8x128xbf16>
    %528 = arith.index_cast %c13_i32 : i32 to index
    %c0_153 = arith.constant 0 : index
    %c0_154 = arith.constant 0 : index
    %529 = vector.load %arg7[%528, %c0_153, %c0_154] : memref<16x8x128xbf16, #tpu.memory_space<vmem>>, vector<1x8x128xbf16>
    %530 = vector.shape_cast %529 : vector<1x8x128xbf16> to vector<8x128xbf16>
    %531 = vector.shape_cast %527 : vector<8x128xbf16> to vector<1x8x128xbf16>
    tpu.vector_store %arg7[%528, %c0_153, %c0_154], %531 {strides = array<i32>} : memref<16x8x128xbf16, #tpu.memory_space<vmem>>, vector<1x8x128xbf16>,
    %c14_i32 = arith.constant 14 : i32
    %532 = arith.index_cast %c14_i32 : i32 to index
    %c0_155 = arith.constant 0 : index
    %c0_156 = arith.constant 0 : index
    %533 = vector.load %arg10[%532, %c0_155, %c0_156] : memref<16x8x512xf32, #tpu.memory_space<vmem>>, vector<1x8x512xf32>
    %534 = vector.shape_cast %533 : vector<1x8x512xf32> to vector<8x512xf32>
    %535 = arith.truncf %526 : vector<8x128xf32> to vector<8x128xbf16>
    %c0_157 = arith.constant 0 : index
    %c0_158 = arith.constant 0 : index
    %536 = vector.load %arg3[%c0_157, %c0_158] : memref<128x512xbf16, #tpu.memory_space<vmem>>, vector<128x512xbf16>
    %cst_159 = arith.constant dense<0.000000e+00> : vector<8x512xf32>
    %537 = tpu.matmul %535, %536, %cst_159 {dimension_numbers = #tpu.dot_dimension_numbers<[1], [0], [0], [1], [0, 0, 1, 1], [], []>} : vector<8x128xbf16>, vector<128x512xbf16>, vector<8x512xf32> -> vector<8x512xf32>
    %538 = arith.addf %534, %537 : vector<8x512xf32>
    %539 = vector.extract_strided_slice %538 {offsets = [0, 0], sizes = [8, 128], strides = [1, 1]} : vector<8x512xf32> to vector<8x128xf32>
    %540 = arith.negf %539 : vector<8x128xf32>
    %541 = math.exp %540 : vector<8x128xf32>
    %cst_160 = arith.constant 1.000000e+00 : f32
    %542 = vector.broadcast %cst_160 : f32 to vector<8x128xf32>
    %543 = arith.addf %542, %541 : vector<8x128xf32>
    %544 = arith.divf %542, %543 : vector<8x128xf32>
    %545 = vector.extract_strided_slice %538 {offsets = [0, 128], sizes = [8, 128], strides = [1, 1]} : vector<8x512xf32> to vector<8x128xf32>
    %546 = arith.negf %545 : vector<8x128xf32>
    %547 = math.exp %546 : vector<8x128xf32>
    %cst_161 = arith.constant 1.000000e+00 : f32
    %548 = vector.broadcast %cst_161 : f32 to vector<8x128xf32>
    %549 = arith.addf %548, %547 : vector<8x128xf32>
    %550 = arith.divf %548, %549 : vector<8x128xf32>
    %551 = vector.extract_strided_slice %538 {offsets = [0, 256], sizes = [8, 128], strides = [1, 1]} : vector<8x512xf32> to vector<8x128xf32>
    %552 = math.tanh %551 : vector<8x128xf32>
    %553 = vector.extract_strided_slice %538 {offsets = [0, 384], sizes = [8, 128], strides = [1, 1]} : vector<8x512xf32> to vector<8x128xf32>
    %554 = arith.negf %553 : vector<8x128xf32>
    %555 = math.exp %554 : vector<8x128xf32>
    %cst_162 = arith.constant 1.000000e+00 : f32
    %556 = vector.broadcast %cst_162 : f32 to vector<8x128xf32>
    %557 = arith.addf %556, %555 : vector<8x128xf32>
    %558 = arith.divf %556, %557 : vector<8x128xf32>
    %559 = arith.mulf %550, %524 : vector<8x128xf32>
    %560 = arith.mulf %544, %552 : vector<8x128xf32>
    %561 = arith.addf %559, %560 : vector<8x128xf32>
    %562 = math.tanh %561 : vector<8x128xf32>
    %563 = arith.mulf %558, %562 : vector<8x128xf32>
    %564 = arith.truncf %563 : vector<8x128xf32> to vector<8x128xbf16>
    %565 = arith.index_cast %c14_i32 : i32 to index
    %c0_163 = arith.constant 0 : index
    %c0_164 = arith.constant 0 : index
    %566 = vector.load %arg7[%565, %c0_163, %c0_164] : memref<16x8x128xbf16, #tpu.memory_space<vmem>>, vector<1x8x128xbf16>
    %567 = vector.shape_cast %566 : vector<1x8x128xbf16> to vector<8x128xbf16>
    %568 = vector.shape_cast %564 : vector<8x128xbf16> to vector<1x8x128xbf16>
    tpu.vector_store %arg7[%565, %c0_163, %c0_164], %568 {strides = array<i32>} : memref<16x8x128xbf16, #tpu.memory_space<vmem>>, vector<1x8x128xbf16>,
    %c15_i32 = arith.constant 15 : i32
    %569 = arith.index_cast %c15_i32 : i32 to index
    %c0_165 = arith.constant 0 : index
    %c0_166 = arith.constant 0 : index
    %570 = vector.load %arg10[%569, %c0_165, %c0_166] : memref<16x8x512xf32, #tpu.memory_space<vmem>>, vector<1x8x512xf32>
    %571 = vector.shape_cast %570 : vector<1x8x512xf32> to vector<8x512xf32>
    %572 = arith.truncf %563 : vector<8x128xf32> to vector<8x128xbf16>
    %c0_167 = arith.constant 0 : index
    %c0_168 = arith.constant 0 : index
    %573 = vector.load %arg3[%c0_167, %c0_168] : memref<128x512xbf16, #tpu.memory_space<vmem>>, vector<128x512xbf16>
    %cst_169 = arith.constant dense<0.000000e+00> : vector<8x512xf32>
    %574 = tpu.matmul %572, %573, %cst_169 {dimension_numbers = #tpu.dot_dimension_numbers<[1], [0], [0], [1], [0, 0, 1, 1], [], []>} : vector<8x128xbf16>, vector<128x512xbf16>, vector<8x512xf32> -> vector<8x512xf32>
    %575 = arith.addf %571, %574 : vector<8x512xf32>
    %576 = vector.extract_strided_slice %575 {offsets = [0, 0], sizes = [8, 128], strides = [1, 1]} : vector<8x512xf32> to vector<8x128xf32>
    %577 = arith.negf %576 : vector<8x128xf32>
    %578 = math.exp %577 : vector<8x128xf32>
    %cst_170 = arith.constant 1.000000e+00 : f32
    %579 = vector.broadcast %cst_170 : f32 to vector<8x128xf32>
    %580 = arith.addf %579, %578 : vector<8x128xf32>
    %581 = arith.divf %579, %580 : vector<8x128xf32>
    %582 = vector.extract_strided_slice %575 {offsets = [0, 128], sizes = [8, 128], strides = [1, 1]} : vector<8x512xf32> to vector<8x128xf32>
    %583 = arith.negf %582 : vector<8x128xf32>
    %584 = math.exp %583 : vector<8x128xf32>
    %cst_171 = arith.constant 1.000000e+00 : f32
    %585 = vector.broadcast %cst_171 : f32 to vector<8x128xf32>
    %586 = arith.addf %585, %584 : vector<8x128xf32>
    %587 = arith.divf %585, %586 : vector<8x128xf32>
    %588 = vector.extract_strided_slice %575 {offsets = [0, 256], sizes = [8, 128], strides = [1, 1]} : vector<8x512xf32> to vector<8x128xf32>
    %589 = math.tanh %588 : vector<8x128xf32>
    %590 = vector.extract_strided_slice %575 {offsets = [0, 384], sizes = [8, 128], strides = [1, 1]} : vector<8x512xf32> to vector<8x128xf32>
    %591 = arith.negf %590 : vector<8x128xf32>
    %592 = math.exp %591 : vector<8x128xf32>
    %cst_172 = arith.constant 1.000000e+00 : f32
    %593 = vector.broadcast %cst_172 : f32 to vector<8x128xf32>
    %594 = arith.addf %593, %592 : vector<8x128xf32>
    %595 = arith.divf %593, %594 : vector<8x128xf32>
    %596 = arith.mulf %587, %561 : vector<8x128xf32>
    %597 = arith.mulf %581, %589 : vector<8x128xf32>
    %598 = arith.addf %596, %597 : vector<8x128xf32>
    %599 = math.tanh %598 : vector<8x128xf32>
    %600 = arith.mulf %595, %599 : vector<8x128xf32>
    %601 = arith.truncf %600 : vector<8x128xf32> to vector<8x128xbf16>
    %602 = arith.index_cast %c15_i32 : i32 to index
    %c0_173 = arith.constant 0 : index
    %c0_174 = arith.constant 0 : index
    %603 = vector.load %arg7[%602, %c0_173, %c0_174] : memref<16x8x128xbf16, #tpu.memory_space<vmem>>, vector<1x8x128xbf16>
    %604 = vector.shape_cast %603 : vector<1x8x128xbf16> to vector<8x128xbf16>
    %605 = vector.shape_cast %601 : vector<8x128xbf16> to vector<1x8x128xbf16>
    tpu.vector_store %arg7[%602, %c0_173, %c0_174], %605 {strides = array<i32>} : memref<16x8x128xbf16, #tpu.memory_space<vmem>>, vector<1x8x128xbf16>,
    %c16_i32 = arith.constant 16 : i32
    %c0_175 = arith.constant 0 : index
    %c0_176 = arith.constant 0 : index
    %606 = vector.load %arg11[%c0_175, %c0_176] : memref<8x128xf32, #tpu.memory_space<vmem>>, vector<8x128xf32>
    tpu.vector_store %arg11[%c0_175, %c0_176], %600 {strides = array<i32>} : memref<8x128xf32, #tpu.memory_space<vmem>>, vector<8x128xf32>,
    %c0_177 = arith.constant 0 : index
    %c0_178 = arith.constant 0 : index
    %607 = vector.load %arg12[%c0_177, %c0_178] : memref<8x128xf32, #tpu.memory_space<vmem>>, vector<8x128xf32>
    tpu.vector_store %arg12[%c0_177, %c0_178], %598 {strides = array<i32>} : memref<8x128xf32, #tpu.memory_space<vmem>>, vector<8x128xf32>,
    %c0_i32_179 = arith.constant 0 : i32
    %608 = arith.cmpi eq, %arg0, %c0_i32_179 : i32
    %609 = arith.extui %608 : i1 to i32
    %c0_i32_180 = arith.constant 0 : i32
    %610 = arith.cmpi ne, %609, %c0_i32_180 : i32
    scf.if %610 {
      %c0_181 = arith.constant 0 : index
      %c0_182 = arith.constant 0 : index
      %c0_183 = arith.constant 0 : index
      %611 = vector.load %arg8[%c0_181, %c0_182, %c0_183] : memref<1x8x128xf32, #tpu.memory_space<vmem>>, vector<1x8x128xf32>
      %612 = vector.shape_cast %611 : vector<1x8x128xf32> to vector<8x128xf32>
      %613 = vector.shape_cast %600 : vector<8x128xf32> to vector<1x8x128xf32>
      tpu.vector_store %arg8[%c0_181, %c0_182, %c0_183], %613 {strides = array<i32>} : memref<1x8x128xf32, #tpu.memory_space<vmem>>, vector<1x8x128xf32>,
      %c0_184 = arith.constant 0 : index
      %c0_185 = arith.constant 0 : index
      %c0_186 = arith.constant 0 : index
      %614 = vector.load %arg9[%c0_184, %c0_185, %c0_186] : memref<1x8x128xf32, #tpu.memory_space<vmem>>, vector<1x8x128xf32>
      %615 = vector.shape_cast %614 : vector<1x8x128xf32> to vector<8x128xf32>
      %616 = vector.shape_cast %598 : vector<8x128xf32> to vector<1x8x128xf32>
      tpu.vector_store %arg9[%c0_184, %c0_185, %c0_186], %616 {strides = array<i32>} : memref<1x8x128xf32, #tpu.memory_space<vmem>>, vector<1x8x128xf32>,
    } else {
    }
    return
  }
  func.func @transform_0(%arg0: i32) -> (i32, i32, i32) {
    %c0_i32 = arith.constant 0 : i32
    %c0_i32_0 = arith.constant 0 : i32
    %c0_i32_1 = arith.constant 0 : i32
    return %arg0, %c0_i32, %c0_i32_0 : i32, i32, i32
  }
  func.func @transform_1(%arg0: i32) -> (i32, i32) {
    %c0_i32 = arith.constant 0 : i32
    %c0_i32_0 = arith.constant 0 : i32
    %c0_i32_1 = arith.constant 0 : i32
    return %c0_i32, %c0_i32_0 : i32, i32
  }
  func.func @transform_2(%arg0: i32) -> (i32, i32) {
    %c0_i32 = arith.constant 0 : i32
    %c0_i32_0 = arith.constant 0 : i32
    %c0_i32_1 = arith.constant 0 : i32
    return %c0_i32, %c0_i32_0 : i32, i32
  }
  func.func @transform_3(%arg0: i32) -> (i32, i32) {
    %c0_i32 = arith.constant 0 : i32
    %c0_i32_0 = arith.constant 0 : i32
    %c0_i32_1 = arith.constant 0 : i32
    return %c0_i32, %c0_i32_0 : i32, i32
  }
  func.func @transform_4(%arg0: i32) -> (i32, i32, i32) {
    %c0_i32 = arith.constant 0 : i32
    %c0_i32_0 = arith.constant 0 : i32
    %c0_i32_1 = arith.constant 0 : i32
    %c0_i32_2 = arith.constant 0 : i32
    return %c0_i32, %c0_i32_0, %c0_i32_1 : i32, i32, i32
  }
  func.func @transform_5(%arg0: i32) -> (i32, i32, i32) {
    %c0_i32 = arith.constant 0 : i32
    %c0_i32_0 = arith.constant 0 : i32
    %c0_i32_1 = arith.constant 0 : i32
    %c0_i32_2 = arith.constant 0 : i32
    return %c0_i32, %c0_i32_0, %c0_i32_1 : i32, i32, i32
  }
  func.func @transform_6(%arg0: i32) -> (i32, i32, i32) {
    %c0_i32 = arith.constant 0 : i32
    %c0_i32_0 = arith.constant 0 : i32
    %c0_i32_1 = arith.constant 0 : i32
    return %arg0, %c0_i32, %c0_i32_0 : i32, i32, i32
  }
  func.func @transform_7(%arg0: i32) -> (i32, i32, i32) {
    %c0_i32 = arith.constant 0 : i32
    %c0_i32_0 = arith.constant 0 : i32
    %c0_i32_1 = arith.constant 0 : i32
    %c0_i32_2 = arith.constant 0 : i32
    return %c0_i32, %c0_i32_0, %c0_i32_1 : i32, i32, i32
  }
  func.func @transform_8(%arg0: i32) -> (i32, i32, i32) {
    %c0_i32 = arith.constant 0 : i32
    %c0_i32_0 = arith.constant 0 : i32
    %c0_i32_1 = arith.constant 0 : i32
    %c0_i32_2 = arith.constant 0 : i32
    return %c0_i32, %c0_i32_0, %c0_i32_1 : i32, i32, i32
  }
}

</mosaic_0001>

<llo_original>
// kernel: lstm_model_forward.3
$region0: #{lstm_model_forward.3}
  #allocation0 [shape = 'u32[]', space=smem, size = 0x4, offset = 0x4, fixed_abs, tag = 'smem constant byte address 0x4 - core index']
  #allocation1 [shape = 'u32[144,128]{1,0:T(1,128)}', space=vmem, size = 0x12000, scoped, tag = 'internal scratch']
  %s0 = inlined_call_operand.vmem [shape: bf16[16,8,128], index: 0, kind: input, shape index: {}]
  %s1 = inlined_call_operand.vmem [shape: bf16[128,256], index: 1, kind: input, shape index: {}]
  %s2 = inlined_call_operand.vmem [shape: f32[1,256], index: 2, kind: input, shape index: {}]
  %s3 = inlined_call_operand.hbm [shape: f32[8,16,256], index: 3, kind: output, shape index: {}]
  %s4 = sld [smem:[#allocation0]]
  $region22: #{lstm_model_forward.3} parent=0
    _
  %s6 = ssub.s32 1, %s4
  %s7 = scalar_select 0, %s6, %s4
  $region1: #{lstm_model_forward.3} parent=0
    #allocation2 [shape = 'u8[131072]{0}', space=vmem, size = 0x20000, scoped, tag = 'output window, operand 0, single buffered']
    #allocation3 [shape = 's32[1]{0}', space=sflag, size = 0x4, scoped, tag = 'scoped memory for lstm_model_forward.3']
    %8 = vsyncpa [#allocation3], 0
    // Predicated region
    $region2: #{lstm_model_forward.3} parent=1 // pred_check
      _
    $region3: #{lstm_model_forward.3} parent=1 // pred_check_branch
      %10 = sbr.rel (0) target = $region5
    $region4: #{lstm_model_forward.3} parent=1 // pred_region
      _
    $region5: #{lstm_model_forward.3} parent=1 // pred_fallthru
      _
    // Predicated region
    $region6: #{lstm_model_forward.3} parent=1 // pred_check
      _
    $region7: #{lstm_model_forward.3} parent=1 // pred_check_branch
      %12 = sbr.rel (0) target = $region9
    $region8: #{lstm_model_forward.3} parent=1 // pred_region
      _
    $region9: #{lstm_model_forward.3} parent=1 // pred_fallthru
      _
    // Predicated region
    $region10: #{lstm_model_forward.3} parent=1 // pred_check
      _
    $region11: #{lstm_model_forward.3} parent=1 // pred_check_branch
      %14 = sbr.rel (0) target = $region13
    $region12: #{lstm_model_forward.3} parent=1 // pred_region
      _
    $region13: #{lstm_model_forward.3} parent=1 // pred_fallthru
      _
    %v16 = vld [vmem:[%s0] sm:$0xf]
    %v17 = vld [vmem:[%s0 + $0x4] sm:$0xf]
    %v18 = vld [vmem:[%s0 + $0x8] sm:$0xf]
    %v19 = vld [vmem:[%s0 + $0xc] sm:$0xf]
    %v20 = vld [vmem:[%s0 + $0x10] sm:$0xf]
    %v21 = vld [vmem:[%s0 + $0x14] sm:$0xf]
    %v22 = vld [vmem:[%s0 + $0x18] sm:$0xf]
    %v23 = vld [vmem:[%s0 + $0x1c] sm:$0xf]
    %v24 = vld [vmem:[%s0 + $0x20] sm:$0xf]
    %v25 = vld [vmem:[%s0 + $0x24] sm:$0xf]
    %v26 = vld [vmem:[%s0 + $0x28] sm:$0xf]
    %v27 = vld [vmem:[%s0 + $0x2c] sm:$0xf]
    %v28 = vld [vmem:[%s0 + $0x30] sm:$0xf]
    %v29 = vld [vmem:[%s0 + $0x34] sm:$0xf]
    %v30 = vld [vmem:[%s0 + $0x38] sm:$0xf]
    %v31 = vld [vmem:[%s0 + $0x3c] sm:$0xf]
    %v32 = vld [vmem:[%s1] sm:$0xff]
    %v33 = vld [vmem:[%s1 + $0x8] sm:$0xff]
    %v34 = vld [vmem:[%s1 + $0x10] sm:$0xff]
    %v35 = vld [vmem:[%s1 + $0x18] sm:$0xff]
    %v36 = vld [vmem:[%s1 + $0x20] sm:$0xff]
    %v37 = vld [vmem:[%s1 + $0x28] sm:$0xff]
    %v38 = vld [vmem:[%s1 + $0x30] sm:$0xff]
    %v39 = vld [vmem:[%s1 + $0x38] sm:$0xff]
    %v40 = vld [vmem:[%s1 + $0x40] sm:$0xff]
    %v41 = vld [vmem:[%s1 + $0x48] sm:$0xff]
    %v42 = vld [vmem:[%s1 + $0x50] sm:$0xff]
    %v43 = vld [vmem:[%s1 + $0x58] sm:$0xff]
    %v44 = vld [vmem:[%s1 + $0x60] sm:$0xff]
    %v45 = vld [vmem:[%s1 + $0x68] sm:$0xff]
    %v46 = vld [vmem:[%s1 + $0x70] sm:$0xff]
    %v47 = vld [vmem:[%s1 + $0x78] sm:$0xff]
    %v48 = vld [vmem:[%s2] sm:$0x3]
    %v50 = vlaneseq
    %v51 = vshrl.u32 %v50, 7
    %v52 = vsub.s32 0, %v51
    %v53 = vrot.slane %v48, %v52
    %v54 = vlaneseq
    %v55 = vshrl.u32 %v54, 7
    %v56 = vsub.s32 1, %v55
    %v57 = vrot.slane %v48, %v56
    %v76 = vunpack.c.l.b16 %v16
    %v77 = vunpack.c.l.b16 %v17
    %v78 = vunpack.c.l.b16 %v18
    %v79 = vunpack.c.l.b16 %v19
    %v80 = vunpack.c.l.b16 %v20
    %v81 = vunpack.c.l.b16 %v21
    %v82 = vunpack.c.l.b16 %v22
    %v83 = vunpack.c.l.b16 %v23
    %v84 = vunpack.c.l.b16 %v24
    %v85 = vunpack.c.l.b16 %v25
    %v86 = vunpack.c.l.b16 %v26
    %v87 = vunpack.c.l.b16 %v27
    %v88 = vunpack.c.l.b16 %v28
    %v89 = vunpack.c.l.b16 %v29
    %v90 = vunpack.c.l.b16 %v30
    %v91 = vunpack.c.l.b16 %v31
    %v92 = vpack.c.b16 %v77, %v76
    %v93 = vpack.c.b16 %v79, %v78
    %v94 = vpack.c.b16 %v81, %v80
    %v95 = vpack.c.b16 %v83, %v82
    %v96 = vpack.c.b16 %v85, %v84
    %v97 = vpack.c.b16 %v87, %v86
    %v98 = vpack.c.b16 %v89, %v88
    %v99 = vpack.c.b16 %v91, %v90
    %v124 = vunpack.c.l.b16 %v32
    %v125 = vunpack.c.h.b16 %v32
    %v126 = vunpack.c.l.b16 %v33
    %v127 = vunpack.c.h.b16 %v33
    %v128 = vunpack.c.l.b16 %v34
    %v129 = vunpack.c.h.b16 %v34
    %v130 = vunpack.c.l.b16 %v35
    %v131 = vunpack.c.h.b16 %v35
    %v132 = vunpack.c.l.b16 %v36
    %v133 = vunpack.c.h.b16 %v36
    %v134 = vunpack.c.l.b16 %v37
    %v135 = vunpack.c.h.b16 %v37
    %v136 = vunpack.c.l.b16 %v38
    %v137 = vunpack.c.h.b16 %v38
    %v138 = vunpack.c.l.b16 %v39
    %v139 = vunpack.c.h.b16 %v39
    %v140 = vunpack.c.l.b16 %v40
    %v141 = vunpack.c.h.b16 %v40
    %v142 = vunpack.c.l.b16 %v41
    %v143 = vunpack.c.h.b16 %v41
    %v144 = vunpack.c.l.b16 %v42
    %v145 = vunpack.c.h.b16 %v42
    %v146 = vunpack.c.l.b16 %v43
    %v147 = vunpack.c.h.b16 %v43
    %v148 = vunpack.c.l.b16 %v44
    %v149 = vunpack.c.h.b16 %v44
    %v150 = vunpack.c.l.b16 %v45
    %v151 = vunpack.c.h.b16 %v45
    %v152 = vunpack.c.l.b16 %v46
    %v153 = vunpack.c.h.b16 %v46
    %v154 = vunpack.c.l.b16 %v47
    %v155 = vunpack.c.h.b16 %v47
    %v156 = vpack.c.b16 %v126, %v124
    %v157 = vpack.c.b16 %v127, %v125
    %v158 = vpack.c.b16 %v130, %v128
    %v159 = vpack.c.b16 %v131, %v129
    %v160 = vpack.c.b16 %v134, %v132
    %v161 = vpack.c.b16 %v135, %v133
    %v162 = vpack.c.b16 %v138, %v136
    %v163 = vpack.c.b16 %v139, %v137
    %v164 = vpack.c.b16 %v142, %v140
    %v165 = vpack.c.b16 %v143, %v141
    %v166 = vpack.c.b16 %v146, %v144
    %v167 = vpack.c.b16 %v147, %v145
    %v168 = vpack.c.b16 %v150, %v148
    %v169 = vpack.c.b16 %v151, %v149
    %v170 = vpack.c.b16 %v154, %v152
    %v171 = vpack.c.b16 %v155, %v153
    %188 = vmatprep.subr.bf16.mxu0 %v157
    %189 = vmatpush1.bf16.msra.mxu0 %v156
    %190 = vmatprep.subr.bf16.mxu0 %v159
    %191 = vmatpush1.bf16.msra.mxu0 %v158
    %192 = vmatprep.subr.bf16.mxu0 %v161
    %193 = vmatpush1.bf16.msra.mxu0 %v160
    %194 = vmatprep.subr.bf16.mxu0 %v163
    %195 = vmatpush1.bf16.msra.mxu0 %v162
    %196 = vmatprep.subr.bf16.mxu0 %v165
    %197 = vmatpush1.bf16.msra.mxu0 %v164
    %198 = vmatprep.subr.bf16.mxu0 %v167
    %199 = vmatpush1.bf16.msra.mxu0 %v166
    %200 = vmatprep.subr.bf16.mxu0 %v169
    %201 = vmatpush1.bf16.msra.mxu0 %v168
    %202 = vmatprep.subr.bf16.mxu0 %v171
    %203 = vmatpush1.bf16.msra.mxu0 %v170
    %204 = vmatprep.subr.bf16.mxu0 0
    %205 = vmatpush1.bf16.msra.mxu0 0
    %206 = vmatprep.subr.bf16.mxu0 0
    %207 = vmatpush1.bf16.msra.mxu0 0
    %208 = vmatprep.subr.bf16.mxu0 0
    %209 = vmatpush1.bf16.msra.mxu0 0
    %210 = vmatprep.subr.bf16.mxu0 0
    %211 = vmatpush1.bf16.msra.mxu0 0
    %212 = vmatprep.subr.bf16.mxu0 0
    %213 = vmatpush1.bf16.msra.mxu0 0
    %214 = vmatprep.subr.bf16.mxu0 0
    %215 = vmatpush1.bf16.msra.mxu0 0
    %216 = vmatprep.subr.bf16.mxu0 0
    %217 = vmatpush1.bf16.msra.mxu0 0
    %218 = vmatprep.subr.bf16.mxu0 0
    %219 = vmatpush1.bf16.msra.mxu0 0
    %220 = vmatprep.mubr.bf16.mxu0 0
    %221 = vmatmul.mubr.bf16.gmra.mrb[0].mxu0 %v92
    %v222 = vpop.f32.mrb[0].mxu0
    %v223 = vadd.f32 %v53, %v222
    %v224 = vpop.f32.mrb[0].mxu0
    %v225 = vadd.f32 %v57, %v224
    %v226 = vpop.f32.mrb[0].mxu0
    %v227 = vadd.f32 %v53, %v226
    %v228 = vpop.f32.mrb[0].mxu0
    %v229 = vadd.f32 %v57, %v228
    %230 = vmatprep.mubr.bf16.mxu0 0
    %231 = vmatmul.mubr.bf16.gmra.mrb[0].mxu0 %v93
    %v232 = vpop.f32.mrb[0].mxu0
    %v233 = vadd.f32 %v53, %v232
    %v234 = vpop.f32.mrb[0].mxu0
    %v235 = vadd.f32 %v57, %v234
    %v236 = vpop.f32.mrb[0].mxu0
    %v237 = vadd.f32 %v53, %v236
    %v238 = vpop.f32.mrb[0].mxu0
    %v239 = vadd.f32 %v57, %v238
    %240 = vmatprep.mubr.bf16.mxu0 0
    %241 = vmatmul.mubr.bf16.gmra.mrb[0].mxu0 %v94
    %v242 = vpop.f32.mrb[0].mxu0
    %v243 = vadd.f32 %v53, %v242
    %v244 = vpop.f32.mrb[0].mxu0
    %v245 = vadd.f32 %v57, %v244
    %v246 = vpop.f32.mrb[0].mxu0
    %v247 = vadd.f32 %v53, %v246
    %v248 = vpop.f32.mrb[0].mxu0
    %v249 = vadd.f32 %v57, %v248
    %250 = vmatprep.mubr.bf16.mxu0 0
    %251 = vmatmul.mubr.bf16.gmra.mrb[0].mxu0 %v95
    %v252 = vpop.f32.mrb[0].mxu0
    %v253 = vadd.f32 %v53, %v252
    %v254 = vpop.f32.mrb[0].mxu0
    %v255 = vadd.f32 %v57, %v254
    %v256 = vpop.f32.mrb[0].mxu0
    %v257 = vadd.f32 %v53, %v256
    %v258 = vpop.f32.mrb[0].mxu0
    %v259 = vadd.f32 %v57, %v258
    %260 = vmatprep.mubr.bf16.mxu0 0
    %261 = vmatmul.mubr.bf16.gmra.mrb[0].mxu0 %v96
    %v262 = vpop.f32.mrb[0].mxu0
    %v263 = vadd.f32 %v53, %v262
    %v264 = vpop.f32.mrb[0].mxu0
    %v265 = vadd.f32 %v57, %v264
    %v266 = vpop.f32.mrb[0].mxu0
    %v267 = vadd.f32 %v53, %v266
    %v268 = vpop.f32.mrb[0].mxu0
    %v269 = vadd.f32 %v57, %v268
    %270 = vmatprep.mubr.bf16.mxu0 0
    %271 = vmatmul.mubr.bf16.gmra.mrb[0].mxu0 %v97
    %v272 = vpop.f32.mrb[0].mxu0
    %v273 = vadd.f32 %v53, %v272
    %v274 = vpop.f32.mrb[0].mxu0
    %v275 = vadd.f32 %v57, %v274
    %v276 = vpop.f32.mrb[0].mxu0
    %v277 = vadd.f32 %v53, %v276
    %v278 = vpop.f32.mrb[0].mxu0
    %v279 = vadd.f32 %v57, %v278
    %280 = vmatprep.mubr.bf16.mxu0 0
    %281 = vmatmul.mubr.bf16.gmra.mrb[0].mxu0 %v98
    %v282 = vpop.f32.mrb[0].mxu0
    %v283 = vadd.f32 %v53, %v282
    %v284 = vpop.f32.mrb[0].mxu0
    %v285 = vadd.f32 %v57, %v284
    %v286 = vpop.f32.mrb[0].mxu0
    %v287 = vadd.f32 %v53, %v286
    %v288 = vpop.f32.mrb[0].mxu0
    %v289 = vadd.f32 %v57, %v288
    %290 = vmatprep.mubr.bf16.mxu0 0
    %291 = vmatmul.mubr.bf16.gmra.mrb[0].mxu0 %v99
    %v292 = vpop.f32.mrb[0].mxu0
    %v293 = vadd.f32 %v53, %v292
    %v294 = vpop.f32.mrb[0].mxu0
    %v295 = vadd.f32 %v57, %v294
    %v296 = vpop.f32.mrb[0].mxu0
    %v297 = vadd.f32 %v53, %v296
    %v298 = vpop.f32.mrb[0].mxu0
    %v299 = vadd.f32 %v57, %v298
    %300 = vdwg.mxu0
    %v301 = vcombine.low %v223, %v233
    %v302 = vcombine.high %v223, %v233
    %v304 = vunpack.c.l.s4 1983009808
    %v305 = vunpack.c.0.s8 %v304
    %v306 = vlaneseq
    %v307 = vshrl.u32 %v306, 7
    %v308 = vsub.s32 %v305, %v307
    %v309 = vrot.slane %v301, %v308
    %v311 = vunpack.c.l.s4 1983009808
    %v312 = vunpack.c.0.s8 %v311
    %v313 = vlaneseq
    %v314 = vshrl.u32 %v313, 7
    %v315 = vsub.s32 %v312, %v314
    %v316 = vrot.slane %v302, %v315
    %v317 = vcombine.low %v227, %v237
    %v318 = vcombine.high %v227, %v237
    %v320 = vunpack.c.l.s4 1983009808
    %v321 = vunpack.c.0.s8 %v320
    %v322 = vlaneseq
    %v323 = vshrl.u32 %v322, 7
    %v324 = vsub.s32 %v321, %v323
    %v325 = vrot.slane %v317, %v324
    %v327 = vunpack.c.l.s4 1983009808
    %v328 = vunpack.c.0.s8 %v327
    %v329 = vlaneseq
    %v330 = vshrl.u32 %v329, 7
    %v331 = vsub.s32 %v328, %v330
    %v332 = vrot.slane %v318, %v331
    %v333 = vcombine.low %v243, %v253
    %v334 = vcombine.high %v243, %v253
    %v336 = vunpack.c.l.s4 1983009808
    %v337 = vunpack.c.0.s8 %v336
    %v338 = vlaneseq
    %v339 = vshrl.u32 %v338, 7
    %v340 = vsub.s32 %v337, %v339
    %v341 = vrot.slane %v333, %v340
    %v343 = vunpack.c.l.s4 1983009808
    %v344 = vunpack.c.0.s8 %v343
    %v345 = vlaneseq
    %v346 = vshrl.u32 %v345, 7
    %v347 = vsub.s32 %v344, %v346
    %v348 = vrot.slane %v334, %v347
    %v349 = vcombine.low %v247, %v257
    %v350 = vcombine.high %v247, %v257
    %v352 = vunpack.c.l.s4 1983009808
    %v353 = vunpack.c.0.s8 %v352
    %v354 = vlaneseq
    %v355 = vshrl.u32 %v354, 7
    %v356 = vsub.s32 %v353, %v355
    %v357 = vrot.slane %v349, %v356
    %v359 = vunpack.c.l.s4 1983009808
    %v360 = vunpack.c.0.s8 %v359
    %v361 = vlaneseq
    %v362 = vshrl.u32 %v361, 7
    %v363 = vsub.s32 %v360, %v362
    %v364 = vrot.slane %v350, %v363
    %v365 = vcombine.low %v309, %v325
    %v366 = vcombine.high %v309, %v325
    %v368 = vunpack.c.l.s4 1934713408
    %v369 = vunpack.c.0.s8 %v368
    %v370 = vlaneseq
    %v371 = vshrl.u32 %v370, 7
    %v372 = vsub.s32 %v369, %v371
    %v373 = vrot.slane %v365, %v372
    %v375 = vunpack.c.l.s4 1934713408
    %v376 = vunpack.c.0.s8 %v375
    %v377 = vlaneseq
    %v378 = vshrl.u32 %v377, 7
    %v379 = vsub.s32 %v376, %v378
    %v380 = vrot.slane %v366, %v379
    %v381 = vcombine.low %v316, %v332
    %v382 = vcombine.high %v316, %v332
    %v384 = vunpack.c.l.s4 1934713408
    %v385 = vunpack.c.0.s8 %v384
    %v386 = vlaneseq
    %v387 = vshrl.u32 %v386, 7
    %v388 = vsub.s32 %v385, %v387
    %v389 = vrot.slane %v381, %v388
    %v391 = vunpack.c.l.s4 1934713408
    %v392 = vunpack.c.0.s8 %v391
    %v393 = vlaneseq
    %v394 = vshrl.u32 %v393, 7
    %v395 = vsub.s32 %v392, %v394
    %v396 = vrot.slane %v382, %v395
    %v397 = vcombine.low %v341, %v357
    %v398 = vcombine.high %v341, %v357
    %v400 = vunpack.c.l.s4 1934713408
    %v401 = vunpack.c.0.s8 %v400
    %v402 = vlaneseq
    %v403 = vshrl.u32 %v402, 7
    %v404 = vsub.s32 %v401, %v403
    %v405 = vrot.slane %v397, %v404
    %v407 = vunpack.c.l.s4 1934713408
    %v408 = vunpack.c.0.s8 %v407
    %v409 = vlaneseq
    %v410 = vshrl.u32 %v409, 7
    %v411 = vsub.s32 %v408, %v410
    %v412 = vrot.slane %v398, %v411
    %v413 = vcombine.low %v348, %v364
    %v414 = vcombine.high %v348, %v364
    %v416 = vunpack.c.l.s4 1934713408
    %v417 = vunpack.c.0.s8 %v416
    %v418 = vlaneseq
    %v419 = vshrl.u32 %v418, 7
    %v420 = vsub.s32 %v417, %v419
    %v421 = vrot.slane %v413, %v420
    %v423 = vunpack.c.l.s4 1934713408
    %v424 = vunpack.c.0.s8 %v423
    %v425 = vlaneseq
    %v426 = vshrl.u32 %v425, 7
    %v427 = vsub.s32 %v424, %v426
    %v428 = vrot.slane %v414, %v427
    %v429 = vcombine.low %v373, %v405
    %v430 = vcombine.high %v373, %v405
    %v431 = vcombine.low %v380, %v412
    %v432 = vcombine.high %v380, %v412
    %v433 = vcombine.low %v389, %v421
    %v434 = vcombine.high %v389, %v421
    %v435 = vcombine.low %v396, %v428
    %v436 = vcombine.high %v396, %v428
    %v437 = vcombine.low %v263, %v273
    %v438 = vcombine.high %v263, %v273
    %v440 = vunpack.c.l.s4 1983009808
    %v441 = vunpack.c.0.s8 %v440
    %v442 = vlaneseq
    %v443 = vshrl.u32 %v442, 7
    %v444 = vsub.s32 %v441, %v443
    %v445 = vrot.slane %v437, %v444
    %v447 = vunpack.c.l.s4 1983009808
    %v448 = vunpack.c.0.s8 %v447
    %v449 = vlaneseq
    %v450 = vshrl.u32 %v449, 7
    %v451 = vsub.s32 %v448, %v450
    %v452 = vrot.slane %v438, %v451
    %v453 = vcombine.low %v267, %v277
    %v454 = vcombine.high %v267, %v277
    %v456 = vunpack.c.l.s4 1983009808
    %v457 = vunpack.c.0.s8 %v456
    %v458 = vlaneseq
    %v459 = vshrl.u32 %v458, 7
    %v460 = vsub.s32 %v457, %v459
    %v461 = vrot.slane %v453, %v460
    %v463 = vunpack.c.l.s4 1983009808
    %v464 = vunpack.c.0.s8 %v463
    %v465 = vlaneseq
    %v466 = vshrl.u32 %v465, 7
    %v467 = vsub.s32 %v464, %v466
    %v468 = vrot.slane %v454, %v467
    %v469 = vcombine.low %v283, %v293
    %v470 = vcombine.high %v283, %v293
    %v472 = vunpack.c.l.s4 1983009808
    %v473 = vunpack.c.0.s8 %v472
    %v474 = vlaneseq
    %v475 = vshrl.u32 %v474, 7
    %v476 = vsub.s32 %v473, %v475
    %v477 = vrot.slane %v469, %v476
    %v479 = vunpack.c.l.s4 1983009808
    %v480 = vunpack.c.0.s8 %v479
    %v481 = vlaneseq
    %v482 = vshrl.u32 %v481, 7
    %v483 = vsub.s32 %v480, %v482
    %v484 = vrot.slane %v470, %v483
    %v485 = vcombine.low %v287, %v297
    %v486 = vcombine.high %v287, %v297
    %v488 = vunpack.c.l.s4 1983009808
    %v489 = vunpack.c.0.s8 %v488
    %v490 = vlaneseq
    %v491 = vshrl.u32 %v490, 7
    %v492 = vsub.s32 %v489, %v491
    %v493 = vrot.slane %v485, %v492
    %v495 = vunpack.c.l.s4 1983009808
    %v496 = vunpack.c.0.s8 %v495
    %v497 = vlaneseq
    %v498 = vshrl.u32 %v497, 7
    %v499 = vsub.s32 %v496, %v498
    %v500 = vrot.slane %v486, %v499
    %v501 = vcombine.low %v445, %v461
    %v502 = vcombine.high %v445, %v461
    %v504 = vunpack.c.l.s4 1934713408
    %v505 = vunpack.c.0.s8 %v504
    %v506 = vlaneseq
    %v507 = vshrl.u32 %v506, 7
    %v508 = vsub.s32 %v505, %v507
    %v509 = vrot.slane %v501, %v508
    %v511 = vunpack.c.l.s4 1934713408
    %v512 = vunpack.c.0.s8 %v511
    %v513 = vlaneseq
    %v514 = vshrl.u32 %v513, 7
    %v515 = vsub.s32 %v512, %v514
    %v516 = vrot.slane %v502, %v515
    %v517 = vcombine.low %v452, %v468
    %v518 = vcombine.high %v452, %v468
    %v520 = vunpack.c.l.s4 1934713408
    %v521 = vunpack.c.0.s8 %v520
    %v522 = vlaneseq
    %v523 = vshrl.u32 %v522, 7
    %v524 = vsub.s32 %v521, %v523
    %v525 = vrot.slane %v517, %v524
    %v527 = vunpack.c.l.s4 1934713408
    %v528 = vunpack.c.0.s8 %v527
    %v529 = vlaneseq
    %v530 = vshrl.u32 %v529, 7
    %v531 = vsub.s32 %v528, %v530
    %v532 = vrot.slane %v518, %v531
    %v533 = vcombine.low %v477, %v493
    %v534 = vcombine.high %v477, %v493
    %v536 = vunpack.c.l.s4 1934713408
    %v537 = vunpack.c.0.s8 %v536
    %v538 = vlaneseq
    %v539 = vshrl.u32 %v538, 7
    %v540 = vsub.s32 %v537, %v539
    %v541 = vrot.slane %v533, %v540
    %v543 = vunpack.c.l.s4 1934713408
    %v544 = vunpack.c.0.s8 %v543
    %v545 = vlaneseq
    %v546 = vshrl.u32 %v545, 7
    %v547 = vsub.s32 %v544, %v546
    %v548 = vrot.slane %v534, %v547
    %v549 = vcombine.low %v484, %v500
    %v550 = vcombine.high %v484, %v500
    %v552 = vunpack.c.l.s4 1934713408
    %v553 = vunpack.c.0.s8 %v552
    %v554 = vlaneseq
    %v555 = vshrl.u32 %v554, 7
    %v556 = vsub.s32 %v553, %v555
    %v557 = vrot.slane %v549, %v556
    %v559 = vunpack.c.l.s4 1934713408
    %v560 = vunpack.c.0.s8 %v559
    %v561 = vlaneseq
    %v562 = vshrl.u32 %v561, 7
    %v563 = vsub.s32 %v560, %v562
    %v564 = vrot.slane %v550, %v563
    %v565 = vcombine.low %v509, %v541
    %v566 = vcombine.high %v509, %v541
    %v567 = vcombine.low %v516, %v548
    %v568 = vcombine.high %v516, %v548
    %v569 = vcombine.low %v525, %v557
    %v570 = vcombine.high %v525, %v557
    %v571 = vcombine.low %v532, %v564
    %v572 = vcombine.high %v532, %v564
    %v573 = vcombine.low %v225, %v235
    %v574 = vcombine.high %v225, %v235
    %v576 = vunpack.c.l.s4 1983009808
    %v577 = vunpack.c.0.s8 %v576
    %v578 = vlaneseq
    %v579 = vshrl.u32 %v578, 7
    %v580 = vsub.s32 %v577, %v579
    %v581 = vrot.slane %v573, %v580
    %v583 = vunpack.c.l.s4 1983009808
    %v584 = vunpack.c.0.s8 %v583
    %v585 = vlaneseq
    %v586 = vshrl.u32 %v585, 7
    %v587 = vsub.s32 %v584, %v586
    %v588 = vrot.slane %v574, %v587
    %v589 = vcombine.low %v229, %v239
    %v590 = vcombine.high %v229, %v239
    %v592 = vunpack.c.l.s4 1983009808
    %v593 = vunpack.c.0.s8 %v592
    %v594 = vlaneseq
    %v595 = vshrl.u32 %v594, 7
    %v596 = vsub.s32 %v593, %v595
    %v597 = vrot.slane %v589, %v596
    %v599 = vunpack.c.l.s4 1983009808
    %v600 = vunpack.c.0.s8 %v599
    %v601 = vlaneseq
    %v602 = vshrl.u32 %v601, 7
    %v603 = vsub.s32 %v600, %v602
    %v604 = vrot.slane %v590, %v603
    %v605 = vcombine.low %v245, %v255
    %v606 = vcombine.high %v245, %v255
    %v608 = vunpack.c.l.s4 1983009808
    %v609 = vunpack.c.0.s8 %v608
    %v610 = vlaneseq
    %v611 = vshrl.u32 %v610, 7
    %v612 = vsub.s32 %v609, %v611
    %v613 = vrot.slane %v605, %v612
    %v615 = vunpack.c.l.s4 1983009808
    %v616 = vunpack.c.0.s8 %v615
    %v617 = vlaneseq
    %v618 = vshrl.u32 %v617, 7
    %v619 = vsub.s32 %v616, %v618
    %v620 = vrot.slane %v606, %v619
    %v621 = vcombine.low %v249, %v259
    %v622 = vcombine.high %v249, %v259
    %v624 = vunpack.c.l.s4 1983009808
    %v625 = vunpack.c.0.s8 %v624
    %v626 = vlaneseq
    %v627 = vshrl.u32 %v626, 7
    %v628 = vsub.s32 %v625, %v627
    %v629 = vrot.slane %v621, %v628
    %v631 = vunpack.c.l.s4 1983009808
    %v632 = vunpack.c.0.s8 %v631
    %v633 = vlaneseq
    %v634 = vshrl.u32 %v633, 7
    %v635 = vsub.s32 %v632, %v634
    %v636 = vrot.slane %v622, %v635
    %v637 = vcombine.low %v581, %v597
    %v638 = vcombine.high %v581, %v597
    %v640 = vunpack.c.l.s4 1934713408
    %v641 = vunpack.c.0.s8 %v640
    %v642 = vlaneseq
    %v643 = vshrl.u32 %v642, 7
    %v644 = vsub.s32 %v641, %v643
    %v645 = vrot.slane %v637, %v644
    %v647 = vunpack.c.l.s4 1934713408
    %v648 = vunpack.c.0.s8 %v647
    %v649 = vlaneseq
    %v650 = vshrl.u32 %v649, 7
    %v651 = vsub.s32 %v648, %v650
    %v652 = vrot.slane %v638, %v651
    %v653 = vcombine.low %v588, %v604
    %v654 = vcombine.high %v588, %v604
    %v656 = vunpack.c.l.s4 1934713408
    %v657 = vunpack.c.0.s8 %v656
    %v658 = vlaneseq
    %v659 = vshrl.u32 %v658, 7
    %v660 = vsub.s32 %v657, %v659
    %v661 = vrot.slane %v653, %v660
    %v663 = vunpack.c.l.s4 1934713408
    %v664 = vunpack.c.0.s8 %v663
    %v665 = vlaneseq
    %v666 = vshrl.u32 %v665, 7
    %v667 = vsub.s32 %v664, %v666
    %v668 = vrot.slane %v654, %v667
    %v669 = vcombine.low %v613, %v629
    %v670 = vcombine.high %v613, %v629
    %v672 = vunpack.c.l.s4 1934713408
    %v673 = vunpack.c.0.s8 %v672
    %v674 = vlaneseq
    %v675 = vshrl.u32 %v674, 7
    %v676 = vsub.s32 %v673, %v675
    %v677 = vrot.slane %v669, %v676
    %v679 = vunpack.c.l.s4 1934713408
    %v680 = vunpack.c.0.s8 %v679
    %v681 = vlaneseq
    %v682 = vshrl.u32 %v681, 7
    %v683 = vsub.s32 %v680, %v682
    %v684 = vrot.slane %v670, %v683
    %v685 = vcombine.low %v620, %v636
    %v686 = vcombine.high %v620, %v636
    %v688 = vunpack.c.l.s4 1934713408
    %v689 = vunpack.c.0.s8 %v688
    %v690 = vlaneseq
    %v691 = vshrl.u32 %v690, 7
    %v692 = vsub.s32 %v689, %v691
    %v693 = vrot.slane %v685, %v692
    %v695 = vunpack.c.l.s4 1934713408
    %v696 = vunpack.c.0.s8 %v695
    %v697 = vlaneseq
    %v698 = vshrl.u32 %v697, 7
    %v699 = vsub.s32 %v696, %v698
    %v700 = vrot.slane %v686, %v699
    %v701 = vcombine.low %v645, %v677
    %v702 = vcombine.high %v645, %v677
    %v703 = vcombine.low %v652, %v684
    %v704 = vcombine.high %v652, %v684
    %v705 = vcombine.low %v661, %v693
    %v706 = vcombine.high %v661, %v693
    %v707 = vcombine.low %v668, %v700
    %v708 = vcombine.high %v668, %v700
    %v709 = vcombine.low %v265, %v275
    %v710 = vcombine.high %v265, %v275
    %v712 = vunpack.c.l.s4 1983009808
    %v713 = vunpack.c.0.s8 %v712
    %v714 = vlaneseq
    %v715 = vshrl.u32 %v714, 7
    %v716 = vsub.s32 %v713, %v715
    %v717 = vrot.slane %v709, %v716
    %v719 = vunpack.c.l.s4 1983009808
    %v720 = vunpack.c.0.s8 %v719
    %v721 = vlaneseq
    %v722 = vshrl.u32 %v721, 7
    %v723 = vsub.s32 %v720, %v722
    %v724 = vrot.slane %v710, %v723
    %v725 = vcombine.low %v269, %v279
    %v726 = vcombine.high %v269, %v279
    %v728 = vunpack.c.l.s4 1983009808
    %v729 = vunpack.c.0.s8 %v728
    %v730 = vlaneseq
    %v731 = vshrl.u32 %v730, 7
    %v732 = vsub.s32 %v729, %v731
    %v733 = vrot.slane %v725, %v732
    %v735 = vunpack.c.l.s4 1983009808
    %v736 = vunpack.c.0.s8 %v735
    %v737 = vlaneseq
    %v738 = vshrl.u32 %v737, 7
    %v739 = vsub.s32 %v736, %v738
    %v740 = vrot.slane %v726, %v739
    %v741 = vcombine.low %v285, %v295
    %v742 = vcombine.high %v285, %v295
    %v744 = vunpack.c.l.s4 1983009808
    %v745 = vunpack.c.0.s8 %v744
    %v746 = vlaneseq
    %v747 = vshrl.u32 %v746, 7
    %v748 = vsub.s32 %v745, %v747
    %v749 = vrot.slane %v741, %v748
    %v751 = vunpack.c.l.s4 1983009808
    %v752 = vunpack.c.0.s8 %v751
    %v753 = vlaneseq
    %v754 = vshrl.u32 %v753, 7
    %v755 = vsub.s32 %v752, %v754
    %v756 = vrot.slane %v742, %v755
    %v757 = vcombine.low %v289, %v299
    %v758 = vcombine.high %v289, %v299
    %v760 = vunpack.c.l.s4 1983009808
    %v761 = vunpack.c.0.s8 %v760
    %v762 = vlaneseq
    %v763 = vshrl.u32 %v762, 7
    %v764 = vsub.s32 %v761, %v763
    %v765 = vrot.slane %v757, %v764
    %v767 = vunpack.c.l.s4 1983009808
    %v768 = vunpack.c.0.s8 %v767
    %v769 = vlaneseq
    %v770 = vshrl.u32 %v769, 7
    %v771 = vsub.s32 %v768, %v770
    %v772 = vrot.slane %v758, %v771
    %v773 = vcombine.low %v717, %v733
    %v774 = vcombine.high %v717, %v733
    %v776 = vunpack.c.l.s4 1934713408
    %v777 = vunpack.c.0.s8 %v776
    %v778 = vlaneseq
    %v779 = vshrl.u32 %v778, 7
    %v780 = vsub.s32 %v777, %v779
    %v781 = vrot.slane %v773, %v780
    %v783 = vunpack.c.l.s4 1934713408
    %v784 = vunpack.c.0.s8 %v783
    %v785 = vlaneseq
    %v786 = vshrl.u32 %v785, 7
    %v787 = vsub.s32 %v784, %v786
    %v788 = vrot.slane %v774, %v787
    %v789 = vcombine.low %v724, %v740
    %v790 = vcombine.high %v724, %v740
    %v792 = vunpack.c.l.s4 1934713408
    %v793 = vunpack.c.0.s8 %v792
    %v794 = vlaneseq
    %v795 = vshrl.u32 %v794, 7
    %v796 = vsub.s32 %v793, %v795
    %v797 = vrot.slane %v789, %v796
    %v799 = vunpack.c.l.s4 1934713408
    %v800 = vunpack.c.0.s8 %v799
    %v801 = vlaneseq
    %v802 = vshrl.u32 %v801, 7
    %v803 = vsub.s32 %v800, %v802
    %v804 = vrot.slane %v790, %v803
    %v805 = vcombine.low %v749, %v765
    %v806 = vcombine.high %v749, %v765
    %v808 = vunpack.c.l.s4 1934713408
    %v809 = vunpack.c.0.s8 %v808
    %v810 = vlaneseq
    %v811 = vshrl.u32 %v810, 7
    %v812 = vsub.s32 %v809, %v811
    %v813 = vrot.slane %v805, %v812
    %v815 = vunpack.c.l.s4 1934713408
    %v816 = vunpack.c.0.s8 %v815
    %v817 = vlaneseq
    %v818 = vshrl.u32 %v817, 7
    %v819 = vsub.s32 %v816, %v818
    %v820 = vrot.slane %v806, %v819
    %v821 = vcombine.low %v756, %v772
    %v822 = vcombine.high %v756, %v772
    %v824 = vunpack.c.l.s4 1934713408
    %v825 = vunpack.c.0.s8 %v824
    %v826 = vlaneseq
    %v827 = vshrl.u32 %v826, 7
    %v828 = vsub.s32 %v825, %v827
    %v829 = vrot.slane %v821, %v828
    %v831 = vunpack.c.l.s4 1934713408
    %v832 = vunpack.c.0.s8 %v831
    %v833 = vlaneseq
    %v834 = vshrl.u32 %v833, 7
    %v835 = vsub.s32 %v832, %v834
    %v836 = vrot.slane %v822, %v835
    %v837 = vcombine.low %v781, %v813
    %v838 = vcombine.high %v781, %v813
    %v839 = vcombine.low %v788, %v820
    %v840 = vcombine.high %v788, %v820
    %v841 = vcombine.low %v797, %v829
    %v842 = vcombine.high %v797, %v829
    %v843 = vcombine.low %v804, %v836
    %v844 = vcombine.high %v804, %v836
    %845 = vst [vmem:[#allocation2] sm:$0xff] %v429
    %846 = vst [vmem:[#allocation2 + $0x8] sm:$0xff] %v701
    %847 = vst [vmem:[#allocation2 + $0x10] sm:$0xff] %v565
    %848 = vst [vmem:[#allocation2 + $0x18] sm:$0xff] %v837
    %849 = vst [vmem:[#allocation2 + $0x20] sm:$0xff] %v430
    %850 = vst [vmem:[#allocation2 + $0x28] sm:$0xff] %v702
    %851 = vst [vmem:[#allocation2 + $0x30] sm:$0xff] %v566
    %852 = vst [vmem:[#allocation2 + $0x38] sm:$0xff] %v838
    %853 = vst [vmem:[#allocation2 + $0x40] sm:$0xff] %v431
    %854 = vst [vmem:[#allocation2 + $0x48] sm:$0xff] %v703
    %855 = vst [vmem:[#allocation2 + $0x50] sm:$0xff] %v567
    %856 = vst [vmem:[#allocation2 + $0x58] sm:$0xff] %v839
    %857 = vst [vmem:[#allocation2 + $0x60] sm:$0xff] %v432
    %858 = vst [vmem:[#allocation2 + $0x68] sm:$0xff] %v704
    %859 = vst [vmem:[#allocation2 + $0x70] sm:$0xff] %v568
    %860 = vst [vmem:[#allocation2 + $0x78] sm:$0xff] %v840
    %861 = vst [vmem:[#allocation2 + $0x80] sm:$0xff] %v433
    %862 = vst [vmem:[#allocation2 + $0x88] sm:$0xff] %v705
    %863 = vst [vmem:[#allocation2 + $0x90] sm:$0xff] %v569
    %864 = vst [vmem:[#allocation2 + $0x98] sm:$0xff] %v841
    %865 = vst [vmem:[#allocation2 + $0xa0] sm:$0xff] %v434
    %866 = vst [vmem:[#allocation2 + $0xa8] sm:$0xff] %v706
    %867 = vst [vmem:[#allocation2 + $0xb0] sm:$0xff] %v570
    %868 = vst [vmem:[#allocation2 + $0xb8] sm:$0xff] %v842
    %869 = vst [vmem:[#allocation2 + $0xc0] sm:$0xff] %v435
    %870 = vst [vmem:[#allocation2 + $0xc8] sm:$0xff] %v707
    %871 = vst [vmem:[#allocation2 + $0xd0] sm:$0xff] %v571
    %872 = vst [vmem:[#allocation2 + $0xd8] sm:$0xff] %v843
    %873 = vst [vmem:[#allocation2 + $0xe0] sm:$0xff] %v436
    %874 = vst [vmem:[#allocation2 + $0xe8] sm:$0xff] %v708
    %875 = vst [vmem:[#allocation2 + $0xf0] sm:$0xff] %v572
    %876 = vst [vmem:[#allocation2 + $0xf8] sm:$0xff] %v844
    // Predicated region
    $region14: #{lstm_model_forward.3} parent=1 // pred_check
      _
    $region15: #{lstm_model_forward.3} parent=1 // pred_check_branch
      %878 = sbr.rel (0) target = $region17
    $region16: #{lstm_model_forward.3} parent=1 // pred_region
      %s880 = ssub.s32 4096, 4096
      %881 = vsyncadd [#allocation3], %s880
      %s882 = sshll.u32 [#allocation2], 4
      %s883 = int_to_ptr.vmem [resolvable:$true] %s882
      %888 = dma.vmem_to_hbm [thread:$0]  %s883, 4096, %s3, [#allocation3], 256, 256, 16
    $region17: #{lstm_model_forward.3} parent=1 // pred_fallthru
      _
    // Predicated region
    $region18: #{lstm_model_forward.3} parent=1 // pred_check
      _
    $region19: #{lstm_model_forward.3} parent=1 // pred_check_branch
      %890 = sbr.rel (0) target = $region21
    $region20: #{lstm_model_forward.3} parent=1 // pred_region
      %891 = dma.done [#allocation3], 4096
    $region21: #{lstm_model_forward.3} parent=1 // pred_fallthru
      _
    %892 = vsyncpa [#allocation3], 1

// kernel: lstm_model_forward.2
$region0: #{lstm_model_forward.2}
  #allocation0 [shape = 'u32[]', space=smem, size = 0x4, offset = 0x4, fixed_abs, tag = 'smem constant byte address 0x4 - core index']
  #allocation1 [shape = 'u32[144,128]{1,0:T(1,128)}', space=vmem, size = 0x12000, scoped, tag = 'internal scratch']
  #allocation2 [shape = 'f32[16,8,512]{2,1,0:T(8,128)}', space=vmem, size = 0x40000, scoped, tag = 'scratch operand']
  #allocation3 [shape = 'f32[8,128]{1,0:T(8,128)}', space=vmem, size = 0x1000, scoped, tag = 'scratch operand']
  #allocation4 [shape = 'f32[8,128]{1,0:T(8,128)}', space=vmem, size = 0x1000, scoped, tag = 'scratch operand']
  %s0 = inlined_call_operand.vmem [shape: bf16[16,8,128], index: 0, kind: input, shape index: {}]
  %s1 = inlined_call_operand.vmem [shape: bf16[128,512], index: 1, kind: input, shape index: {}]
  %s2 = inlined_call_operand.vmem [shape: bf16[128,512], index: 2, kind: input, shape index: {}]
  %s3 = inlined_call_operand.vmem [shape: f32[1,512], index: 3, kind: input, shape index: {}]
  %s4 = inlined_call_operand.vmem [shape: f32[1,8,128], index: 4, kind: input, shape index: {}]
  %s5 = inlined_call_operand.vmem [shape: f32[1,8,128], index: 5, kind: input, shape index: {}]
  %s6 = inlined_call_operand.vmem [shape: bf16[16,8,128], index: 6, kind: output, shape index: {0}]
  %s7 = inlined_call_operand.hbm [shape: f32[1,8,128], index: 7, kind: output, shape index: {1}]
  %s8 = inlined_call_operand.hbm [shape: f32[1,8,128], index: 8, kind: output, shape index: {2}]
  %9 = xla_tuple %s6, %s7, %s8
  %s10 = sld [smem:[#allocation0]]
  $region58: #{lstm_model_forward.2} parent=0
    _
  %s12 = ssub.s32 1, %s10
  %s13 = scalar_select 0, %s12, %s10
  $region1: #{lstm_model_forward.2} parent=0
    #allocation5 [shape = 'u8[4096]{0}', space=vmem, size = 0x1000, scoped, tag = 'output window, operand 1, single buffered']
    #allocation6 [shape = 's32[1]{0}', space=sflag, size = 0x4, scoped, tag = 'scoped memory for lstm_model_forward.2']
    #allocation7 [shape = 'u8[4096]{0}', space=vmem, size = 0x1000, scoped, tag = 'output window, operand 2, single buffered']
    #allocation8 [shape = 's32[1]{0}', space=sflag, size = 0x4, scoped, tag = 'scoped memory for lstm_model_forward.2']
    %14 = vsyncpa [#allocation6], 0
    %15 = vsyncpa [#allocation8], 0
    // Predicated region
    $region2: #{lstm_model_forward.2} parent=1 // pred_check
      _
    $region3: #{lstm_model_forward.2} parent=1 // pred_check_branch
      %17 = sbr.rel (0) target = $region5
    $region4: #{lstm_model_forward.2} parent=1 // pred_region
      _
    $region5: #{lstm_model_forward.2} parent=1 // pred_fallthru
      _
    // Predicated region
    $region6: #{lstm_model_forward.2} parent=1 // pred_check
      _
    $region7: #{lstm_model_forward.2} parent=1 // pred_check_branch
      %19 = sbr.rel (0) target = $region9
    $region8: #{lstm_model_forward.2} parent=1 // pred_region
      _
    $region9: #{lstm_model_forward.2} parent=1 // pred_fallthru
      _
    // Predicated region
    $region10: #{lstm_model_forward.2} parent=1 // pred_check
      _
    $region11: #{lstm_model_forward.2} parent=1 // pred_check_branch
      %21 = sbr.rel (0) target = $region13
    $region12: #{lstm_model_forward.2} parent=1 // pred_region
      _
    $region13: #{lstm_model_forward.2} parent=1 // pred_fallthru
      _
    // Predicated region
    $region14: #{lstm_model_forward.2} parent=1 // pred_check
      _
    $region15: #{lstm_model_forward.2} parent=1 // pred_check_branch
      %23 = sbr.rel (0) target = $region17
    $region16: #{lstm_model_forward.2} parent=1 // pred_region
      _
    $region17: #{lstm_model_forward.2} parent=1 // pred_fallthru
      _
    // Predicated region
    $region18: #{lstm_model_forward.2} parent=1 // pred_check
      _
    $region19: #{lstm_model_forward.2} parent=1 // pred_check_branch
      %25 = sbr.rel (0) target = $region21
    $region20: #{lstm_model_forward.2} parent=1 // pred_region
      _
    $region21: #{lstm_model_forward.2} parent=1 // pred_fallthru
      _
    // Predicated region
    $region22: #{lstm_model_forward.2} parent=1 // pred_check
      _
    $region23: #{lstm_model_forward.2} parent=1 // pred_check_branch
      %27 = sbr.rel (0) target = $region25
    $region24: #{lstm_model_forward.2} parent=1 // pred_region
      _
    $region25: #{lstm_model_forward.2} parent=1 // pred_fallthru
      _
    %p29 = scmp.eq.s32.totalorder 0, 0
    // Predicated region
    $region26: #{lstm_model_forward.2} parent=1 // pred_check
      %p30 = pneg %p29
    $region27: #{lstm_model_forward.2} parent=1 // pred_check_branch
      %32 = sbr.rel (%p30) target = $region29
    $region28: #{lstm_model_forward.2} parent=1 // pred_region
      %v33 = vld [vmem:[%s4] sm:$0xff]
      %34 = vst [vmem:[#allocation3] sm:$0xff] %v33
      %v35 = vld [vmem:[%s5] sm:$0xff]
      %36 = vst [vmem:[#allocation4] sm:$0xff] %v35
    $region29: #{lstm_model_forward.2} parent=1 // pred_fallthru
      _
    %v37 = vld [vmem:[%s0] sm:$0xf]
    %v38 = vld [vmem:[%s0 + $0x4] sm:$0xf]
    %v39 = vld [vmem:[%s0 + $0x8] sm:$0xf]
    %v40 = vld [vmem:[%s0 + $0xc] sm:$0xf]
    %v41 = vld [vmem:[%s0 + $0x10] sm:$0xf]
    %v42 = vld [vmem:[%s0 + $0x14] sm:$0xf]
    %v43 = vld [vmem:[%s0 + $0x18] sm:$0xf]
    %v44 = vld [vmem:[%s0 + $0x1c] sm:$0xf]
    %v45 = vld [vmem:[%s0 + $0x20] sm:$0xf]
    %v46 = vld [vmem:[%s0 + $0x24] sm:$0xf]
    %v47 = vld [vmem:[%s0 + $0x28] sm:$0xf]
    %v48 = vld [vmem:[%s0 + $0x2c] sm:$0xf]
    %v49 = vld [vmem:[%s0 + $0x30] sm:$0xf]
    %v50 = vld [vmem:[%s0 + $0x34] sm:$0xf]
    %v51 = vld [vmem:[%s0 + $0x38] sm:$0xf]
    %v52 = vld [vmem:[%s0 + $0x3c] sm:$0xf]
    %v53 = vld [vmem:[%s1] sm:$0xff]
    %v54 = vld [vmem:[%s1 + $0x8] sm:$0xff]
    %v55 = vld [vmem:[%s1 + $0x10] sm:$0xff]
    %v56 = vld [vmem:[%s1 + $0x18] sm:$0xff]
    %v57 = vld [vmem:[%s1 + $0x20] sm:$0xff]
    %v58 = vld [vmem:[%s1 + $0x28] sm:$0xff]
    %v59 = vld [vmem:[%s1 + $0x30] sm:$0xff]
    %v60 = vld [vmem:[%s1 + $0x38] sm:$0xff]
    %v61 = vld [vmem:[%s1 + $0x40] sm:$0xff]
    %v62 = vld [vmem:[%s1 + $0x48] sm:$0xff]
    %v63 = vld [vmem:[%s1 + $0x50] sm:$0xff]
    %v64 = vld [vmem:[%s1 + $0x58] sm:$0xff]
    %v65 = vld [vmem:[%s1 + $0x60] sm:$0xff]
    %v66 = vld [vmem:[%s1 + $0x68] sm:$0xff]
    %v67 = vld [vmem:[%s1 + $0x70] sm:$0xff]
    %v68 = vld [vmem:[%s1 + $0x78] sm:$0xff]
    %v69 = vld [vmem:[%s1 + $0x80] sm:$0xff]
    %v70 = vld [vmem:[%s1 + $0x88] sm:$0xff]
    %v71 = vld [vmem:[%s1 + $0x90] sm:$0xff]
    %v72 = vld [vmem:[%s1 + $0x98] sm:$0xff]
    %v73 = vld [vmem:[%s1 + $0xa0] sm:$0xff]
    %v74 = vld [vmem:[%s1 + $0xa8] sm:$0xff]
    %v75 = vld [vmem:[%s1 + $0xb0] sm:$0xff]
    %v76 = vld [vmem:[%s1 + $0xb8] sm:$0xff]
    %v77 = vld [vmem:[%s1 + $0xc0] sm:$0xff]
    %v78 = vld [vmem:[%s1 + $0xc8] sm:$0xff]
    %v79 = vld [vmem:[%s1 + $0xd0] sm:$0xff]
    %v80 = vld [vmem:[%s1 + $0xd8] sm:$0xff]
    %v81 = vld [vmem:[%s1 + $0xe0] sm:$0xff]
    %v82 = vld [vmem:[%s1 + $0xe8] sm:$0xff]
    %v83 = vld [vmem:[%s1 + $0xf0] sm:$0xff]
    %v84 = vld [vmem:[%s1 + $0xf8] sm:$0xff]
    %v85 = vld [vmem:[%s3] sm:$0xf]
    %v87 = vlaneseq
    %v88 = vshrl.u32 %v87, 7
    %v89 = vsub.s32 0, %v88
    %v90 = vrot.slane %v85, %v89
    %v91 = vlaneseq
    %v92 = vshrl.u32 %v91, 7
    %v93 = vsub.s32 1, %v92
    %v94 = vrot.slane %v85, %v93
    %v95 = vlaneseq
    %v96 = vshrl.u32 %v95, 7
    %v97 = vsub.s32 2, %v96
    %v98 = vrot.slane %v85, %v97
    %v99 = vlaneseq
    %v100 = vshrl.u32 %v99, 7
    %v101 = vsub.s32 3, %v100
    %v102 = vrot.slane %v85, %v101
    %v123 = vunpack.c.l.b16 %v37
    %v124 = vunpack.c.l.b16 %v38
    %v125 = vunpack.c.l.b16 %v39
    %v126 = vunpack.c.l.b16 %v40
    %v127 = vunpack.c.l.b16 %v41
    %v128 = vunpack.c.l.b16 %v42
    %v129 = vunpack.c.l.b16 %v43
    %v130 = vunpack.c.l.b16 %v44
    %v131 = vunpack.c.l.b16 %v45
    %v132 = vunpack.c.l.b16 %v46
    %v133 = vunpack.c.l.b16 %v47
    %v134 = vunpack.c.l.b16 %v48
    %v135 = vunpack.c.l.b16 %v49
    %v136 = vunpack.c.l.b16 %v50
    %v137 = vunpack.c.l.b16 %v51
    %v138 = vunpack.c.l.b16 %v52
    %v139 = vpack.c.b16 %v124, %v123
    %v140 = vpack.c.b16 %v126, %v125
    %v141 = vpack.c.b16 %v128, %v127
    %v142 = vpack.c.b16 %v130, %v129
    %v143 = vpack.c.b16 %v132, %v131
    %v144 = vpack.c.b16 %v134, %v133
    %v145 = vpack.c.b16 %v136, %v135
    %v146 = vpack.c.b16 %v138, %v137
    %v187 = vunpack.c.l.b16 %v53
    %v188 = vunpack.c.h.b16 %v53
    %v189 = vunpack.c.l.b16 %v54
    %v190 = vunpack.c.h.b16 %v54
    %v191 = vunpack.c.l.b16 %v55
    %v192 = vunpack.c.h.b16 %v55
    %v193 = vunpack.c.l.b16 %v56
    %v194 = vunpack.c.h.b16 %v56
    %v195 = vunpack.c.l.b16 %v57
    %v196 = vunpack.c.h.b16 %v57
    %v197 = vunpack.c.l.b16 %v58
    %v198 = vunpack.c.h.b16 %v58
    %v199 = vunpack.c.l.b16 %v59
    %v200 = vunpack.c.h.b16 %v59
    %v201 = vunpack.c.l.b16 %v60
    %v202 = vunpack.c.h.b16 %v60
    %v203 = vunpack.c.l.b16 %v61
    %v204 = vunpack.c.h.b16 %v61
    %v205 = vunpack.c.l.b16 %v62
    %v206 = vunpack.c.h.b16 %v62
    %v207 = vunpack.c.l.b16 %v63
    %v208 = vunpack.c.h.b16 %v63
    %v209 = vunpack.c.l.b16 %v64
    %v210 = vunpack.c.h.b16 %v64
    %v211 = vunpack.c.l.b16 %v65
    %v212 = vunpack.c.h.b16 %v65
    %v213 = vunpack.c.l.b16 %v66
    %v214 = vunpack.c.h.b16 %v66
    %v215 = vunpack.c.l.b16 %v67
    %v216 = vunpack.c.h.b16 %v67
    %v217 = vunpack.c.l.b16 %v68
    %v218 = vunpack.c.h.b16 %v68
    %v219 = vunpack.c.l.b16 %v69
    %v220 = vunpack.c.h.b16 %v69
    %v221 = vunpack.c.l.b16 %v70
    %v222 = vunpack.c.h.b16 %v70
    %v223 = vunpack.c.l.b16 %v71
    %v224 = vunpack.c.h.b16 %v71
    %v225 = vunpack.c.l.b16 %v72
    %v226 = vunpack.c.h.b16 %v72
    %v227 = vunpack.c.l.b16 %v73
    %v228 = vunpack.c.h.b16 %v73
    %v229 = vunpack.c.l.b16 %v74
    %v230 = vunpack.c.h.b16 %v74
    %v231 = vunpack.c.l.b16 %v75
    %v232 = vunpack.c.h.b16 %v75
    %v233 = vunpack.c.l.b16 %v76
    %v234 = vunpack.c.h.b16 %v76
    %v235 = vunpack.c.l.b16 %v77
    %v236 = vunpack.c.h.b16 %v77
    %v237 = vunpack.c.l.b16 %v78
    %v238 = vunpack.c.h.b16 %v78
    %v239 = vunpack.c.l.b16 %v79
    %v240 = vunpack.c.h.b16 %v79
    %v241 = vunpack.c.l.b16 %v80
    %v242 = vunpack.c.h.b16 %v80
    %v243 = vunpack.c.l.b16 %v81
    %v244 = vunpack.c.h.b16 %v81
    %v245 = vunpack.c.l.b16 %v82
    %v246 = vunpack.c.h.b16 %v82
    %v247 = vunpack.c.l.b16 %v83
    %v248 = vunpack.c.h.b16 %v83
    %v249 = vunpack.c.l.b16 %v84
    %v250 = vunpack.c.h.b16 %v84
    %v251 = vpack.c.b16 %v191, %v187
    %v252 = vpack.c.b16 %v192, %v188
    %v253 = vpack.c.b16 %v193, %v189
    %v254 = vpack.c.b16 %v194, %v190
    %v255 = vpack.c.b16 %v199, %v195
    %v256 = vpack.c.b16 %v200, %v196
    %v257 = vpack.c.b16 %v201, %v197
    %v258 = vpack.c.b16 %v202, %v198
    %v259 = vpack.c.b16 %v207, %v203
    %v260 = vpack.c.b16 %v208, %v204
    %v261 = vpack.c.b16 %v209, %v205
    %v262 = vpack.c.b16 %v210, %v206
    %v263 = vpack.c.b16 %v215, %v211
    %v264 = vpack.c.b16 %v216, %v212
    %v265 = vpack.c.b16 %v217, %v213
    %v266 = vpack.c.b16 %v218, %v214
    %v267 = vpack.c.b16 %v223, %v219
    %v268 = vpack.c.b16 %v224, %v220
    %v269 = vpack.c.b16 %v225, %v221
    %v270 = vpack.c.b16 %v226, %v222
    %v271 = vpack.c.b16 %v231, %v227
    %v272 = vpack.c.b16 %v232, %v228
    %v273 = vpack.c.b16 %v233, %v229
    %v274 = vpack.c.b16 %v234, %v230
    %v275 = vpack.c.b16 %v239, %v235
    %v276 = vpack.c.b16 %v240, %v236
    %v277 = vpack.c.b16 %v241, %v237
    %v278 = vpack.c.b16 %v242, %v238
    %v279 = vpack.c.b16 %v247, %v243
    %v280 = vpack.c.b16 %v248, %v244
    %v281 = vpack.c.b16 %v249, %v245
    %v282 = vpack.c.b16 %v250, %v246
    %315 = vmatprep.subr.bf16.mxu0 %v252
    %316 = vmatpush1.bf16.msra.mxu0 %v251
    %317 = vmatprep.subr.bf16.mxu0 %v256
    %318 = vmatpush1.bf16.msra.mxu0 %v255
    %319 = vmatprep.subr.bf16.mxu0 %v260
    %320 = vmatpush1.bf16.msra.mxu0 %v259
    %321 = vmatprep.subr.bf16.mxu0 %v264
    %322 = vmatpush1.bf16.msra.mxu0 %v263
    %323 = vmatprep.subr.bf16.mxu0 %v268
    %324 = vmatpush1.bf16.msra.mxu0 %v267
    %325 = vmatprep.subr.bf16.mxu0 %v272
    %326 = vmatpush1.bf16.msra.mxu0 %v271
    %327 = vmatprep.subr.bf16.mxu0 %v276
    %328 = vmatpush1.bf16.msra.mxu0 %v275
    %329 = vmatprep.subr.bf16.mxu0 %v280
    %330 = vmatpush1.bf16.msra.mxu0 %v279
    %331 = vmatprep.subr.bf16.mxu0 0
    %332 = vmatpush1.bf16.msra.mxu0 0
    %333 = vmatprep.subr.bf16.mxu0 0
    %334 = vmatpush1.bf16.msra.mxu0 0
    %335 = vmatprep.subr.bf16.mxu0 0
    %336 = vmatpush1.bf16.msra.mxu0 0
    %337 = vmatprep.subr.bf16.mxu0 0
    %338 = vmatpush1.bf16.msra.mxu0 0
    %339 = vmatprep.subr.bf16.mxu0 0
    %340 = vmatpush1.bf16.msra.mxu0 0
    %341 = vmatprep.subr.bf16.mxu0 0
    %342 = vmatpush1.bf16.msra.mxu0 0
    %343 = vmatprep.subr.bf16.mxu0 0
    %344 = vmatpush1.bf16.msra.mxu0 0
    %345 = vmatprep.subr.bf16.mxu0 0
    %346 = vmatpush1.bf16.msra.mxu0 0
    %347 = vmatprep.mubr.bf16.mxu0 0
    %348 = vmatmul.mubr.bf16.gmra.mrb[0].mxu0 %v139
    %v349 = vpop.f32.mrb[0].mxu0
    %v350 = vadd.f32 %v90, %v349
    %v351 = vpop.f32.mrb[0].mxu0
    %v352 = vadd.f32 %v94, %v351
    %v353 = vpop.f32.mrb[0].mxu0
    %v354 = vadd.f32 %v90, %v353
    %v355 = vpop.f32.mrb[0].mxu0
    %v356 = vadd.f32 %v94, %v355
    %357 = vmatprep.mubr.bf16.mxu0 0
    %358 = vmatmul.mubr.bf16.gmra.mrb[0].mxu0 %v140
    %v359 = vpop.f32.mrb[0].mxu0
    %v360 = vadd.f32 %v90, %v359
    %v361 = vpop.f32.mrb[0].mxu0
    %v362 = vadd.f32 %v94, %v361
    %v363 = vpop.f32.mrb[0].mxu0
    %v364 = vadd.f32 %v90, %v363
    %v365 = vpop.f32.mrb[0].mxu0
    %v366 = vadd.f32 %v94, %v365
    %367 = vmatprep.mubr.bf16.mxu0 0
    %368 = vmatmul.mubr.bf16.gmra.mrb[0].mxu0 %v141
    %v369 = vpop.f32.mrb[0].mxu0
    %v370 = vadd.f32 %v90, %v369
    %v371 = vpop.f32.mrb[0].mxu0
    %v372 = vadd.f32 %v94, %v371
    %v373 = vpop.f32.mrb[0].mxu0
    %v374 = vadd.f32 %v90, %v373
    %v375 = vpop.f32.mrb[0].mxu0
    %v376 = vadd.f32 %v94, %v375
    %377 = vmatprep.mubr.bf16.mxu0 0
    %378 = vmatmul.mubr.bf16.gmra.mrb[0].mxu0 %v142
    %v379 = vpop.f32.mrb[0].mxu0
    %v380 = vadd.f32 %v90, %v379
    %v381 = vpop.f32.mrb[0].mxu0
    %v382 = vadd.f32 %v94, %v381
    %v383 = vpop.f32.mrb[0].mxu0
    %v384 = vadd.f32 %v90, %v383
    %v385 = vpop.f32.mrb[0].mxu0
    %v386 = vadd.f32 %v94, %v385
    %387 = vmatprep.mubr.bf16.mxu0 0
    %388 = vmatmul.mubr.bf16.gmra.mrb[0].mxu0 %v143
    %v389 = vpop.f32.mrb[0].mxu0
    %v390 = vadd.f32 %v90, %v389
    %v391 = vpop.f32.mrb[0].mxu0
    %v392 = vadd.f32 %v94, %v391
    %v393 = vpop.f32.mrb[0].mxu0
    %v394 = vadd.f32 %v90, %v393
    %v395 = vpop.f32.mrb[0].mxu0
    %v396 = vadd.f32 %v94, %v395
    %397 = vmatprep.mubr.bf16.mxu0 0
    %398 = vmatmul.mubr.bf16.gmra.mrb[0].mxu0 %v144
    %v399 = vpop.f32.mrb[0].mxu0
    %v400 = vadd.f32 %v90, %v399
    %v401 = vpop.f32.mrb[0].mxu0
    %v402 = vadd.f32 %v94, %v401
    %v403 = vpop.f32.mrb[0].mxu0
    %v404 = vadd.f32 %v90, %v403
    %v405 = vpop.f32.mrb[0].mxu0
    %v406 = vadd.f32 %v94, %v405
    %407 = vmatprep.mubr.bf16.mxu0 0
    %408 = vmatmul.mubr.bf16.gmra.mrb[0].mxu0 %v145
    %v409 = vpop.f32.mrb[0].mxu0
    %v410 = vadd.f32 %v90, %v409
    %v411 = vpop.f32.mrb[0].mxu0
    %v412 = vadd.f32 %v94, %v411
    %v413 = vpop.f32.mrb[0].mxu0
    %v414 = vadd.f32 %v90, %v413
    %v415 = vpop.f32.mrb[0].mxu0
    %v416 = vadd.f32 %v94, %v415
    %417 = vmatprep.mubr.bf16.mxu0 0
    %418 = vmatmul.mubr.bf16.gmra.mrb[0].mxu0 %v146
    %v419 = vpop.f32.mrb[0].mxu0
    %v420 = vadd.f32 %v90, %v419
    %v421 = vpop.f32.mrb[0].mxu0
    %v422 = vadd.f32 %v94, %v421
    %v423 = vpop.f32.mrb[0].mxu0
    %v424 = vadd.f32 %v90, %v423
    %v425 = vpop.f32.mrb[0].mxu0
    %v426 = vadd.f32 %v94, %v425
    %427 = vdwg.mxu0
    %428 = vmatprep.subr.bf16.mxu0 %v254
    %429 = vmatpush1.bf16.msra.mxu0 %v253
    %430 = vmatprep.subr.bf16.mxu0 %v258
    %431 = vmatpush1.bf16.msra.mxu0 %v257
    %432 = vmatprep.subr.bf16.mxu0 %v262
    %433 = vmatpush1.bf16.msra.mxu0 %v261
    %434 = vmatprep.subr.bf16.mxu0 %v266
    %435 = vmatpush1.bf16.msra.mxu0 %v265
    %436 = vmatprep.subr.bf16.mxu0 %v270
    %437 = vmatpush1.bf16.msra.mxu0 %v269
    %438 = vmatprep.subr.bf16.mxu0 %v274
    %439 = vmatpush1.bf16.msra.mxu0 %v273
    %440 = vmatprep.subr.bf16.mxu0 %v278
    %441 = vmatpush1.bf16.msra.mxu0 %v277
    %442 = vmatprep.subr.bf16.mxu0 %v282
    %443 = vmatpush1.bf16.msra.mxu0 %v281
    %444 = vmatprep.subr.bf16.mxu0 0
    %445 = vmatpush1.bf16.msra.mxu0 0
    %446 = vmatprep.subr.bf16.mxu0 0
    %447 = vmatpush1.bf16.msra.mxu0 0
    %448 = vmatprep.subr.bf16.mxu0 0
    %449 = vmatpush1.bf16.msra.mxu0 0
    %450 = vmatprep.subr.bf16.mxu0 0
    %451 = vmatpush1.bf16.msra.mxu0 0
    %452 = vmatprep.subr.bf16.mxu0 0
    %453 = vmatpush1.bf16.msra.mxu0 0
    %454 = vmatprep.subr.bf16.mxu0 0
    %455 = vmatpush1.bf16.msra.mxu0 0
    %456 = vmatprep.subr.bf16.mxu0 0
    %457 = vmatpush1.bf16.msra.mxu0 0
    %458 = vmatprep.subr.bf16.mxu0 0
    %459 = vmatpush1.bf16.msra.mxu0 0
    %460 = vmatprep.mubr.bf16.mxu0 0
    %461 = vmatmul.mubr.bf16.gmra.mrb[0].mxu0 %v139
    %v462 = vpop.f32.mrb[0].mxu0
    %v463 = vadd.f32 %v98, %v462
    %v464 = vpop.f32.mrb[0].mxu0
    %v465 = vadd.f32 %v102, %v464
    %v466 = vpop.f32.mrb[0].mxu0
    %v467 = vadd.f32 %v98, %v466
    %v468 = vpop.f32.mrb[0].mxu0
    %v469 = vadd.f32 %v102, %v468
    %470 = vmatprep.mubr.bf16.mxu0 0
    %471 = vmatmul.mubr.bf16.gmra.mrb[0].mxu0 %v140
    %v472 = vpop.f32.mrb[0].mxu0
    %v473 = vadd.f32 %v98, %v472
    %v474 = vpop.f32.mrb[0].mxu0
    %v475 = vadd.f32 %v102, %v474
    %v476 = vpop.f32.mrb[0].mxu0
    %v477 = vadd.f32 %v98, %v476
    %v478 = vpop.f32.mrb[0].mxu0
    %v479 = vadd.f32 %v102, %v478
    %480 = vmatprep.mubr.bf16.mxu0 0
    %481 = vmatmul.mubr.bf16.gmra.mrb[0].mxu0 %v141
    %v482 = vpop.f32.mrb[0].mxu0
    %v483 = vadd.f32 %v98, %v482
    %v484 = vpop.f32.mrb[0].mxu0
    %v485 = vadd.f32 %v102, %v484
    %v486 = vpop.f32.mrb[0].mxu0
    %v487 = vadd.f32 %v98, %v486
    %v488 = vpop.f32.mrb[0].mxu0
    %v489 = vadd.f32 %v102, %v488
    %490 = vmatprep.mubr.bf16.mxu0 0
    %491 = vmatmul.mubr.bf16.gmra.mrb[0].mxu0 %v142
    %v492 = vpop.f32.mrb[0].mxu0
    %v493 = vadd.f32 %v98, %v492
    %v494 = vpop.f32.mrb[0].mxu0
    %v495 = vadd.f32 %v102, %v494
    %v496 = vpop.f32.mrb[0].mxu0
    %v497 = vadd.f32 %v98, %v496
    %v498 = vpop.f32.mrb[0].mxu0
    %v499 = vadd.f32 %v102, %v498
    %500 = vmatprep.mubr.bf16.mxu0 0
    %501 = vmatmul.mubr.bf16.gmra.mrb[0].mxu0 %v143
    %v502 = vpop.f32.mrb[0].mxu0
    %v503 = vadd.f32 %v98, %v502
    %v504 = vpop.f32.mrb[0].mxu0
    %v505 = vadd.f32 %v102, %v504
    %v506 = vpop.f32.mrb[0].mxu0
    %v507 = vadd.f32 %v98, %v506
    %v508 = vpop.f32.mrb[0].mxu0
    %v509 = vadd.f32 %v102, %v508
    %510 = vmatprep.mubr.bf16.mxu0 0
    %511 = vmatmul.mubr.bf16.gmra.mrb[0].mxu0 %v144
    %v512 = vpop.f32.mrb[0].mxu0
    %v513 = vadd.f32 %v98, %v512
    %v514 = vpop.f32.mrb[0].mxu0
    %v515 = vadd.f32 %v102, %v514
    %v516 = vpop.f32.mrb[0].mxu0
    %v517 = vadd.f32 %v98, %v516
    %v518 = vpop.f32.mrb[0].mxu0
    %v519 = vadd.f32 %v102, %v518
    %520 = vmatprep.mubr.bf16.mxu0 0
    %521 = vmatmul.mubr.bf16.gmra.mrb[0].mxu0 %v145
    %v522 = vpop.f32.mrb[0].mxu0
    %v523 = vadd.f32 %v98, %v522
    %v524 = vpop.f32.mrb[0].mxu0
    %v525 = vadd.f32 %v102, %v524
    %v526 = vpop.f32.mrb[0].mxu0
    %v527 = vadd.f32 %v98, %v526
    %v528 = vpop.f32.mrb[0].mxu0
    %v529 = vadd.f32 %v102, %v528
    %530 = vmatprep.mubr.bf16.mxu0 0
    %531 = vmatmul.mubr.bf16.gmra.mrb[0].mxu0 %v146
    %v532 = vpop.f32.mrb[0].mxu0
    %v533 = vadd.f32 %v98, %v532
    %v534 = vpop.f32.mrb[0].mxu0
    %v535 = vadd.f32 %v102, %v534
    %v536 = vpop.f32.mrb[0].mxu0
    %v537 = vadd.f32 %v98, %v536
    %v538 = vpop.f32.mrb[0].mxu0
    %v539 = vadd.f32 %v102, %v538
    %540 = vdwg.mxu0
    %541 = vst [vmem:[#allocation2] sm:$0xff] %v350
    %542 = vst [vmem:[#allocation2 + $0x8] sm:$0xff] %v352
    %543 = vst [vmem:[#allocation2 + $0x10] sm:$0xff] %v463
    %544 = vst [vmem:[#allocation2 + $0x18] sm:$0xff] %v465
    %545 = vst [vmem:[#allocation2 + $0x20] sm:$0xff] %v354
    %546 = vst [vmem:[#allocation2 + $0x28] sm:$0xff] %v356
    %547 = vst [vmem:[#allocation2 + $0x30] sm:$0xff] %v467
    %548 = vst [vmem:[#allocation2 + $0x38] sm:$0xff] %v469
    %549 = vst [vmem:[#allocation2 + $0x40] sm:$0xff] %v360
    %550 = vst [vmem:[#allocation2 + $0x48] sm:$0xff] %v362
    %551 = vst [vmem:[#allocation2 + $0x50] sm:$0xff] %v473
    %552 = vst [vmem:[#allocation2 + $0x58] sm:$0xff] %v475
    %553 = vst [vmem:[#allocation2 + $0x60] sm:$0xff] %v364
    %554 = vst [vmem:[#allocation2 + $0x68] sm:$0xff] %v366
    %555 = vst [vmem:[#allocation2 + $0x70] sm:$0xff] %v477
    %556 = vst [vmem:[#allocation2 + $0x78] sm:$0xff] %v479
    %557 = vst [vmem:[#allocation2 + $0x80] sm:$0xff] %v370
    %558 = vst [vmem:[#allocation2 + $0x88] sm:$0xff] %v372
    %559 = vst [vmem:[#allocation2 + $0x90] sm:$0xff] %v483
    %560 = vst [vmem:[#allocation2 + $0x98] sm:$0xff] %v485
    %561 = vst [vmem:[#allocation2 + $0xa0] sm:$0xff] %v374
    %562 = vst [vmem:[#allocation2 + $0xa8] sm:$0xff] %v376
    %563 = vst [vmem:[#allocation2 + $0xb0] sm:$0xff] %v487
    %564 = vst [vmem:[#allocation2 + $0xb8] sm:$0xff] %v489
    %565 = vst [vmem:[#allocation2 + $0xc0] sm:$0xff] %v380
    %566 = vst [vmem:[#allocation2 + $0xc8] sm:$0xff] %v382
    %567 = vst [vmem:[#allocation2 + $0xd0] sm:$0xff] %v493
    %568 = vst [vmem:[#allocation2 + $0xd8] sm:$0xff] %v495
    %569 = vst [vmem:[#allocation2 + $0xe0] sm:$0xff] %v384
    %570 = vst [vmem:[#allocation2 + $0xe8] sm:$0xff] %v386
    %571 = vst [vmem:[#allocation2 + $0xf0] sm:$0xff] %v497
    %572 = vst [vmem:[#allocation2 + $0xf8] sm:$0xff] %v499
    %573 = vst [vmem:[#allocation2 + $0x100] sm:$0xff] %v390
    %574 = vst [vmem:[#allocation2 + $0x108] sm:$0xff] %v392
    %575 = vst [vmem:[#allocation2 + $0x110] sm:$0xff] %v503
    %576 = vst [vmem:[#allocation2 + $0x118] sm:$0xff] %v505
    %577 = vst [vmem:[#allocation2 + $0x120] sm:$0xff] %v394
    %578 = vst [vmem:[#allocation2 + $0x128] sm:$0xff] %v396
    %579 = vst [vmem:[#allocation2 + $0x130] sm:$0xff] %v507
    %580 = vst [vmem:[#allocation2 + $0x138] sm:$0xff] %v509
    %581 = vst [vmem:[#allocation2 + $0x140] sm:$0xff] %v400
    %582 = vst [vmem:[#allocation2 + $0x148] sm:$0xff] %v402
    %583 = vst [vmem:[#allocation2 + $0x150] sm:$0xff] %v513
    %584 = vst [vmem:[#allocation2 + $0x158] sm:$0xff] %v515
    %585 = vst [vmem:[#allocation2 + $0x160] sm:$0xff] %v404
    %586 = vst [vmem:[#allocation2 + $0x168] sm:$0xff] %v406
    %587 = vst [vmem:[#allocation2 + $0x170] sm:$0xff] %v517
    %588 = vst [vmem:[#allocation2 + $0x178] sm:$0xff] %v519
    %589 = vst [vmem:[#allocation2 + $0x180] sm:$0xff] %v410
    %590 = vst [vmem:[#allocation2 + $0x188] sm:$0xff] %v412
    %591 = vst [vmem:[#allocation2 + $0x190] sm:$0xff] %v523
    %592 = vst [vmem:[#allocation2 + $0x198] sm:$0xff] %v525
    %593 = vst [vmem:[#allocation2 + $0x1a0] sm:$0xff] %v414
    %594 = vst [vmem:[#allocation2 + $0x1a8] sm:$0xff] %v416
    %595 = vst [vmem:[#allocation2 + $0x1b0] sm:$0xff] %v527
    %596 = vst [vmem:[#allocation2 + $0x1b8] sm:$0xff] %v529
    %597 = vst [vmem:[#allocation2 + $0x1c0] sm:$0xff] %v420
    %598 = vst [vmem:[#allocation2 + $0x1c8] sm:$0xff] %v422
    %599 = vst [vmem:[#allocation2 + $0x1d0] sm:$0xff] %v533
    %600 = vst [vmem:[#allocation2 + $0x1d8] sm:$0xff] %v535
    %601 = vst [vmem:[#allocation2 + $0x1e0] sm:$0xff] %v424
    %602 = vst [vmem:[#allocation2 + $0x1e8] sm:$0xff] %v426
    %603 = vst [vmem:[#allocation2 + $0x1f0] sm:$0xff] %v537
    %604 = vst [vmem:[#allocation2 + $0x1f8] sm:$0xff] %v539
    %v605 = vld [vmem:[#allocation3] sm:$0xff]
    %v606 = vld [vmem:[#allocation4] sm:$0xff]
    %v607 = vld [vmem:[#allocation2] sm:$0xff]
    %v608 = vld [vmem:[#allocation2 + $0x8] sm:$0xff]
    %v609 = vld [vmem:[#allocation2 + $0x10] sm:$0xff]
    %v610 = vld [vmem:[#allocation2 + $0x18] sm:$0xff]
    %v611 = vpack.c.bf16 %v605, %v605
    %v612 = vld [vmem:[%s2] sm:$0xff]
    %v613 = vld [vmem:[%s2 + $0x8] sm:$0xff]
    %v614 = vld [vmem:[%s2 + $0x10] sm:$0xff]
    %v615 = vld [vmem:[%s2 + $0x18] sm:$0xff]
    %v616 = vld [vmem:[%s2 + $0x20] sm:$0xff]
    %v617 = vld [vmem:[%s2 + $0x28] sm:$0xff]
    %v618 = vld [vmem:[%s2 + $0x30] sm:$0xff]
    %v619 = vld [vmem:[%s2 + $0x38] sm:$0xff]
    %v620 = vld [vmem:[%s2 + $0x40] sm:$0xff]
    %v621 = vld [vmem:[%s2 + $0x48] sm:$0xff]
    %v622 = vld [vmem:[%s2 + $0x50] sm:$0xff]
    %v623 = vld [vmem:[%s2 + $0x58] sm:$0xff]
    %v624 = vld [vmem:[%s2 + $0x60] sm:$0xff]
    %v625 = vld [vmem:[%s2 + $0x68] sm:$0xff]
    %v626 = vld [vmem:[%s2 + $0x70] sm:$0xff]
    %v627 = vld [vmem:[%s2 + $0x78] sm:$0xff]
    %v628 = vld [vmem:[%s2 + $0x80] sm:$0xff]
    %v629 = vld [vmem:[%s2 + $0x88] sm:$0xff]
    %v630 = vld [vmem:[%s2 + $0x90] sm:$0xff]
    %v631 = vld [vmem:[%s2 + $0x98] sm:$0xff]
    %v632 = vld [vmem:[%s2 + $0xa0] sm:$0xff]
    %v633 = vld [vmem:[%s2 + $0xa8] sm:$0xff]
    %v634 = vld [vmem:[%s2 + $0xb0] sm:$0xff]
    %v635 = vld [vmem:[%s2 + $0xb8] sm:$0xff]
    %v636 = vld [vmem:[%s2 + $0xc0] sm:$0xff]
    %v637 = vld [vmem:[%s2 + $0xc8] sm:$0xff]
    %v638 = vld [vmem:[%s2 + $0xd0] sm:$0xff]
    %v639 = vld [vmem:[%s2 + $0xd8] sm:$0xff]
    %v640 = vld [vmem:[%s2 + $0xe0] sm:$0xff]
    %v641 = vld [vmem:[%s2 + $0xe8] sm:$0xff]
    %v642 = vld [vmem:[%s2 + $0xf0] sm:$0xff]
    %v643 = vld [vmem:[%s2 + $0xf8] sm:$0xff]
    %v676 = vunpack.c.l.b16 %v612
    %v677 = vunpack.c.h.b16 %v612
    %v678 = vunpack.c.l.b16 %v613
    %v679 = vunpack.c.h.b16 %v613
    %v680 = vunpack.c.l.b16 %v614
    %v681 = vunpack.c.h.b16 %v614
    %v682 = vunpack.c.l.b16 %v615
    %v683 = vunpack.c.h.b16 %v615
    %v684 = vunpack.c.l.b16 %v616
    %v685 = vunpack.c.h.b16 %v616
    %v686 = vunpack.c.l.b16 %v617
    %v687 = vunpack.c.h.b16 %v617
    %v688 = vunpack.c.l.b16 %v618
    %v689 = vunpack.c.h.b16 %v618
    %v690 = vunpack.c.l.b16 %v619
    %v691 = vunpack.c.h.b16 %v619
    %v692 = vunpack.c.l.b16 %v620
    %v693 = vunpack.c.h.b16 %v620
    %v694 = vunpack.c.l.b16 %v621
    %v695 = vunpack.c.h.b16 %v621
    %v696 = vunpack.c.l.b16 %v622
    %v697 = vunpack.c.h.b16 %v622
    %v698 = vunpack.c.l.b16 %v623
    %v699 = vunpack.c.h.b16 %v623
    %v700 = vunpack.c.l.b16 %v624
    %v701 = vunpack.c.h.b16 %v624
    %v702 = vunpack.c.l.b16 %v625
    %v703 = vunpack.c.h.b16 %v625
    %v704 = vunpack.c.l.b16 %v626
    %v705 = vunpack.c.h.b16 %v626
    %v706 = vunpack.c.l.b16 %v627
    %v707 = vunpack.c.h.b16 %v627
    %v708 = vunpack.c.l.b16 %v628
    %v709 = vunpack.c.h.b16 %v628
    %v710 = vunpack.c.l.b16 %v629
    %v711 = vunpack.c.h.b16 %v629
    %v712 = vunpack.c.l.b16 %v630
    %v713 = vunpack.c.h.b16 %v630
    %v714 = vunpack.c.l.b16 %v631
    %v715 = vunpack.c.h.b16 %v631
    %v716 = vunpack.c.l.b16 %v632
    %v717 = vunpack.c.h.b16 %v632
    %v718 = vunpack.c.l.b16 %v633
    %v719 = vunpack.c.h.b16 %v633
    %v720 = vunpack.c.l.b16 %v634
    %v721 = vunpack.c.h.b16 %v634
    %v722 = vunpack.c.l.b16 %v635
    %v723 = vunpack.c.h.b16 %v635
    %v724 = vunpack.c.l.b16 %v636
    %v725 = vunpack.c.h.b16 %v636
    %v726 = vunpack.c.l.b16 %v637
    %v727 = vunpack.c.h.b16 %v637
    %v728 = vunpack.c.l.b16 %v638
    %v729 = vunpack.c.h.b16 %v638
    %v730 = vunpack.c.l.b16 %v639
    %v731 = vunpack.c.h.b16 %v639
    %v732 = vunpack.c.l.b16 %v640
    %v733 = vunpack.c.h.b16 %v640
    %v734 = vunpack.c.l.b16 %v641
    %v735 = vunpack.c.h.b16 %v641
    %v736 = vunpack.c.l.b16 %v642
    %v737 = vunpack.c.h.b16 %v642
    %v738 = vunpack.c.l.b16 %v643
    %v739 = vunpack.c.h.b16 %v643
    %v740 = vpack.c.b16 %v680, %v676
    %v741 = vpack.c.b16 %v681, %v677
    %v742 = vpack.c.b16 %v682, %v678
    %v743 = vpack.c.b16 %v683, %v679
    %v744 = vpack.c.b16 %v688, %v684
    %v745 = vpack.c.b16 %v689, %v685
    %v746 = vpack.c.b16 %v690, %v686
    %v747 = vpack.c.b16 %v691, %v687
    %v748 = vpack.c.b16 %v696, %v692
    %v749 = vpack.c.b16 %v697, %v693
    %v750 = vpack.c.b16 %v698, %v694
    %v751 = vpack.c.b16 %v699, %v695
    %v752 = vpack.c.b16 %v704, %v700
    %v753 = vpack.c.b16 %v705, %v701
    %v754 = vpack.c.b16 %v706, %v702
    %v755 = vpack.c.b16 %v707, %v703
    %v756 = vpack.c.b16 %v712, %v708
    %v757 = vpack.c.b16 %v713, %v709
    %v758 = vpack.c.b16 %v714, %v710
    %v759 = vpack.c.b16 %v715, %v711
    %v760 = vpack.c.b16 %v720, %v716
    %v761 = vpack.c.b16 %v721, %v717
    %v762 = vpack.c.b16 %v722, %v718
    %v763 = vpack.c.b16 %v723, %v719
    %v764 = vpack.c.b16 %v728, %v724
    %v765 = vpack.c.b16 %v729, %v725
    %v766 = vpack.c.b16 %v730, %v726
    %v767 = vpack.c.b16 %v731, %v727
    %v768 = vpack.c.b16 %v736, %v732
    %v769 = vpack.c.b16 %v737, %v733
    %v770 = vpack.c.b16 %v738, %v734
    %v771 = vpack.c.b16 %v739, %v735
    %804 = vmatprep.subr.bf16.mxu0 %v741
    %805 = vmatpush1.bf16.msra.mxu0 %v740
    %806 = vmatprep.subr.bf16.mxu0 %v745
    %807 = vmatpush1.bf16.msra.mxu0 %v744
    %808 = vmatprep.subr.bf16.mxu0 %v749
    %809 = vmatpush1.bf16.msra.mxu0 %v748
    %810 = vmatprep.subr.bf16.mxu0 %v753
    %811 = vmatpush1.bf16.msra.mxu0 %v752
    %812 = vmatprep.subr.bf16.mxu0 %v757
    %813 = vmatpush1.bf16.msra.mxu0 %v756
    %814 = vmatprep.subr.bf16.mxu0 %v761
    %815 = vmatpush1.bf16.msra.mxu0 %v760
    %816 = vmatprep.subr.bf16.mxu0 %v765
    %817 = vmatpush1.bf16.msra.mxu0 %v764
    %818 = vmatprep.subr.bf16.mxu0 %v769
    %819 = vmatpush1.bf16.msra.mxu0 %v768
    %820 = vmatprep.subr.bf16.mxu0 0
    %821 = vmatpush1.bf16.msra.mxu0 0
    %822 = vmatprep.subr.bf16.mxu0 0
    %823 = vmatpush1.bf16.msra.mxu0 0
    %824 = vmatprep.subr.bf16.mxu0 0
    %825 = vmatpush1.bf16.msra.mxu0 0
    %826 = vmatprep.subr.bf16.mxu0 0
    %827 = vmatpush1.bf16.msra.mxu0 0
    %828 = vmatprep.subr.bf16.mxu0 0
    %829 = vmatpush1.bf16.msra.mxu0 0
    %830 = vmatprep.subr.bf16.mxu0 0
    %831 = vmatpush1.bf16.msra.mxu0 0
    %832 = vmatprep.subr.bf16.mxu0 0
    %833 = vmatpush1.bf16.msra.mxu0 0
    %834 = vmatprep.subr.bf16.mxu0 0
    %835 = vmatpush1.bf16.msra.mxu0 0
    %836 = vmatprep.mubr.bf16.mxu0 0
    %837 = vmatmul.mubr.bf16.gmra.mrb[0].mxu0 %v611
    %v838 = vpop.f32.mrb[0].mxu0
    %v839 = vadd.f32 0.0, %v838
    %v840 = vpop.f32.mrb[0].mxu0
    %v841 = vadd.f32 0.0, %v840
    %v842 = vpop.f32.mrb[0].mxu0
    %v843 = vpop.f32.mrb[0].mxu0
    %844 = vdwg.mxu0
    %845 = vmatprep.subr.bf16.mxu0 %v743
    %846 = vmatpush1.bf16.msra.mxu0 %v742
    %847 = vmatprep.subr.bf16.mxu0 %v747
    %848 = vmatpush1.bf16.msra.mxu0 %v746
    %849 = vmatprep.subr.bf16.mxu0 %v751
    %850 = vmatpush1.bf16.msra.mxu0 %v750
    %851 = vmatprep.subr.bf16.mxu0 %v755
    %852 = vmatpush1.bf16.msra.mxu0 %v754
    %853 = vmatprep.subr.bf16.mxu0 %v759
    %854 = vmatpush1.bf16.msra.mxu0 %v758
    %855 = vmatprep.subr.bf16.mxu0 %v763
    %856 = vmatpush1.bf16.msra.mxu0 %v762
    %857 = vmatprep.subr.bf16.mxu0 %v767
    %858 = vmatpush1.bf16.msra.mxu0 %v766
    %859 = vmatprep.subr.bf16.mxu0 %v771
    %860 = vmatpush1.bf16.msra.mxu0 %v770
    %861 = vmatprep.subr.bf16.mxu0 0
    %862 = vmatpush1.bf16.msra.mxu0 0
    %863 = vmatprep.subr.bf16.mxu0 0
    %864 = vmatpush1.bf16.msra.mxu0 0
    %865 = vmatprep.subr.bf16.mxu0 0
    %866 = vmatpush1.bf16.msra.mxu0 0
    %867 = vmatprep.subr.bf16.mxu0 0
    %868 = vmatpush1.bf16.msra.mxu0 0
    %869 = vmatprep.subr.bf16.mxu0 0
    %870 = vmatpush1.bf16.msra.mxu0 0
    %871 = vmatprep.subr.bf16.mxu0 0
    %872 = vmatpush1.bf16.msra.mxu0 0
    %873 = vmatprep.subr.bf16.mxu0 0
    %874 = vmatpush1.bf16.msra.mxu0 0
    %875 = vmatprep.subr.bf16.mxu0 0
    %876 = vmatpush1.bf16.msra.mxu0 0
    %877 = vmatprep.mubr.bf16.mxu0 0
    %878 = vmatmul.mubr.bf16.gmra.mrb[0].mxu0 %v611
    %v879 = vpop.f32.mrb[0].mxu0
    %v880 = vadd.f32 0.0, %v879
    %v881 = vpop.f32.mrb[0].mxu0
    %v882 = vadd.f32 0.0, %v881
    %v883 = vpop.f32.mrb[0].mxu0
    %v884 = vpop.f32.mrb[0].mxu0
    %885 = vdwg.mxu0
    %v886 = vadd.f32 %v607, %v839
    %v887 = vadd.f32 %v608, %v841
    %v888 = vadd.f32 %v609, %v880
    %v889 = vadd.f32 %v610, %v882
    %v890 = vxor.u32 %v886, 2147483648
    %v891 = vmul.f32 %v890, 1.442695
    %v892 = vpow.pop %v891
    %v893 = vadd.f32 %v892, 1.0
    %v894 = vrcp.pop %v893
    %v895 = vmul.f32 1.0, %v894
    %v896 = vxor.u32 %v887, 2147483648
    %v897 = vmul.f32 %v896, 1.442695
    %v898 = vpow.pop %v897
    %v899 = vadd.f32 %v898, 1.0
    %v900 = vrcp.pop %v899
    %v901 = vmul.f32 1.0, %v900
    %v902 = vtanh.pop %v888
    %v903 = vxor.u32 %v889, 2147483648
    %v904 = vmul.f32 %v903, 1.442695
    %v905 = vpow.pop %v904
    %v906 = vadd.f32 %v905, 1.0
    %v907 = vrcp.pop %v906
    %v908 = vmul.f32 1.0, %v907
    %v909 = vmul.f32 %v901, %v606
    %v910 = vmul.f32 %v895, %v902
    %v911 = vadd.f32 %v909, %v910
    %v912 = vtanh.pop %v911
    %v913 = vmul.f32 %v908, %v912
    %v914 = vpack.c.bf16 %v913, %v913
    %915 = vst [vmem:[%s6] sm:$0xf] %v914
    %s916 = scalar_lea.vmem [#allocation2], 32
    %v917 = vld [vmem:[%s916] sm:$0xff]
    %v918 = vld [vmem:[%s916 + $0x8] sm:$0xff]
    %v919 = vld [vmem:[%s916 + $0x10] sm:$0xff]
    %v920 = vld [vmem:[%s916 + $0x18] sm:$0xff]
    %v921 = vld [vmem:[%s2] sm:$0xff]
    %v922 = vld [vmem:[%s2 + $0x8] sm:$0xff]
    %v923 = vld [vmem:[%s2 + $0x10] sm:$0xff]
    %v924 = vld [vmem:[%s2 + $0x18] sm:$0xff]
    %v925 = vld [vmem:[%s2 + $0x20] sm:$0xff]
    %v926 = vld [vmem:[%s2 + $0x28] sm:$0xff]
    %v927 = vld [vmem:[%s2 + $0x30] sm:$0xff]
    %v928 = vld [vmem:[%s2 + $0x38] sm:$0xff]
    %v929 = vld [vmem:[%s2 + $0x40] sm:$0xff]
    %v930 = vld [vmem:[%s2 + $0x48] sm:$0xff]
    %v931 = vld [vmem:[%s2 + $0x50] sm:$0xff]
    %v932 = vld [vmem:[%s2 + $0x58] sm:$0xff]
    %v933 = vld [vmem:[%s2 + $0x60] sm:$0xff]
    %v934 = vld [vmem:[%s2 + $0x68] sm:$0xff]
    %v935 = vld [vmem:[%s2 + $0x70] sm:$0xff]
    %v936 = vld [vmem:[%s2 + $0x78] sm:$0xff]
    %v937 = vld [vmem:[%s2 + $0x80] sm:$0xff]
    %v938 = vld [vmem:[%s2 + $0x88] sm:$0xff]
    %v939 = vld [vmem:[%s2 + $0x90] sm:$0xff]
    %v940 = vld [vmem:[%s2 + $0x98] sm:$0xff]
    %v941 = vld [vmem:[%s2 + $0xa0] sm:$0xff]
    %v942 = vld [vmem:[%s2 + $0xa8] sm:$0xff]
    %v943 = vld [vmem:[%s2 + $0xb0] sm:$0xff]
    %v944 = vld [vmem:[%s2 + $0xb8] sm:$0xff]
    %v945 = vld [vmem:[%s2 + $0xc0] sm:$0xff]
    %v946 = vld [vmem:[%s2 + $0xc8] sm:$0xff]
    %v947 = vld [vmem:[%s2 + $0xd0] sm:$0xff]
    %v948 = vld [vmem:[%s2 + $0xd8] sm:$0xff]
    %v949 = vld [vmem:[%s2 + $0xe0] sm:$0xff]
    %v950 = vld [vmem:[%s2 + $0xe8] sm:$0xff]
    %v951 = vld [vmem:[%s2 + $0xf0] sm:$0xff]
    %v952 = vld [vmem:[%s2 + $0xf8] sm:$0xff]
    %v985 = vunpack.c.l.b16 %v921
    %v986 = vunpack.c.h.b16 %v921
    %v987 = vunpack.c.l.b16 %v922
    %v988 = vunpack.c.h.b16 %v922
    %v989 = vunpack.c.l.b16 %v923
    %v990 = vunpack.c.h.b16 %v923
    %v991 = vunpack.c.l.b16 %v924
    %v992 = vunpack.c.h.b16 %v924
    %v993 = vunpack.c.l.b16 %v925
    %v994 = vunpack.c.h.b16 %v925
    %v995 = vunpack.c.l.b16 %v926
    %v996 = vunpack.c.h.b16 %v926
    %v997 = vunpack.c.l.b16 %v927
    %v998 = vunpack.c.h.b16 %v927
    %v999 = vunpack.c.l.b16 %v928
    %v1000 = vunpack.c.h.b16 %v928
    %v1001 = vunpack.c.l.b16 %v929
    %v1002 = vunpack.c.h.b16 %v929
    %v1003 = vunpack.c.l.b16 %v930
    %v1004 = vunpack.c.h.b16 %v930
    %v1005 = vunpack.c.l.b16 %v931
    %v1006 = vunpack.c.h.b16 %v931
    %v1007 = vunpack.c.l.b16 %v932
    %v1008 = vunpack.c.h.b16 %v932
    %v1009 = vunpack.c.l.b16 %v933
    %v1010 = vunpack.c.h.b16 %v933
    %v1011 = vunpack.c.l.b16 %v934
    %v1012 = vunpack.c.h.b16 %v934
    %v1013 = vunpack.c.l.b16 %v935
    %v1014 = vunpack.c.h.b16 %v935
    %v1015 = vunpack.c.l.b16 %v936
    %v1016 = vunpack.c.h.b16 %v936
    %v1017 = vunpack.c.l.b16 %v937
    %v1018 = vunpack.c.h.b16 %v937
    %v1019 = vunpack.c.l.b16 %v938
    %v1020 = vunpack.c.h.b16 %v938
    %v1021 = vunpack.c.l.b16 %v939
    %v1022 = vunpack.c.h.b16 %v939
    %v1023 = vunpack.c.l.b16 %v940
    %v1024 = vunpack.c.h.b16 %v940
    %v1025 = vunpack.c.l.b16 %v941
    %v1026 = vunpack.c.h.b16 %v941
    %v1027 = vunpack.c.l.b16 %v942
    %v1028 = vunpack.c.h.b16 %v942
    %v1029 = vunpack.c.l.b16 %v943
    %v1030 = vunpack.c.h.b16 %v943
    %v1031 = vunpack.c.l.b16 %v944
    %v1032 = vunpack.c.h.b16 %v944
    %v1033 = vunpack.c.l.b16 %v945
    %v1034 = vunpack.c.h.b16 %v945
    %v1035 = vunpack.c.l.b16 %v946
    %v1036 = vunpack.c.h.b16 %v946
    %v1037 = vunpack.c.l.b16 %v947
    %v1038 = vunpack.c.h.b16 %v947
    %v1039 = vunpack.c.l.b16 %v948
    %v1040 = vunpack.c.h.b16 %v948
    %v1041 = vunpack.c.l.b16 %v949
    %v1042 = vunpack.c.h.b16 %v949
    %v1043 = vunpack.c.l.b16 %v950
    %v1044 = vunpack.c.h.b16 %v950
    %v1045 = vunpack.c.l.b16 %v951
    %v1046 = vunpack.c.h.b16 %v951
    %v1047 = vunpack.c.l.b16 %v952
    %v1048 = vunpack.c.h.b16 %v952
    %v1049 = vpack.c.b16 %v989, %v985
    %v1050 = vpack.c.b16 %v990, %v986
    %v1051 = vpack.c.b16 %v991, %v987
    %v1052 = vpack.c.b16 %v992, %v988
    %v1053 = vpack.c.b16 %v997, %v993
    %v1054 = vpack.c.b16 %v998, %v994
    %v1055 = vpack.c.b16 %v999, %v995
    %v1056 = vpack.c.b16 %v1000, %v996
    %v1057 = vpack.c.b16 %v1005, %v1001
    %v1058 = vpack.c.b16 %v1006, %v1002
    %v1059 = vpack.c.b16 %v1007, %v1003
    %v1060 = vpack.c.b16 %v1008, %v1004
    %v1061 = vpack.c.b16 %v1013, %v1009
    %v1062 = vpack.c.b16 %v1014, %v1010
    %v1063 = vpack.c.b16 %v1015, %v1011
    %v1064 = vpack.c.b16 %v1016, %v1012
    %v1065 = vpack.c.b16 %v1021, %v1017
    %v1066 = vpack.c.b16 %v1022, %v1018
    %v1067 = vpack.c.b16 %v1023, %v1019
    %v1068 = vpack.c.b16 %v1024, %v1020
    %v1069 = vpack.c.b16 %v1029, %v1025
    %v1070 = vpack.c.b16 %v1030, %v1026
    %v1071 = vpack.c.b16 %v1031, %v1027
    %v1072 = vpack.c.b16 %v1032, %v1028
    %v1073 = vpack.c.b16 %v1037, %v1033
    %v1074 = vpack.c.b16 %v1038, %v1034
    %v1075 = vpack.c.b16 %v1039, %v1035
    %v1076 = vpack.c.b16 %v1040, %v1036
    %v1077 = vpack.c.b16 %v1045, %v1041
    %v1078 = vpack.c.b16 %v1046, %v1042
    %v1079 = vpack.c.b16 %v1047, %v1043
    %v1080 = vpack.c.b16 %v1048, %v1044
    %1113 = vmatprep.subr.bf16.mxu0 %v1050
    %1114 = vmatpush1.bf16.msra.mxu0 %v1049
    %1115 = vmatprep.subr.bf16.mxu0 %v1054
    %1116 = vmatpush1.bf16.msra.mxu0 %v1053
    %1117 = vmatprep.subr.bf16.mxu0 %v1058
    %1118 = vmatpush1.bf16.msra.mxu0 %v1057
    %1119 = vmatprep.subr.bf16.mxu0 %v1062
    %1120 = vmatpush1.bf16.msra.mxu0 %v1061
    %1121 = vmatprep.subr.bf16.mxu0 %v1066
    %1122 = vmatpush1.bf16.msra.mxu0 %v1065
    %1123 = vmatprep.subr.bf16.mxu0 %v1070
    %1124 = vmatpush1.bf16.msra.mxu0 %v1069
    %1125 = vmatprep.subr.bf16.mxu0 %v1074
    %1126 = vmatpush1.bf16.msra.mxu0 %v1073
    %1127 = vmatprep.subr.bf16.mxu0 %v1078
    %1128 = vmatpush1.bf16.msra.mxu0 %v1077
    %1129 = vmatprep.subr.bf16.mxu0 0
    %1130 = vmatpush1.bf16.msra.mxu0 0
    %1131 = vmatprep.subr.bf16.mxu0 0
    %1132 = vmatpush1.bf16.msra.mxu0 0
    %1133 = vmatprep.subr.bf16.mxu0 0
    %1134 = vmatpush1.bf16.msra.mxu0 0
    %1135 = vmatprep.subr.bf16.mxu0 0
    %1136 = vmatpush1.bf16.msra.mxu0 0
    %1137 = vmatprep.subr.bf16.mxu0 0
    %1138 = vmatpush1.bf16.msra.mxu0 0
    %1139 = vmatprep.subr.bf16.mxu0 0
    %1140 = vmatpush1.bf16.msra.mxu0 0
    %1141 = vmatprep.subr.bf16.mxu0 0
    %1142 = vmatpush1.bf16.msra.mxu0 0
    %1143 = vmatprep.subr.bf16.mxu0 0
    %1144 = vmatpush1.bf16.msra.mxu0 0
    %1145 = vmatprep.mubr.bf16.mxu0 0
    %1146 = vmatmul.mubr.bf16.gmra.mrb[0].mxu0 %v914
    %v1147 = vpop.f32.mrb[0].mxu0
    %v1148 = vadd.f32 0.0, %v1147
    %v1149 = vpop.f32.mrb[0].mxu0
    %v1150 = vadd.f32 0.0, %v1149
    %v1151 = vpop.f32.mrb[0].mxu0
    %v1152 = vpop.f32.mrb[0].mxu0
    %1153 = vdwg.mxu0
    %1154 = vmatprep.subr.bf16.mxu0 %v1052
    %1155 = vmatpush1.bf16.msra.mxu0 %v1051
    %1156 = vmatprep.subr.bf16.mxu0 %v1056
    %1157 = vmatpush1.bf16.msra.mxu0 %v1055
    %1158 = vmatprep.subr.bf16.mxu0 %v1060
    %1159 = vmatpush1.bf16.msra.mxu0 %v1059
    %1160 = vmatprep.subr.bf16.mxu0 %v1064
    %1161 = vmatpush1.bf16.msra.mxu0 %v1063
    %1162 = vmatprep.subr.bf16.mxu0 %v1068
    %1163 = vmatpush1.bf16.msra.mxu0 %v1067
    %1164 = vmatprep.subr.bf16.mxu0 %v1072
    %1165 = vmatpush1.bf16.msra.mxu0 %v1071
    %1166 = vmatprep.subr.bf16.mxu0 %v1076
    %1167 = vmatpush1.bf16.msra.mxu0 %v1075
    %1168 = vmatprep.subr.bf16.mxu0 %v1080
    %1169 = vmatpush1.bf16.msra.mxu0 %v1079
    %1170 = vmatprep.subr.bf16.mxu0 0
    %1171 = vmatpush1.bf16.msra.mxu0 0
    %1172 = vmatprep.subr.bf16.mxu0 0
    %1173 = vmatpush1.bf16.msra.mxu0 0
    %1174 = vmatprep.subr.bf16.mxu0 0
    %1175 = vmatpush1.bf16.msra.mxu0 0
    %1176 = vmatprep.subr.bf16.mxu0 0
    %1177 = vmatpush1.bf16.msra.mxu0 0
    %1178 = vmatprep.subr.bf16.mxu0 0
    %1179 = vmatpush1.bf16.msra.mxu0 0
    %1180 = vmatprep.subr.bf16.mxu0 0
    %1181 = vmatpush1.bf16.msra.mxu0 0
    %1182 = vmatprep.subr.bf16.mxu0 0
    %1183 = vmatpush1.bf16.msra.mxu0 0
    %1184 = vmatprep.subr.bf16.mxu0 0
    %1185 = vmatpush1.bf16.msra.mxu0 0
    %1186 = vmatprep.mubr.bf16.mxu0 0
    %1187 = vmatmul.mubr.bf16.gmra.mrb[0].mxu0 %v914
    %v1188 = vpop.f32.mrb[0].mxu0
    %v1189 = vadd.f32 0.0, %v1188
    %v1190 = vpop.f32.mrb[0].mxu0
    %v1191 = vadd.f32 0.0, %v1190
    %v1192 = vpop.f32.mrb[0].mxu0
    %v1193 = vpop.f32.mrb[0].mxu0
    %1194 = vdwg.mxu0
    %v1195 = vadd.f32 %v917, %v1148
    %v1196 = vadd.f32 %v918, %v1150
    %v1197 = vadd.f32 %v919, %v1189
    %v1198 = vadd.f32 %v920, %v1191
    %v1199 = vxor.u32 %v1195, 2147483648
    %v1200 = vmul.f32 %v1199, 1.442695
    %v1201 = vpow.pop %v1200
    %v1202 = vadd.f32 %v1201, 1.0
    %v1203 = vrcp.pop %v1202
    %v1204 = vmul.f32 1.0, %v1203
    %v1205 = vxor.u32 %v1196, 2147483648
    %v1206 = vmul.f32 %v1205, 1.442695
    %v1207 = vpow.pop %v1206
    %v1208 = vadd.f32 %v1207, 1.0
    %v1209 = vrcp.pop %v1208
    %v1210 = vmul.f32 1.0, %v1209
    %v1211 = vtanh.pop %v1197
    %v1212 = vxor.u32 %v1198, 2147483648
    %v1213 = vmul.f32 %v1212, 1.442695
    %v1214 = vpow.pop %v1213
    %v1215 = vadd.f32 %v1214, 1.0
    %v1216 = vrcp.pop %v1215
    %v1217 = vmul.f32 1.0, %v1216
    %v1218 = vmul.f32 %v1210, %v911
    %v1219 = vmul.f32 %v1204, %v1211
    %v1220 = vadd.f32 %v1218, %v1219
    %v1221 = vtanh.pop %v1220
    %v1222 = vmul.f32 %v1217, %v1221
    %v1223 = vpack.c.bf16 %v1222, %v1222
    %s1224 = scalar_lea.vmem %s6, 4
    %1225 = vst [vmem:[%s1224] sm:$0xf] %v1223
    %s1226 = scalar_lea.vmem [#allocation2], 64
    %v1227 = vld [vmem:[%s1226] sm:$0xff]
    %v1228 = vld [vmem:[%s1226 + $0x8] sm:$0xff]
    %v1229 = vld [vmem:[%s1226 + $0x10] sm:$0xff]
    %v1230 = vld [vmem:[%s1226 + $0x18] sm:$0xff]
    %v1231 = vld [vmem:[%s2] sm:$0xff]
    %v1232 = vld [vmem:[%s2 + $0x8] sm:$0xff]
    %v1233 = vld [vmem:[%s2 + $0x10] sm:$0xff]
    %v1234 = vld [vmem:[%s2 + $0x18] sm:$0xff]
    %v1235 = vld [vmem:[%s2 + $0x20] sm:$0xff]
    %v1236 = vld [vmem:[%s2 + $0x28] sm:$0xff]
    %v1237 = vld [vmem:[%s2 + $0x30] sm:$0xff]
    %v1238 = vld [vmem:[%s2 + $0x38] sm:$0xff]
    %v1239 = vld [vmem:[%s2 + $0x40] sm:$0xff]
    %v1240 = vld [vmem:[%s2 + $0x48] sm:$0xff]
    %v1241 = vld [vmem:[%s2 + $0x50] sm:$0xff]
    %v1242 = vld [vmem:[%s2 + $0x58] sm:$0xff]
    %v1243 = vld [vmem:[%s2 + $0x60] sm:$0xff]
    %v1244 = vld [vmem:[%s2 + $0x68] sm:$0xff]
    %v1245 = vld [vmem:[%s2 + $0x70] sm:$0xff]
    %v1246 = vld [vmem:[%s2 + $0x78] sm:$0xff]
    %v1247 = vld [vmem:[%s2 + $0x80] sm:$0xff]
    %v1248 = vld [vmem:[%s2 + $0x88] sm:$0xff]
    %v1249 = vld [vmem:[%s2 + $0x90] sm:$0xff]
    %v1250 = vld [vmem:[%s2 + $0x98] sm:$0xff]
    %v1251 = vld [vmem:[%s2 + $0xa0] sm:$0xff]
    %v1252 = vld [vmem:[%s2 + $0xa8] sm:$0xff]
    %v1253 = vld [vmem:[%s2 + $0xb0] sm:$0xff]
    %v1254 = vld [vmem:[%s2 + $0xb8] sm:$0xff]
    %v1255 = vld [vmem:[%s2 + $0xc0] sm:$0xff]
    %v1256 = vld [vmem:[%s2 + $0xc8] sm:$0xff]
    %v1257 = vld [vmem:[%s2 + $0xd0] sm:$0xff]
    %v1258 = vld [vmem:[%s2 + $0xd8] sm:$0xff]
    %v1259 = vld [vmem:[%s2 + $0xe0] sm:$0xff]
    %v1260 = vld [vmem:[%s2 + $0xe8] sm:$0xff]
    %v1261 = vld [vmem:[%s2 + $0xf0] sm:$0xff]
    %v1262 = vld [vmem:[%s2 + $0xf8] sm:$0xff]
    %v1295 = vunpack.c.l.b16 %v1231
    %v1296 = vunpack.c.h.b16 %v1231
    %v1297 = vunpack.c.l.b16 %v1232
    %v1298 = vunpack.c.h.b16 %v1232
    %v1299 = vunpack.c.l.b16 %v1233
    %v1300 = vunpack.c.h.b16 %v1233
    %v1301 = vunpack.c.l.b16 %v1234
    %v1302 = vunpack.c.h.b16 %v1234
    %v1303 = vunpack.c.l.b16 %v1235
    %v1304 = vunpack.c.h.b16 %v1235
    %v1305 = vunpack.c.l.b16 %v1236
    %v1306 = vunpack.c.h.b16 %v1236
    %v1307 = vunpack.c.l.b16 %v1237
    %v1308 = vunpack.c.h.b16 %v1237
    %v1309 = vunpack.c.l.b16 %v1238
    %v1310 = vunpack.c.h.b16 %v1238
    %v1311 = vunpack.c.l.b16 %v1239
    %v1312 = vunpack.c.h.b16 %v1239
    %v1313 = vunpack.c.l.b16 %v1240
    %v1314 = vunpack.c.h.b16 %v1240
    %v1315 = vunpack.c.l.b16 %v1241
    %v1316 = vunpack.c.h.b16 %v1241
    %v1317 = vunpack.c.l.b16 %v1242
    %v1318 = vunpack.c.h.b16 %v1242
    %v1319 = vunpack.c.l.b16 %v1243
    %v1320 = vunpack.c.h.b16 %v1243
    %v1321 = vunpack.c.l.b16 %v1244
    %v1322 = vunpack.c.h.b16 %v1244
    %v1323 = vunpack.c.l.b16 %v1245
    %v1324 = vunpack.c.h.b16 %v1245
    %v1325 = vunpack.c.l.b16 %v1246
    %v1326 = vunpack.c.h.b16 %v1246
    %v1327 = vunpack.c.l.b16 %v1247
    %v1328 = vunpack.c.h.b16 %v1247
    %v1329 = vunpack.c.l.b16 %v1248
    %v1330 = vunpack.c.h.b16 %v1248
    %v1331 = vunpack.c.l.b16 %v1249
    %v1332 = vunpack.c.h.b16 %v1249
    %v1333 = vunpack.c.l.b16 %v1250
    %v1334 = vunpack.c.h.b16 %v1250
    %v1335 = vunpack.c.l.b16 %v1251
    %v1336 = vunpack.c.h.b16 %v1251
    %v1337 = vunpack.c.l.b16 %v1252
    %v1338 = vunpack.c.h.b16 %v1252
    %v1339 = vunpack.c.l.b16 %v1253
    %v1340 = vunpack.c.h.b16 %v1253
    %v1341 = vunpack.c.l.b16 %v1254
    %v1342 = vunpack.c.h.b16 %v1254
    %v1343 = vunpack.c.l.b16 %v1255
    %v1344 = vunpack.c.h.b16 %v1255
    %v1345 = vunpack.c.l.b16 %v1256
    %v1346 = vunpack.c.h.b16 %v1256
    %v1347 = vunpack.c.l.b16 %v1257
    %v1348 = vunpack.c.h.b16 %v1257
    %v1349 = vunpack.c.l.b16 %v1258
    %v1350 = vunpack.c.h.b16 %v1258
    %v1351 = vunpack.c.l.b16 %v1259
    %v1352 = vunpack.c.h.b16 %v1259
    %v1353 = vunpack.c.l.b16 %v1260
    %v1354 = vunpack.c.h.b16 %v1260
    %v1355 = vunpack.c.l.b16 %v1261
    %v1356 = vunpack.c.h.b16 %v1261
    %v1357 = vunpack.c.l.b16 %v1262
    %v1358 = vunpack.c.h.b16 %v1262
    %v1359 = vpack.c.b16 %v1299, %v1295
    %v1360 = vpack.c.b16 %v1300, %v1296
    %v1361 = vpack.c.b16 %v1301, %v1297
    %v1362 = vpack.c.b16 %v1302, %v1298
    %v1363 = vpack.c.b16 %v1307, %v1303
    %v1364 = vpack.c.b16 %v1308, %v1304
    %v1365 = vpack.c.b16 %v1309, %v1305
    %v1366 = vpack.c.b16 %v1310, %v1306
    %v1367 = vpack.c.b16 %v1315, %v1311
    %v1368 = vpack.c.b16 %v1316, %v1312
    %v1369 = vpack.c.b16 %v1317, %v1313
    %v1370 = vpack.c.b16 %v1318, %v1314
    %v1371 = vpack.c.b16 %v1323, %v1319
    %v1372 = vpack.c.b16 %v1324, %v1320
    %v1373 = vpack.c.b16 %v1325, %v1321
    %v1374 = vpack.c.b16 %v1326, %v1322
    %v1375 = vpack.c.b16 %v1331, %v1327
    %v1376 = vpack.c.b16 %v1332, %v1328
    %v1377 = vpack.c.b16 %v1333, %v1329
    %v1378 = vpack.c.b16 %v1334, %v1330
    %v1379 = vpack.c.b16 %v1339, %v1335
    %v1380 = vpack.c.b16 %v1340, %v1336
    %v1381 = vpack.c.b16 %v1341, %v1337
    %v1382 = vpack.c.b16 %v1342, %v1338
    %v1383 = vpack.c.b16 %v1347, %v1343
    %v1384 = vpack.c.b16 %v1348, %v1344
    %v1385 = vpack.c.b16 %v1349, %v1345
    %v1386 = vpack.c.b16 %v1350, %v1346
    %v1387 = vpack.c.b16 %v1355, %v1351
    %v1388 = vpack.c.b16 %v1356, %v1352
    %v1389 = vpack.c.b16 %v1357, %v1353
    %v1390 = vpack.c.b16 %v1358, %v1354
    %1423 = vmatprep.subr.bf16.mxu0 %v1360
    %1424 = vmatpush1.bf16.msra.mxu0 %v1359
    %1425 = vmatprep.subr.bf16.mxu0 %v1364
    %1426 = vmatpush1.bf16.msra.mxu0 %v1363
    %1427 = vmatprep.subr.bf16.mxu0 %v1368
    %1428 = vmatpush1.bf16.msra.mxu0 %v1367
    %1429 = vmatprep.subr.bf16.mxu0 %v1372
    %1430 = vmatpush1.bf16.msra.mxu0 %v1371
    %1431 = vmatprep.subr.bf16.mxu0 %v1376
    %1432 = vmatpush1.bf16.msra.mxu0 %v1375
    %1433 = vmatprep.subr.bf16.mxu0 %v1380
    %1434 = vmatpush1.bf16.msra.mxu0 %v1379
    %1435 = vmatprep.subr.bf16.mxu0 %v1384
    %1436 = vmatpush1.bf16.msra.mxu0 %v1383
    %1437 = vmatprep.subr.bf16.mxu0 %v1388
    %1438 = vmatpush1.bf16.msra.mxu0 %v1387
    %1439 = vmatprep.subr.bf16.mxu0 0
    %1440 = vmatpush1.bf16.msra.mxu0 0
    %1441 = vmatprep.subr.bf16.mxu0 0
    %1442 = vmatpush1.bf16.msra.mxu0 0
    %1443 = vmatprep.subr.bf16.mxu0 0
    %1444 = vmatpush1.bf16.msra.mxu0 0
    %1445 = vmatprep.subr.bf16.mxu0 0
    %1446 = vmatpush1.bf16.msra.mxu0 0
    %1447 = vmatprep.subr.bf16.mxu0 0
    %1448 = vmatpush1.bf16.msra.mxu0 0
    %1449 = vmatprep.subr.bf16.mxu0 0
    %1450 = vmatpush1.bf16.msra.mxu0 0
    %1451 = vmatprep.subr.bf16.mxu0 0
    %1452 = vmatpush1.bf16.msra.mxu0 0
    %1453 = vmatprep.subr.bf16.mxu0 0
    %1454 = vmatpush1.bf16.msra.mxu0 0
    %1455 = vmatprep.mubr.bf16.mxu0 0
    %1456 = vmatmul.mubr.bf16.gmra.mrb[0].mxu0 %v1223
    %v1457 = vpop.f32.mrb[0].mxu0
    %v1458 = vadd.f32 0.0, %v1457
    %v1459 = vpop.f32.mrb[0].mxu0
    %v1460 = vadd.f32 0.0, %v1459
    %v1461 = vpop.f32.mrb[0].mxu0
    %v1462 = vpop.f32.mrb[0].mxu0
    %1463 = vdwg.mxu0
    %1464 = vmatprep.subr.bf16.mxu0 %v1362
    %1465 = vmatpush1.bf16.msra.mxu0 %v1361
    %1466 = vmatprep.subr.bf16.mxu0 %v1366
    %1467 = vmatpush1.bf16.msra.mxu0 %v1365
    %1468 = vmatprep.subr.bf16.mxu0 %v1370
    %1469 = vmatpush1.bf16.msra.mxu0 %v1369
    %1470 = vmatprep.subr.bf16.mxu0 %v1374
    %1471 = vmatpush1.bf16.msra.mxu0 %v1373
    %1472 = vmatprep.subr.bf16.mxu0 %v1378
    %1473 = vmatpush1.bf16.msra.mxu0 %v1377
    %1474 = vmatprep.subr.bf16.mxu0 %v1382
    %1475 = vmatpush1.bf16.msra.mxu0 %v1381
    %1476 = vmatprep.subr.bf16.mxu0 %v1386
    %1477 = vmatpush1.bf16.msra.mxu0 %v1385
    %1478 = vmatprep.subr.bf16.mxu0 %v1390
    %1479 = vmatpush1.bf16.msra.mxu0 %v1389
    %1480 = vmatprep.subr.bf16.mxu0 0
    %1481 = vmatpush1.bf16.msra.mxu0 0
    %1482 = vmatprep.subr.bf16.mxu0 0
    %1483 = vmatpush1.bf16.msra.mxu0 0
    %1484 = vmatprep.subr.bf16.mxu0 0
    %1485 = vmatpush1.bf16.msra.mxu0 0
    %1486 = vmatprep.subr.bf16.mxu0 0
    %1487 = vmatpush1.bf16.msra.mxu0 0
    %1488 = vmatprep.subr.bf16.mxu0 0
    %1489 = vmatpush1.bf16.msra.mxu0 0
    %1490 = vmatprep.subr.bf16.mxu0 0
    %1491 = vmatpush1.bf16.msra.mxu0 0
    %1492 = vmatprep.subr.bf16.mxu0 0
    %1493 = vmatpush1.bf16.msra.mxu0 0
    %1494 = vmatprep.subr.bf16.mxu0 0
    %1495 = vmatpush1.bf16.msra.mxu0 0
    %1496 = vmatprep.mubr.bf16.mxu0 0
    %1497 = vmatmul.mubr.bf16.gmra.mrb[0].mxu0 %v1223
    %v1498 = vpop.f32.mrb[0].mxu0
    %v1499 = vadd.f32 0.0, %v1498
    %v1500 = vpop.f32.mrb[0].mxu0
    %v1501 = vadd.f32 0.0, %v1500
    %v1502 = vpop.f32.mrb[0].mxu0
    %v1503 = vpop.f32.mrb[0].mxu0
    %1504 = vdwg.mxu0
    %v1505 = vadd.f32 %v1227, %v1458
    %v1506 = vadd.f32 %v1228, %v1460
    %v1507 = vadd.f32 %v1229, %v1499
    %v1508 = vadd.f32 %v1230, %v1501
    %v1509 = vxor.u32 %v1505, 2147483648
    %v1510 = vmul.f32 %v1509, 1.442695
    %v1511 = vpow.pop %v1510
    %v1512 = vadd.f32 %v1511, 1.0
    %v1513 = vrcp.pop %v1512
    %v1514 = vmul.f32 1.0, %v1513
    %v1515 = vxor.u32 %v1506, 2147483648
    %v1516 = vmul.f32 %v1515, 1.442695
    %v1517 = vpow.pop %v1516
    %v1518 = vadd.f32 %v1517, 1.0
    %v1519 = vrcp.pop %v1518
    %v1520 = vmul.f32 1.0, %v1519
    %v1521 = vtanh.pop %v1507
    %v1522 = vxor.u32 %v1508, 2147483648
    %v1523 = vmul.f32 %v1522, 1.442695
    %v1524 = vpow.pop %v1523
    %v1525 = vadd.f32 %v1524, 1.0
    %v1526 = vrcp.pop %v1525
    %v1527 = vmul.f32 1.0, %v1526
    %v1528 = vmul.f32 %v1520, %v1220
    %v1529 = vmul.f32 %v1514, %v1521
    %v1530 = vadd.f32 %v1528, %v1529
    %v1531 = vtanh.pop %v1530
    %v1532 = vmul.f32 %v1527, %v1531
    %v1533 = vpack.c.bf16 %v1532, %v1532
    %s1534 = scalar_lea.vmem %s6, 8
    %1535 = vst [vmem:[%s1534] sm:$0xf] %v1533
    %s1536 = scalar_lea.vmem [#allocation2], 96
    %v1537 = vld [vmem:[%s1536] sm:$0xff]
    %v1538 = vld [vmem:[%s1536 + $0x8] sm:$0xff]
    %v1539 = vld [vmem:[%s1536 + $0x10] sm:$0xff]
    %v1540 = vld [vmem:[%s1536 + $0x18] sm:$0xff]
    %v1541 = vld [vmem:[%s2] sm:$0xff]
    %v1542 = vld [vmem:[%s2 + $0x8] sm:$0xff]
    %v1543 = vld [vmem:[%s2 + $0x10] sm:$0xff]
    %v1544 = vld [vmem:[%s2 + $0x18] sm:$0xff]
    %v1545 = vld [vmem:[%s2 + $0x20] sm:$0xff]
    %v1546 = vld [vmem:[%s2 + $0x28] sm:$0xff]
    %v1547 = vld [vmem:[%s2 + $0x30] sm:$0xff]
    %v1548 = vld [vmem:[%s2 + $0x38] sm:$0xff]
    %v1549 = vld [vmem:[%s2 + $0x40] sm:$0xff]
    %v1550 = vld [vmem:[%s2 + $0x48] sm:$0xff]
    %v1551 = vld [vmem:[%s2 + $0x50] sm:$0xff]
    %v1552 = vld [vmem:[%s2 + $0x58] sm:$0xff]
    %v1553 = vld [vmem:[%s2 + $0x60] sm:$0xff]
    %v1554 = vld [vmem:[%s2 + $0x68] sm:$0xff]
    %v1555 = vld [vmem:[%s2 + $0x70] sm:$0xff]
    %v1556 = vld [vmem:[%s2 + $0x78] sm:$0xff]
    %v1557 = vld [vmem:[%s2 + $0x80] sm:$0xff]
    %v1558 = vld [vmem:[%s2 + $0x88] sm:$0xff]
    %v1559 = vld [vmem:[%s2 + $0x90] sm:$0xff]
    %v1560 = vld [vmem:[%s2 + $0x98] sm:$0xff]
    %v1561 = vld [vmem:[%s2 + $0xa0] sm:$0xff]
    %v1562 = vld [vmem:[%s2 + $0xa8] sm:$0xff]
    %v1563 = vld [vmem:[%s2 + $0xb0] sm:$0xff]
    %v1564 = vld [vmem:[%s2 + $0xb8] sm:$0xff]
    %v1565 = vld [vmem:[%s2 + $0xc0] sm:$0xff]
    %v1566 = vld [vmem:[%s2 + $0xc8] sm:$0xff]
    %v1567 = vld [vmem:[%s2 + $0xd0] sm:$0xff]
    %v1568 = vld [vmem:[%s2 + $0xd8] sm:$0xff]
    %v1569 = vld [vmem:[%s2 + $0xe0] sm:$0xff]
    %v1570 = vld [vmem:[%s2 + $0xe8] sm:$0xff]
    %v1571 = vld [vmem:[%s2 + $0xf0] sm:$0xff]
    %v1572 = vld [vmem:[%s2 + $0xf8] sm:$0xff]
    %v1605 = vunpack.c.l.b16 %v1541
    %v1606 = vunpack.c.h.b16 %v1541
    %v1607 = vunpack.c.l.b16 %v1542
    %v1608 = vunpack.c.h.b16 %v1542
    %v1609 = vunpack.c.l.b16 %v1543
    %v1610 = vunpack.c.h.b16 %v1543
    %v1611 = vunpack.c.l.b16 %v1544
    %v1612 = vunpack.c.h.b16 %v1544
    %v1613 = vunpack.c.l.b16 %v1545
    %v1614 = vunpack.c.h.b16 %v1545
    %v1615 = vunpack.c.l.b16 %v1546
    %v1616 = vunpack.c.h.b16 %v1546
    %v1617 = vunpack.c.l.b16 %v1547
    %v1618 = vunpack.c.h.b16 %v1547
    %v1619 = vunpack.c.l.b16 %v1548
    %v1620 = vunpack.c.h.b16 %v1548
    %v1621 = vunpack.c.l.b16 %v1549
    %v1622 = vunpack.c.h.b16 %v1549
    %v1623 = vunpack.c.l.b16 %v1550
    %v1624 = vunpack.c.h.b16 %v1550
    %v1625 = vunpack.c.l.b16 %v1551
    %v1626 = vunpack.c.h.b16 %v1551
    %v1627 = vunpack.c.l.b16 %v1552
    %v1628 = vunpack.c.h.b16 %v1552
    %v1629 = vunpack.c.l.b16 %v1553
    %v1630 = vunpack.c.h.b16 %v1553
    %v1631 = vunpack.c.l.b16 %v1554
    %v1632 = vunpack.c.h.b16 %v1554
    %v1633 = vunpack.c.l.b16 %v1555
    %v1634 = vunpack.c.h.b16 %v1555
    %v1635 = vunpack.c.l.b16 %v1556
    %v1636 = vunpack.c.h.b16 %v1556
    %v1637 = vunpack.c.l.b16 %v1557
    %v1638 = vunpack.c.h.b16 %v1557
    %v1639 = vunpack.c.l.b16 %v1558
    %v1640 = vunpack.c.h.b16 %v1558
    %v1641 = vunpack.c.l.b16 %v1559
    %v1642 = vunpack.c.h.b16 %v1559
    %v1643 = vunpack.c.l.b16 %v1560
    %v1644 = vunpack.c.h.b16 %v1560
    %v1645 = vunpack.c.l.b16 %v1561
    %v1646 = vunpack.c.h.b16 %v1561
    %v1647 = vunpack.c.l.b16 %v1562
    %v1648 = vunpack.c.h.b16 %v1562
    %v1649 = vunpack.c.l.b16 %v1563
    %v1650 = vunpack.c.h.b16 %v1563
    %v1651 = vunpack.c.l.b16 %v1564
    %v1652 = vunpack.c.h.b16 %v1564
    %v1653 = vunpack.c.l.b16 %v1565
    %v1654 = vunpack.c.h.b16 %v1565
    %v1655 = vunpack.c.l.b16 %v1566
    %v1656 = vunpack.c.h.b16 %v1566
    %v1657 = vunpack.c.l.b16 %v1567
    %v1658 = vunpack.c.h.b16 %v1567
    %v1659 = vunpack.c.l.b16 %v1568
    %v1660 = vunpack.c.h.b16 %v1568
    %v1661 = vunpack.c.l.b16 %v1569
    %v1662 = vunpack.c.h.b16 %v1569
    %v1663 = vunpack.c.l.b16 %v1570
    %v1664 = vunpack.c.h.b16 %v1570
    %v1665 = vunpack.c.l.b16 %v1571
    %v1666 = vunpack.c.h.b16 %v1571
    %v1667 = vunpack.c.l.b16 %v1572
    %v1668 = vunpack.c.h.b16 %v1572
    %v1669 = vpack.c.b16 %v1609, %v1605
    %v1670 = vpack.c.b16 %v1610, %v1606
    %v1671 = vpack.c.b16 %v1611, %v1607
    %v1672 = vpack.c.b16 %v1612, %v1608
    %v1673 = vpack.c.b16 %v1617, %v1613
    %v1674 = vpack.c.b16 %v1618, %v1614
    %v1675 = vpack.c.b16 %v1619, %v1615
    %v1676 = vpack.c.b16 %v1620, %v1616
    %v1677 = vpack.c.b16 %v1625, %v1621
    %v1678 = vpack.c.b16 %v1626, %v1622
    %v1679 = vpack.c.b16 %v1627, %v1623
    %v1680 = vpack.c.b16 %v1628, %v1624
    %v1681 = vpack.c.b16 %v1633, %v1629
    %v1682 = vpack.c.b16 %v1634, %v1630
    %v1683 = vpack.c.b16 %v1635, %v1631
    %v1684 = vpack.c.b16 %v1636, %v1632
    %v1685 = vpack.c.b16 %v1641, %v1637
    %v1686 = vpack.c.b16 %v1642, %v1638
    %v1687 = vpack.c.b16 %v1643, %v1639
    %v1688 = vpack.c.b16 %v1644, %v1640
    %v1689 = vpack.c.b16 %v1649, %v1645
    %v1690 = vpack.c.b16 %v1650, %v1646
    %v1691 = vpack.c.b16 %v1651, %v1647
    %v1692 = vpack.c.b16 %v1652, %v1648
    %v1693 = vpack.c.b16 %v1657, %v1653
    %v1694 = vpack.c.b16 %v1658, %v1654
    %v1695 = vpack.c.b16 %v1659, %v1655
    %v1696 = vpack.c.b16 %v1660, %v1656
    %v1697 = vpack.c.b16 %v1665, %v1661
    %v1698 = vpack.c.b16 %v1666, %v1662
    %v1699 = vpack.c.b16 %v1667, %v1663
    %v1700 = vpack.c.b16 %v1668, %v1664
    %1733 = vmatprep.subr.bf16.mxu0 %v1670
    %1734 = vmatpush1.bf16.msra.mxu0 %v1669
    %1735 = vmatprep.subr.bf16.mxu0 %v1674
    %1736 = vmatpush1.bf16.msra.mxu0 %v1673
    %1737 = vmatprep.subr.bf16.mxu0 %v1678
    %1738 = vmatpush1.bf16.msra.mxu0 %v1677
    %1739 = vmatprep.subr.bf16.mxu0 %v1682
    %1740 = vmatpush1.bf16.msra.mxu0 %v1681
    %1741 = vmatprep.subr.bf16.mxu0 %v1686
    %1742 = vmatpush1.bf16.msra.mxu0 %v1685
    %1743 = vmatprep.subr.bf16.mxu0 %v1690
    %1744 = vmatpush1.bf16.msra.mxu0 %v1689
    %1745 = vmatprep.subr.bf16.mxu0 %v1694
    %1746 = vmatpush1.bf16.msra.mxu0 %v1693
    %1747 = vmatprep.subr.bf16.mxu0 %v1698
    %1748 = vmatpush1.bf16.msra.mxu0 %v1697
    %1749 = vmatprep.subr.bf16.mxu0 0
    %1750 = vmatpush1.bf16.msra.mxu0 0
    %1751 = vmatprep.subr.bf16.mxu0 0
    %1752 = vmatpush1.bf16.msra.mxu0 0
    %1753 = vmatprep.subr.bf16.mxu0 0
    %1754 = vmatpush1.bf16.msra.mxu0 0
    %1755 = vmatprep.subr.bf16.mxu0 0
    %1756 = vmatpush1.bf16.msra.mxu0 0
    %1757 = vmatprep.subr.bf16.mxu0 0
    %1758 = vmatpush1.bf16.msra.mxu0 0
    %1759 = vmatprep.subr.bf16.mxu0 0
    %1760 = vmatpush1.bf16.msra.mxu0 0
    %1761 = vmatprep.subr.bf16.mxu0 0
    %1762 = vmatpush1.bf16.msra.mxu0 0
    %1763 = vmatprep.subr.bf16.mxu0 0
    %1764 = vmatpush1.bf16.msra.mxu0 0
    %1765 = vmatprep.mubr.bf16.mxu0 0
    %1766 = vmatmul.mubr.bf16.gmra.mrb[0].mxu0 %v1533
    %v1767 = vpop.f32.mrb[0].mxu0
    %v1768 = vadd.f32 0.0, %v1767
    %v1769 = vpop.f32.mrb[0].mxu0
    %v1770 = vadd.f32 0.0, %v1769
    %v1771 = vpop.f32.mrb[0].mxu0
    %v1772 = vpop.f32.mrb[0].mxu0
    %1773 = vdwg.mxu0
    %1774 = vmatprep.subr.bf16.mxu0 %v1672
    %1775 = vmatpush1.bf16.msra.mxu0 %v1671
    %1776 = vmatprep.subr.bf16.mxu0 %v1676
    %1777 = vmatpush1.bf16.msra.mxu0 %v1675
    %1778 = vmatprep.subr.bf16.mxu0 %v1680
    %1779 = vmatpush1.bf16.msra.mxu0 %v1679
    %1780 = vmatprep.subr.bf16.mxu0 %v1684
    %1781 = vmatpush1.bf16.msra.mxu0 %v1683
    %1782 = vmatprep.subr.bf16.mxu0 %v1688
    %1783 = vmatpush1.bf16.msra.mxu0 %v1687
    %1784 = vmatprep.subr.bf16.mxu0 %v1692
    %1785 = vmatpush1.bf16.msra.mxu0 %v1691
    %1786 = vmatprep.subr.bf16.mxu0 %v1696
    %1787 = vmatpush1.bf16.msra.mxu0 %v1695
    %1788 = vmatprep.subr.bf16.mxu0 %v1700
    %1789 = vmatpush1.bf16.msra.mxu0 %v1699
    %1790 = vmatprep.subr.bf16.mxu0 0
    %1791 = vmatpush1.bf16.msra.mxu0 0
    %1792 = vmatprep.subr.bf16.mxu0 0
    %1793 = vmatpush1.bf16.msra.mxu0 0
    %1794 = vmatprep.subr.bf16.mxu0 0
    %1795 = vmatpush1.bf16.msra.mxu0 0
    %1796 = vmatprep.subr.bf16.mxu0 0
    %1797 = vmatpush1.bf16.msra.mxu0 0
    %1798 = vmatprep.subr.bf16.mxu0 0
    %1799 = vmatpush1.bf16.msra.mxu0 0
    %1800 = vmatprep.subr.bf16.mxu0 0
    %1801 = vmatpush1.bf16.msra.mxu0 0
    %1802 = vmatprep.subr.bf16.mxu0 0
    %1803 = vmatpush1.bf16.msra.mxu0 0
    %1804 = vmatprep.subr.bf16.mxu0 0
    %1805 = vmatpush1.bf16.msra.mxu0 0
    %1806 = vmatprep.mubr.bf16.mxu0 0
    %1807 = vmatmul.mubr.bf16.gmra.mrb[0].mxu0 %v1533
    %v1808 = vpop.f32.mrb[0].mxu0
    %v1809 = vadd.f32 0.0, %v1808
    %v1810 = vpop.f32.mrb[0].mxu0
    %v1811 = vadd.f32 0.0, %v1810
    %v1812 = vpop.f32.mrb[0].mxu0
    %v1813 = vpop.f32.mrb[0].mxu0
    %1814 = vdwg.mxu0
    %v1815 = vadd.f32 %v1537, %v1768
    %v1816 = vadd.f32 %v1538, %v1770
    %v1817 = vadd.f32 %v1539, %v1809
    %v1818 = vadd.f32 %v1540, %v1811
    %v1819 = vxor.u32 %v1815, 2147483648
    %v1820 = vmul.f32 %v1819, 1.442695
    %v1821 = vpow.pop %v1820
    %v1822 = vadd.f32 %v1821, 1.0
    %v1823 = vrcp.pop %v1822
    %v1824 = vmul.f32 1.0, %v1823
    %v1825 = vxor.u32 %v1816, 2147483648
    %v1826 = vmul.f32 %v1825, 1.442695
    %v1827 = vpow.pop %v1826
    %v1828 = vadd.f32 %v1827, 1.0
    %v1829 = vrcp.pop %v1828
    %v1830 = vmul.f32 1.0, %v1829
    %v1831 = vtanh.pop %v1817
    %v1832 = vxor.u32 %v1818, 2147483648
    %v1833 = vmul.f32 %v1832, 1.442695
    %v1834 = vpow.pop %v1833
    %v1835 = vadd.f32 %v1834, 1.0
    %v1836 = vrcp.pop %v1835
    %v1837 = vmul.f32 1.0, %v1836
    %v1838 = vmul.f32 %v1830, %v1530
    %v1839 = vmul.f32 %v1824, %v1831
    %v1840 = vadd.f32 %v1838, %v1839
    %v1841 = vtanh.pop %v1840
    %v1842 = vmul.f32 %v1837, %v1841
    %v1843 = vpack.c.bf16 %v1842, %v1842
    %s1844 = scalar_lea.vmem %s6, 12
    %1845 = vst [vmem:[%s1844] sm:$0xf] %v1843
    %s1846 = scalar_lea.vmem [#allocation2], 128
    %v1847 = vld [vmem:[%s1846] sm:$0xff]
    %v1848 = vld [vmem:[%s1846 + $0x8] sm:$0xff]
    %v1849 = vld [vmem:[%s1846 + $0x10] sm:$0xff]
    %v1850 = vld [vmem:[%s1846 + $0x18] sm:$0xff]
    %v1851 = vld [vmem:[%s2] sm:$0xff]
    %v1852 = vld [vmem:[%s2 + $0x8] sm:$0xff]
    %v1853 = vld [vmem:[%s2 + $0x10] sm:$0xff]
    %v1854 = vld [vmem:[%s2 + $0x18] sm:$0xff]
    %v1855 = vld [vmem:[%s2 + $0x20] sm:$0xff]
    %v1856 = vld [vmem:[%s2 + $0x28] sm:$0xff]
    %v1857 = vld [vmem:[%s2 + $0x30] sm:$0xff]
    %v1858 = vld [vmem:[%s2 + $0x38] sm:$0xff]
    %v1859 = vld [vmem:[%s2 + $0x40] sm:$0xff]
    %v1860 = vld [vmem:[%s2 + $0x48] sm:$0xff]
    %v1861 = vld [vmem:[%s2 + $0x50] sm:$0xff]
    %v1862 = vld [vmem:[%s2 + $0x58] sm:$0xff]
    %v1863 = vld [vmem:[%s2 + $0x60] sm:$0xff]
    %v1864 = vld [vmem:[%s2 + $0x68] sm:$0xff]
    %v1865 = vld [vmem:[%s2 + $0x70] sm:$0xff]
    %v1866 = vld [vmem:[%s2 + $0x78] sm:$0xff]
    %v1867 = vld [vmem:[%s2 + $0x80] sm:$0xff]
    %v1868 = vld [vmem:[%s2 + $0x88] sm:$0xff]
    %v1869 = vld [vmem:[%s2 + $0x90] sm:$0xff]
    %v1870 = vld [vmem:[%s2 + $0x98] sm:$0xff]
    %v1871 = vld [vmem:[%s2 + $0xa0] sm:$0xff]
    %v1872 = vld [vmem:[%s2 + $0xa8] sm:$0xff]
    %v1873 = vld [vmem:[%s2 + $0xb0] sm:$0xff]
    %v1874 = vld [vmem:[%s2 + $0xb8] sm:$0xff]
    %v1875 = vld [vmem:[%s2 + $0xc0] sm:$0xff]
    %v1876 = vld [vmem:[%s2 + $0xc8] sm:$0xff]
    %v1877 = vld [vmem:[%s2 + $0xd0] sm:$0xff]
    %v1878 = vld [vmem:[%s2 + $0xd8] sm:$0xff]
    %v1879 = vld [vmem:[%s2 + $0xe0] sm:$0xff]
    %v1880 = vld [vmem:[%s2 + $0xe8] sm:$0xff]
    %v1881 = vld [vmem:[%s2 + $0xf0] sm:$0xff]
    %v1882 = vld [vmem:[%s2 + $0xf8] sm:$0xff]
    %v1915 = vunpack.c.l.b16 %v1851
    %v1916 = vunpack.c.h.b16 %v1851
    %v1917 = vunpack.c.l.b16 %v1852
    %v1918 = vunpack.c.h.b16 %v1852
    %v1919 = vunpack.c.l.b16 %v1853
    %v1920 = vunpack.c.h.b16 %v1853
    %v1921 = vunpack.c.l.b16 %v1854
    %v1922 = vunpack.c.h.b16 %v1854
    %v1923 = vunpack.c.l.b16 %v1855
    %v1924 = vunpack.c.h.b16 %v1855
    %v1925 = vunpack.c.l.b16 %v1856
    %v1926 = vunpack.c.h.b16 %v1856
    %v1927 = vunpack.c.l.b16 %v1857
    %v1928 = vunpack.c.h.b16 %v1857
    %v1929 = vunpack.c.l.b16 %v1858
    %v1930 = vunpack.c.h.b16 %v1858
    %v1931 = vunpack.c.l.b16 %v1859
    %v1932 = vunpack.c.h.b16 %v1859
    %v1933 = vunpack.c.l.b16 %v1860
    %v1934 = vunpack.c.h.b16 %v1860
    %v1935 = vunpack.c.l.b16 %v1861
    %v1936 = vunpack.c.h.b16 %v1861
    %v1937 = vunpack.c.l.b16 %v1862
    %v1938 = vunpack.c.h.b16 %v1862
    %v1939 = vunpack.c.l.b16 %v1863
    %v1940 = vunpack.c.h.b16 %v1863
    %v1941 = vunpack.c.l.b16 %v1864
    %v1942 = vunpack.c.h.b16 %v1864
    %v1943 = vunpack.c.l.b16 %v1865
    %v1944 = vunpack.c.h.b16 %v1865
    %v1945 = vunpack.c.l.b16 %v1866
    %v1946 = vunpack.c.h.b16 %v1866
    %v1947 = vunpack.c.l.b16 %v1867
    %v1948 = vunpack.c.h.b16 %v1867
    %v1949 = vunpack.c.l.b16 %v1868
    %v1950 = vunpack.c.h.b16 %v1868
    %v1951 = vunpack.c.l.b16 %v1869
    %v1952 = vunpack.c.h.b16 %v1869
    %v1953 = vunpack.c.l.b16 %v1870
    %v1954 = vunpack.c.h.b16 %v1870
    %v1955 = vunpack.c.l.b16 %v1871
    %v1956 = vunpack.c.h.b16 %v1871
    %v1957 = vunpack.c.l.b16 %v1872
    %v1958 = vunpack.c.h.b16 %v1872
    %v1959 = vunpack.c.l.b16 %v1873
    %v1960 = vunpack.c.h.b16 %v1873
    %v1961 = vunpack.c.l.b16 %v1874
    %v1962 = vunpack.c.h.b16 %v1874
    %v1963 = vunpack.c.l.b16 %v1875
    %v1964 = vunpack.c.h.b16 %v1875
    %v1965 = vunpack.c.l.b16 %v1876
    %v1966 = vunpack.c.h.b16 %v1876
    %v1967 = vunpack.c.l.b16 %v1877
    %v1968 = vunpack.c.h.b16 %v1877
    %v1969 = vunpack.c.l.b16 %v1878
    %v1970 = vunpack.c.h.b16 %v1878
    %v1971 = vunpack.c.l.b16 %v1879
    %v1972 = vunpack.c.h.b16 %v1879
    %v1973 = vunpack.c.l.b16 %v1880
    %v1974 = vunpack.c.h.b16 %v1880
    %v1975 = vunpack.c.l.b16 %v1881
    %v1976 = vunpack.c.h.b16 %v1881
    %v1977 = vunpack.c.l.b16 %v1882
    %v1978 = vunpack.c.h.b16 %v1882
    %v1979 = vpack.c.b16 %v1919, %v1915
    %v1980 = vpack.c.b16 %v1920, %v1916
    %v1981 = vpack.c.b16 %v1921, %v1917
    %v1982 = vpack.c.b16 %v1922, %v1918
    %v1983 = vpack.c.b16 %v1927, %v1923
    %v1984 = vpack.c.b16 %v1928, %v1924
    %v1985 = vpack.c.b16 %v1929, %v1925
    %v1986 = vpack.c.b16 %v1930, %v1926
    %v1987 = vpack.c.b16 %v1935, %v1931
    %v1988 = vpack.c.b16 %v1936, %v1932
    %v1989 = vpack.c.b16 %v1937, %v1933
    %v1990 = vpack.c.b16 %v1938, %v1934
    %v1991 = vpack.c.b16 %v1943, %v1939
    %v1992 = vpack.c.b16 %v1944, %v1940
    %v1993 = vpack.c.b16 %v1945, %v1941
    %v1994 = vpack.c.b16 %v1946, %v1942
    %v1995 = vpack.c.b16 %v1951, %v1947
    %v1996 = vpack.c.b16 %v1952, %v1948
    %v1997 = vpack.c.b16 %v1953, %v1949
    %v1998 = vpack.c.b16 %v1954, %v1950
    %v1999 = vpack.c.b16 %v1959, %v1955
    %v2000 = vpack.c.b16 %v1960, %v1956
    %v2001 = vpack.c.b16 %v1961, %v1957
    %v2002 = vpack.c.b16 %v1962, %v1958
    %v2003 = vpack.c.b16 %v1967, %v1963
    %v2004 = vpack.c.b16 %v1968, %v1964
    %v2005 = vpack.c.b16 %v1969, %v1965
    %v2006 = vpack.c.b16 %v1970, %v1966
    %v2007 = vpack.c.b16 %v1975, %v1971
    %v2008 = vpack.c.b16 %v1976, %v1972
    %v2009 = vpack.c.b16 %v1977, %v1973
    %v2010 = vpack.c.b16 %v1978, %v1974
    %2043 = vmatprep.subr.bf16.mxu0 %v1980
    %2044 = vmatpush1.bf16.msra.mxu0 %v1979
    %2045 = vmatprep.subr.bf16.mxu0 %v1984
    %2046 = vmatpush1.bf16.msra.mxu0 %v1983
    %2047 = vmatprep.subr.bf16.mxu0 %v1988
    %2048 = vmatpush1.bf16.msra.mxu0 %v1987
    %2049 = vmatprep.subr.bf16.mxu0 %v1992
    %2050 = vmatpush1.bf16.msra.mxu0 %v1991
    %2051 = vmatprep.subr.bf16.mxu0 %v1996
    %2052 = vmatpush1.bf16.msra.mxu0 %v1995
    %2053 = vmatprep.subr.bf16.mxu0 %v2000
    %2054 = vmatpush1.bf16.msra.mxu0 %v1999
    %2055 = vmatprep.subr.bf16.mxu0 %v2004
    %2056 = vmatpush1.bf16.msra.mxu0 %v2003
    %2057 = vmatprep.subr.bf16.mxu0 %v2008
    %2058 = vmatpush1.bf16.msra.mxu0 %v2007
    %2059 = vmatprep.subr.bf16.mxu0 0
    %2060 = vmatpush1.bf16.msra.mxu0 0
    %2061 = vmatprep.subr.bf16.mxu0 0
    %2062 = vmatpush1.bf16.msra.mxu0 0
    %2063 = vmatprep.subr.bf16.mxu0 0
    %2064 = vmatpush1.bf16.msra.mxu0 0
    %2065 = vmatprep.subr.bf16.mxu0 0
    %2066 = vmatpush1.bf16.msra.mxu0 0
    %2067 = vmatprep.subr.bf16.mxu0 0
    %2068 = vmatpush1.bf16.msra.mxu0 0
    %2069 = vmatprep.subr.bf16.mxu0 0
    %2070 = vmatpush1.bf16.msra.mxu0 0
    %2071 = vmatprep.subr.bf16.mxu0 0
    %2072 = vmatpush1.bf16.msra.mxu0 0
    %2073 = vmatprep.subr.bf16.mxu0 0
    %2074 = vmatpush1.bf16.msra.mxu0 0
    %2075 = vmatprep.mubr.bf16.mxu0 0
    %2076 = vmatmul.mubr.bf16.gmra.mrb[0].mxu0 %v1843
    %v2077 = vpop.f32.mrb[0].mxu0
    %v2078 = vadd.f32 0.0, %v2077
    %v2079 = vpop.f32.mrb[0].mxu0
    %v2080 = vadd.f32 0.0, %v2079
    %v2081 = vpop.f32.mrb[0].mxu0
    %v2082 = vpop.f32.mrb[0].mxu0
    %2083 = vdwg.mxu0
    %2084 = vmatprep.subr.bf16.mxu0 %v1982
    %2085 = vmatpush1.bf16.msra.mxu0 %v1981
    %2086 = vmatprep.subr.bf16.mxu0 %v1986
    %2087 = vmatpush1.bf16.msra.mxu0 %v1985
    %2088 = vmatprep.subr.bf16.mxu0 %v1990
    %2089 = vmatpush1.bf16.msra.mxu0 %v1989
    %2090 = vmatprep.subr.bf16.mxu0 %v1994
    %2091 = vmatpush1.bf16.msra.mxu0 %v1993
    %2092 = vmatprep.subr.bf16.mxu0 %v1998
    %2093 = vmatpush1.bf16.msra.mxu0 %v1997
    %2094 = vmatprep.subr.bf16.mxu0 %v2002
    %2095 = vmatpush1.bf16.msra.mxu0 %v2001
    %2096 = vmatprep.subr.bf16.mxu0 %v2006
    %2097 = vmatpush1.bf16.msra.mxu0 %v2005
    %2098 = vmatprep.subr.bf16.mxu0 %v2010
    %2099 = vmatpush1.bf16.msra.mxu0 %v2009
    %2100 = vmatprep.subr.bf16.mxu0 0
    %2101 = vmatpush1.bf16.msra.mxu0 0
    %2102 = vmatprep.subr.bf16.mxu0 0
    %2103 = vmatpush1.bf16.msra.mxu0 0
    %2104 = vmatprep.subr.bf16.mxu0 0
    %2105 = vmatpush1.bf16.msra.mxu0 0
    %2106 = vmatprep.subr.bf16.mxu0 0
    %2107 = vmatpush1.bf16.msra.mxu0 0
    %2108 = vmatprep.subr.bf16.mxu0 0
    %2109 = vmatpush1.bf16.msra.mxu0 0
    %2110 = vmatprep.subr.bf16.mxu0 0
    %2111 = vmatpush1.bf16.msra.mxu0 0
    %2112 = vmatprep.subr.bf16.mxu0 0
    %2113 = vmatpush1.bf16.msra.mxu0 0
    %2114 = vmatprep.subr.bf16.mxu0 0
    %2115 = vmatpush1.bf16.msra.mxu0 0
    %2116 = vmatprep.mubr.bf16.mxu0 0
    %2117 = vmatmul.mubr.bf16.gmra.mrb[0].mxu0 %v1843
    %v2118 = vpop.f32.mrb[0].mxu0
    %v2119 = vadd.f32 0.0, %v2118
    %v2120 = vpop.f32.mrb[0].mxu0
    %v2121 = vadd.f32 0.0, %v2120
    %v2122 = vpop.f32.mrb[0].mxu0
    %v2123 = vpop.f32.mrb[0].mxu0
    %2124 = vdwg.mxu0
    %v2125 = vadd.f32 %v1847, %v2078
    %v2126 = vadd.f32 %v1848, %v2080
    %v2127 = vadd.f32 %v1849, %v2119
    %v2128 = vadd.f32 %v1850, %v2121
    %v2129 = vxor.u32 %v2125, 2147483648
    %v2130 = vmul.f32 %v2129, 1.442695
    %v2131 = vpow.pop %v2130
    %v2132 = vadd.f32 %v2131, 1.0
    %v2133 = vrcp.pop %v2132
    %v2134 = vmul.f32 1.0, %v2133
    %v2135 = vxor.u32 %v2126, 2147483648
    %v2136 = vmul.f32 %v2135, 1.442695
    %v2137 = vpow.pop %v2136
    %v2138 = vadd.f32 %v2137, 1.0
    %v2139 = vrcp.pop %v2138
    %v2140 = vmul.f32 1.0, %v2139
    %v2141 = vtanh.pop %v2127
    %v2142 = vxor.u32 %v2128, 2147483648
    %v2143 = vmul.f32 %v2142, 1.442695
    %v2144 = vpow.pop %v2143
    %v2145 = vadd.f32 %v2144, 1.0
    %v2146 = vrcp.pop %v2145
    %v2147 = vmul.f32 1.0, %v2146
    %v2148 = vmul.f32 %v2140, %v1840
    %v2149 = vmul.f32 %v2134, %v2141
    %v2150 = vadd.f32 %v2148, %v2149
    %v2151 = vtanh.pop %v2150
    %v2152 = vmul.f32 %v2147, %v2151
    %v2153 = vpack.c.bf16 %v2152, %v2152
    %s2154 = scalar_lea.vmem %s6, 16
    %2155 = vst [vmem:[%s2154] sm:$0xf] %v2153
    %s2156 = scalar_lea.vmem [#allocation2], 160
    %v2157 = vld [vmem:[%s2156] sm:$0xff]
    %v2158 = vld [vmem:[%s2156 + $0x8] sm:$0xff]
    %v2159 = vld [vmem:[%s2156 + $0x10] sm:$0xff]
    %v2160 = vld [vmem:[%s2156 + $0x18] sm:$0xff]
    %v2161 = vld [vmem:[%s2] sm:$0xff]
    %v2162 = vld [vmem:[%s2 + $0x8] sm:$0xff]
    %v2163 = vld [vmem:[%s2 + $0x10] sm:$0xff]
    %v2164 = vld [vmem:[%s2 + $0x18] sm:$0xff]
    %v2165 = vld [vmem:[%s2 + $0x20] sm:$0xff]
    %v2166 = vld [vmem:[%s2 + $0x28] sm:$0xff]
    %v2167 = vld [vmem:[%s2 + $0x30] sm:$0xff]
    %v2168 = vld [vmem:[%s2 + $0x38] sm:$0xff]
    %v2169 = vld [vmem:[%s2 + $0x40] sm:$0xff]
    %v2170 = vld [vmem:[%s2 + $0x48] sm:$0xff]
    %v2171 = vld [vmem:[%s2 + $0x50] sm:$0xff]
    %v2172 = vld [vmem:[%s2 + $0x58] sm:$0xff]
    %v2173 = vld [vmem:[%s2 + $0x60] sm:$0xff]
    %v2174 = vld [vmem:[%s2 + $0x68] sm:$0xff]
    %v2175 = vld [vmem:[%s2 + $0x70] sm:$0xff]
    %v2176 = vld [vmem:[%s2 + $0x78] sm:$0xff]
    %v2177 = vld [vmem:[%s2 + $0x80] sm:$0xff]
    %v2178 = vld [vmem:[%s2 + $0x88] sm:$0xff]
    %v2179 = vld [vmem:[%s2 + $0x90] sm:$0xff]
    %v2180 = vld [vmem:[%s2 + $0x98] sm:$0xff]
    %v2181 = vld [vmem:[%s2 + $0xa0] sm:$0xff]
    %v2182 = vld [vmem:[%s2 + $0xa8] sm:$0xff]
    %v2183 = vld [vmem:[%s2 + $0xb0] sm:$0xff]
    %v2184 = vld [vmem:[%s2 + $0xb8] sm:$0xff]
    %v2185 = vld [vmem:[%s2 + $0xc0] sm:$0xff]
    %v2186 = vld [vmem:[%s2 + $0xc8] sm:$0xff]
    %v2187 = vld [vmem:[%s2 + $0xd0] sm:$0xff]
    %v2188 = vld [vmem:[%s2 + $0xd8] sm:$0xff]
    %v2189 = vld [vmem:[%s2 + $0xe0] sm:$0xff]
    %v2190 = vld [vmem:[%s2 + $0xe8] sm:$0xff]
    %v2191 = vld [vmem:[%s2 + $0xf0] sm:$0xff]
    %v2192 = vld [vmem:[%s2 + $0xf8] sm:$0xff]
    %v2225 = vunpack.c.l.b16 %v2161
    %v2226 = vunpack.c.h.b16 %v2161
    %v2227 = vunpack.c.l.b16 %v2162
    %v2228 = vunpack.c.h.b16 %v2162
    %v2229 = vunpack.c.l.b16 %v2163
    %v2230 = vunpack.c.h.b16 %v2163
    %v2231 = vunpack.c.l.b16 %v2164
    %v2232 = vunpack.c.h.b16 %v2164
    %v2233 = vunpack.c.l.b16 %v2165
    %v2234 = vunpack.c.h.b16 %v2165
    %v2235 = vunpack.c.l.b16 %v2166
    %v2236 = vunpack.c.h.b16 %v2166
    %v2237 = vunpack.c.l.b16 %v2167
    %v2238 = vunpack.c.h.b16 %v2167
    %v2239 = vunpack.c.l.b16 %v2168
    %v2240 = vunpack.c.h.b16 %v2168
    %v2241 = vunpack.c.l.b16 %v2169
    %v2242 = vunpack.c.h.b16 %v2169
    %v2243 = vunpack.c.l.b16 %v2170
    %v2244 = vunpack.c.h.b16 %v2170
    %v2245 = vunpack.c.l.b16 %v2171
    %v2246 = vunpack.c.h.b16 %v2171
    %v2247 = vunpack.c.l.b16 %v2172
    %v2248 = vunpack.c.h.b16 %v2172
    %v2249 = vunpack.c.l.b16 %v2173
    %v2250 = vunpack.c.h.b16 %v2173
    %v2251 = vunpack.c.l.b16 %v2174
    %v2252 = vunpack.c.h.b16 %v2174
    %v2253 = vunpack.c.l.b16 %v2175
    %v2254 = vunpack.c.h.b16 %v2175
    %v2255 = vunpack.c.l.b16 %v2176
    %v2256 = vunpack.c.h.b16 %v2176
    %v2257 = vunpack.c.l.b16 %v2177
    %v2258 = vunpack.c.h.b16 %v2177
    %v2259 = vunpack.c.l.b16 %v2178
    %v2260 = vunpack.c.h.b16 %v2178
    %v2261 = vunpack.c.l.b16 %v2179
    %v2262 = vunpack.c.h.b16 %v2179
    %v2263 = vunpack.c.l.b16 %v2180
    %v2264 = vunpack.c.h.b16 %v2180
    %v2265 = vunpack.c.l.b16 %v2181
    %v2266 = vunpack.c.h.b16 %v2181
    %v2267 = vunpack.c.l.b16 %v2182
    %v2268 = vunpack.c.h.b16 %v2182
    %v2269 = vunpack.c.l.b16 %v2183
    %v2270 = vunpack.c.h.b16 %v2183
    %v2271 = vunpack.c.l.b16 %v2184
    %v2272 = vunpack.c.h.b16 %v2184
    %v2273 = vunpack.c.l.b16 %v2185
    %v2274 = vunpack.c.h.b16 %v2185
    %v2275 = vunpack.c.l.b16 %v2186
    %v2276 = vunpack.c.h.b16 %v2186
    %v2277 = vunpack.c.l.b16 %v2187
    %v2278 = vunpack.c.h.b16 %v2187
    %v2279 = vunpack.c.l.b16 %v2188
    %v2280 = vunpack.c.h.b16 %v2188
    %v2281 = vunpack.c.l.b16 %v2189
    %v2282 = vunpack.c.h.b16 %v2189
    %v2283 = vunpack.c.l.b16 %v2190
    %v2284 = vunpack.c.h.b16 %v2190
    %v2285 = vunpack.c.l.b16 %v2191
    %v2286 = vunpack.c.h.b16 %v2191
    %v2287 = vunpack.c.l.b16 %v2192
    %v2288 = vunpack.c.h.b16 %v2192
    %v2289 = vpack.c.b16 %v2229, %v2225
    %v2290 = vpack.c.b16 %v2230, %v2226
    %v2291 = vpack.c.b16 %v2231, %v2227
    %v2292 = vpack.c.b16 %v2232, %v2228
    %v2293 = vpack.c.b16 %v2237, %v2233
    %v2294 = vpack.c.b16 %v2238, %v2234
    %v2295 = vpack.c.b16 %v2239, %v2235
    %v2296 = vpack.c.b16 %v2240, %v2236
    %v2297 = vpack.c.b16 %v2245, %v2241
    %v2298 = vpack.c.b16 %v2246, %v2242
    %v2299 = vpack.c.b16 %v2247, %v2243
    %v2300 = vpack.c.b16 %v2248, %v2244
    %v2301 = vpack.c.b16 %v2253, %v2249
    %v2302 = vpack.c.b16 %v2254, %v2250
    %v2303 = vpack.c.b16 %v2255, %v2251
    %v2304 = vpack.c.b16 %v2256, %v2252
    %v2305 = vpack.c.b16 %v2261, %v2257
    %v2306 = vpack.c.b16 %v2262, %v2258
    %v2307 = vpack.c.b16 %v2263, %v2259
    %v2308 = vpack.c.b16 %v2264, %v2260
    %v2309 = vpack.c.b16 %v2269, %v2265
    %v2310 = vpack.c.b16 %v2270, %v2266
    %v2311 = vpack.c.b16 %v2271, %v2267
    %v2312 = vpack.c.b16 %v2272, %v2268
    %v2313 = vpack.c.b16 %v2277, %v2273
    %v2314 = vpack.c.b16 %v2278, %v2274
    %v2315 = vpack.c.b16 %v2279, %v2275
    %v2316 = vpack.c.b16 %v2280, %v2276
    %v2317 = vpack.c.b16 %v2285, %v2281
    %v2318 = vpack.c.b16 %v2286, %v2282
    %v2319 = vpack.c.b16 %v2287, %v2283
    %v2320 = vpack.c.b16 %v2288, %v2284
    %2353 = vmatprep.subr.bf16.mxu0 %v2290
    %2354 = vmatpush1.bf16.msra.mxu0 %v2289
    %2355 = vmatprep.subr.bf16.mxu0 %v2294
    %2356 = vmatpush1.bf16.msra.mxu0 %v2293
    %2357 = vmatprep.subr.bf16.mxu0 %v2298
    %2358 = vmatpush1.bf16.msra.mxu0 %v2297
    %2359 = vmatprep.subr.bf16.mxu0 %v2302
    %2360 = vmatpush1.bf16.msra.mxu0 %v2301
    %2361 = vmatprep.subr.bf16.mxu0 %v2306
    %2362 = vmatpush1.bf16.msra.mxu0 %v2305
    %2363 = vmatprep.subr.bf16.mxu0 %v2310
    %2364 = vmatpush1.bf16.msra.mxu0 %v2309
    %2365 = vmatprep.subr.bf16.mxu0 %v2314
    %2366 = vmatpush1.bf16.msra.mxu0 %v2313
    %2367 = vmatprep.subr.bf16.mxu0 %v2318
    %2368 = vmatpush1.bf16.msra.mxu0 %v2317
    %2369 = vmatprep.subr.bf16.mxu0 0
    %2370 = vmatpush1.bf16.msra.mxu0 0
    %2371 = vmatprep.subr.bf16.mxu0 0
    %2372 = vmatpush1.bf16.msra.mxu0 0
    %2373 = vmatprep.subr.bf16.mxu0 0
    %2374 = vmatpush1.bf16.msra.mxu0 0
    %2375 = vmatprep.subr.bf16.mxu0 0
    %2376 = vmatpush1.bf16.msra.mxu0 0
    %2377 = vmatprep.subr.bf16.mxu0 0
    %2378 = vmatpush1.bf16.msra.mxu0 0
    %2379 = vmatprep.subr.bf16.mxu0 0
    %2380 = vmatpush1.bf16.msra.mxu0 0
    %2381 = vmatprep.subr.bf16.mxu0 0
    %2382 = vmatpush1.bf16.msra.mxu0 0
    %2383 = vmatprep.subr.bf16.mxu0 0
    %2384 = vmatpush1.bf16.msra.mxu0 0
    %2385 = vmatprep.mubr.bf16.mxu0 0
    %2386 = vmatmul.mubr.bf16.gmra.mrb[0].mxu0 %v2153
    %v2387 = vpop.f32.mrb[0].mxu0
    %v2388 = vadd.f32 0.0, %v2387
    %v2389 = vpop.f32.mrb[0].mxu0
    %v2390 = vadd.f32 0.0, %v2389
    %v2391 = vpop.f32.mrb[0].mxu0
    %v2392 = vpop.f32.mrb[0].mxu0
    %2393 = vdwg.mxu0
    %2394 = vmatprep.subr.bf16.mxu0 %v2292
    %2395 = vmatpush1.bf16.msra.mxu0 %v2291
    %2396 = vmatprep.subr.bf16.mxu0 %v2296
    %2397 = vmatpush1.bf16.msra.mxu0 %v2295
    %2398 = vmatprep.subr.bf16.mxu0 %v2300
    %2399 = vmatpush1.bf16.msra.mxu0 %v2299
    %2400 = vmatprep.subr.bf16.mxu0 %v2304
    %2401 = vmatpush1.bf16.msra.mxu0 %v2303
    %2402 = vmatprep.subr.bf16.mxu0 %v2308
    %2403 = vmatpush1.bf16.msra.mxu0 %v2307
    %2404 = vmatprep.subr.bf16.mxu0 %v2312
    %2405 = vmatpush1.bf16.msra.mxu0 %v2311
    %2406 = vmatprep.subr.bf16.mxu0 %v2316
    %2407 = vmatpush1.bf16.msra.mxu0 %v2315
    %2408 = vmatprep.subr.bf16.mxu0 %v2320
    %2409 = vmatpush1.bf16.msra.mxu0 %v2319
    %2410 = vmatprep.subr.bf16.mxu0 0
    %2411 = vmatpush1.bf16.msra.mxu0 0
    %2412 = vmatprep.subr.bf16.mxu0 0
    %2413 = vmatpush1.bf16.msra.mxu0 0
    %2414 = vmatprep.subr.bf16.mxu0 0
    %2415 = vmatpush1.bf16.msra.mxu0 0
    %2416 = vmatprep.subr.bf16.mxu0 0
    %2417 = vmatpush1.bf16.msra.mxu0 0
    %2418 = vmatprep.subr.bf16.mxu0 0
    %2419 = vmatpush1.bf16.msra.mxu0 0
    %2420 = vmatprep.subr.bf16.mxu0 0
    %2421 = vmatpush1.bf16.msra.mxu0 0
    %2422 = vmatprep.subr.bf16.mxu0 0
    %2423 = vmatpush1.bf16.msra.mxu0 0
    %2424 = vmatprep.subr.bf16.mxu0 0
    %2425 = vmatpush1.bf16.msra.mxu0 0
    %2426 = vmatprep.mubr.bf16.mxu0 0
    %2427 = vmatmul.mubr.bf16.gmra.mrb[0].mxu0 %v2153
    %v2428 = vpop.f32.mrb[0].mxu0
    %v2429 = vadd.f32 0.0, %v2428
    %v2430 = vpop.f32.mrb[0].mxu0
    %v2431 = vadd.f32 0.0, %v2430
    %v2432 = vpop.f32.mrb[0].mxu0
    %v2433 = vpop.f32.mrb[0].mxu0
    %2434 = vdwg.mxu0
    %v2435 = vadd.f32 %v2157, %v2388
    %v2436 = vadd.f32 %v2158, %v2390
    %v2437 = vadd.f32 %v2159, %v2429
    %v2438 = vadd.f32 %v2160, %v2431
    %v2439 = vxor.u32 %v2435, 2147483648
    %v2440 = vmul.f32 %v2439, 1.442695
    %v2441 = vpow.pop %v2440
    %v2442 = vadd.f32 %v2441, 1.0
    %v2443 = vrcp.pop %v2442
    %v2444 = vmul.f32 1.0, %v2443
    %v2445 = vxor.u32 %v2436, 2147483648
    %v2446 = vmul.f32 %v2445, 1.442695
    %v2447 = vpow.pop %v2446
    %v2448 = vadd.f32 %v2447, 1.0
    %v2449 = vrcp.pop %v2448
    %v2450 = vmul.f32 1.0, %v2449
    %v2451 = vtanh.pop %v2437
    %v2452 = vxor.u32 %v2438, 2147483648
    %v2453 = vmul.f32 %v2452, 1.442695
    %v2454 = vpow.pop %v2453
    %v2455 = vadd.f32 %v2454, 1.0
    %v2456 = vrcp.pop %v2455
    %v2457 = vmul.f32 1.0, %v2456
    %v2458 = vmul.f32 %v2450, %v2150
    %v2459 = vmul.f32 %v2444, %v2451
    %v2460 = vadd.f32 %v2458, %v2459
    %v2461 = vtanh.pop %v2460
    %v2462 = vmul.f32 %v2457, %v2461
    %v2463 = vpack.c.bf16 %v2462, %v2462
    %s2464 = scalar_lea.vmem %s6, 20
    %2465 = vst [vmem:[%s2464] sm:$0xf] %v2463
    %s2466 = scalar_lea.vmem [#allocation2], 192
    %v2467 = vld [vmem:[%s2466] sm:$0xff]
    %v2468 = vld [vmem:[%s2466 + $0x8] sm:$0xff]
    %v2469 = vld [vmem:[%s2466 + $0x10] sm:$0xff]
    %v2470 = vld [vmem:[%s2466 + $0x18] sm:$0xff]
    %v2471 = vld [vmem:[%s2] sm:$0xff]
    %v2472 = vld [vmem:[%s2 + $0x8] sm:$0xff]
    %v2473 = vld [vmem:[%s2 + $0x10] sm:$0xff]
    %v2474 = vld [vmem:[%s2 + $0x18] sm:$0xff]
    %v2475 = vld [vmem:[%s2 + $0x20] sm:$0xff]
    %v2476 = vld [vmem:[%s2 + $0x28] sm:$0xff]
    %v2477 = vld [vmem:[%s2 + $0x30] sm:$0xff]
    %v2478 = vld [vmem:[%s2 + $0x38] sm:$0xff]
    %v2479 = vld [vmem:[%s2 + $0x40] sm:$0xff]
    %v2480 = vld [vmem:[%s2 + $0x48] sm:$0xff]
    %v2481 = vld [vmem:[%s2 + $0x50] sm:$0xff]
    %v2482 = vld [vmem:[%s2 + $0x58] sm:$0xff]
    %v2483 = vld [vmem:[%s2 + $0x60] sm:$0xff]
    %v2484 = vld [vmem:[%s2 + $0x68] sm:$0xff]
    %v2485 = vld [vmem:[%s2 + $0x70] sm:$0xff]
    %v2486 = vld [vmem:[%s2 + $0x78] sm:$0xff]
    %v2487 = vld [vmem:[%s2 + $0x80] sm:$0xff]
    %v2488 = vld [vmem:[%s2 + $0x88] sm:$0xff]
    %v2489 = vld [vmem:[%s2 + $0x90] sm:$0xff]
    %v2490 = vld [vmem:[%s2 + $0x98] sm:$0xff]
    %v2491 = vld [vmem:[%s2 + $0xa0] sm:$0xff]
    %v2492 = vld [vmem:[%s2 + $0xa8] sm:$0xff]
    %v2493 = vld [vmem:[%s2 + $0xb0] sm:$0xff]
    %v2494 = vld [vmem:[%s2 + $0xb8] sm:$0xff]
    %v2495 = vld [vmem:[%s2 + $0xc0] sm:$0xff]
    %v2496 = vld [vmem:[%s2 + $0xc8] sm:$0xff]
    %v2497 = vld [vmem:[%s2 + $0xd0] sm:$0xff]
    %v2498 = vld [vmem:[%s2 + $0xd8] sm:$0xff]
    %v2499 = vld [vmem:[%s2 + $0xe0] sm:$0xff]
    %v2500 = vld [vmem:[%s2 + $0xe8] sm:$0xff]
    %v2501 = vld [vmem:[%s2 + $0xf0] sm:$0xff]
    %v2502 = vld [vmem:[%s2 + $0xf8] sm:$0xff]
    %v2535 = vunpack.c.l.b16 %v2471
    %v2536 = vunpack.c.h.b16 %v2471
    %v2537 = vunpack.c.l.b16 %v2472
    %v2538 = vunpack.c.h.b16 %v2472
    %v2539 = vunpack.c.l.b16 %v2473
    %v2540 = vunpack.c.h.b16 %v2473
    %v2541 = vunpack.c.l.b16 %v2474
    %v2542 = vunpack.c.h.b16 %v2474
    %v2543 = vunpack.c.l.b16 %v2475
    %v2544 = vunpack.c.h.b16 %v2475
    %v2545 = vunpack.c.l.b16 %v2476
    %v2546 = vunpack.c.h.b16 %v2476
    %v2547 = vunpack.c.l.b16 %v2477
    %v2548 = vunpack.c.h.b16 %v2477
    %v2549 = vunpack.c.l.b16 %v2478
    %v2550 = vunpack.c.h.b16 %v2478
    %v2551 = vunpack.c.l.b16 %v2479
    %v2552 = vunpack.c.h.b16 %v2479
    %v2553 = vunpack.c.l.b16 %v2480
    %v2554 = vunpack.c.h.b16 %v2480
    %v2555 = vunpack.c.l.b16 %v2481
    %v2556 = vunpack.c.h.b16 %v2481
    %v2557 = vunpack.c.l.b16 %v2482
    %v2558 = vunpack.c.h.b16 %v2482
    %v2559 = vunpack.c.l.b16 %v2483
    %v2560 = vunpack.c.h.b16 %v2483
    %v2561 = vunpack.c.l.b16 %v2484
    %v2562 = vunpack.c.h.b16 %v2484
    %v2563 = vunpack.c.l.b16 %v2485
    %v2564 = vunpack.c.h.b16 %v2485
    %v2565 = vunpack.c.l.b16 %v2486
    %v2566 = vunpack.c.h.b16 %v2486
    %v2567 = vunpack.c.l.b16 %v2487
    %v2568 = vunpack.c.h.b16 %v2487
    %v2569 = vunpack.c.l.b16 %v2488
    %v2570 = vunpack.c.h.b16 %v2488
    %v2571 = vunpack.c.l.b16 %v2489
    %v2572 = vunpack.c.h.b16 %v2489
    %v2573 = vunpack.c.l.b16 %v2490
    %v2574 = vunpack.c.h.b16 %v2490
    %v2575 = vunpack.c.l.b16 %v2491
    %v2576 = vunpack.c.h.b16 %v2491
    %v2577 = vunpack.c.l.b16 %v2492
    %v2578 = vunpack.c.h.b16 %v2492
    %v2579 = vunpack.c.l.b16 %v2493
    %v2580 = vunpack.c.h.b16 %v2493
    %v2581 = vunpack.c.l.b16 %v2494
    %v2582 = vunpack.c.h.b16 %v2494
    %v2583 = vunpack.c.l.b16 %v2495
    %v2584 = vunpack.c.h.b16 %v2495
    %v2585 = vunpack.c.l.b16 %v2496
    %v2586 = vunpack.c.h.b16 %v2496
    %v2587 = vunpack.c.l.b16 %v2497
    %v2588 = vunpack.c.h.b16 %v2497
    %v2589 = vunpack.c.l.b16 %v2498
    %v2590 = vunpack.c.h.b16 %v2498
    %v2591 = vunpack.c.l.b16 %v2499
    %v2592 = vunpack.c.h.b16 %v2499
    %v2593 = vunpack.c.l.b16 %v2500
    %v2594 = vunpack.c.h.b16 %v2500
    %v2595 = vunpack.c.l.b16 %v2501
    %v2596 = vunpack.c.h.b16 %v2501
    %v2597 = vunpack.c.l.b16 %v2502
    %v2598 = vunpack.c.h.b16 %v2502
    %v2599 = vpack.c.b16 %v2539, %v2535
    %v2600 = vpack.c.b16 %v2540, %v2536
    %v2601 = vpack.c.b16 %v2541, %v2537
    %v2602 = vpack.c.b16 %v2542, %v2538
    %v2603 = vpack.c.b16 %v2547, %v2543
    %v2604 = vpack.c.b16 %v2548, %v2544
    %v2605 = vpack.c.b16 %v2549, %v2545
    %v2606 = vpack.c.b16 %v2550, %v2546
    %v2607 = vpack.c.b16 %v2555, %v2551
    %v2608 = vpack.c.b16 %v2556, %v2552
    %v2609 = vpack.c.b16 %v2557, %v2553
    %v2610 = vpack.c.b16 %v2558, %v2554
    %v2611 = vpack.c.b16 %v2563, %v2559
    %v2612 = vpack.c.b16 %v2564, %v2560
    %v2613 = vpack.c.b16 %v2565, %v2561
    %v2614 = vpack.c.b16 %v2566, %v2562
    %v2615 = vpack.c.b16 %v2571, %v2567
    %v2616 = vpack.c.b16 %v2572, %v2568
    %v2617 = vpack.c.b16 %v2573, %v2569
    %v2618 = vpack.c.b16 %v2574, %v2570
    %v2619 = vpack.c.b16 %v2579, %v2575
    %v2620 = vpack.c.b16 %v2580, %v2576
    %v2621 = vpack.c.b16 %v2581, %v2577
    %v2622 = vpack.c.b16 %v2582, %v2578
    %v2623 = vpack.c.b16 %v2587, %v2583
    %v2624 = vpack.c.b16 %v2588, %v2584
    %v2625 = vpack.c.b16 %v2589, %v2585
    %v2626 = vpack.c.b16 %v2590, %v2586
    %v2627 = vpack.c.b16 %v2595, %v2591
    %v2628 = vpack.c.b16 %v2596, %v2592
    %v2629 = vpack.c.b16 %v2597, %v2593
    %v2630 = vpack.c.b16 %v2598, %v2594
    %2663 = vmatprep.subr.bf16.mxu0 %v2600
    %2664 = vmatpush1.bf16.msra.mxu0 %v2599
    %2665 = vmatprep.subr.bf16.mxu0 %v2604
    %2666 = vmatpush1.bf16.msra.mxu0 %v2603
    %2667 = vmatprep.subr.bf16.mxu0 %v2608
    %2668 = vmatpush1.bf16.msra.mxu0 %v2607
    %2669 = vmatprep.subr.bf16.mxu0 %v2612
    %2670 = vmatpush1.bf16.msra.mxu0 %v2611
    %2671 = vmatprep.subr.bf16.mxu0 %v2616
    %2672 = vmatpush1.bf16.msra.mxu0 %v2615
    %2673 = vmatprep.subr.bf16.mxu0 %v2620
    %2674 = vmatpush1.bf16.msra.mxu0 %v2619
    %2675 = vmatprep.subr.bf16.mxu0 %v2624
    %2676 = vmatpush1.bf16.msra.mxu0 %v2623
    %2677 = vmatprep.subr.bf16.mxu0 %v2628
    %2678 = vmatpush1.bf16.msra.mxu0 %v2627
    %2679 = vmatprep.subr.bf16.mxu0 0
    %2680 = vmatpush1.bf16.msra.mxu0 0
    %2681 = vmatprep.subr.bf16.mxu0 0
    %2682 = vmatpush1.bf16.msra.mxu0 0
    %2683 = vmatprep.subr.bf16.mxu0 0
    %2684 = vmatpush1.bf16.msra.mxu0 0
    %2685 = vmatprep.subr.bf16.mxu0 0
    %2686 = vmatpush1.bf16.msra.mxu0 0
    %2687 = vmatprep.subr.bf16.mxu0 0
    %2688 = vmatpush1.bf16.msra.mxu0 0
    %2689 = vmatprep.subr.bf16.mxu0 0
    %2690 = vmatpush1.bf16.msra.mxu0 0
    %2691 = vmatprep.subr.bf16.mxu0 0
    %2692 = vmatpush1.bf16.msra.mxu0 0
    %2693 = vmatprep.subr.bf16.mxu0 0
    %2694 = vmatpush1.bf16.msra.mxu0 0
    %2695 = vmatprep.mubr.bf16.mxu0 0
    %2696 = vmatmul.mubr.bf16.gmra.mrb[0].mxu0 %v2463
    %v2697 = vpop.f32.mrb[0].mxu0
    %v2698 = vadd.f32 0.0, %v2697
    %v2699 = vpop.f32.mrb[0].mxu0
    %v2700 = vadd.f32 0.0, %v2699
    %v2701 = vpop.f32.mrb[0].mxu0
    %v2702 = vpop.f32.mrb[0].mxu0
    %2703 = vdwg.mxu0
    %2704 = vmatprep.subr.bf16.mxu0 %v2602
    %2705 = vmatpush1.bf16.msra.mxu0 %v2601
    %2706 = vmatprep.subr.bf16.mxu0 %v2606
    %2707 = vmatpush1.bf16.msra.mxu0 %v2605
    %2708 = vmatprep.subr.bf16.mxu0 %v2610
    %2709 = vmatpush1.bf16.msra.mxu0 %v2609
    %2710 = vmatprep.subr.bf16.mxu0 %v2614
    %2711 = vmatpush1.bf16.msra.mxu0 %v2613
    %2712 = vmatprep.subr.bf16.mxu0 %v2618
    %2713 = vmatpush1.bf16.msra.mxu0 %v2617
    %2714 = vmatprep.subr.bf16.mxu0 %v2622
    %2715 = vmatpush1.bf16.msra.mxu0 %v2621
    %2716 = vmatprep.subr.bf16.mxu0 %v2626
    %2717 = vmatpush1.bf16.msra.mxu0 %v2625
    %2718 = vmatprep.subr.bf16.mxu0 %v2630
    %2719 = vmatpush1.bf16.msra.mxu0 %v2629
    %2720 = vmatprep.subr.bf16.mxu0 0
    %2721 = vmatpush1.bf16.msra.mxu0 0
    %2722 = vmatprep.subr.bf16.mxu0 0
    %2723 = vmatpush1.bf16.msra.mxu0 0
    %2724 = vmatprep.subr.bf16.mxu0 0
    %2725 = vmatpush1.bf16.msra.mxu0 0
    %2726 = vmatprep.subr.bf16.mxu0 0
    %2727 = vmatpush1.bf16.msra.mxu0 0
    %2728 = vmatprep.subr.bf16.mxu0 0
    %2729 = vmatpush1.bf16.msra.mxu0 0
    %2730 = vmatprep.subr.bf16.mxu0 0
    %2731 = vmatpush1.bf16.msra.mxu0 0
    %2732 = vmatprep.subr.bf16.mxu0 0
    %2733 = vmatpush1.bf16.msra.mxu0 0
    %2734 = vmatprep.subr.bf16.mxu0 0
    %2735 = vmatpush1.bf16.msra.mxu0 0
    %2736 = vmatprep.mubr.bf16.mxu0 0
    %2737 = vmatmul.mubr.bf16.gmra.mrb[0].mxu0 %v2463
    %v2738 = vpop.f32.mrb[0].mxu0
    %v2739 = vadd.f32 0.0, %v2738
    %v2740 = vpop.f32.mrb[0].mxu0
    %v2741 = vadd.f32 0.0, %v2740
    %v2742 = vpop.f32.mrb[0].mxu0
    %v2743 = vpop.f32.mrb[0].mxu0
    %2744 = vdwg.mxu0
    %v2745 = vadd.f32 %v2467, %v2698
    %v2746 = vadd.f32 %v2468, %v2700
    %v2747 = vadd.f32 %v2469, %v2739
    %v2748 = vadd.f32 %v2470, %v2741
    %v2749 = vxor.u32 %v2745, 2147483648
    %v2750 = vmul.f32 %v2749, 1.442695
    %v2751 = vpow.pop %v2750
    %v2752 = vadd.f32 %v2751, 1.0
    %v2753 = vrcp.pop %v2752
    %v2754 = vmul.f32 1.0, %v2753
    %v2755 = vxor.u32 %v2746, 2147483648
    %v2756 = vmul.f32 %v2755, 1.442695
    %v2757 = vpow.pop %v2756
    %v2758 = vadd.f32 %v2757, 1.0
    %v2759 = vrcp.pop %v2758
    %v2760 = vmul.f32 1.0, %v2759
    %v2761 = vtanh.pop %v2747
    %v2762 = vxor.u32 %v2748, 2147483648
    %v2763 = vmul.f32 %v2762, 1.442695
    %v2764 = vpow.pop %v2763
    %v2765 = vadd.f32 %v2764, 1.0
    %v2766 = vrcp.pop %v2765
    %v2767 = vmul.f32 1.0, %v2766
    %v2768 = vmul.f32 %v2760, %v2460
    %v2769 = vmul.f32 %v2754, %v2761
    %v2770 = vadd.f32 %v2768, %v2769
    %v2771 = vtanh.pop %v2770
    %v2772 = vmul.f32 %v2767, %v2771
    %v2773 = vpack.c.bf16 %v2772, %v2772
    %s2774 = scalar_lea.vmem %s6, 24
    %2775 = vst [vmem:[%s2774] sm:$0xf] %v2773
    %s2776 = scalar_lea.vmem [#allocation2], 224
    %v2777 = vld [vmem:[%s2776] sm:$0xff]
    %v2778 = vld [vmem:[%s2776 + $0x8] sm:$0xff]
    %v2779 = vld [vmem:[%s2776 + $0x10] sm:$0xff]
    %v2780 = vld [vmem:[%s2776 + $0x18] sm:$0xff]
    %v2781 = vld [vmem:[%s2] sm:$0xff]
    %v2782 = vld [vmem:[%s2 + $0x8] sm:$0xff]
    %v2783 = vld [vmem:[%s2 + $0x10] sm:$0xff]
    %v2784 = vld [vmem:[%s2 + $0x18] sm:$0xff]
    %v2785 = vld [vmem:[%s2 + $0x20] sm:$0xff]
    %v2786 = vld [vmem:[%s2 + $0x28] sm:$0xff]
    %v2787 = vld [vmem:[%s2 + $0x30] sm:$0xff]
    %v2788 = vld [vmem:[%s2 + $0x38] sm:$0xff]
    %v2789 = vld [vmem:[%s2 + $0x40] sm:$0xff]
    %v2790 = vld [vmem:[%s2 + $0x48] sm:$0xff]
    %v2791 = vld [vmem:[%s2 + $0x50] sm:$0xff]
    %v2792 = vld [vmem:[%s2 + $0x58] sm:$0xff]
    %v2793 = vld [vmem:[%s2 + $0x60] sm:$0xff]
    %v2794 = vld [vmem:[%s2 + $0x68] sm:$0xff]
    %v2795 = vld [vmem:[%s2 + $0x70] sm:$0xff]
    %v2796 = vld [vmem:[%s2 + $0x78] sm:$0xff]
    %v2797 = vld [vmem:[%s2 + $0x80] sm:$0xff]
    %v2798 = vld [vmem:[%s2 + $0x88] sm:$0xff]
    %v2799 = vld [vmem:[%s2 + $0x90] sm:$0xff]
    %v2800 = vld [vmem:[%s2 + $0x98] sm:$0xff]
    %v2801 = vld [vmem:[%s2 + $0xa0] sm:$0xff]
    %v2802 = vld [vmem:[%s2 + $0xa8] sm:$0xff]
    %v2803 = vld [vmem:[%s2 + $0xb0] sm:$0xff]
    %v2804 = vld [vmem:[%s2 + $0xb8] sm:$0xff]
    %v2805 = vld [vmem:[%s2 + $0xc0] sm:$0xff]
    %v2806 = vld [vmem:[%s2 + $0xc8] sm:$0xff]
    %v2807 = vld [vmem:[%s2 + $0xd0] sm:$0xff]
    %v2808 = vld [vmem:[%s2 + $0xd8] sm:$0xff]
    %v2809 = vld [vmem:[%s2 + $0xe0] sm:$0xff]
    %v2810 = vld [vmem:[%s2 + $0xe8] sm:$0xff]
    %v2811 = vld [vmem:[%s2 + $0xf0] sm:$0xff]
    %v2812 = vld [vmem:[%s2 + $0xf8] sm:$0xff]
    %v2845 = vunpack.c.l.b16 %v2781
    %v2846 = vunpack.c.h.b16 %v2781
    %v2847 = vunpack.c.l.b16 %v2782
    %v2848 = vunpack.c.h.b16 %v2782
    %v2849 = vunpack.c.l.b16 %v2783
    %v2850 = vunpack.c.h.b16 %v2783
    %v2851 = vunpack.c.l.b16 %v2784
    %v2852 = vunpack.c.h.b16 %v2784
    %v2853 = vunpack.c.l.b16 %v2785
    %v2854 = vunpack.c.h.b16 %v2785
    %v2855 = vunpack.c.l.b16 %v2786
    %v2856 = vunpack.c.h.b16 %v2786
    %v2857 = vunpack.c.l.b16 %v2787
    %v2858 = vunpack.c.h.b16 %v2787
    %v2859 = vunpack.c.l.b16 %v2788
    %v2860 = vunpack.c.h.b16 %v2788
    %v2861 = vunpack.c.l.b16 %v2789
    %v2862 = vunpack.c.h.b16 %v2789
    %v2863 = vunpack.c.l.b16 %v2790
    %v2864 = vunpack.c.h.b16 %v2790
    %v2865 = vunpack.c.l.b16 %v2791
    %v2866 = vunpack.c.h.b16 %v2791
    %v2867 = vunpack.c.l.b16 %v2792
    %v2868 = vunpack.c.h.b16 %v2792
    %v2869 = vunpack.c.l.b16 %v2793
    %v2870 = vunpack.c.h.b16 %v2793
    %v2871 = vunpack.c.l.b16 %v2794
    %v2872 = vunpack.c.h.b16 %v2794
    %v2873 = vunpack.c.l.b16 %v2795
    %v2874 = vunpack.c.h.b16 %v2795
    %v2875 = vunpack.c.l.b16 %v2796
    %v2876 = vunpack.c.h.b16 %v2796
    %v2877 = vunpack.c.l.b16 %v2797
    %v2878 = vunpack.c.h.b16 %v2797
    %v2879 = vunpack.c.l.b16 %v2798
    %v2880 = vunpack.c.h.b16 %v2798
    %v2881 = vunpack.c.l.b16 %v2799
    %v2882 = vunpack.c.h.b16 %v2799
    %v2883 = vunpack.c.l.b16 %v2800
    %v2884 = vunpack.c.h.b16 %v2800
    %v2885 = vunpack.c.l.b16 %v2801
    %v2886 = vunpack.c.h.b16 %v2801
    %v2887 = vunpack.c.l.b16 %v2802
    %v2888 = vunpack.c.h.b16 %v2802
    %v2889 = vunpack.c.l.b16 %v2803
    %v2890 = vunpack.c.h.b16 %v2803
    %v2891 = vunpack.c.l.b16 %v2804
    %v2892 = vunpack.c.h.b16 %v2804
    %v2893 = vunpack.c.l.b16 %v2805
    %v2894 = vunpack.c.h.b16 %v2805
    %v2895 = vunpack.c.l.b16 %v2806
    %v2896 = vunpack.c.h.b16 %v2806
    %v2897 = vunpack.c.l.b16 %v2807
    %v2898 = vunpack.c.h.b16 %v2807
    %v2899 = vunpack.c.l.b16 %v2808
    %v2900 = vunpack.c.h.b16 %v2808
    %v2901 = vunpack.c.l.b16 %v2809
    %v2902 = vunpack.c.h.b16 %v2809
    %v2903 = vunpack.c.l.b16 %v2810
    %v2904 = vunpack.c.h.b16 %v2810
    %v2905 = vunpack.c.l.b16 %v2811
    %v2906 = vunpack.c.h.b16 %v2811
    %v2907 = vunpack.c.l.b16 %v2812
    %v2908 = vunpack.c.h.b16 %v2812
    %v2909 = vpack.c.b16 %v2849, %v2845
    %v2910 = vpack.c.b16 %v2850, %v2846
    %v2911 = vpack.c.b16 %v2851, %v2847
    %v2912 = vpack.c.b16 %v2852, %v2848
    %v2913 = vpack.c.b16 %v2857, %v2853
    %v2914 = vpack.c.b16 %v2858, %v2854
    %v2915 = vpack.c.b16 %v2859, %v2855
    %v2916 = vpack.c.b16 %v2860, %v2856
    %v2917 = vpack.c.b16 %v2865, %v2861
    %v2918 = vpack.c.b16 %v2866, %v2862
    %v2919 = vpack.c.b16 %v2867, %v2863
    %v2920 = vpack.c.b16 %v2868, %v2864
    %v2921 = vpack.c.b16 %v2873, %v2869
    %v2922 = vpack.c.b16 %v2874, %v2870
    %v2923 = vpack.c.b16 %v2875, %v2871
    %v2924 = vpack.c.b16 %v2876, %v2872
    %v2925 = vpack.c.b16 %v2881, %v2877
    %v2926 = vpack.c.b16 %v2882, %v2878
    %v2927 = vpack.c.b16 %v2883, %v2879
    %v2928 = vpack.c.b16 %v2884, %v2880
    %v2929 = vpack.c.b16 %v2889, %v2885
    %v2930 = vpack.c.b16 %v2890, %v2886
    %v2931 = vpack.c.b16 %v2891, %v2887
    %v2932 = vpack.c.b16 %v2892, %v2888
    %v2933 = vpack.c.b16 %v2897, %v2893
    %v2934 = vpack.c.b16 %v2898, %v2894
    %v2935 = vpack.c.b16 %v2899, %v2895
    %v2936 = vpack.c.b16 %v2900, %v2896
    %v2937 = vpack.c.b16 %v2905, %v2901
    %v2938 = vpack.c.b16 %v2906, %v2902
    %v2939 = vpack.c.b16 %v2907, %v2903
    %v2940 = vpack.c.b16 %v2908, %v2904
    %2973 = vmatprep.subr.bf16.mxu0 %v2910
    %2974 = vmatpush1.bf16.msra.mxu0 %v2909
    %2975 = vmatprep.subr.bf16.mxu0 %v2914
    %2976 = vmatpush1.bf16.msra.mxu0 %v2913
    %2977 = vmatprep.subr.bf16.mxu0 %v2918
    %2978 = vmatpush1.bf16.msra.mxu0 %v2917
    %2979 = vmatprep.subr.bf16.mxu0 %v2922
    %2980 = vmatpush1.bf16.msra.mxu0 %v2921
    %2981 = vmatprep.subr.bf16.mxu0 %v2926
    %2982 = vmatpush1.bf16.msra.mxu0 %v2925
    %2983 = vmatprep.subr.bf16.mxu0 %v2930
    %2984 = vmatpush1.bf16.msra.mxu0 %v2929
    %2985 = vmatprep.subr.bf16.mxu0 %v2934
    %2986 = vmatpush1.bf16.msra.mxu0 %v2933
    %2987 = vmatprep.subr.bf16.mxu0 %v2938
    %2988 = vmatpush1.bf16.msra.mxu0 %v2937
    %2989 = vmatprep.subr.bf16.mxu0 0
    %2990 = vmatpush1.bf16.msra.mxu0 0
    %2991 = vmatprep.subr.bf16.mxu0 0
    %2992 = vmatpush1.bf16.msra.mxu0 0
    %2993 = vmatprep.subr.bf16.mxu0 0
    %2994 = vmatpush1.bf16.msra.mxu0 0
    %2995 = vmatprep.subr.bf16.mxu0 0
    %2996 = vmatpush1.bf16.msra.mxu0 0
    %2997 = vmatprep.subr.bf16.mxu0 0
    %2998 = vmatpush1.bf16.msra.mxu0 0
    %2999 = vmatprep.subr.bf16.mxu0 0
    %3000 = vmatpush1.bf16.msra.mxu0 0
    %3001 = vmatprep.subr.bf16.mxu0 0
    %3002 = vmatpush1.bf16.msra.mxu0 0
    %3003 = vmatprep.subr.bf16.mxu0 0
    %3004 = vmatpush1.bf16.msra.mxu0 0
    %3005 = vmatprep.mubr.bf16.mxu0 0
    %3006 = vmatmul.mubr.bf16.gmra.mrb[0].mxu0 %v2773
    %v3007 = vpop.f32.mrb[0].mxu0
    %v3008 = vadd.f32 0.0, %v3007
    %v3009 = vpop.f32.mrb[0].mxu0
    %v3010 = vadd.f32 0.0, %v3009
    %v3011 = vpop.f32.mrb[0].mxu0
    %v3012 = vpop.f32.mrb[0].mxu0
    %3013 = vdwg.mxu0
    %3014 = vmatprep.subr.bf16.mxu0 %v2912
    %3015 = vmatpush1.bf16.msra.mxu0 %v2911
    %3016 = vmatprep.subr.bf16.mxu0 %v2916
    %3017 = vmatpush1.bf16.msra.mxu0 %v2915
    %3018 = vmatprep.subr.bf16.mxu0 %v2920
    %3019 = vmatpush1.bf16.msra.mxu0 %v2919
    %3020 = vmatprep.subr.bf16.mxu0 %v2924
    %3021 = vmatpush1.bf16.msra.mxu0 %v2923
    %3022 = vmatprep.subr.bf16.mxu0 %v2928
    %3023 = vmatpush1.bf16.msra.mxu0 %v2927
    %3024 = vmatprep.subr.bf16.mxu0 %v2932
    %3025 = vmatpush1.bf16.msra.mxu0 %v2931
    %3026 = vmatprep.subr.bf16.mxu0 %v2936
    %3027 = vmatpush1.bf16.msra.mxu0 %v2935
    %3028 = vmatprep.subr.bf16.mxu0 %v2940
    %3029 = vmatpush1.bf16.msra.mxu0 %v2939
    %3030 = vmatprep.subr.bf16.mxu0 0
    %3031 = vmatpush1.bf16.msra.mxu0 0
    %3032 = vmatprep.subr.bf16.mxu0 0
    %3033 = vmatpush1.bf16.msra.mxu0 0
    %3034 = vmatprep.subr.bf16.mxu0 0
    %3035 = vmatpush1.bf16.msra.mxu0 0
    %3036 = vmatprep.subr.bf16.mxu0 0
    %3037 = vmatpush1.bf16.msra.mxu0 0
    %3038 = vmatprep.subr.bf16.mxu0 0
    %3039 = vmatpush1.bf16.msra.mxu0 0
    %3040 = vmatprep.subr.bf16.mxu0 0
    %3041 = vmatpush1.bf16.msra.mxu0 0
    %3042 = vmatprep.subr.bf16.mxu0 0
    %3043 = vmatpush1.bf16.msra.mxu0 0
    %3044 = vmatprep.subr.bf16.mxu0 0
    %3045 = vmatpush1.bf16.msra.mxu0 0
    %3046 = vmatprep.mubr.bf16.mxu0 0
    %3047 = vmatmul.mubr.bf16.gmra.mrb[0].mxu0 %v2773
    %v3048 = vpop.f32.mrb[0].mxu0
    %v3049 = vadd.f32 0.0, %v3048
    %v3050 = vpop.f32.mrb[0].mxu0
    %v3051 = vadd.f32 0.0, %v3050
    %v3052 = vpop.f32.mrb[0].mxu0
    %v3053 = vpop.f32.mrb[0].mxu0
    %3054 = vdwg.mxu0
    %v3055 = vadd.f32 %v2777, %v3008
    %v3056 = vadd.f32 %v2778, %v3010
    %v3057 = vadd.f32 %v2779, %v3049
    %v3058 = vadd.f32 %v2780, %v3051
    %v3059 = vxor.u32 %v3055, 2147483648
    %v3060 = vmul.f32 %v3059, 1.442695
    %v3061 = vpow.pop %v3060
    %v3062 = vadd.f32 %v3061, 1.0
    %v3063 = vrcp.pop %v3062
    %v3064 = vmul.f32 1.0, %v3063
    %v3065 = vxor.u32 %v3056, 2147483648
    %v3066 = vmul.f32 %v3065, 1.442695
    %v3067 = vpow.pop %v3066
    %v3068 = vadd.f32 %v3067, 1.0
    %v3069 = vrcp.pop %v3068
    %v3070 = vmul.f32 1.0, %v3069
    %v3071 = vtanh.pop %v3057
    %v3072 = vxor.u32 %v3058, 2147483648
    %v3073 = vmul.f32 %v3072, 1.442695
    %v3074 = vpow.pop %v3073
    %v3075 = vadd.f32 %v3074, 1.0
    %v3076 = vrcp.pop %v3075
    %v3077 = vmul.f32 1.0, %v3076
    %v3078 = vmul.f32 %v3070, %v2770
    %v3079 = vmul.f32 %v3064, %v3071
    %v3080 = vadd.f32 %v3078, %v3079
    %v3081 = vtanh.pop %v3080
    %v3082 = vmul.f32 %v3077, %v3081
    %v3083 = vpack.c.bf16 %v3082, %v3082
    %s3084 = scalar_lea.vmem %s6, 28
    %3085 = vst [vmem:[%s3084] sm:$0xf] %v3083
    %s3086 = scalar_lea.vmem [#allocation2], 256
    %v3087 = vld [vmem:[%s3086] sm:$0xff]
    %v3088 = vld [vmem:[%s3086 + $0x8] sm:$0xff]
    %v3089 = vld [vmem:[%s3086 + $0x10] sm:$0xff]
    %v3090 = vld [vmem:[%s3086 + $0x18] sm:$0xff]
    %v3091 = vld [vmem:[%s2] sm:$0xff]
    %v3092 = vld [vmem:[%s2 + $0x8] sm:$0xff]
    %v3093 = vld [vmem:[%s2 + $0x10] sm:$0xff]
    %v3094 = vld [vmem:[%s2 + $0x18] sm:$0xff]
    %v3095 = vld [vmem:[%s2 + $0x20] sm:$0xff]
    %v3096 = vld [vmem:[%s2 + $0x28] sm:$0xff]
    %v3097 = vld [vmem:[%s2 + $0x30] sm:$0xff]
    %v3098 = vld [vmem:[%s2 + $0x38] sm:$0xff]
    %v3099 = vld [vmem:[%s2 + $0x40] sm:$0xff]
    %v3100 = vld [vmem:[%s2 + $0x48] sm:$0xff]
    %v3101 = vld [vmem:[%s2 + $0x50] sm:$0xff]
    %v3102 = vld [vmem:[%s2 + $0x58] sm:$0xff]
    %v3103 = vld [vmem:[%s2 + $0x60] sm:$0xff]
    %v3104 = vld [vmem:[%s2 + $0x68] sm:$0xff]
    %v3105 = vld [vmem:[%s2 + $0x70] sm:$0xff]
    %v3106 = vld [vmem:[%s2 + $0x78] sm:$0xff]
    %v3107 = vld [vmem:[%s2 + $0x80] sm:$0xff]
    %v3108 = vld [vmem:[%s2 + $0x88] sm:$0xff]
    %v3109 = vld [vmem:[%s2 + $0x90] sm:$0xff]
    %v3110 = vld [vmem:[%s2 + $0x98] sm:$0xff]
    %v3111 = vld [vmem:[%s2 + $0xa0] sm:$0xff]
    %v3112 = vld [vmem:[%s2 + $0xa8] sm:$0xff]
    %v3113 = vld [vmem:[%s2 + $0xb0] sm:$0xff]
    %v3114 = vld [vmem:[%s2 + $0xb8] sm:$0xff]
    %v3115 = vld [vmem:[%s2 + $0xc0] sm:$0xff]
    %v3116 = vld [vmem:[%s2 + $0xc8] sm:$0xff]
    %v3117 = vld [vmem:[%s2 + $0xd0] sm:$0xff]
    %v3118 = vld [vmem:[%s2 + $0xd8] sm:$0xff]
    %v3119 = vld [vmem:[%s2 + $0xe0] sm:$0xff]
    %v3120 = vld [vmem:[%s2 + $0xe8] sm:$0xff]
    %v3121 = vld [vmem:[%s2 + $0xf0] sm:$0xff]
    %v3122 = vld [vmem:[%s2 + $0xf8] sm:$0xff]
    %v3155 = vunpack.c.l.b16 %v3091
    %v3156 = vunpack.c.h.b16 %v3091
    %v3157 = vunpack.c.l.b16 %v3092
    %v3158 = vunpack.c.h.b16 %v3092
    %v3159 = vunpack.c.l.b16 %v3093
    %v3160 = vunpack.c.h.b16 %v3093
    %v3161 = vunpack.c.l.b16 %v3094
    %v3162 = vunpack.c.h.b16 %v3094
    %v3163 = vunpack.c.l.b16 %v3095
    %v3164 = vunpack.c.h.b16 %v3095
    %v3165 = vunpack.c.l.b16 %v3096
    %v3166 = vunpack.c.h.b16 %v3096
    %v3167 = vunpack.c.l.b16 %v3097
    %v3168 = vunpack.c.h.b16 %v3097
    %v3169 = vunpack.c.l.b16 %v3098
    %v3170 = vunpack.c.h.b16 %v3098
    %v3171 = vunpack.c.l.b16 %v3099
    %v3172 = vunpack.c.h.b16 %v3099
    %v3173 = vunpack.c.l.b16 %v3100
    %v3174 = vunpack.c.h.b16 %v3100
    %v3175 = vunpack.c.l.b16 %v3101
    %v3176 = vunpack.c.h.b16 %v3101
    %v3177 = vunpack.c.l.b16 %v3102
    %v3178 = vunpack.c.h.b16 %v3102
    %v3179 = vunpack.c.l.b16 %v3103
    %v3180 = vunpack.c.h.b16 %v3103
    %v3181 = vunpack.c.l.b16 %v3104
    %v3182 = vunpack.c.h.b16 %v3104
    %v3183 = vunpack.c.l.b16 %v3105
    %v3184 = vunpack.c.h.b16 %v3105
    %v3185 = vunpack.c.l.b16 %v3106
    %v3186 = vunpack.c.h.b16 %v3106
    %v3187 = vunpack.c.l.b16 %v3107
    %v3188 = vunpack.c.h.b16 %v3107
    %v3189 = vunpack.c.l.b16 %v3108
    %v3190 = vunpack.c.h.b16 %v3108
    %v3191 = vunpack.c.l.b16 %v3109
    %v3192 = vunpack.c.h.b16 %v3109
    %v3193 = vunpack.c.l.b16 %v3110
    %v3194 = vunpack.c.h.b16 %v3110
    %v3195 = vunpack.c.l.b16 %v3111
    %v3196 = vunpack.c.h.b16 %v3111
    %v3197 = vunpack.c.l.b16 %v3112
    %v3198 = vunpack.c.h.b16 %v3112
    %v3199 = vunpack.c.l.b16 %v3113
    %v3200 = vunpack.c.h.b16 %v3113
    %v3201 = vunpack.c.l.b16 %v3114
    %v3202 = vunpack.c.h.b16 %v3114
    %v3203 = vunpack.c.l.b16 %v3115
    %v3204 = vunpack.c.h.b16 %v3115
    %v3205 = vunpack.c.l.b16 %v3116
    %v3206 = vunpack.c.h.b16 %v3116
    %v3207 = vunpack.c.l.b16 %v3117
    %v3208 = vunpack.c.h.b16 %v3117
    %v3209 = vunpack.c.l.b16 %v3118
    %v3210 = vunpack.c.h.b16 %v3118
    %v3211 = vunpack.c.l.b16 %v3119
    %v3212 = vunpack.c.h.b16 %v3119
    %v3213 = vunpack.c.l.b16 %v3120
    %v3214 = vunpack.c.h.b16 %v3120
    %v3215 = vunpack.c.l.b16 %v3121
    %v3216 = vunpack.c.h.b16 %v3121
    %v3217 = vunpack.c.l.b16 %v3122
    %v3218 = vunpack.c.h.b16 %v3122
    %v3219 = vpack.c.b16 %v3159, %v3155
    %v3220 = vpack.c.b16 %v3160, %v3156
    %v3221 = vpack.c.b16 %v3161, %v3157
    %v3222 = vpack.c.b16 %v3162, %v3158
    %v3223 = vpack.c.b16 %v3167, %v3163
    %v3224 = vpack.c.b16 %v3168, %v3164
    %v3225 = vpack.c.b16 %v3169, %v3165
    %v3226 = vpack.c.b16 %v3170, %v3166
    %v3227 = vpack.c.b16 %v3175, %v3171
    %v3228 = vpack.c.b16 %v3176, %v3172
    %v3229 = vpack.c.b16 %v3177, %v3173
    %v3230 = vpack.c.b16 %v3178, %v3174
    %v3231 = vpack.c.b16 %v3183, %v3179
    %v3232 = vpack.c.b16 %v3184, %v3180
    %v3233 = vpack.c.b16 %v3185, %v3181
    %v3234 = vpack.c.b16 %v3186, %v3182
    %v3235 = vpack.c.b16 %v3191, %v3187
    %v3236 = vpack.c.b16 %v3192, %v3188
    %v3237 = vpack.c.b16 %v3193, %v3189
    %v3238 = vpack.c.b16 %v3194, %v3190
    %v3239 = vpack.c.b16 %v3199, %v3195
    %v3240 = vpack.c.b16 %v3200, %v3196
    %v3241 = vpack.c.b16 %v3201, %v3197
    %v3242 = vpack.c.b16 %v3202, %v3198
    %v3243 = vpack.c.b16 %v3207, %v3203
    %v3244 = vpack.c.b16 %v3208, %v3204
    %v3245 = vpack.c.b16 %v3209, %v3205
    %v3246 = vpack.c.b16 %v3210, %v3206
    %v3247 = vpack.c.b16 %v3215, %v3211
    %v3248 = vpack.c.b16 %v3216, %v3212
    %v3249 = vpack.c.b16 %v3217, %v3213
    %v3250 = vpack.c.b16 %v3218, %v3214
    %3283 = vmatprep.subr.bf16.mxu0 %v3220
    %3284 = vmatpush1.bf16.msra.mxu0 %v3219
    %3285 = vmatprep.subr.bf16.mxu0 %v3224
    %3286 = vmatpush1.bf16.msra.mxu0 %v3223
    %3287 = vmatprep.subr.bf16.mxu0 %v3228
    %3288 = vmatpush1.bf16.msra.mxu0 %v3227
    %3289 = vmatprep.subr.bf16.mxu0 %v3232
    %3290 = vmatpush1.bf16.msra.mxu0 %v3231
    %3291 = vmatprep.subr.bf16.mxu0 %v3236
    %3292 = vmatpush1.bf16.msra.mxu0 %v3235
    %3293 = vmatprep.subr.bf16.mxu0 %v3240
    %3294 = vmatpush1.bf16.msra.mxu0 %v3239
    %3295 = vmatprep.subr.bf16.mxu0 %v3244
    %3296 = vmatpush1.bf16.msra.mxu0 %v3243
    %3297 = vmatprep.subr.bf16.mxu0 %v3248
    %3298 = vmatpush1.bf16.msra.mxu0 %v3247
    %3299 = vmatprep.subr.bf16.mxu0 0
    %3300 = vmatpush1.bf16.msra.mxu0 0
    %3301 = vmatprep.subr.bf16.mxu0 0
    %3302 = vmatpush1.bf16.msra.mxu0 0
    %3303 = vmatprep.subr.bf16.mxu0 0
    %3304 = vmatpush1.bf16.msra.mxu0 0
    %3305 = vmatprep.subr.bf16.mxu0 0
    %3306 = vmatpush1.bf16.msra.mxu0 0
    %3307 = vmatprep.subr.bf16.mxu0 0
    %3308 = vmatpush1.bf16.msra.mxu0 0
    %3309 = vmatprep.subr.bf16.mxu0 0
    %3310 = vmatpush1.bf16.msra.mxu0 0
    %3311 = vmatprep.subr.bf16.mxu0 0
    %3312 = vmatpush1.bf16.msra.mxu0 0
    %3313 = vmatprep.subr.bf16.mxu0 0
    %3314 = vmatpush1.bf16.msra.mxu0 0
    %3315 = vmatprep.mubr.bf16.mxu0 0
    %3316 = vmatmul.mubr.bf16.gmra.mrb[0].mxu0 %v3083
    %v3317 = vpop.f32.mrb[0].mxu0
    %v3318 = vadd.f32 0.0, %v3317
    %v3319 = vpop.f32.mrb[0].mxu0
    %v3320 = vadd.f32 0.0, %v3319
    %v3321 = vpop.f32.mrb[0].mxu0
    %v3322 = vpop.f32.mrb[0].mxu0
    %3323 = vdwg.mxu0
    %3324 = vmatprep.subr.bf16.mxu0 %v3222
    %3325 = vmatpush1.bf16.msra.mxu0 %v3221
    %3326 = vmatprep.subr.bf16.mxu0 %v3226
    %3327 = vmatpush1.bf16.msra.mxu0 %v3225
    %3328 = vmatprep.subr.bf16.mxu0 %v3230
    %3329 = vmatpush1.bf16.msra.mxu0 %v3229
    %3330 = vmatprep.subr.bf16.mxu0 %v3234
    %3331 = vmatpush1.bf16.msra.mxu0 %v3233
    %3332 = vmatprep.subr.bf16.mxu0 %v3238
    %3333 = vmatpush1.bf16.msra.mxu0 %v3237
    %3334 = vmatprep.subr.bf16.mxu0 %v3242
    %3335 = vmatpush1.bf16.msra.mxu0 %v3241
    %3336 = vmatprep.subr.bf16.mxu0 %v3246
    %3337 = vmatpush1.bf16.msra.mxu0 %v3245
    %3338 = vmatprep.subr.bf16.mxu0 %v3250
    %3339 = vmatpush1.bf16.msra.mxu0 %v3249
    %3340 = vmatprep.subr.bf16.mxu0 0
    %3341 = vmatpush1.bf16.msra.mxu0 0
    %3342 = vmatprep.subr.bf16.mxu0 0
    %3343 = vmatpush1.bf16.msra.mxu0 0
    %3344 = vmatprep.subr.bf16.mxu0 0
    %3345 = vmatpush1.bf16.msra.mxu0 0
    %3346 = vmatprep.subr.bf16.mxu0 0
    %3347 = vmatpush1.bf16.msra.mxu0 0
    %3348 = vmatprep.subr.bf16.mxu0 0
    %3349 = vmatpush1.bf16.msra.mxu0 0
    %3350 = vmatprep.subr.bf16.mxu0 0
    %3351 = vmatpush1.bf16.msra.mxu0 0
    %3352 = vmatprep.subr.bf16.mxu0 0
    %3353 = vmatpush1.bf16.msra.mxu0 0
    %3354 = vmatprep.subr.bf16.mxu0 0
    %3355 = vmatpush1.bf16.msra.mxu0 0
    %3356 = vmatprep.mubr.bf16.mxu0 0
    %3357 = vmatmul.mubr.bf16.gmra.mrb[0].mxu0 %v3083
    %v3358 = vpop.f32.mrb[0].mxu0
    %v3359 = vadd.f32 0.0, %v3358
    %v3360 = vpop.f32.mrb[0].mxu0
    %v3361 = vadd.f32 0.0, %v3360
    %v3362 = vpop.f32.mrb[0].mxu0
    %v3363 = vpop.f32.mrb[0].mxu0
    %3364 = vdwg.mxu0
    %v3365 = vadd.f32 %v3087, %v3318
    %v3366 = vadd.f32 %v3088, %v3320
    %v3367 = vadd.f32 %v3089, %v3359
    %v3368 = vadd.f32 %v3090, %v3361
    %v3369 = vxor.u32 %v3365, 2147483648
    %v3370 = vmul.f32 %v3369, 1.442695
    %v3371 = vpow.pop %v3370
    %v3372 = vadd.f32 %v3371, 1.0
    %v3373 = vrcp.pop %v3372
    %v3374 = vmul.f32 1.0, %v3373
    %v3375 = vxor.u32 %v3366, 2147483648
    %v3376 = vmul.f32 %v3375, 1.442695
    %v3377 = vpow.pop %v3376
    %v3378 = vadd.f32 %v3377, 1.0
    %v3379 = vrcp.pop %v3378
    %v3380 = vmul.f32 1.0, %v3379
    %v3381 = vtanh.pop %v3367
    %v3382 = vxor.u32 %v3368, 2147483648
    %v3383 = vmul.f32 %v3382, 1.442695
    %v3384 = vpow.pop %v3383
    %v3385 = vadd.f32 %v3384, 1.0
    %v3386 = vrcp.pop %v3385
    %v3387 = vmul.f32 1.0, %v3386
    %v3388 = vmul.f32 %v3380, %v3080
    %v3389 = vmul.f32 %v3374, %v3381
    %v3390 = vadd.f32 %v3388, %v3389
    %v3391 = vtanh.pop %v3390
    %v3392 = vmul.f32 %v3387, %v3391
    %v3393 = vpack.c.bf16 %v3392, %v3392
    %s3394 = scalar_lea.vmem %s6, 32
    %3395 = vst [vmem:[%s3394] sm:$0xf] %v3393
    %s3396 = scalar_lea.vmem [#allocation2], 288
    %v3397 = vld [vmem:[%s3396] sm:$0xff]
    %v3398 = vld [vmem:[%s3396 + $0x8] sm:$0xff]
    %v3399 = vld [vmem:[%s3396 + $0x10] sm:$0xff]
    %v3400 = vld [vmem:[%s3396 + $0x18] sm:$0xff]
    %v3401 = vld [vmem:[%s2] sm:$0xff]
    %v3402 = vld [vmem:[%s2 + $0x8] sm:$0xff]
    %v3403 = vld [vmem:[%s2 + $0x10] sm:$0xff]
    %v3404 = vld [vmem:[%s2 + $0x18] sm:$0xff]
    %v3405 = vld [vmem:[%s2 + $0x20] sm:$0xff]
    %v3406 = vld [vmem:[%s2 + $0x28] sm:$0xff]
    %v3407 = vld [vmem:[%s2 + $0x30] sm:$0xff]
    %v3408 = vld [vmem:[%s2 + $0x38] sm:$0xff]
    %v3409 = vld [vmem:[%s2 + $0x40] sm:$0xff]
    %v3410 = vld [vmem:[%s2 + $0x48] sm:$0xff]
    %v3411 = vld [vmem:[%s2 + $0x50] sm:$0xff]
    %v3412 = vld [vmem:[%s2 + $0x58] sm:$0xff]
    %v3413 = vld [vmem:[%s2 + $0x60] sm:$0xff]
    %v3414 = vld [vmem:[%s2 + $0x68] sm:$0xff]
    %v3415 = vld [vmem:[%s2 + $0x70] sm:$0xff]
    %v3416 = vld [vmem:[%s2 + $0x78] sm:$0xff]
    %v3417 = vld [vmem:[%s2 + $0x80] sm:$0xff]
    %v3418 = vld [vmem:[%s2 + $0x88] sm:$0xff]
    %v3419 = vld [vmem:[%s2 + $0x90] sm:$0xff]
    %v3420 = vld [vmem:[%s2 + $0x98] sm:$0xff]
    %v3421 = vld [vmem:[%s2 + $0xa0] sm:$0xff]
    %v3422 = vld [vmem:[%s2 + $0xa8] sm:$0xff]
    %v3423 = vld [vmem:[%s2 + $0xb0] sm:$0xff]
    %v3424 = vld [vmem:[%s2 + $0xb8] sm:$0xff]
    %v3425 = vld [vmem:[%s2 + $0xc0] sm:$0xff]
    %v3426 = vld [vmem:[%s2 + $0xc8] sm:$0xff]
    %v3427 = vld [vmem:[%s2 + $0xd0] sm:$0xff]
    %v3428 = vld [vmem:[%s2 + $0xd8] sm:$0xff]
    %v3429 = vld [vmem:[%s2 + $0xe0] sm:$0xff]
    %v3430 = vld [vmem:[%s2 + $0xe8] sm:$0xff]
    %v3431 = vld [vmem:[%s2 + $0xf0] sm:$0xff]
    %v3432 = vld [vmem:[%s2 + $0xf8] sm:$0xff]
    %v3465 = vunpack.c.l.b16 %v3401
    %v3466 = vunpack.c.h.b16 %v3401
    %v3467 = vunpack.c.l.b16 %v3402
    %v3468 = vunpack.c.h.b16 %v3402
    %v3469 = vunpack.c.l.b16 %v3403
    %v3470 = vunpack.c.h.b16 %v3403
    %v3471 = vunpack.c.l.b16 %v3404
    %v3472 = vunpack.c.h.b16 %v3404
    %v3473 = vunpack.c.l.b16 %v3405
    %v3474 = vunpack.c.h.b16 %v3405
    %v3475 = vunpack.c.l.b16 %v3406
    %v3476 = vunpack.c.h.b16 %v3406
    %v3477 = vunpack.c.l.b16 %v3407
    %v3478 = vunpack.c.h.b16 %v3407
    %v3479 = vunpack.c.l.b16 %v3408
    %v3480 = vunpack.c.h.b16 %v3408
    %v3481 = vunpack.c.l.b16 %v3409
    %v3482 = vunpack.c.h.b16 %v3409
    %v3483 = vunpack.c.l.b16 %v3410
    %v3484 = vunpack.c.h.b16 %v3410
    %v3485 = vunpack.c.l.b16 %v3411
    %v3486 = vunpack.c.h.b16 %v3411
    %v3487 = vunpack.c.l.b16 %v3412
    %v3488 = vunpack.c.h.b16 %v3412
    %v3489 = vunpack.c.l.b16 %v3413
    %v3490 = vunpack.c.h.b16 %v3413
    %v3491 = vunpack.c.l.b16 %v3414
    %v3492 = vunpack.c.h.b16 %v3414
    %v3493 = vunpack.c.l.b16 %v3415
    %v3494 = vunpack.c.h.b16 %v3415
    %v3495 = vunpack.c.l.b16 %v3416
    %v3496 = vunpack.c.h.b16 %v3416
    %v3497 = vunpack.c.l.b16 %v3417
    %v3498 = vunpack.c.h.b16 %v3417
    %v3499 = vunpack.c.l.b16 %v3418
    %v3500 = vunpack.c.h.b16 %v3418
    %v3501 = vunpack.c.l.b16 %v3419
    %v3502 = vunpack.c.h.b16 %v3419
    %v3503 = vunpack.c.l.b16 %v3420
    %v3504 = vunpack.c.h.b16 %v3420
    %v3505 = vunpack.c.l.b16 %v3421
    %v3506 = vunpack.c.h.b16 %v3421
    %v3507 = vunpack.c.l.b16 %v3422
    %v3508 = vunpack.c.h.b16 %v3422
    %v3509 = vunpack.c.l.b16 %v3423
    %v3510 = vunpack.c.h.b16 %v3423
    %v3511 = vunpack.c.l.b16 %v3424
    %v3512 = vunpack.c.h.b16 %v3424
    %v3513 = vunpack.c.l.b16 %v3425
    %v3514 = vunpack.c.h.b16 %v3425
    %v3515 = vunpack.c.l.b16 %v3426
    %v3516 = vunpack.c.h.b16 %v3426
    %v3517 = vunpack.c.l.b16 %v3427
    %v3518 = vunpack.c.h.b16 %v3427
    %v3519 = vunpack.c.l.b16 %v3428
    %v3520 = vunpack.c.h.b16 %v3428
    %v3521 = vunpack.c.l.b16 %v3429
    %v3522 = vunpack.c.h.b16 %v3429
    %v3523 = vunpack.c.l.b16 %v3430
    %v3524 = vunpack.c.h.b16 %v3430
    %v3525 = vunpack.c.l.b16 %v3431
    %v3526 = vunpack.c.h.b16 %v3431
    %v3527 = vunpack.c.l.b16 %v3432
    %v3528 = vunpack.c.h.b16 %v3432
    %v3529 = vpack.c.b16 %v3469, %v3465
    %v3530 = vpack.c.b16 %v3470, %v3466
    %v3531 = vpack.c.b16 %v3471, %v3467
    %v3532 = vpack.c.b16 %v3472, %v3468
    %v3533 = vpack.c.b16 %v3477, %v3473
    %v3534 = vpack.c.b16 %v3478, %v3474
    %v3535 = vpack.c.b16 %v3479, %v3475
    %v3536 = vpack.c.b16 %v3480, %v3476
    %v3537 = vpack.c.b16 %v3485, %v3481
    %v3538 = vpack.c.b16 %v3486, %v3482
    %v3539 = vpack.c.b16 %v3487, %v3483
    %v3540 = vpack.c.b16 %v3488, %v3484
    %v3541 = vpack.c.b16 %v3493, %v3489
    %v3542 = vpack.c.b16 %v3494, %v3490
    %v3543 = vpack.c.b16 %v3495, %v3491
    %v3544 = vpack.c.b16 %v3496, %v3492
    %v3545 = vpack.c.b16 %v3501, %v3497
    %v3546 = vpack.c.b16 %v3502, %v3498
    %v3547 = vpack.c.b16 %v3503, %v3499
    %v3548 = vpack.c.b16 %v3504, %v3500
    %v3549 = vpack.c.b16 %v3509, %v3505
    %v3550 = vpack.c.b16 %v3510, %v3506
    %v3551 = vpack.c.b16 %v3511, %v3507
    %v3552 = vpack.c.b16 %v3512, %v3508
    %v3553 = vpack.c.b16 %v3517, %v3513
    %v3554 = vpack.c.b16 %v3518, %v3514
    %v3555 = vpack.c.b16 %v3519, %v3515
    %v3556 = vpack.c.b16 %v3520, %v3516
    %v3557 = vpack.c.b16 %v3525, %v3521
    %v3558 = vpack.c.b16 %v3526, %v3522
    %v3559 = vpack.c.b16 %v3527, %v3523
    %v3560 = vpack.c.b16 %v3528, %v3524
    %3593 = vmatprep.subr.bf16.mxu0 %v3530
    %3594 = vmatpush1.bf16.msra.mxu0 %v3529
    %3595 = vmatprep.subr.bf16.mxu0 %v3534
    %3596 = vmatpush1.bf16.msra.mxu0 %v3533
    %3597 = vmatprep.subr.bf16.mxu0 %v3538
    %3598 = vmatpush1.bf16.msra.mxu0 %v3537
    %3599 = vmatprep.subr.bf16.mxu0 %v3542
    %3600 = vmatpush1.bf16.msra.mxu0 %v3541
    %3601 = vmatprep.subr.bf16.mxu0 %v3546
    %3602 = vmatpush1.bf16.msra.mxu0 %v3545
    %3603 = vmatprep.subr.bf16.mxu0 %v3550
    %3604 = vmatpush1.bf16.msra.mxu0 %v3549
    %3605 = vmatprep.subr.bf16.mxu0 %v3554
    %3606 = vmatpush1.bf16.msra.mxu0 %v3553
    %3607 = vmatprep.subr.bf16.mxu0 %v3558
    %3608 = vmatpush1.bf16.msra.mxu0 %v3557
    %3609 = vmatprep.subr.bf16.mxu0 0
    %3610 = vmatpush1.bf16.msra.mxu0 0
    %3611 = vmatprep.subr.bf16.mxu0 0
    %3612 = vmatpush1.bf16.msra.mxu0 0
    %3613 = vmatprep.subr.bf16.mxu0 0
    %3614 = vmatpush1.bf16.msra.mxu0 0
    %3615 = vmatprep.subr.bf16.mxu0 0
    %3616 = vmatpush1.bf16.msra.mxu0 0
    %3617 = vmatprep.subr.bf16.mxu0 0
    %3618 = vmatpush1.bf16.msra.mxu0 0
    %3619 = vmatprep.subr.bf16.mxu0 0
    %3620 = vmatpush1.bf16.msra.mxu0 0
    %3621 = vmatprep.subr.bf16.mxu0 0
    %3622 = vmatpush1.bf16.msra.mxu0 0
    %3623 = vmatprep.subr.bf16.mxu0 0
    %3624 = vmatpush1.bf16.msra.mxu0 0
    %3625 = vmatprep.mubr.bf16.mxu0 0
    %3626 = vmatmul.mubr.bf16.gmra.mrb[0].mxu0 %v3393
    %v3627 = vpop.f32.mrb[0].mxu0
    %v3628 = vadd.f32 0.0, %v3627
    %v3629 = vpop.f32.mrb[0].mxu0
    %v3630 = vadd.f32 0.0, %v3629
    %v3631 = vpop.f32.mrb[0].mxu0
    %v3632 = vpop.f32.mrb[0].mxu0
    %3633 = vdwg.mxu0
    %3634 = vmatprep.subr.bf16.mxu0 %v3532
    %3635 = vmatpush1.bf16.msra.mxu0 %v3531
    %3636 = vmatprep.subr.bf16.mxu0 %v3536
    %3637 = vmatpush1.bf16.msra.mxu0 %v3535
    %3638 = vmatprep.subr.bf16.mxu0 %v3540
    %3639 = vmatpush1.bf16.msra.mxu0 %v3539
    %3640 = vmatprep.subr.bf16.mxu0 %v3544
    %3641 = vmatpush1.bf16.msra.mxu0 %v3543
    %3642 = vmatprep.subr.bf16.mxu0 %v3548
    %3643 = vmatpush1.bf16.msra.mxu0 %v3547
    %3644 = vmatprep.subr.bf16.mxu0 %v3552
    %3645 = vmatpush1.bf16.msra.mxu0 %v3551
    %3646 = vmatprep.subr.bf16.mxu0 %v3556
    %3647 = vmatpush1.bf16.msra.mxu0 %v3555
    %3648 = vmatprep.subr.bf16.mxu0 %v3560
    %3649 = vmatpush1.bf16.msra.mxu0 %v3559
    %3650 = vmatprep.subr.bf16.mxu0 0
    %3651 = vmatpush1.bf16.msra.mxu0 0
    %3652 = vmatprep.subr.bf16.mxu0 0
    %3653 = vmatpush1.bf16.msra.mxu0 0
    %3654 = vmatprep.subr.bf16.mxu0 0
    %3655 = vmatpush1.bf16.msra.mxu0 0
    %3656 = vmatprep.subr.bf16.mxu0 0
    %3657 = vmatpush1.bf16.msra.mxu0 0
    %3658 = vmatprep.subr.bf16.mxu0 0
    %3659 = vmatpush1.bf16.msra.mxu0 0
    %3660 = vmatprep.subr.bf16.mxu0 0
    %3661 = vmatpush1.bf16.msra.mxu0 0
    %3662 = vmatprep.subr.bf16.mxu0 0
    %3663 = vmatpush1.bf16.msra.mxu0 0
    %3664 = vmatprep.subr.bf16.mxu0 0
    %3665 = vmatpush1.bf16.msra.mxu0 0
    %3666 = vmatprep.mubr.bf16.mxu0 0
    %3667 = vmatmul.mubr.bf16.gmra.mrb[0].mxu0 %v3393
    %v3668 = vpop.f32.mrb[0].mxu0
    %v3669 = vadd.f32 0.0, %v3668
    %v3670 = vpop.f32.mrb[0].mxu0
    %v3671 = vadd.f32 0.0, %v3670
    %v3672 = vpop.f32.mrb[0].mxu0
    %v3673 = vpop.f32.mrb[0].mxu0
    %3674 = vdwg.mxu0
    %v3675 = vadd.f32 %v3397, %v3628
    %v3676 = vadd.f32 %v3398, %v3630
    %v3677 = vadd.f32 %v3399, %v3669
    %v3678 = vadd.f32 %v3400, %v3671
    %v3679 = vxor.u32 %v3675, 2147483648
    %v3680 = vmul.f32 %v3679, 1.442695
    %v3681 = vpow.pop %v3680
    %v3682 = vadd.f32 %v3681, 1.0
    %v3683 = vrcp.pop %v3682
    %v3684 = vmul.f32 1.0, %v3683
    %v3685 = vxor.u32 %v3676, 2147483648
    %v3686 = vmul.f32 %v3685, 1.442695
    %v3687 = vpow.pop %v3686
    %v3688 = vadd.f32 %v3687, 1.0
    %v3689 = vrcp.pop %v3688
    %v3690 = vmul.f32 1.0, %v3689
    %v3691 = vtanh.pop %v3677
    %v3692 = vxor.u32 %v3678, 2147483648
    %v3693 = vmul.f32 %v3692, 1.442695
    %v3694 = vpow.pop %v3693
    %v3695 = vadd.f32 %v3694, 1.0
    %v3696 = vrcp.pop %v3695
    %v3697 = vmul.f32 1.0, %v3696
    %v3698 = vmul.f32 %v3690, %v3390
    %v3699 = vmul.f32 %v3684, %v3691
    %v3700 = vadd.f32 %v3698, %v3699
    %v3701 = vtanh.pop %v3700
    %v3702 = vmul.f32 %v3697, %v3701
    %v3703 = vpack.c.bf16 %v3702, %v3702
    %s3704 = scalar_lea.vmem %s6, 36
    %3705 = vst [vmem:[%s3704] sm:$0xf] %v3703
    %s3706 = scalar_lea.vmem [#allocation2], 320
    %v3707 = vld [vmem:[%s3706] sm:$0xff]
    %v3708 = vld [vmem:[%s3706 + $0x8] sm:$0xff]
    %v3709 = vld [vmem:[%s3706 + $0x10] sm:$0xff]
    %v3710 = vld [vmem:[%s3706 + $0x18] sm:$0xff]
    %v3711 = vld [vmem:[%s2] sm:$0xff]
    %v3712 = vld [vmem:[%s2 + $0x8] sm:$0xff]
    %v3713 = vld [vmem:[%s2 + $0x10] sm:$0xff]
    %v3714 = vld [vmem:[%s2 + $0x18] sm:$0xff]
    %v3715 = vld [vmem:[%s2 + $0x20] sm:$0xff]
    %v3716 = vld [vmem:[%s2 + $0x28] sm:$0xff]
    %v3717 = vld [vmem:[%s2 + $0x30] sm:$0xff]
    %v3718 = vld [vmem:[%s2 + $0x38] sm:$0xff]
    %v3719 = vld [vmem:[%s2 + $0x40] sm:$0xff]
    %v3720 = vld [vmem:[%s2 + $0x48] sm:$0xff]
    %v3721 = vld [vmem:[%s2 + $0x50] sm:$0xff]
    %v3722 = vld [vmem:[%s2 + $0x58] sm:$0xff]
    %v3723 = vld [vmem:[%s2 + $0x60] sm:$0xff]
    %v3724 = vld [vmem:[%s2 + $0x68] sm:$0xff]
    %v3725 = vld [vmem:[%s2 + $0x70] sm:$0xff]
    %v3726 = vld [vmem:[%s2 + $0x78] sm:$0xff]
    %v3727 = vld [vmem:[%s2 + $0x80] sm:$0xff]
    %v3728 = vld [vmem:[%s2 + $0x88] sm:$0xff]
    %v3729 = vld [vmem:[%s2 + $0x90] sm:$0xff]
    %v3730 = vld [vmem:[%s2 + $0x98] sm:$0xff]
    %v3731 = vld [vmem:[%s2 + $0xa0] sm:$0xff]
    %v3732 = vld [vmem:[%s2 + $0xa8] sm:$0xff]
    %v3733 = vld [vmem:[%s2 + $0xb0] sm:$0xff]
    %v3734 = vld [vmem:[%s2 + $0xb8] sm:$0xff]
    %v3735 = vld [vmem:[%s2 + $0xc0] sm:$0xff]
    %v3736 = vld [vmem:[%s2 + $0xc8] sm:$0xff]
    %v3737 = vld [vmem:[%s2 + $0xd0] sm:$0xff]
    %v3738 = vld [vmem:[%s2 + $0xd8] sm:$0xff]
    %v3739 = vld [vmem:[%s2 + $0xe0] sm:$0xff]
    %v3740 = vld [vmem:[%s2 + $0xe8] sm:$0xff]
    %v3741 = vld [vmem:[%s2 + $0xf0] sm:$0xff]
    %v3742 = vld [vmem:[%s2 + $0xf8] sm:$0xff]
    %v3775 = vunpack.c.l.b16 %v3711
    %v3776 = vunpack.c.h.b16 %v3711
    %v3777 = vunpack.c.l.b16 %v3712
    %v3778 = vunpack.c.h.b16 %v3712
    %v3779 = vunpack.c.l.b16 %v3713
    %v3780 = vunpack.c.h.b16 %v3713
    %v3781 = vunpack.c.l.b16 %v3714
    %v3782 = vunpack.c.h.b16 %v3714
    %v3783 = vunpack.c.l.b16 %v3715
    %v3784 = vunpack.c.h.b16 %v3715
    %v3785 = vunpack.c.l.b16 %v3716
    %v3786 = vunpack.c.h.b16 %v3716
    %v3787 = vunpack.c.l.b16 %v3717
    %v3788 = vunpack.c.h.b16 %v3717
    %v3789 = vunpack.c.l.b16 %v3718
    %v3790 = vunpack.c.h.b16 %v3718
    %v3791 = vunpack.c.l.b16 %v3719
    %v3792 = vunpack.c.h.b16 %v3719
    %v3793 = vunpack.c.l.b16 %v3720
    %v3794 = vunpack.c.h.b16 %v3720
    %v3795 = vunpack.c.l.b16 %v3721
    %v3796 = vunpack.c.h.b16 %v3721
    %v3797 = vunpack.c.l.b16 %v3722
    %v3798 = vunpack.c.h.b16 %v3722
    %v3799 = vunpack.c.l.b16 %v3723
    %v3800 = vunpack.c.h.b16 %v3723
    %v3801 = vunpack.c.l.b16 %v3724
    %v3802 = vunpack.c.h.b16 %v3724
    %v3803 = vunpack.c.l.b16 %v3725
    %v3804 = vunpack.c.h.b16 %v3725
    %v3805 = vunpack.c.l.b16 %v3726
    %v3806 = vunpack.c.h.b16 %v3726
    %v3807 = vunpack.c.l.b16 %v3727
    %v3808 = vunpack.c.h.b16 %v3727
    %v3809 = vunpack.c.l.b16 %v3728
    %v3810 = vunpack.c.h.b16 %v3728
    %v3811 = vunpack.c.l.b16 %v3729
    %v3812 = vunpack.c.h.b16 %v3729
    %v3813 = vunpack.c.l.b16 %v3730
    %v3814 = vunpack.c.h.b16 %v3730
    %v3815 = vunpack.c.l.b16 %v3731
    %v3816 = vunpack.c.h.b16 %v3731
    %v3817 = vunpack.c.l.b16 %v3732
    %v3818 = vunpack.c.h.b16 %v3732
    %v3819 = vunpack.c.l.b16 %v3733
    %v3820 = vunpack.c.h.b16 %v3733
    %v3821 = vunpack.c.l.b16 %v3734
    %v3822 = vunpack.c.h.b16 %v3734
    %v3823 = vunpack.c.l.b16 %v3735
    %v3824 = vunpack.c.h.b16 %v3735
    %v3825 = vunpack.c.l.b16 %v3736
    %v3826 = vunpack.c.h.b16 %v3736
    %v3827 = vunpack.c.l.b16 %v3737
    %v3828 = vunpack.c.h.b16 %v3737
    %v3829 = vunpack.c.l.b16 %v3738
    %v3830 = vunpack.c.h.b16 %v3738
    %v3831 = vunpack.c.l.b16 %v3739
    %v3832 = vunpack.c.h.b16 %v3739
    %v3833 = vunpack.c.l.b16 %v3740
    %v3834 = vunpack.c.h.b16 %v3740
    %v3835 = vunpack.c.l.b16 %v3741
    %v3836 = vunpack.c.h.b16 %v3741
    %v3837 = vunpack.c.l.b16 %v3742
    %v3838 = vunpack.c.h.b16 %v3742
    %v3839 = vpack.c.b16 %v3779, %v3775
    %v3840 = vpack.c.b16 %v3780, %v3776
    %v3841 = vpack.c.b16 %v3781, %v3777
    %v3842 = vpack.c.b16 %v3782, %v3778
    %v3843 = vpack.c.b16 %v3787, %v3783
    %v3844 = vpack.c.b16 %v3788, %v3784
    %v3845 = vpack.c.b16 %v3789, %v3785
    %v3846 = vpack.c.b16 %v3790, %v3786
    %v3847 = vpack.c.b16 %v3795, %v3791
    %v3848 = vpack.c.b16 %v3796, %v3792
    %v3849 = vpack.c.b16 %v3797, %v3793
    %v3850 = vpack.c.b16 %v3798, %v3794
    %v3851 = vpack.c.b16 %v3803, %v3799
    %v3852 = vpack.c.b16 %v3804, %v3800
    %v3853 = vpack.c.b16 %v3805, %v3801
    %v3854 = vpack.c.b16 %v3806, %v3802
    %v3855 = vpack.c.b16 %v3811, %v3807
    %v3856 = vpack.c.b16 %v3812, %v3808
    %v3857 = vpack.c.b16 %v3813, %v3809
    %v3858 = vpack.c.b16 %v3814, %v3810
    %v3859 = vpack.c.b16 %v3819, %v3815
    %v3860 = vpack.c.b16 %v3820, %v3816
    %v3861 = vpack.c.b16 %v3821, %v3817
    %v3862 = vpack.c.b16 %v3822, %v3818
    %v3863 = vpack.c.b16 %v3827, %v3823
    %v3864 = vpack.c.b16 %v3828, %v3824
    %v3865 = vpack.c.b16 %v3829, %v3825
    %v3866 = vpack.c.b16 %v3830, %v3826
    %v3867 = vpack.c.b16 %v3835, %v3831
    %v3868 = vpack.c.b16 %v3836, %v3832
    %v3869 = vpack.c.b16 %v3837, %v3833
    %v3870 = vpack.c.b16 %v3838, %v3834
    %3903 = vmatprep.subr.bf16.mxu0 %v3840
    %3904 = vmatpush1.bf16.msra.mxu0 %v3839
    %3905 = vmatprep.subr.bf16.mxu0 %v3844
    %3906 = vmatpush1.bf16.msra.mxu0 %v3843
    %3907 = vmatprep.subr.bf16.mxu0 %v3848
    %3908 = vmatpush1.bf16.msra.mxu0 %v3847
    %3909 = vmatprep.subr.bf16.mxu0 %v3852
    %3910 = vmatpush1.bf16.msra.mxu0 %v3851
    %3911 = vmatprep.subr.bf16.mxu0 %v3856
    %3912 = vmatpush1.bf16.msra.mxu0 %v3855
    %3913 = vmatprep.subr.bf16.mxu0 %v3860
    %3914 = vmatpush1.bf16.msra.mxu0 %v3859
    %3915 = vmatprep.subr.bf16.mxu0 %v3864
    %3916 = vmatpush1.bf16.msra.mxu0 %v3863
    %3917 = vmatprep.subr.bf16.mxu0 %v3868
    %3918 = vmatpush1.bf16.msra.mxu0 %v3867
    %3919 = vmatprep.subr.bf16.mxu0 0
    %3920 = vmatpush1.bf16.msra.mxu0 0
    %3921 = vmatprep.subr.bf16.mxu0 0
    %3922 = vmatpush1.bf16.msra.mxu0 0
    %3923 = vmatprep.subr.bf16.mxu0 0
    %3924 = vmatpush1.bf16.msra.mxu0 0
    %3925 = vmatprep.subr.bf16.mxu0 0
    %3926 = vmatpush1.bf16.msra.mxu0 0
    %3927 = vmatprep.subr.bf16.mxu0 0
    %3928 = vmatpush1.bf16.msra.mxu0 0
    %3929 = vmatprep.subr.bf16.mxu0 0
    %3930 = vmatpush1.bf16.msra.mxu0 0
    %3931 = vmatprep.subr.bf16.mxu0 0
    %3932 = vmatpush1.bf16.msra.mxu0 0
    %3933 = vmatprep.subr.bf16.mxu0 0
    %3934 = vmatpush1.bf16.msra.mxu0 0
    %3935 = vmatprep.mubr.bf16.mxu0 0
    %3936 = vmatmul.mubr.bf16.gmra.mrb[0].mxu0 %v3703
    %v3937 = vpop.f32.mrb[0].mxu0
    %v3938 = vadd.f32 0.0, %v3937
    %v3939 = vpop.f32.mrb[0].mxu0
    %v3940 = vadd.f32 0.0, %v3939
    %v3941 = vpop.f32.mrb[0].mxu0
    %v3942 = vpop.f32.mrb[0].mxu0
    %3943 = vdwg.mxu0
    %3944 = vmatprep.subr.bf16.mxu0 %v3842
    %3945 = vmatpush1.bf16.msra.mxu0 %v3841
    %3946 = vmatprep.subr.bf16.mxu0 %v3846
    %3947 = vmatpush1.bf16.msra.mxu0 %v3845
    %3948 = vmatprep.subr.bf16.mxu0 %v3850
    %3949 = vmatpush1.bf16.msra.mxu0 %v3849
    %3950 = vmatprep.subr.bf16.mxu0 %v3854
    %3951 = vmatpush1.bf16.msra.mxu0 %v3853
    %3952 = vmatprep.subr.bf16.mxu0 %v3858
    %3953 = vmatpush1.bf16.msra.mxu0 %v3857
    %3954 = vmatprep.subr.bf16.mxu0 %v3862
    %3955 = vmatpush1.bf16.msra.mxu0 %v3861
    %3956 = vmatprep.subr.bf16.mxu0 %v3866
    %3957 = vmatpush1.bf16.msra.mxu0 %v3865
    %3958 = vmatprep.subr.bf16.mxu0 %v3870
    %3959 = vmatpush1.bf16.msra.mxu0 %v3869
    %3960 = vmatprep.subr.bf16.mxu0 0
    %3961 = vmatpush1.bf16.msra.mxu0 0
    %3962 = vmatprep.subr.bf16.mxu0 0
    %3963 = vmatpush1.bf16.msra.mxu0 0
    %3964 = vmatprep.subr.bf16.mxu0 0
    %3965 = vmatpush1.bf16.msra.mxu0 0
    %3966 = vmatprep.subr.bf16.mxu0 0
    %3967 = vmatpush1.bf16.msra.mxu0 0
    %3968 = vmatprep.subr.bf16.mxu0 0
    %3969 = vmatpush1.bf16.msra.mxu0 0
    %3970 = vmatprep.subr.bf16.mxu0 0
    %3971 = vmatpush1.bf16.msra.mxu0 0
    %3972 = vmatprep.subr.bf16.mxu0 0
    %3973 = vmatpush1.bf16.msra.mxu0 0
    %3974 = vmatprep.subr.bf16.mxu0 0
    %3975 = vmatpush1.bf16.msra.mxu0 0
    %3976 = vmatprep.mubr.bf16.mxu0 0
    %3977 = vmatmul.mubr.bf16.gmra.mrb[0].mxu0 %v3703
    %v3978 = vpop.f32.mrb[0].mxu0
    %v3979 = vadd.f32 0.0, %v3978
    %v3980 = vpop.f32.mrb[0].mxu0
    %v3981 = vadd.f32 0.0, %v3980
    %v3982 = vpop.f32.mrb[0].mxu0
    %v3983 = vpop.f32.mrb[0].mxu0
    %3984 = vdwg.mxu0
    %v3985 = vadd.f32 %v3707, %v3938
    %v3986 = vadd.f32 %v3708, %v3940
    %v3987 = vadd.f32 %v3709, %v3979
    %v3988 = vadd.f32 %v3710, %v3981
    %v3989 = vxor.u32 %v3985, 2147483648
    %v3990 = vmul.f32 %v3989, 1.442695
    %v3991 = vpow.pop %v3990
    %v3992 = vadd.f32 %v3991, 1.0
    %v3993 = vrcp.pop %v3992
    %v3994 = vmul.f32 1.0, %v3993
    %v3995 = vxor.u32 %v3986, 2147483648
    %v3996 = vmul.f32 %v3995, 1.442695
    %v3997 = vpow.pop %v3996
    %v3998 = vadd.f32 %v3997, 1.0
    %v3999 = vrcp.pop %v3998
    %v4000 = vmul.f32 1.0, %v3999
    %v4001 = vtanh.pop %v3987
    %v4002 = vxor.u32 %v3988, 2147483648
    %v4003 = vmul.f32 %v4002, 1.442695
    %v4004 = vpow.pop %v4003
    %v4005 = vadd.f32 %v4004, 1.0
    %v4006 = vrcp.pop %v4005
    %v4007 = vmul.f32 1.0, %v4006
    %v4008 = vmul.f32 %v4000, %v3700
    %v4009 = vmul.f32 %v3994, %v4001
    %v4010 = vadd.f32 %v4008, %v4009
    %v4011 = vtanh.pop %v4010
    %v4012 = vmul.f32 %v4007, %v4011
    %v4013 = vpack.c.bf16 %v4012, %v4012
    %s4014 = scalar_lea.vmem %s6, 40
    %4015 = vst [vmem:[%s4014] sm:$0xf] %v4013
    %s4016 = scalar_lea.vmem [#allocation2], 352
    %v4017 = vld [vmem:[%s4016] sm:$0xff]
    %v4018 = vld [vmem:[%s4016 + $0x8] sm:$0xff]
    %v4019 = vld [vmem:[%s4016 + $0x10] sm:$0xff]
    %v4020 = vld [vmem:[%s4016 + $0x18] sm:$0xff]
    %v4021 = vld [vmem:[%s2] sm:$0xff]
    %v4022 = vld [vmem:[%s2 + $0x8] sm:$0xff]
    %v4023 = vld [vmem:[%s2 + $0x10] sm:$0xff]
    %v4024 = vld [vmem:[%s2 + $0x18] sm:$0xff]
    %v4025 = vld [vmem:[%s2 + $0x20] sm:$0xff]
    %v4026 = vld [vmem:[%s2 + $0x28] sm:$0xff]
    %v4027 = vld [vmem:[%s2 + $0x30] sm:$0xff]
    %v4028 = vld [vmem:[%s2 + $0x38] sm:$0xff]
    %v4029 = vld [vmem:[%s2 + $0x40] sm:$0xff]
    %v4030 = vld [vmem:[%s2 + $0x48] sm:$0xff]
    %v4031 = vld [vmem:[%s2 + $0x50] sm:$0xff]
    %v4032 = vld [vmem:[%s2 + $0x58] sm:$0xff]
    %v4033 = vld [vmem:[%s2 + $0x60] sm:$0xff]
    %v4034 = vld [vmem:[%s2 + $0x68] sm:$0xff]
    %v4035 = vld [vmem:[%s2 + $0x70] sm:$0xff]
    %v4036 = vld [vmem:[%s2 + $0x78] sm:$0xff]
    %v4037 = vld [vmem:[%s2 + $0x80] sm:$0xff]
    %v4038 = vld [vmem:[%s2 + $0x88] sm:$0xff]
    %v4039 = vld [vmem:[%s2 + $0x90] sm:$0xff]
    %v4040 = vld [vmem:[%s2 + $0x98] sm:$0xff]
    %v4041 = vld [vmem:[%s2 + $0xa0] sm:$0xff]
    %v4042 = vld [vmem:[%s2 + $0xa8] sm:$0xff]
    %v4043 = vld [vmem:[%s2 + $0xb0] sm:$0xff]
    %v4044 = vld [vmem:[%s2 + $0xb8] sm:$0xff]
    %v4045 = vld [vmem:[%s2 + $0xc0] sm:$0xff]
    %v4046 = vld [vmem:[%s2 + $0xc8] sm:$0xff]
    %v4047 = vld [vmem:[%s2 + $0xd0] sm:$0xff]
    %v4048 = vld [vmem:[%s2 + $0xd8] sm:$0xff]
    %v4049 = vld [vmem:[%s2 + $0xe0] sm:$0xff]
    %v4050 = vld [vmem:[%s2 + $0xe8] sm:$0xff]
    %v4051 = vld [vmem:[%s2 + $0xf0] sm:$0xff]
    %v4052 = vld [vmem:[%s2 + $0xf8] sm:$0xff]
    %v4085 = vunpack.c.l.b16 %v4021
    %v4086 = vunpack.c.h.b16 %v4021
    %v4087 = vunpack.c.l.b16 %v4022
    %v4088 = vunpack.c.h.b16 %v4022
    %v4089 = vunpack.c.l.b16 %v4023
    %v4090 = vunpack.c.h.b16 %v4023
    %v4091 = vunpack.c.l.b16 %v4024
    %v4092 = vunpack.c.h.b16 %v4024
    %v4093 = vunpack.c.l.b16 %v4025
    %v4094 = vunpack.c.h.b16 %v4025
    %v4095 = vunpack.c.l.b16 %v4026
    %v4096 = vunpack.c.h.b16 %v4026
    %v4097 = vunpack.c.l.b16 %v4027
    %v4098 = vunpack.c.h.b16 %v4027
    %v4099 = vunpack.c.l.b16 %v4028
    %v4100 = vunpack.c.h.b16 %v4028
    %v4101 = vunpack.c.l.b16 %v4029
    %v4102 = vunpack.c.h.b16 %v4029
    %v4103 = vunpack.c.l.b16 %v4030
    %v4104 = vunpack.c.h.b16 %v4030
    %v4105 = vunpack.c.l.b16 %v4031
    %v4106 = vunpack.c.h.b16 %v4031
    %v4107 = vunpack.c.l.b16 %v4032
    %v4108 = vunpack.c.h.b16 %v4032
    %v4109 = vunpack.c.l.b16 %v4033
    %v4110 = vunpack.c.h.b16 %v4033
    %v4111 = vunpack.c.l.b16 %v4034
    %v4112 = vunpack.c.h.b16 %v4034
    %v4113 = vunpack.c.l.b16 %v4035
    %v4114 = vunpack.c.h.b16 %v4035
    %v4115 = vunpack.c.l.b16 %v4036
    %v4116 = vunpack.c.h.b16 %v4036
    %v4117 = vunpack.c.l.b16 %v4037
    %v4118 = vunpack.c.h.b16 %v4037
    %v4119 = vunpack.c.l.b16 %v4038
    %v4120 = vunpack.c.h.b16 %v4038
    %v4121 = vunpack.c.l.b16 %v4039
    %v4122 = vunpack.c.h.b16 %v4039
    %v4123 = vunpack.c.l.b16 %v4040
    %v4124 = vunpack.c.h.b16 %v4040
    %v4125 = vunpack.c.l.b16 %v4041
    %v4126 = vunpack.c.h.b16 %v4041
    %v4127 = vunpack.c.l.b16 %v4042
    %v4128 = vunpack.c.h.b16 %v4042
    %v4129 = vunpack.c.l.b16 %v4043
    %v4130 = vunpack.c.h.b16 %v4043
    %v4131 = vunpack.c.l.b16 %v4044
    %v4132 = vunpack.c.h.b16 %v4044
    %v4133 = vunpack.c.l.b16 %v4045
    %v4134 = vunpack.c.h.b16 %v4045
    %v4135 = vunpack.c.l.b16 %v4046
    %v4136 = vunpack.c.h.b16 %v4046
    %v4137 = vunpack.c.l.b16 %v4047
    %v4138 = vunpack.c.h.b16 %v4047
    %v4139 = vunpack.c.l.b16 %v4048
    %v4140 = vunpack.c.h.b16 %v4048
    %v4141 = vunpack.c.l.b16 %v4049
    %v4142 = vunpack.c.h.b16 %v4049
    %v4143 = vunpack.c.l.b16 %v4050
    %v4144 = vunpack.c.h.b16 %v4050
    %v4145 = vunpack.c.l.b16 %v4051
    %v4146 = vunpack.c.h.b16 %v4051
    %v4147 = vunpack.c.l.b16 %v4052
    %v4148 = vunpack.c.h.b16 %v4052
    %v4149 = vpack.c.b16 %v4089, %v4085
    %v4150 = vpack.c.b16 %v4090, %v4086
    %v4151 = vpack.c.b16 %v4091, %v4087
    %v4152 = vpack.c.b16 %v4092, %v4088
    %v4153 = vpack.c.b16 %v4097, %v4093
    %v4154 = vpack.c.b16 %v4098, %v4094
    %v4155 = vpack.c.b16 %v4099, %v4095
    %v4156 = vpack.c.b16 %v4100, %v4096
    %v4157 = vpack.c.b16 %v4105, %v4101
    %v4158 = vpack.c.b16 %v4106, %v4102
    %v4159 = vpack.c.b16 %v4107, %v4103
    %v4160 = vpack.c.b16 %v4108, %v4104
    %v4161 = vpack.c.b16 %v4113, %v4109
    %v4162 = vpack.c.b16 %v4114, %v4110
    %v4163 = vpack.c.b16 %v4115, %v4111
    %v4164 = vpack.c.b16 %v4116, %v4112
    %v4165 = vpack.c.b16 %v4121, %v4117
    %v4166 = vpack.c.b16 %v4122, %v4118
    %v4167 = vpack.c.b16 %v4123, %v4119
    %v4168 = vpack.c.b16 %v4124, %v4120
    %v4169 = vpack.c.b16 %v4129, %v4125
    %v4170 = vpack.c.b16 %v4130, %v4126
    %v4171 = vpack.c.b16 %v4131, %v4127
    %v4172 = vpack.c.b16 %v4132, %v4128
    %v4173 = vpack.c.b16 %v4137, %v4133
    %v4174 = vpack.c.b16 %v4138, %v4134
    %v4175 = vpack.c.b16 %v4139, %v4135
    %v4176 = vpack.c.b16 %v4140, %v4136
    %v4177 = vpack.c.b16 %v4145, %v4141
    %v4178 = vpack.c.b16 %v4146, %v4142
    %v4179 = vpack.c.b16 %v4147, %v4143
    %v4180 = vpack.c.b16 %v4148, %v4144
    %4213 = vmatprep.subr.bf16.mxu0 %v4150
    %4214 = vmatpush1.bf16.msra.mxu0 %v4149
    %4215 = vmatprep.subr.bf16.mxu0 %v4154
    %4216 = vmatpush1.bf16.msra.mxu0 %v4153
    %4217 = vmatprep.subr.bf16.mxu0 %v4158
    %4218 = vmatpush1.bf16.msra.mxu0 %v4157
    %4219 = vmatprep.subr.bf16.mxu0 %v4162
    %4220 = vmatpush1.bf16.msra.mxu0 %v4161
    %4221 = vmatprep.subr.bf16.mxu0 %v4166
    %4222 = vmatpush1.bf16.msra.mxu0 %v4165
    %4223 = vmatprep.subr.bf16.mxu0 %v4170
    %4224 = vmatpush1.bf16.msra.mxu0 %v4169
    %4225 = vmatprep.subr.bf16.mxu0 %v4174
    %4226 = vmatpush1.bf16.msra.mxu0 %v4173
    %4227 = vmatprep.subr.bf16.mxu0 %v4178
    %4228 = vmatpush1.bf16.msra.mxu0 %v4177
    %4229 = vmatprep.subr.bf16.mxu0 0
    %4230 = vmatpush1.bf16.msra.mxu0 0
    %4231 = vmatprep.subr.bf16.mxu0 0
    %4232 = vmatpush1.bf16.msra.mxu0 0
    %4233 = vmatprep.subr.bf16.mxu0 0
    %4234 = vmatpush1.bf16.msra.mxu0 0
    %4235 = vmatprep.subr.bf16.mxu0 0
    %4236 = vmatpush1.bf16.msra.mxu0 0
    %4237 = vmatprep.subr.bf16.mxu0 0
    %4238 = vmatpush1.bf16.msra.mxu0 0
    %4239 = vmatprep.subr.bf16.mxu0 0
    %4240 = vmatpush1.bf16.msra.mxu0 0
    %4241 = vmatprep.subr.bf16.mxu0 0
    %4242 = vmatpush1.bf16.msra.mxu0 0
    %4243 = vmatprep.subr.bf16.mxu0 0
    %4244 = vmatpush1.bf16.msra.mxu0 0
    %4245 = vmatprep.mubr.bf16.mxu0 0
    %4246 = vmatmul.mubr.bf16.gmra.mrb[0].mxu0 %v4013
    %v4247 = vpop.f32.mrb[0].mxu0
    %v4248 = vadd.f32 0.0, %v4247
    %v4249 = vpop.f32.mrb[0].mxu0
    %v4250 = vadd.f32 0.0, %v4249
    %v4251 = vpop.f32.mrb[0].mxu0
    %v4252 = vpop.f32.mrb[0].mxu0
    %4253 = vdwg.mxu0
    %4254 = vmatprep.subr.bf16.mxu0 %v4152
    %4255 = vmatpush1.bf16.msra.mxu0 %v4151
    %4256 = vmatprep.subr.bf16.mxu0 %v4156
    %4257 = vmatpush1.bf16.msra.mxu0 %v4155
    %4258 = vmatprep.subr.bf16.mxu0 %v4160
    %4259 = vmatpush1.bf16.msra.mxu0 %v4159
    %4260 = vmatprep.subr.bf16.mxu0 %v4164
    %4261 = vmatpush1.bf16.msra.mxu0 %v4163
    %4262 = vmatprep.subr.bf16.mxu0 %v4168
    %4263 = vmatpush1.bf16.msra.mxu0 %v4167
    %4264 = vmatprep.subr.bf16.mxu0 %v4172
    %4265 = vmatpush1.bf16.msra.mxu0 %v4171
    %4266 = vmatprep.subr.bf16.mxu0 %v4176
    %4267 = vmatpush1.bf16.msra.mxu0 %v4175
    %4268 = vmatprep.subr.bf16.mxu0 %v4180
    %4269 = vmatpush1.bf16.msra.mxu0 %v4179
    %4270 = vmatprep.subr.bf16.mxu0 0
    %4271 = vmatpush1.bf16.msra.mxu0 0
    %4272 = vmatprep.subr.bf16.mxu0 0
    %4273 = vmatpush1.bf16.msra.mxu0 0
    %4274 = vmatprep.subr.bf16.mxu0 0
    %4275 = vmatpush1.bf16.msra.mxu0 0
    %4276 = vmatprep.subr.bf16.mxu0 0
    %4277 = vmatpush1.bf16.msra.mxu0 0
    %4278 = vmatprep.subr.bf16.mxu0 0
    %4279 = vmatpush1.bf16.msra.mxu0 0
    %4280 = vmatprep.subr.bf16.mxu0 0
    %4281 = vmatpush1.bf16.msra.mxu0 0
    %4282 = vmatprep.subr.bf16.mxu0 0
    %4283 = vmatpush1.bf16.msra.mxu0 0
    %4284 = vmatprep.subr.bf16.mxu0 0
    %4285 = vmatpush1.bf16.msra.mxu0 0
    %4286 = vmatprep.mubr.bf16.mxu0 0
    %4287 = vmatmul.mubr.bf16.gmra.mrb[0].mxu0 %v4013
    %v4288 = vpop.f32.mrb[0].mxu0
    %v4289 = vadd.f32 0.0, %v4288
    %v4290 = vpop.f32.mrb[0].mxu0
    %v4291 = vadd.f32 0.0, %v4290
    %v4292 = vpop.f32.mrb[0].mxu0
    %v4293 = vpop.f32.mrb[0].mxu0
    %4294 = vdwg.mxu0
    %v4295 = vadd.f32 %v4017, %v4248
    %v4296 = vadd.f32 %v4018, %v4250
    %v4297 = vadd.f32 %v4019, %v4289
    %v4298 = vadd.f32 %v4020, %v4291
    %v4299 = vxor.u32 %v4295, 2147483648
    %v4300 = vmul.f32 %v4299, 1.442695
    %v4301 = vpow.pop %v4300
    %v4302 = vadd.f32 %v4301, 1.0
    %v4303 = vrcp.pop %v4302
    %v4304 = vmul.f32 1.0, %v4303
    %v4305 = vxor.u32 %v4296, 2147483648
    %v4306 = vmul.f32 %v4305, 1.442695
    %v4307 = vpow.pop %v4306
    %v4308 = vadd.f32 %v4307, 1.0
    %v4309 = vrcp.pop %v4308
    %v4310 = vmul.f32 1.0, %v4309
    %v4311 = vtanh.pop %v4297
    %v4312 = vxor.u32 %v4298, 2147483648
    %v4313 = vmul.f32 %v4312, 1.442695
    %v4314 = vpow.pop %v4313
    %v4315 = vadd.f32 %v4314, 1.0
    %v4316 = vrcp.pop %v4315
    %v4317 = vmul.f32 1.0, %v4316
    %v4318 = vmul.f32 %v4310, %v4010
    %v4319 = vmul.f32 %v4304, %v4311
    %v4320 = vadd.f32 %v4318, %v4319
    %v4321 = vtanh.pop %v4320
    %v4322 = vmul.f32 %v4317, %v4321
    %v4323 = vpack.c.bf16 %v4322, %v4322
    %s4324 = scalar_lea.vmem %s6, 44
    %4325 = vst [vmem:[%s4324] sm:$0xf] %v4323
    %s4326 = scalar_lea.vmem [#allocation2], 384
    %v4327 = vld [vmem:[%s4326] sm:$0xff]
    %v4328 = vld [vmem:[%s4326 + $0x8] sm:$0xff]
    %v4329 = vld [vmem:[%s4326 + $0x10] sm:$0xff]
    %v4330 = vld [vmem:[%s4326 + $0x18] sm:$0xff]
    %v4331 = vld [vmem:[%s2] sm:$0xff]
    %v4332 = vld [vmem:[%s2 + $0x8] sm:$0xff]
    %v4333 = vld [vmem:[%s2 + $0x10] sm:$0xff]
    %v4334 = vld [vmem:[%s2 + $0x18] sm:$0xff]
    %v4335 = vld [vmem:[%s2 + $0x20] sm:$0xff]
    %v4336 = vld [vmem:[%s2 + $0x28] sm:$0xff]
    %v4337 = vld [vmem:[%s2 + $0x30] sm:$0xff]
    %v4338 = vld [vmem:[%s2 + $0x38] sm:$0xff]
    %v4339 = vld [vmem:[%s2 + $0x40] sm:$0xff]
    %v4340 = vld [vmem:[%s2 + $0x48] sm:$0xff]
    %v4341 = vld [vmem:[%s2 + $0x50] sm:$0xff]
    %v4342 = vld [vmem:[%s2 + $0x58] sm:$0xff]
    %v4343 = vld [vmem:[%s2 + $0x60] sm:$0xff]
    %v4344 = vld [vmem:[%s2 + $0x68] sm:$0xff]
    %v4345 = vld [vmem:[%s2 + $0x70] sm:$0xff]
    %v4346 = vld [vmem:[%s2 + $0x78] sm:$0xff]
    %v4347 = vld [vmem:[%s2 + $0x80] sm:$0xff]
    %v4348 = vld [vmem:[%s2 + $0x88] sm:$0xff]
    %v4349 = vld [vmem:[%s2 + $0x90] sm:$0xff]
    %v4350 = vld [vmem:[%s2 + $0x98] sm:$0xff]
    %v4351 = vld [vmem:[%s2 + $0xa0] sm:$0xff]
    %v4352 = vld [vmem:[%s2 + $0xa8] sm:$0xff]
    %v4353 = vld [vmem:[%s2 + $0xb0] sm:$0xff]
    %v4354 = vld [vmem:[%s2 + $0xb8] sm:$0xff]
    %v4355 = vld [vmem:[%s2 + $0xc0] sm:$0xff]
    %v4356 = vld [vmem:[%s2 + $0xc8] sm:$0xff]
    %v4357 = vld [vmem:[%s2 + $0xd0] sm:$0xff]
    %v4358 = vld [vmem:[%s2 + $0xd8] sm:$0xff]
    %v4359 = vld [vmem:[%s2 + $0xe0] sm:$0xff]
    %v4360 = vld [vmem:[%s2 + $0xe8] sm:$0xff]
    %v4361 = vld [vmem:[%s2 + $0xf0] sm:$0xff]
    %v4362 = vld [vmem:[%s2 + $0xf8] sm:$0xff]
    %v4395 = vunpack.c.l.b16 %v4331
    %v4396 = vunpack.c.h.b16 %v4331
    %v4397 = vunpack.c.l.b16 %v4332
    %v4398 = vunpack.c.h.b16 %v4332
    %v4399 = vunpack.c.l.b16 %v4333
    %v4400 = vunpack.c.h.b16 %v4333
    %v4401 = vunpack.c.l.b16 %v4334
    %v4402 = vunpack.c.h.b16 %v4334
    %v4403 = vunpack.c.l.b16 %v4335
    %v4404 = vunpack.c.h.b16 %v4335
    %v4405 = vunpack.c.l.b16 %v4336
    %v4406 = vunpack.c.h.b16 %v4336
    %v4407 = vunpack.c.l.b16 %v4337
    %v4408 = vunpack.c.h.b16 %v4337
    %v4409 = vunpack.c.l.b16 %v4338
    %v4410 = vunpack.c.h.b16 %v4338
    %v4411 = vunpack.c.l.b16 %v4339
    %v4412 = vunpack.c.h.b16 %v4339
    %v4413 = vunpack.c.l.b16 %v4340
    %v4414 = vunpack.c.h.b16 %v4340
    %v4415 = vunpack.c.l.b16 %v4341
    %v4416 = vunpack.c.h.b16 %v4341
    %v4417 = vunpack.c.l.b16 %v4342
    %v4418 = vunpack.c.h.b16 %v4342
    %v4419 = vunpack.c.l.b16 %v4343
    %v4420 = vunpack.c.h.b16 %v4343
    %v4421 = vunpack.c.l.b16 %v4344
    %v4422 = vunpack.c.h.b16 %v4344
    %v4423 = vunpack.c.l.b16 %v4345
    %v4424 = vunpack.c.h.b16 %v4345
    %v4425 = vunpack.c.l.b16 %v4346
    %v4426 = vunpack.c.h.b16 %v4346
    %v4427 = vunpack.c.l.b16 %v4347
    %v4428 = vunpack.c.h.b16 %v4347
    %v4429 = vunpack.c.l.b16 %v4348
    %v4430 = vunpack.c.h.b16 %v4348
    %v4431 = vunpack.c.l.b16 %v4349
    %v4432 = vunpack.c.h.b16 %v4349
    %v4433 = vunpack.c.l.b16 %v4350
    %v4434 = vunpack.c.h.b16 %v4350
    %v4435 = vunpack.c.l.b16 %v4351
    %v4436 = vunpack.c.h.b16 %v4351
    %v4437 = vunpack.c.l.b16 %v4352
    %v4438 = vunpack.c.h.b16 %v4352
    %v4439 = vunpack.c.l.b16 %v4353
    %v4440 = vunpack.c.h.b16 %v4353
    %v4441 = vunpack.c.l.b16 %v4354
    %v4442 = vunpack.c.h.b16 %v4354
    %v4443 = vunpack.c.l.b16 %v4355
    %v4444 = vunpack.c.h.b16 %v4355
    %v4445 = vunpack.c.l.b16 %v4356
    %v4446 = vunpack.c.h.b16 %v4356
    %v4447 = vunpack.c.l.b16 %v4357
    %v4448 = vunpack.c.h.b16 %v4357
    %v4449 = vunpack.c.l.b16 %v4358
    %v4450 = vunpack.c.h.b16 %v4358
    %v4451 = vunpack.c.l.b16 %v4359
    %v4452 = vunpack.c.h.b16 %v4359
    %v4453 = vunpack.c.l.b16 %v4360
    %v4454 = vunpack.c.h.b16 %v4360
    %v4455 = vunpack.c.l.b16 %v4361
    %v4456 = vunpack.c.h.b16 %v4361
    %v4457 = vunpack.c.l.b16 %v4362
    %v4458 = vunpack.c.h.b16 %v4362
    %v4459 = vpack.c.b16 %v4399, %v4395
    %v4460 = vpack.c.b16 %v4400, %v4396
    %v4461 = vpack.c.b16 %v4401, %v4397
    %v4462 = vpack.c.b16 %v4402, %v4398
    %v4463 = vpack.c.b16 %v4407, %v4403
    %v4464 = vpack.c.b16 %v4408, %v4404
    %v4465 = vpack.c.b16 %v4409, %v4405
    %v4466 = vpack.c.b16 %v4410, %v4406
    %v4467 = vpack.c.b16 %v4415, %v4411
    %v4468 = vpack.c.b16 %v4416, %v4412
    %v4469 = vpack.c.b16 %v4417, %v4413
    %v4470 = vpack.c.b16 %v4418, %v4414
    %v4471 = vpack.c.b16 %v4423, %v4419
    %v4472 = vpack.c.b16 %v4424, %v4420
    %v4473 = vpack.c.b16 %v4425, %v4421
    %v4474 = vpack.c.b16 %v4426, %v4422
    %v4475 = vpack.c.b16 %v4431, %v4427
    %v4476 = vpack.c.b16 %v4432, %v4428
    %v4477 = vpack.c.b16 %v4433, %v4429
    %v4478 = vpack.c.b16 %v4434, %v4430
    %v4479 = vpack.c.b16 %v4439, %v4435
    %v4480 = vpack.c.b16 %v4440, %v4436
    %v4481 = vpack.c.b16 %v4441, %v4437
    %v4482 = vpack.c.b16 %v4442, %v4438
    %v4483 = vpack.c.b16 %v4447, %v4443
    %v4484 = vpack.c.b16 %v4448, %v4444
    %v4485 = vpack.c.b16 %v4449, %v4445
    %v4486 = vpack.c.b16 %v4450, %v4446
    %v4487 = vpack.c.b16 %v4455, %v4451
    %v4488 = vpack.c.b16 %v4456, %v4452
    %v4489 = vpack.c.b16 %v4457, %v4453
    %v4490 = vpack.c.b16 %v4458, %v4454
    %4523 = vmatprep.subr.bf16.mxu0 %v4460
    %4524 = vmatpush1.bf16.msra.mxu0 %v4459
    %4525 = vmatprep.subr.bf16.mxu0 %v4464
    %4526 = vmatpush1.bf16.msra.mxu0 %v4463
    %4527 = vmatprep.subr.bf16.mxu0 %v4468
    %4528 = vmatpush1.bf16.msra.mxu0 %v4467
    %4529 = vmatprep.subr.bf16.mxu0 %v4472
    %4530 = vmatpush1.bf16.msra.mxu0 %v4471
    %4531 = vmatprep.subr.bf16.mxu0 %v4476
    %4532 = vmatpush1.bf16.msra.mxu0 %v4475
    %4533 = vmatprep.subr.bf16.mxu0 %v4480
    %4534 = vmatpush1.bf16.msra.mxu0 %v4479
    %4535 = vmatprep.subr.bf16.mxu0 %v4484
    %4536 = vmatpush1.bf16.msra.mxu0 %v4483
    %4537 = vmatprep.subr.bf16.mxu0 %v4488
    %4538 = vmatpush1.bf16.msra.mxu0 %v4487
    %4539 = vmatprep.subr.bf16.mxu0 0
    %4540 = vmatpush1.bf16.msra.mxu0 0
    %4541 = vmatprep.subr.bf16.mxu0 0
    %4542 = vmatpush1.bf16.msra.mxu0 0
    %4543 = vmatprep.subr.bf16.mxu0 0
    %4544 = vmatpush1.bf16.msra.mxu0 0
    %4545 = vmatprep.subr.bf16.mxu0 0
    %4546 = vmatpush1.bf16.msra.mxu0 0
    %4547 = vmatprep.subr.bf16.mxu0 0
    %4548 = vmatpush1.bf16.msra.mxu0 0
    %4549 = vmatprep.subr.bf16.mxu0 0
    %4550 = vmatpush1.bf16.msra.mxu0 0
    %4551 = vmatprep.subr.bf16.mxu0 0
    %4552 = vmatpush1.bf16.msra.mxu0 0
    %4553 = vmatprep.subr.bf16.mxu0 0
    %4554 = vmatpush1.bf16.msra.mxu0 0
    %4555 = vmatprep.mubr.bf16.mxu0 0
    %4556 = vmatmul.mubr.bf16.gmra.mrb[0].mxu0 %v4323
    %v4557 = vpop.f32.mrb[0].mxu0
    %v4558 = vadd.f32 0.0, %v4557
    %v4559 = vpop.f32.mrb[0].mxu0
    %v4560 = vadd.f32 0.0, %v4559
    %v4561 = vpop.f32.mrb[0].mxu0
    %v4562 = vpop.f32.mrb[0].mxu0
    %4563 = vdwg.mxu0
    %4564 = vmatprep.subr.bf16.mxu0 %v4462
    %4565 = vmatpush1.bf16.msra.mxu0 %v4461
    %4566 = vmatprep.subr.bf16.mxu0 %v4466
    %4567 = vmatpush1.bf16.msra.mxu0 %v4465
    %4568 = vmatprep.subr.bf16.mxu0 %v4470
    %4569 = vmatpush1.bf16.msra.mxu0 %v4469
    %4570 = vmatprep.subr.bf16.mxu0 %v4474
    %4571 = vmatpush1.bf16.msra.mxu0 %v4473
    %4572 = vmatprep.subr.bf16.mxu0 %v4478
    %4573 = vmatpush1.bf16.msra.mxu0 %v4477
    %4574 = vmatprep.subr.bf16.mxu0 %v4482
    %4575 = vmatpush1.bf16.msra.mxu0 %v4481
    %4576 = vmatprep.subr.bf16.mxu0 %v4486
    %4577 = vmatpush1.bf16.msra.mxu0 %v4485
    %4578 = vmatprep.subr.bf16.mxu0 %v4490
    %4579 = vmatpush1.bf16.msra.mxu0 %v4489
    %4580 = vmatprep.subr.bf16.mxu0 0
    %4581 = vmatpush1.bf16.msra.mxu0 0
    %4582 = vmatprep.subr.bf16.mxu0 0
    %4583 = vmatpush1.bf16.msra.mxu0 0
    %4584 = vmatprep.subr.bf16.mxu0 0
    %4585 = vmatpush1.bf16.msra.mxu0 0
    %4586 = vmatprep.subr.bf16.mxu0 0
    %4587 = vmatpush1.bf16.msra.mxu0 0
    %4588 = vmatprep.subr.bf16.mxu0 0
    %4589 = vmatpush1.bf16.msra.mxu0 0
    %4590 = vmatprep.subr.bf16.mxu0 0
    %4591 = vmatpush1.bf16.msra.mxu0 0
    %4592 = vmatprep.subr.bf16.mxu0 0
    %4593 = vmatpush1.bf16.msra.mxu0 0
    %4594 = vmatprep.subr.bf16.mxu0 0
    %4595 = vmatpush1.bf16.msra.mxu0 0
    %4596 = vmatprep.mubr.bf16.mxu0 0
    %4597 = vmatmul.mubr.bf16.gmra.mrb[0].mxu0 %v4323
    %v4598 = vpop.f32.mrb[0].mxu0
    %v4599 = vadd.f32 0.0, %v4598
    %v4600 = vpop.f32.mrb[0].mxu0
    %v4601 = vadd.f32 0.0, %v4600
    %v4602 = vpop.f32.mrb[0].mxu0
    %v4603 = vpop.f32.mrb[0].mxu0
    %4604 = vdwg.mxu0
    %v4605 = vadd.f32 %v4327, %v4558
    %v4606 = vadd.f32 %v4328, %v4560
    %v4607 = vadd.f32 %v4329, %v4599
    %v4608 = vadd.f32 %v4330, %v4601
    %v4609 = vxor.u32 %v4605, 2147483648
    %v4610 = vmul.f32 %v4609, 1.442695
    %v4611 = vpow.pop %v4610
    %v4612 = vadd.f32 %v4611, 1.0
    %v4613 = vrcp.pop %v4612
    %v4614 = vmul.f32 1.0, %v4613
    %v4615 = vxor.u32 %v4606, 2147483648
    %v4616 = vmul.f32 %v4615, 1.442695
    %v4617 = vpow.pop %v4616
    %v4618 = vadd.f32 %v4617, 1.0
    %v4619 = vrcp.pop %v4618
    %v4620 = vmul.f32 1.0, %v4619
    %v4621 = vtanh.pop %v4607
    %v4622 = vxor.u32 %v4608, 2147483648
    %v4623 = vmul.f32 %v4622, 1.442695
    %v4624 = vpow.pop %v4623
    %v4625 = vadd.f32 %v4624, 1.0
    %v4626 = vrcp.pop %v4625
    %v4627 = vmul.f32 1.0, %v4626
    %v4628 = vmul.f32 %v4620, %v4320
    %v4629 = vmul.f32 %v4614, %v4621
    %v4630 = vadd.f32 %v4628, %v4629
    %v4631 = vtanh.pop %v4630
    %v4632 = vmul.f32 %v4627, %v4631
    %v4633 = vpack.c.bf16 %v4632, %v4632
    %s4634 = scalar_lea.vmem %s6, 48
    %4635 = vst [vmem:[%s4634] sm:$0xf] %v4633
    %s4636 = scalar_lea.vmem [#allocation2], 416
    %v4637 = vld [vmem:[%s4636] sm:$0xff]
    %v4638 = vld [vmem:[%s4636 + $0x8] sm:$0xff]
    %v4639 = vld [vmem:[%s4636 + $0x10] sm:$0xff]
    %v4640 = vld [vmem:[%s4636 + $0x18] sm:$0xff]
    %v4641 = vld [vmem:[%s2] sm:$0xff]
    %v4642 = vld [vmem:[%s2 + $0x8] sm:$0xff]
    %v4643 = vld [vmem:[%s2 + $0x10] sm:$0xff]
    %v4644 = vld [vmem:[%s2 + $0x18] sm:$0xff]
    %v4645 = vld [vmem:[%s2 + $0x20] sm:$0xff]
    %v4646 = vld [vmem:[%s2 + $0x28] sm:$0xff]
    %v4647 = vld [vmem:[%s2 + $0x30] sm:$0xff]
    %v4648 = vld [vmem:[%s2 + $0x38] sm:$0xff]
    %v4649 = vld [vmem:[%s2 + $0x40] sm:$0xff]
    %v4650 = vld [vmem:[%s2 + $0x48] sm:$0xff]
    %v4651 = vld [vmem:[%s2 + $0x50] sm:$0xff]
    %v4652 = vld [vmem:[%s2 + $0x58] sm:$0xff]
    %v4653 = vld [vmem:[%s2 + $0x60] sm:$0xff]
    %v4654 = vld [vmem:[%s2 + $0x68] sm:$0xff]
    %v4655 = vld [vmem:[%s2 + $0x70] sm:$0xff]
    %v4656 = vld [vmem:[%s2 + $0x78] sm:$0xff]
    %v4657 = vld [vmem:[%s2 + $0x80] sm:$0xff]
    %v4658 = vld [vmem:[%s2 + $0x88] sm:$0xff]
    %v4659 = vld [vmem:[%s2 + $0x90] sm:$0xff]
    %v4660 = vld [vmem:[%s2 + $0x98] sm:$0xff]
    %v4661 = vld [vmem:[%s2 + $0xa0] sm:$0xff]
    %v4662 = vld [vmem:[%s2 + $0xa8] sm:$0xff]
    %v4663 = vld [vmem:[%s2 + $0xb0] sm:$0xff]
    %v4664 = vld [vmem:[%s2 + $0xb8] sm:$0xff]
    %v4665 = vld [vmem:[%s2 + $0xc0] sm:$0xff]
    %v4666 = vld [vmem:[%s2 + $0xc8] sm:$0xff]
    %v4667 = vld [vmem:[%s2 + $0xd0] sm:$0xff]
    %v4668 = vld [vmem:[%s2 + $0xd8] sm:$0xff]
    %v4669 = vld [vmem:[%s2 + $0xe0] sm:$0xff]
    %v4670 = vld [vmem:[%s2 + $0xe8] sm:$0xff]
    %v4671 = vld [vmem:[%s2 + $0xf0] sm:$0xff]
    %v4672 = vld [vmem:[%s2 + $0xf8] sm:$0xff]
    %v4705 = vunpack.c.l.b16 %v4641
    %v4706 = vunpack.c.h.b16 %v4641
    %v4707 = vunpack.c.l.b16 %v4642
    %v4708 = vunpack.c.h.b16 %v4642
    %v4709 = vunpack.c.l.b16 %v4643
    %v4710 = vunpack.c.h.b16 %v4643
    %v4711 = vunpack.c.l.b16 %v4644
    %v4712 = vunpack.c.h.b16 %v4644
    %v4713 = vunpack.c.l.b16 %v4645
    %v4714 = vunpack.c.h.b16 %v4645
    %v4715 = vunpack.c.l.b16 %v4646
    %v4716 = vunpack.c.h.b16 %v4646
    %v4717 = vunpack.c.l.b16 %v4647
    %v4718 = vunpack.c.h.b16 %v4647
    %v4719 = vunpack.c.l.b16 %v4648
    %v4720 = vunpack.c.h.b16 %v4648
    %v4721 = vunpack.c.l.b16 %v4649
    %v4722 = vunpack.c.h.b16 %v4649
    %v4723 = vunpack.c.l.b16 %v4650
    %v4724 = vunpack.c.h.b16 %v4650
    %v4725 = vunpack.c.l.b16 %v4651
    %v4726 = vunpack.c.h.b16 %v4651
    %v4727 = vunpack.c.l.b16 %v4652
    %v4728 = vunpack.c.h.b16 %v4652
    %v4729 = vunpack.c.l.b16 %v4653
    %v4730 = vunpack.c.h.b16 %v4653
    %v4731 = vunpack.c.l.b16 %v4654
    %v4732 = vunpack.c.h.b16 %v4654
    %v4733 = vunpack.c.l.b16 %v4655
    %v4734 = vunpack.c.h.b16 %v4655
    %v4735 = vunpack.c.l.b16 %v4656
    %v4736 = vunpack.c.h.b16 %v4656
    %v4737 = vunpack.c.l.b16 %v4657
    %v4738 = vunpack.c.h.b16 %v4657
    %v4739 = vunpack.c.l.b16 %v4658
    %v4740 = vunpack.c.h.b16 %v4658
    %v4741 = vunpack.c.l.b16 %v4659
    %v4742 = vunpack.c.h.b16 %v4659
    %v4743 = vunpack.c.l.b16 %v4660
    %v4744 = vunpack.c.h.b16 %v4660
    %v4745 = vunpack.c.l.b16 %v4661
    %v4746 = vunpack.c.h.b16 %v4661
    %v4747 = vunpack.c.l.b16 %v4662
    %v4748 = vunpack.c.h.b16 %v4662
    %v4749 = vunpack.c.l.b16 %v4663
    %v4750 = vunpack.c.h.b16 %v4663
    %v4751 = vunpack.c.l.b16 %v4664
    %v4752 = vunpack.c.h.b16 %v4664
    %v4753 = vunpack.c.l.b16 %v4665
    %v4754 = vunpack.c.h.b16 %v4665
    %v4755 = vunpack.c.l.b16 %v4666
    %v4756 = vunpack.c.h.b16 %v4666
    %v4757 = vunpack.c.l.b16 %v4667
    %v4758 = vunpack.c.h.b16 %v4667
    %v4759 = vunpack.c.l.b16 %v4668
    %v4760 = vunpack.c.h.b16 %v4668
    %v4761 = vunpack.c.l.b16 %v4669
    %v4762 = vunpack.c.h.b16 %v4669
    %v4763 = vunpack.c.l.b16 %v4670
    %v4764 = vunpack.c.h.b16 %v4670
    %v4765 = vunpack.c.l.b16 %v4671
    %v4766 = vunpack.c.h.b16 %v4671
    %v4767 = vunpack.c.l.b16 %v4672
    %v4768 = vunpack.c.h.b16 %v4672
    %v4769 = vpack.c.b16 %v4709, %v4705
    %v4770 = vpack.c.b16 %v4710, %v4706
    %v4771 = vpack.c.b16 %v4711, %v4707
    %v4772 = vpack.c.b16 %v4712, %v4708
    %v4773 = vpack.c.b16 %v4717, %v4713
    %v4774 = vpack.c.b16 %v4718, %v4714
    %v4775 = vpack.c.b16 %v4719, %v4715
    %v4776 = vpack.c.b16 %v4720, %v4716
    %v4777 = vpack.c.b16 %v4725, %v4721
    %v4778 = vpack.c.b16 %v4726, %v4722
    %v4779 = vpack.c.b16 %v4727, %v4723
    %v4780 = vpack.c.b16 %v4728, %v4724
    %v4781 = vpack.c.b16 %v4733, %v4729
    %v4782 = vpack.c.b16 %v4734, %v4730
    %v4783 = vpack.c.b16 %v4735, %v4731
    %v4784 = vpack.c.b16 %v4736, %v4732
    %v4785 = vpack.c.b16 %v4741, %v4737
    %v4786 = vpack.c.b16 %v4742, %v4738
    %v4787 = vpack.c.b16 %v4743, %v4739
    %v4788 = vpack.c.b16 %v4744, %v4740
    %v4789 = vpack.c.b16 %v4749, %v4745
    %v4790 = vpack.c.b16 %v4750, %v4746
    %v4791 = vpack.c.b16 %v4751, %v4747
    %v4792 = vpack.c.b16 %v4752, %v4748
    %v4793 = vpack.c.b16 %v4757, %v4753
    %v4794 = vpack.c.b16 %v4758, %v4754
    %v4795 = vpack.c.b16 %v4759, %v4755
    %v4796 = vpack.c.b16 %v4760, %v4756
    %v4797 = vpack.c.b16 %v4765, %v4761
    %v4798 = vpack.c.b16 %v4766, %v4762
    %v4799 = vpack.c.b16 %v4767, %v4763
    %v4800 = vpack.c.b16 %v4768, %v4764
    %4833 = vmatprep.subr.bf16.mxu0 %v4770
    %4834 = vmatpush1.bf16.msra.mxu0 %v4769
    %4835 = vmatprep.subr.bf16.mxu0 %v4774
    %4836 = vmatpush1.bf16.msra.mxu0 %v4773
    %4837 = vmatprep.subr.bf16.mxu0 %v4778
    %4838 = vmatpush1.bf16.msra.mxu0 %v4777
    %4839 = vmatprep.subr.bf16.mxu0 %v4782
    %4840 = vmatpush1.bf16.msra.mxu0 %v4781
    %4841 = vmatprep.subr.bf16.mxu0 %v4786
    %4842 = vmatpush1.bf16.msra.mxu0 %v4785
    %4843 = vmatprep.subr.bf16.mxu0 %v4790
    %4844 = vmatpush1.bf16.msra.mxu0 %v4789
    %4845 = vmatprep.subr.bf16.mxu0 %v4794
    %4846 = vmatpush1.bf16.msra.mxu0 %v4793
    %4847 = vmatprep.subr.bf16.mxu0 %v4798
    %4848 = vmatpush1.bf16.msra.mxu0 %v4797
    %4849 = vmatprep.subr.bf16.mxu0 0
    %4850 = vmatpush1.bf16.msra.mxu0 0
    %4851 = vmatprep.subr.bf16.mxu0 0
    %4852 = vmatpush1.bf16.msra.mxu0 0
    %4853 = vmatprep.subr.bf16.mxu0 0
    %4854 = vmatpush1.bf16.msra.mxu0 0
    %4855 = vmatprep.subr.bf16.mxu0 0
    %4856 = vmatpush1.bf16.msra.mxu0 0
    %4857 = vmatprep.subr.bf16.mxu0 0
    %4858 = vmatpush1.bf16.msra.mxu0 0
    %4859 = vmatprep.subr.bf16.mxu0 0
    %4860 = vmatpush1.bf16.msra.mxu0 0
    %4861 = vmatprep.subr.bf16.mxu0 0
    %4862 = vmatpush1.bf16.msra.mxu0 0
    %4863 = vmatprep.subr.bf16.mxu0 0
    %4864 = vmatpush1.bf16.msra.mxu0 0
    %4865 = vmatprep.mubr.bf16.mxu0 0
    %4866 = vmatmul.mubr.bf16.gmra.mrb[0].mxu0 %v4633
    %v4867 = vpop.f32.mrb[0].mxu0
    %v4868 = vadd.f32 0.0, %v4867
    %v4869 = vpop.f32.mrb[0].mxu0
    %v4870 = vadd.f32 0.0, %v4869
    %v4871 = vpop.f32.mrb[0].mxu0
    %v4872 = vpop.f32.mrb[0].mxu0
    %4873 = vdwg.mxu0
    %4874 = vmatprep.subr.bf16.mxu0 %v4772
    %4875 = vmatpush1.bf16.msra.mxu0 %v4771
    %4876 = vmatprep.subr.bf16.mxu0 %v4776
    %4877 = vmatpush1.bf16.msra.mxu0 %v4775
    %4878 = vmatprep.subr.bf16.mxu0 %v4780
    %4879 = vmatpush1.bf16.msra.mxu0 %v4779
    %4880 = vmatprep.subr.bf16.mxu0 %v4784
    %4881 = vmatpush1.bf16.msra.mxu0 %v4783
    %4882 = vmatprep.subr.bf16.mxu0 %v4788
    %4883 = vmatpush1.bf16.msra.mxu0 %v4787
    %4884 = vmatprep.subr.bf16.mxu0 %v4792
    %4885 = vmatpush1.bf16.msra.mxu0 %v4791
    %4886 = vmatprep.subr.bf16.mxu0 %v4796
    %4887 = vmatpush1.bf16.msra.mxu0 %v4795
    %4888 = vmatprep.subr.bf16.mxu0 %v4800
    %4889 = vmatpush1.bf16.msra.mxu0 %v4799
    %4890 = vmatprep.subr.bf16.mxu0 0
    %4891 = vmatpush1.bf16.msra.mxu0 0
    %4892 = vmatprep.subr.bf16.mxu0 0
    %4893 = vmatpush1.bf16.msra.mxu0 0
    %4894 = vmatprep.subr.bf16.mxu0 0
    %4895 = vmatpush1.bf16.msra.mxu0 0
    %4896 = vmatprep.subr.bf16.mxu0 0
    %4897 = vmatpush1.bf16.msra.mxu0 0
    %4898 = vmatprep.subr.bf16.mxu0 0
    %4899 = vmatpush1.bf16.msra.mxu0 0
    %4900 = vmatprep.subr.bf16.mxu0 0
    %4901 = vmatpush1.bf16.msra.mxu0 0
    %4902 = vmatprep.subr.bf16.mxu0 0
    %4903 = vmatpush1.bf16.msra.mxu0 0
    %4904 = vmatprep.subr.bf16.mxu0 0
    %4905 = vmatpush1.bf16.msra.mxu0 0
    %4906 = vmatprep.mubr.bf16.mxu0 0
    %4907 = vmatmul.mubr.bf16.gmra.mrb[0].mxu0 %v4633
    %v4908 = vpop.f32.mrb[0].mxu0
    %v4909 = vadd.f32 0.0, %v4908
    %v4910 = vpop.f32.mrb[0].mxu0
    %v4911 = vadd.f32 0.0, %v4910
    %v4912 = vpop.f32.mrb[0].mxu0
    %v4913 = vpop.f32.mrb[0].mxu0
    %4914 = vdwg.mxu0
    %v4915 = vadd.f32 %v4637, %v4868
    %v4916 = vadd.f32 %v4638, %v4870
    %v4917 = vadd.f32 %v4639, %v4909
    %v4918 = vadd.f32 %v4640, %v4911
    %v4919 = vxor.u32 %v4915, 2147483648
    %v4920 = vmul.f32 %v4919, 1.442695
    %v4921 = vpow.pop %v4920
    %v4922 = vadd.f32 %v4921, 1.0
    %v4923 = vrcp.pop %v4922
    %v4924 = vmul.f32 1.0, %v4923
    %v4925 = vxor.u32 %v4916, 2147483648
    %v4926 = vmul.f32 %v4925, 1.442695
    %v4927 = vpow.pop %v4926
    %v4928 = vadd.f32 %v4927, 1.0
    %v4929 = vrcp.pop %v4928
    %v4930 = vmul.f32 1.0, %v4929
    %v4931 = vtanh.pop %v4917
    %v4932 = vxor.u32 %v4918, 2147483648
    %v4933 = vmul.f32 %v4932, 1.442695
    %v4934 = vpow.pop %v4933
    %v4935 = vadd.f32 %v4934, 1.0
    %v4936 = vrcp.pop %v4935
    %v4937 = vmul.f32 1.0, %v4936
    %v4938 = vmul.f32 %v4930, %v4630
    %v4939 = vmul.f32 %v4924, %v4931
    %v4940 = vadd.f32 %v4938, %v4939
    %v4941 = vtanh.pop %v4940
    %v4942 = vmul.f32 %v4937, %v4941
    %v4943 = vpack.c.bf16 %v4942, %v4942
    %s4944 = scalar_lea.vmem %s6, 52
    %4945 = vst [vmem:[%s4944] sm:$0xf] %v4943
    %s4946 = scalar_lea.vmem [#allocation2], 448
    %v4947 = vld [vmem:[%s4946] sm:$0xff]
    %v4948 = vld [vmem:[%s4946 + $0x8] sm:$0xff]
    %v4949 = vld [vmem:[%s4946 + $0x10] sm:$0xff]
    %v4950 = vld [vmem:[%s4946 + $0x18] sm:$0xff]
    %v4951 = vld [vmem:[%s2] sm:$0xff]
    %v4952 = vld [vmem:[%s2 + $0x8] sm:$0xff]
    %v4953 = vld [vmem:[%s2 + $0x10] sm:$0xff]
    %v4954 = vld [vmem:[%s2 + $0x18] sm:$0xff]
    %v4955 = vld [vmem:[%s2 + $0x20] sm:$0xff]
    %v4956 = vld [vmem:[%s2 + $0x28] sm:$0xff]
    %v4957 = vld [vmem:[%s2 + $0x30] sm:$0xff]
    %v4958 = vld [vmem:[%s2 + $0x38] sm:$0xff]
    %v4959 = vld [vmem:[%s2 + $0x40] sm:$0xff]
    %v4960 = vld [vmem:[%s2 + $0x48] sm:$0xff]
    %v4961 = vld [vmem:[%s2 + $0x50] sm:$0xff]
    %v4962 = vld [vmem:[%s2 + $0x58] sm:$0xff]
    %v4963 = vld [vmem:[%s2 + $0x60] sm:$0xff]
    %v4964 = vld [vmem:[%s2 + $0x68] sm:$0xff]
    %v4965 = vld [vmem:[%s2 + $0x70] sm:$0xff]
    %v4966 = vld [vmem:[%s2 + $0x78] sm:$0xff]
    %v4967 = vld [vmem:[%s2 + $0x80] sm:$0xff]
    %v4968 = vld [vmem:[%s2 + $0x88] sm:$0xff]
    %v4969 = vld [vmem:[%s2 + $0x90] sm:$0xff]
    %v4970 = vld [vmem:[%s2 + $0x98] sm:$0xff]
    %v4971 = vld [vmem:[%s2 + $0xa0] sm:$0xff]
    %v4972 = vld [vmem:[%s2 + $0xa8] sm:$0xff]
    %v4973 = vld [vmem:[%s2 + $0xb0] sm:$0xff]
    %v4974 = vld [vmem:[%s2 + $0xb8] sm:$0xff]
    %v4975 = vld [vmem:[%s2 + $0xc0] sm:$0xff]
    %v4976 = vld [vmem:[%s2 + $0xc8] sm:$0xff]
    %v4977 = vld [vmem:[%s2 + $0xd0] sm:$0xff]
    %v4978 = vld [vmem:[%s2 + $0xd8] sm:$0xff]
    %v4979 = vld [vmem:[%s2 + $0xe0] sm:$0xff]
    %v4980 = vld [vmem:[%s2 + $0xe8] sm:$0xff]
    %v4981 = vld [vmem:[%s2 + $0xf0] sm:$0xff]
    %v4982 = vld [vmem:[%s2 + $0xf8] sm:$0xff]
    %v5015 = vunpack.c.l.b16 %v4951
    %v5016 = vunpack.c.h.b16 %v4951
    %v5017 = vunpack.c.l.b16 %v4952
    %v5018 = vunpack.c.h.b16 %v4952
    %v5019 = vunpack.c.l.b16 %v4953
    %v5020 = vunpack.c.h.b16 %v4953
    %v5021 = vunpack.c.l.b16 %v4954
    %v5022 = vunpack.c.h.b16 %v4954
    %v5023 = vunpack.c.l.b16 %v4955
    %v5024 = vunpack.c.h.b16 %v4955
    %v5025 = vunpack.c.l.b16 %v4956
    %v5026 = vunpack.c.h.b16 %v4956
    %v5027 = vunpack.c.l.b16 %v4957
    %v5028 = vunpack.c.h.b16 %v4957
    %v5029 = vunpack.c.l.b16 %v4958
    %v5030 = vunpack.c.h.b16 %v4958
    %v5031 = vunpack.c.l.b16 %v4959
    %v5032 = vunpack.c.h.b16 %v4959
    %v5033 = vunpack.c.l.b16 %v4960
    %v5034 = vunpack.c.h.b16 %v4960
    %v5035 = vunpack.c.l.b16 %v4961
    %v5036 = vunpack.c.h.b16 %v4961
    %v5037 = vunpack.c.l.b16 %v4962
    %v5038 = vunpack.c.h.b16 %v4962
    %v5039 = vunpack.c.l.b16 %v4963
    %v5040 = vunpack.c.h.b16 %v4963
    %v5041 = vunpack.c.l.b16 %v4964
    %v5042 = vunpack.c.h.b16 %v4964
    %v5043 = vunpack.c.l.b16 %v4965
    %v5044 = vunpack.c.h.b16 %v4965
    %v5045 = vunpack.c.l.b16 %v4966
    %v5046 = vunpack.c.h.b16 %v4966
    %v5047 = vunpack.c.l.b16 %v4967
    %v5048 = vunpack.c.h.b16 %v4967
    %v5049 = vunpack.c.l.b16 %v4968
    %v5050 = vunpack.c.h.b16 %v4968
    %v5051 = vunpack.c.l.b16 %v4969
    %v5052 = vunpack.c.h.b16 %v4969
    %v5053 = vunpack.c.l.b16 %v4970
    %v5054 = vunpack.c.h.b16 %v4970
    %v5055 = vunpack.c.l.b16 %v4971
    %v5056 = vunpack.c.h.b16 %v4971
    %v5057 = vunpack.c.l.b16 %v4972
    %v5058 = vunpack.c.h.b16 %v4972
    %v5059 = vunpack.c.l.b16 %v4973
    %v5060 = vunpack.c.h.b16 %v4973
    %v5061 = vunpack.c.l.b16 %v4974
    %v5062 = vunpack.c.h.b16 %v4974
    %v5063 = vunpack.c.l.b16 %v4975
    %v5064 = vunpack.c.h.b16 %v4975
    %v5065 = vunpack.c.l.b16 %v4976
    %v5066 = vunpack.c.h.b16 %v4976
    %v5067 = vunpack.c.l.b16 %v4977
    %v5068 = vunpack.c.h.b16 %v4977
    %v5069 = vunpack.c.l.b16 %v4978
    %v5070 = vunpack.c.h.b16 %v4978
    %v5071 = vunpack.c.l.b16 %v4979
    %v5072 = vunpack.c.h.b16 %v4979
    %v5073 = vunpack.c.l.b16 %v4980
    %v5074 = vunpack.c.h.b16 %v4980
    %v5075 = vunpack.c.l.b16 %v4981
    %v5076 = vunpack.c.h.b16 %v4981
    %v5077 = vunpack.c.l.b16 %v4982
    %v5078 = vunpack.c.h.b16 %v4982
    %v5079 = vpack.c.b16 %v5019, %v5015
    %v5080 = vpack.c.b16 %v5020, %v5016
    %v5081 = vpack.c.b16 %v5021, %v5017
    %v5082 = vpack.c.b16 %v5022, %v5018
    %v5083 = vpack.c.b16 %v5027, %v5023
    %v5084 = vpack.c.b16 %v5028, %v5024
    %v5085 = vpack.c.b16 %v5029, %v5025
    %v5086 = vpack.c.b16 %v5030, %v5026
    %v5087 = vpack.c.b16 %v5035, %v5031
    %v5088 = vpack.c.b16 %v5036, %v5032
    %v5089 = vpack.c.b16 %v5037, %v5033
    %v5090 = vpack.c.b16 %v5038, %v5034
    %v5091 = vpack.c.b16 %v5043, %v5039
    %v5092 = vpack.c.b16 %v5044, %v5040
    %v5093 = vpack.c.b16 %v5045, %v5041
    %v5094 = vpack.c.b16 %v5046, %v5042
    %v5095 = vpack.c.b16 %v5051, %v5047
    %v5096 = vpack.c.b16 %v5052, %v5048
    %v5097 = vpack.c.b16 %v5053, %v5049
    %v5098 = vpack.c.b16 %v5054, %v5050
    %v5099 = vpack.c.b16 %v5059, %v5055
    %v5100 = vpack.c.b16 %v5060, %v5056
    %v5101 = vpack.c.b16 %v5061, %v5057
    %v5102 = vpack.c.b16 %v5062, %v5058
    %v5103 = vpack.c.b16 %v5067, %v5063
    %v5104 = vpack.c.b16 %v5068, %v5064
    %v5105 = vpack.c.b16 %v5069, %v5065
    %v5106 = vpack.c.b16 %v5070, %v5066
    %v5107 = vpack.c.b16 %v5075, %v5071
    %v5108 = vpack.c.b16 %v5076, %v5072
    %v5109 = vpack.c.b16 %v5077, %v5073
    %v5110 = vpack.c.b16 %v5078, %v5074
    %5143 = vmatprep.subr.bf16.mxu0 %v5080
    %5144 = vmatpush1.bf16.msra.mxu0 %v5079
    %5145 = vmatprep.subr.bf16.mxu0 %v5084
    %5146 = vmatpush1.bf16.msra.mxu0 %v5083
    %5147 = vmatprep.subr.bf16.mxu0 %v5088
    %5148 = vmatpush1.bf16.msra.mxu0 %v5087
    %5149 = vmatprep.subr.bf16.mxu0 %v5092
    %5150 = vmatpush1.bf16.msra.mxu0 %v5091
    %5151 = vmatprep.subr.bf16.mxu0 %v5096
    %5152 = vmatpush1.bf16.msra.mxu0 %v5095
    %5153 = vmatprep.subr.bf16.mxu0 %v5100
    %5154 = vmatpush1.bf16.msra.mxu0 %v5099
    %5155 = vmatprep.subr.bf16.mxu0 %v5104
    %5156 = vmatpush1.bf16.msra.mxu0 %v5103
    %5157 = vmatprep.subr.bf16.mxu0 %v5108
    %5158 = vmatpush1.bf16.msra.mxu0 %v5107
    %5159 = vmatprep.subr.bf16.mxu0 0
    %5160 = vmatpush1.bf16.msra.mxu0 0
    %5161 = vmatprep.subr.bf16.mxu0 0
    %5162 = vmatpush1.bf16.msra.mxu0 0
    %5163 = vmatprep.subr.bf16.mxu0 0
    %5164 = vmatpush1.bf16.msra.mxu0 0
    %5165 = vmatprep.subr.bf16.mxu0 0
    %5166 = vmatpush1.bf16.msra.mxu0 0
    %5167 = vmatprep.subr.bf16.mxu0 0
    %5168 = vmatpush1.bf16.msra.mxu0 0
    %5169 = vmatprep.subr.bf16.mxu0 0
    %5170 = vmatpush1.bf16.msra.mxu0 0
    %5171 = vmatprep.subr.bf16.mxu0 0
    %5172 = vmatpush1.bf16.msra.mxu0 0
    %5173 = vmatprep.subr.bf16.mxu0 0
    %5174 = vmatpush1.bf16.msra.mxu0 0
    %5175 = vmatprep.mubr.bf16.mxu0 0
    %5176 = vmatmul.mubr.bf16.gmra.mrb[0].mxu0 %v4943
    %v5177 = vpop.f32.mrb[0].mxu0
    %v5178 = vadd.f32 0.0, %v5177
    %v5179 = vpop.f32.mrb[0].mxu0
    %v5180 = vadd.f32 0.0, %v5179
    %v5181 = vpop.f32.mrb[0].mxu0
    %v5182 = vpop.f32.mrb[0].mxu0
    %5183 = vdwg.mxu0
    %5184 = vmatprep.subr.bf16.mxu0 %v5082
    %5185 = vmatpush1.bf16.msra.mxu0 %v5081
    %5186 = vmatprep.subr.bf16.mxu0 %v5086
    %5187 = vmatpush1.bf16.msra.mxu0 %v5085
    %5188 = vmatprep.subr.bf16.mxu0 %v5090
    %5189 = vmatpush1.bf16.msra.mxu0 %v5089
    %5190 = vmatprep.subr.bf16.mxu0 %v5094
    %5191 = vmatpush1.bf16.msra.mxu0 %v5093
    %5192 = vmatprep.subr.bf16.mxu0 %v5098
    %5193 = vmatpush1.bf16.msra.mxu0 %v5097
    %5194 = vmatprep.subr.bf16.mxu0 %v5102
    %5195 = vmatpush1.bf16.msra.mxu0 %v5101
    %5196 = vmatprep.subr.bf16.mxu0 %v5106
    %5197 = vmatpush1.bf16.msra.mxu0 %v5105
    %5198 = vmatprep.subr.bf16.mxu0 %v5110
    %5199 = vmatpush1.bf16.msra.mxu0 %v5109
    %5200 = vmatprep.subr.bf16.mxu0 0
    %5201 = vmatpush1.bf16.msra.mxu0 0
    %5202 = vmatprep.subr.bf16.mxu0 0
    %5203 = vmatpush1.bf16.msra.mxu0 0
    %5204 = vmatprep.subr.bf16.mxu0 0
    %5205 = vmatpush1.bf16.msra.mxu0 0
    %5206 = vmatprep.subr.bf16.mxu0 0
    %5207 = vmatpush1.bf16.msra.mxu0 0
    %5208 = vmatprep.subr.bf16.mxu0 0
    %5209 = vmatpush1.bf16.msra.mxu0 0
    %5210 = vmatprep.subr.bf16.mxu0 0
    %5211 = vmatpush1.bf16.msra.mxu0 0
    %5212 = vmatprep.subr.bf16.mxu0 0
    %5213 = vmatpush1.bf16.msra.mxu0 0
    %5214 = vmatprep.subr.bf16.mxu0 0
    %5215 = vmatpush1.bf16.msra.mxu0 0
    %5216 = vmatprep.mubr.bf16.mxu0 0
    %5217 = vmatmul.mubr.bf16.gmra.mrb[0].mxu0 %v4943
    %v5218 = vpop.f32.mrb[0].mxu0
    %v5219 = vadd.f32 0.0, %v5218
    %v5220 = vpop.f32.mrb[0].mxu0
    %v5221 = vadd.f32 0.0, %v5220
    %v5222 = vpop.f32.mrb[0].mxu0
    %v5223 = vpop.f32.mrb[0].mxu0
    %5224 = vdwg.mxu0
    %v5225 = vadd.f32 %v4947, %v5178
    %v5226 = vadd.f32 %v4948, %v5180
    %v5227 = vadd.f32 %v4949, %v5219
    %v5228 = vadd.f32 %v4950, %v5221
    %v5229 = vxor.u32 %v5225, 2147483648
    %v5230 = vmul.f32 %v5229, 1.442695
    %v5231 = vpow.pop %v5230
    %v5232 = vadd.f32 %v5231, 1.0
    %v5233 = vrcp.pop %v5232
    %v5234 = vmul.f32 1.0, %v5233
    %v5235 = vxor.u32 %v5226, 2147483648
    %v5236 = vmul.f32 %v5235, 1.442695
    %v5237 = vpow.pop %v5236
    %v5238 = vadd.f32 %v5237, 1.0
    %v5239 = vrcp.pop %v5238
    %v5240 = vmul.f32 1.0, %v5239
    %v5241 = vtanh.pop %v5227
    %v5242 = vxor.u32 %v5228, 2147483648
    %v5243 = vmul.f32 %v5242, 1.442695
    %v5244 = vpow.pop %v5243
    %v5245 = vadd.f32 %v5244, 1.0
    %v5246 = vrcp.pop %v5245
    %v5247 = vmul.f32 1.0, %v5246
    %v5248 = vmul.f32 %v5240, %v4940
    %v5249 = vmul.f32 %v5234, %v5241
    %v5250 = vadd.f32 %v5248, %v5249
    %v5251 = vtanh.pop %v5250
    %v5252 = vmul.f32 %v5247, %v5251
    %v5253 = vpack.c.bf16 %v5252, %v5252
    %s5254 = scalar_lea.vmem %s6, 56
    %5255 = vst [vmem:[%s5254] sm:$0xf] %v5253
    %s5256 = scalar_lea.vmem [#allocation2], 480
    %v5257 = vld [vmem:[%s5256] sm:$0xff]
    %v5258 = vld [vmem:[%s5256 + $0x8] sm:$0xff]
    %v5259 = vld [vmem:[%s5256 + $0x10] sm:$0xff]
    %v5260 = vld [vmem:[%s5256 + $0x18] sm:$0xff]
    %v5261 = vld [vmem:[%s2] sm:$0xff]
    %v5262 = vld [vmem:[%s2 + $0x8] sm:$0xff]
    %v5263 = vld [vmem:[%s2 + $0x10] sm:$0xff]
    %v5264 = vld [vmem:[%s2 + $0x18] sm:$0xff]
    %v5265 = vld [vmem:[%s2 + $0x20] sm:$0xff]
    %v5266 = vld [vmem:[%s2 + $0x28] sm:$0xff]
    %v5267 = vld [vmem:[%s2 + $0x30] sm:$0xff]
    %v5268 = vld [vmem:[%s2 + $0x38] sm:$0xff]
    %v5269 = vld [vmem:[%s2 + $0x40] sm:$0xff]
    %v5270 = vld [vmem:[%s2 + $0x48] sm:$0xff]
    %v5271 = vld [vmem:[%s2 + $0x50] sm:$0xff]
    %v5272 = vld [vmem:[%s2 + $0x58] sm:$0xff]
    %v5273 = vld [vmem:[%s2 + $0x60] sm:$0xff]
    %v5274 = vld [vmem:[%s2 + $0x68] sm:$0xff]
    %v5275 = vld [vmem:[%s2 + $0x70] sm:$0xff]
    %v5276 = vld [vmem:[%s2 + $0x78] sm:$0xff]
    %v5277 = vld [vmem:[%s2 + $0x80] sm:$0xff]
    %v5278 = vld [vmem:[%s2 + $0x88] sm:$0xff]
    %v5279 = vld [vmem:[%s2 + $0x90] sm:$0xff]
    %v5280 = vld [vmem:[%s2 + $0x98] sm:$0xff]
    %v5281 = vld [vmem:[%s2 + $0xa0] sm:$0xff]
    %v5282 = vld [vmem:[%s2 + $0xa8] sm:$0xff]
    %v5283 = vld [vmem:[%s2 + $0xb0] sm:$0xff]
    %v5284 = vld [vmem:[%s2 + $0xb8] sm:$0xff]
    %v5285 = vld [vmem:[%s2 + $0xc0] sm:$0xff]
    %v5286 = vld [vmem:[%s2 + $0xc8] sm:$0xff]
    %v5287 = vld [vmem:[%s2 + $0xd0] sm:$0xff]
    %v5288 = vld [vmem:[%s2 + $0xd8] sm:$0xff]
    %v5289 = vld [vmem:[%s2 + $0xe0] sm:$0xff]
    %v5290 = vld [vmem:[%s2 + $0xe8] sm:$0xff]
    %v5291 = vld [vmem:[%s2 + $0xf0] sm:$0xff]
    %v5292 = vld [vmem:[%s2 + $0xf8] sm:$0xff]
    %v5325 = vunpack.c.l.b16 %v5261
    %v5326 = vunpack.c.h.b16 %v5261
    %v5327 = vunpack.c.l.b16 %v5262
    %v5328 = vunpack.c.h.b16 %v5262
    %v5329 = vunpack.c.l.b16 %v5263
    %v5330 = vunpack.c.h.b16 %v5263
    %v5331 = vunpack.c.l.b16 %v5264
    %v5332 = vunpack.c.h.b16 %v5264
    %v5333 = vunpack.c.l.b16 %v5265
    %v5334 = vunpack.c.h.b16 %v5265
    %v5335 = vunpack.c.l.b16 %v5266
    %v5336 = vunpack.c.h.b16 %v5266
    %v5337 = vunpack.c.l.b16 %v5267
    %v5338 = vunpack.c.h.b16 %v5267
    %v5339 = vunpack.c.l.b16 %v5268
    %v5340 = vunpack.c.h.b16 %v5268
    %v5341 = vunpack.c.l.b16 %v5269
    %v5342 = vunpack.c.h.b16 %v5269
    %v5343 = vunpack.c.l.b16 %v5270
    %v5344 = vunpack.c.h.b16 %v5270
    %v5345 = vunpack.c.l.b16 %v5271
    %v5346 = vunpack.c.h.b16 %v5271
    %v5347 = vunpack.c.l.b16 %v5272
    %v5348 = vunpack.c.h.b16 %v5272
    %v5349 = vunpack.c.l.b16 %v5273
    %v5350 = vunpack.c.h.b16 %v5273
    %v5351 = vunpack.c.l.b16 %v5274
    %v5352 = vunpack.c.h.b16 %v5274
    %v5353 = vunpack.c.l.b16 %v5275
    %v5354 = vunpack.c.h.b16 %v5275
    %v5355 = vunpack.c.l.b16 %v5276
    %v5356 = vunpack.c.h.b16 %v5276
    %v5357 = vunpack.c.l.b16 %v5277
    %v5358 = vunpack.c.h.b16 %v5277
    %v5359 = vunpack.c.l.b16 %v5278
    %v5360 = vunpack.c.h.b16 %v5278
    %v5361 = vunpack.c.l.b16 %v5279
    %v5362 = vunpack.c.h.b16 %v5279
    %v5363 = vunpack.c.l.b16 %v5280
    %v5364 = vunpack.c.h.b16 %v5280
    %v5365 = vunpack.c.l.b16 %v5281
    %v5366 = vunpack.c.h.b16 %v5281
    %v5367 = vunpack.c.l.b16 %v5282
    %v5368 = vunpack.c.h.b16 %v5282
    %v5369 = vunpack.c.l.b16 %v5283
    %v5370 = vunpack.c.h.b16 %v5283
    %v5371 = vunpack.c.l.b16 %v5284
    %v5372 = vunpack.c.h.b16 %v5284
    %v5373 = vunpack.c.l.b16 %v5285
    %v5374 = vunpack.c.h.b16 %v5285
    %v5375 = vunpack.c.l.b16 %v5286
    %v5376 = vunpack.c.h.b16 %v5286
    %v5377 = vunpack.c.l.b16 %v5287
    %v5378 = vunpack.c.h.b16 %v5287
    %v5379 = vunpack.c.l.b16 %v5288
    %v5380 = vunpack.c.h.b16 %v5288
    %v5381 = vunpack.c.l.b16 %v5289
    %v5382 = vunpack.c.h.b16 %v5289
    %v5383 = vunpack.c.l.b16 %v5290
    %v5384 = vunpack.c.h.b16 %v5290
    %v5385 = vunpack.c.l.b16 %v5291
    %v5386 = vunpack.c.h.b16 %v5291
    %v5387 = vunpack.c.l.b16 %v5292
    %v5388 = vunpack.c.h.b16 %v5292
    %v5389 = vpack.c.b16 %v5329, %v5325
    %v5390 = vpack.c.b16 %v5330, %v5326
    %v5391 = vpack.c.b16 %v5331, %v5327
    %v5392 = vpack.c.b16 %v5332, %v5328
    %v5393 = vpack.c.b16 %v5337, %v5333
    %v5394 = vpack.c.b16 %v5338, %v5334
    %v5395 = vpack.c.b16 %v5339, %v5335
    %v5396 = vpack.c.b16 %v5340, %v5336
    %v5397 = vpack.c.b16 %v5345, %v5341
    %v5398 = vpack.c.b16 %v5346, %v5342
    %v5399 = vpack.c.b16 %v5347, %v5343
    %v5400 = vpack.c.b16 %v5348, %v5344
    %v5401 = vpack.c.b16 %v5353, %v5349
    %v5402 = vpack.c.b16 %v5354, %v5350
    %v5403 = vpack.c.b16 %v5355, %v5351
    %v5404 = vpack.c.b16 %v5356, %v5352
    %v5405 = vpack.c.b16 %v5361, %v5357
    %v5406 = vpack.c.b16 %v5362, %v5358
    %v5407 = vpack.c.b16 %v5363, %v5359
    %v5408 = vpack.c.b16 %v5364, %v5360
    %v5409 = vpack.c.b16 %v5369, %v5365
    %v5410 = vpack.c.b16 %v5370, %v5366
    %v5411 = vpack.c.b16 %v5371, %v5367
    %v5412 = vpack.c.b16 %v5372, %v5368
    %v5413 = vpack.c.b16 %v5377, %v5373
    %v5414 = vpack.c.b16 %v5378, %v5374
    %v5415 = vpack.c.b16 %v5379, %v5375
    %v5416 = vpack.c.b16 %v5380, %v5376
    %v5417 = vpack.c.b16 %v5385, %v5381
    %v5418 = vpack.c.b16 %v5386, %v5382
    %v5419 = vpack.c.b16 %v5387, %v5383
    %v5420 = vpack.c.b16 %v5388, %v5384
    %5453 = vmatprep.subr.bf16.mxu0 %v5390
    %5454 = vmatpush1.bf16.msra.mxu0 %v5389
    %5455 = vmatprep.subr.bf16.mxu0 %v5394
    %5456 = vmatpush1.bf16.msra.mxu0 %v5393
    %5457 = vmatprep.subr.bf16.mxu0 %v5398
    %5458 = vmatpush1.bf16.msra.mxu0 %v5397
    %5459 = vmatprep.subr.bf16.mxu0 %v5402
    %5460 = vmatpush1.bf16.msra.mxu0 %v5401
    %5461 = vmatprep.subr.bf16.mxu0 %v5406
    %5462 = vmatpush1.bf16.msra.mxu0 %v5405
    %5463 = vmatprep.subr.bf16.mxu0 %v5410
    %5464 = vmatpush1.bf16.msra.mxu0 %v5409
    %5465 = vmatprep.subr.bf16.mxu0 %v5414
    %5466 = vmatpush1.bf16.msra.mxu0 %v5413
    %5467 = vmatprep.subr.bf16.mxu0 %v5418
    %5468 = vmatpush1.bf16.msra.mxu0 %v5417
    %5469 = vmatprep.subr.bf16.mxu0 0
    %5470 = vmatpush1.bf16.msra.mxu0 0
    %5471 = vmatprep.subr.bf16.mxu0 0
    %5472 = vmatpush1.bf16.msra.mxu0 0
    %5473 = vmatprep.subr.bf16.mxu0 0
    %5474 = vmatpush1.bf16.msra.mxu0 0
    %5475 = vmatprep.subr.bf16.mxu0 0
    %5476 = vmatpush1.bf16.msra.mxu0 0
    %5477 = vmatprep.subr.bf16.mxu0 0
    %5478 = vmatpush1.bf16.msra.mxu0 0
    %5479 = vmatprep.subr.bf16.mxu0 0
    %5480 = vmatpush1.bf16.msra.mxu0 0
    %5481 = vmatprep.subr.bf16.mxu0 0
    %5482 = vmatpush1.bf16.msra.mxu0 0
    %5483 = vmatprep.subr.bf16.mxu0 0
    %5484 = vmatpush1.bf16.msra.mxu0 0
    %5485 = vmatprep.mubr.bf16.mxu0 0
    %5486 = vmatmul.mubr.bf16.gmra.mrb[0].mxu0 %v5253
    %v5487 = vpop.f32.mrb[0].mxu0
    %v5488 = vadd.f32 0.0, %v5487
    %v5489 = vpop.f32.mrb[0].mxu0
    %v5490 = vadd.f32 0.0, %v5489
    %v5491 = vpop.f32.mrb[0].mxu0
    %v5492 = vpop.f32.mrb[0].mxu0
    %5493 = vdwg.mxu0
    %5494 = vmatprep.subr.bf16.mxu0 %v5392
    %5495 = vmatpush1.bf16.msra.mxu0 %v5391
    %5496 = vmatprep.subr.bf16.mxu0 %v5396
    %5497 = vmatpush1.bf16.msra.mxu0 %v5395
    %5498 = vmatprep.subr.bf16.mxu0 %v5400
    %5499 = vmatpush1.bf16.msra.mxu0 %v5399
    %5500 = vmatprep.subr.bf16.mxu0 %v5404
    %5501 = vmatpush1.bf16.msra.mxu0 %v5403
    %5502 = vmatprep.subr.bf16.mxu0 %v5408
    %5503 = vmatpush1.bf16.msra.mxu0 %v5407
    %5504 = vmatprep.subr.bf16.mxu0 %v5412
    %5505 = vmatpush1.bf16.msra.mxu0 %v5411
    %5506 = vmatprep.subr.bf16.mxu0 %v5416
    %5507 = vmatpush1.bf16.msra.mxu0 %v5415
    %5508 = vmatprep.subr.bf16.mxu0 %v5420
    %5509 = vmatpush1.bf16.msra.mxu0 %v5419
    %5510 = vmatprep.subr.bf16.mxu0 0
    %5511 = vmatpush1.bf16.msra.mxu0 0
    %5512 = vmatprep.subr.bf16.mxu0 0
    %5513 = vmatpush1.bf16.msra.mxu0 0
    %5514 = vmatprep.subr.bf16.mxu0 0
    %5515 = vmatpush1.bf16.msra.mxu0 0
    %5516 = vmatprep.subr.bf16.mxu0 0
    %5517 = vmatpush1.bf16.msra.mxu0 0
    %5518 = vmatprep.subr.bf16.mxu0 0
    %5519 = vmatpush1.bf16.msra.mxu0 0
    %5520 = vmatprep.subr.bf16.mxu0 0
    %5521 = vmatpush1.bf16.msra.mxu0 0
    %5522 = vmatprep.subr.bf16.mxu0 0
    %5523 = vmatpush1.bf16.msra.mxu0 0
    %5524 = vmatprep.subr.bf16.mxu0 0
    %5525 = vmatpush1.bf16.msra.mxu0 0
    %5526 = vmatprep.mubr.bf16.mxu0 0
    %5527 = vmatmul.mubr.bf16.gmra.mrb[0].mxu0 %v5253
    %v5528 = vpop.f32.mrb[0].mxu0
    %v5529 = vadd.f32 0.0, %v5528
    %v5530 = vpop.f32.mrb[0].mxu0
    %v5531 = vadd.f32 0.0, %v5530
    %v5532 = vpop.f32.mrb[0].mxu0
    %v5533 = vpop.f32.mrb[0].mxu0
    %5534 = vdwg.mxu0
    %v5535 = vadd.f32 %v5257, %v5488
    %v5536 = vadd.f32 %v5258, %v5490
    %v5537 = vadd.f32 %v5259, %v5529
    %v5538 = vadd.f32 %v5260, %v5531
    %v5539 = vxor.u32 %v5535, 2147483648
    %v5540 = vmul.f32 %v5539, 1.442695
    %v5541 = vpow.pop %v5540
    %v5542 = vadd.f32 %v5541, 1.0
    %v5543 = vrcp.pop %v5542
    %v5544 = vmul.f32 1.0, %v5543
    %v5545 = vxor.u32 %v5536, 2147483648
    %v5546 = vmul.f32 %v5545, 1.442695
    %v5547 = vpow.pop %v5546
    %v5548 = vadd.f32 %v5547, 1.0
    %v5549 = vrcp.pop %v5548
    %v5550 = vmul.f32 1.0, %v5549
    %v5551 = vtanh.pop %v5537
    %v5552 = vxor.u32 %v5538, 2147483648
    %v5553 = vmul.f32 %v5552, 1.442695
    %v5554 = vpow.pop %v5553
    %v5555 = vadd.f32 %v5554, 1.0
    %v5556 = vrcp.pop %v5555
    %v5557 = vmul.f32 1.0, %v5556
    %v5558 = vmul.f32 %v5550, %v5250
    %v5559 = vmul.f32 %v5544, %v5551
    %v5560 = vadd.f32 %v5558, %v5559
    %v5561 = vtanh.pop %v5560
    %v5562 = vmul.f32 %v5557, %v5561
    %v5563 = vpack.c.bf16 %v5562, %v5562
    %s5564 = scalar_lea.vmem %s6, 60
    %5565 = vst [vmem:[%s5564] sm:$0xf] %v5563
    %5566 = vst [vmem:[#allocation3] sm:$0xff] %v5562
    %5567 = vst [vmem:[#allocation4] sm:$0xff] %v5560
    // Predicated region
    $region30: #{lstm_model_forward.2} parent=1 // pred_check
      %p5568 = pneg %p29
    $region31: #{lstm_model_forward.2} parent=1 // pred_check_branch
      %5570 = sbr.rel (%p5568) target = $region33
    $region32: #{lstm_model_forward.2} parent=1 // pred_region
      %5571 = vst [vmem:[#allocation5] sm:$0xff] %v5562
      %5572 = vst [vmem:[#allocation7] sm:$0xff] %v5560
    $region33: #{lstm_model_forward.2} parent=1 // pred_fallthru
      _
    // Predicated region
    $region34: #{lstm_model_forward.2} parent=1 // pred_check
      _
    $region35: #{lstm_model_forward.2} parent=1 // pred_check_branch
      %5574 = sbr.rel (0) target = $region37
    $region36: #{lstm_model_forward.2} parent=1 // pred_region
      _
    $region37: #{lstm_model_forward.2} parent=1 // pred_fallthru
      _
    // Predicated region
    $region38: #{lstm_model_forward.2} parent=1 // pred_check
      _
    $region39: #{lstm_model_forward.2} parent=1 // pred_check_branch
      %5576 = sbr.rel (0) target = $region41
    $region40: #{lstm_model_forward.2} parent=1 // pred_region
      %s5578 = ssub.s32 128, 128
      %5579 = vsyncadd [#allocation6], %s5578
      %s5581 = sshll.u32 [#allocation5], 4
      %s5582 = int_to_ptr.vmem [resolvable:$true] %s5581
      %5584 = dma.vmem_to_hbm [thread:$0]  %s5582, 128, %s7, [#allocation6]
    $region41: #{lstm_model_forward.2} parent=1 // pred_fallthru
      _
    // Predicated region
    $region42: #{lstm_model_forward.2} parent=1 // pred_check
      _
    $region43: #{lstm_model_forward.2} parent=1 // pred_check_branch
      %5586 = sbr.rel (0) target = $region45
    $region44: #{lstm_model_forward.2} parent=1 // pred_region
      %s5588 = ssub.s32 128, 128
      %5589 = vsyncadd [#allocation8], %s5588
      %s5591 = sshll.u32 [#allocation7], 4
      %s5592 = int_to_ptr.vmem [resolvable:$true] %s5591
      %5594 = dma.vmem_to_hbm [thread:$0]  %s5592, 128, %s8, [#allocation8]
    $region45: #{lstm_model_forward.2} parent=1 // pred_fallthru
      _
    // Predicated region
    $region46: #{lstm_model_forward.2} parent=1 // pred_check
      _
    $region47: #{lstm_model_forward.2} parent=1 // pred_check_branch
      %5596 = sbr.rel (0) target = $region49
    $region48: #{lstm_model_forward.2} parent=1 // pred_region
      _
    $region49: #{lstm_model_forward.2} parent=1 // pred_fallthru
      _
    // Predicated region
    $region50: #{lstm_model_forward.2} parent=1 // pred_check
      _
    $region51: #{lstm_model_forward.2} parent=1 // pred_check_branch
      %5598 = sbr.rel (0) target = $region53
    $region52: #{lstm_model_forward.2} parent=1 // pred_region
      %5599 = dma.done [#allocation6], 128
    $region53: #{lstm_model_forward.2} parent=1 // pred_fallthru
      _
    // Predicated region
    $region54: #{lstm_model_forward.2} parent=1 // pred_check
      _
    $region55: #{lstm_model_forward.2} parent=1 // pred_check_branch
      %5601 = sbr.rel (0) target = $region57
    $region56: #{lstm_model_forward.2} parent=1 // pred_region
      %5602 = dma.done [#allocation8], 128
    $region57: #{lstm_model_forward.2} parent=1 // pred_fallthru
      _
    %5603 = vsyncpa [#allocation6], 1
    %5604 = vsyncpa [#allocation8], 1

</llo_original>
